<compile_context>
chip_gen: v6e
topology: v6e:2x2x1
jax: 0.10.0
libtpu: 0.0.40
codegen_flags: <defaults>
</compile_context>

<pallas_src>
import collections
import functools

import jax
import jax.numpy as jnp
import numpy as np
from jax import lax
from jax.experimental import pallas as pl
from jax.experimental.pallas import tpu as pltpu


LayerPlan = collections.namedtuple(
    "LayerPlan", ["mode", "weight_first", "act", "n_taps", "shifts", "needs_mask"])


# --------------------------------------------------------------------------
# In-kernel building blocks (all activations are (B*C, HW): C on sublanes,
# HW on lanes)
# --------------------------------------------------------------------------
def _activate(y, act):
    if act == "leaky_relu":
        return jnp.where(y >= 0, y, 0.01 * y)
    if act == "sigmoid":
        return jax.nn.sigmoid(y)
    return y


def _conv_matmul(x, s_ref, w_ref, b_ref, lp):
    """x: (B*Cin, HWin).  act( sum_t W_t_blk @ x @ S_t^T + b ) -> (B*Cout, OHW)."""
    acc = None
    for t in range(lp.n_taps):
        if lp.weight_first:           # cheaper when Cout <= Cin
            y = jnp.dot(jnp.dot(w_ref[t], x, preferred_element_type=jnp.float32),
                        s_ref[t], preferred_element_type=jnp.float32)
        else:                         # cheaper when Cin < Cout
            y = jnp.dot(w_ref[t],
                        jnp.dot(x, s_ref[t], preferred_element_type=jnp.float32),
                        preferred_element_type=jnp.float32)
        acc = y if acc is None else acc + y          # MRB-accumulable on v7x
    return _activate(acc + b_ref[...], lp.act)


def _conv_roll(x, m_ref, w_ref, b_ref, lp):
    """Stride-1 'same' conv(-transpose): each tap = lane roll + boundary mask."""
    acc = None
    for t in range(lp.n_taps):
        zt = jnp.dot(w_ref[t], x, preferred_element_type=jnp.float32)   # (B*Cout, HW)
        if lp.shifts[t] != 0:
            zt = pltpu.roll(zt, lp.shifts[t], 1)                        # XLU, ~free
        if lp.needs_mask[t]:
            zt = zt * m_ref[t]                                          # (1, HW) bcast
        acc = zt if acc is None else acc + zt
    return _activate(acc + b_ref[...], lp.act)


def _make_fused_kernel(plan):
    enc_plans, dec_plans = plan["enc"], plan["dec"]
    b_tile, z_dim = plan["b_tile"], plan["z_dim"]
    c_enc, c_dec0 = plan["c_enc"], plan["c_dec0"]

    def kernel(*refs):
        x_ref, o_ref = refs[0], refs[-1]
        pos = 1
        x = x_ref[...]                                      # (B*Cin0, HW0) f32

        # ---- encoder convolutions (+ leaky_relu) ----
        for lp in enc_plans:
            s_ref, w_ref, b_ref = refs[pos:pos + 3]
            pos += 3
            x = _conv_matmul(x, s_ref, w_ref, b_ref, lp)

        # ---- bottleneck: Linear(z) -> Linear(back), per stacked sample ----
        benc_w, be, bdec_w, bdec_b = refs[pos:pos + 4]
        pos += 4
        bdec_bias = bdec_b[...]                             # (c_dec0, hw2)
        outs = []
        for b in range(b_tile):
            xb = x[b * c_enc:(b + 1) * c_enc, :]            # (c_enc, hw2)
            xd = bdec_bias
            for j in range(z_dim):                          # z_dim is tiny (3)
                zj = jnp.sum(xb * benc_w[j], axis=1, keepdims=True)   # lane reduce
                zj = jnp.sum(zj, axis=0, keepdims=True)               # (1, 1)
                zj = zj + be[0:1, j:j + 1]
                xd = xd + zj * bdec_w[j]                    # (1,1)*(c_dec0, hw2)
            outs.append(xd)
        x = outs[0] if b_tile == 1 else jnp.concatenate(outs, axis=0)

        # ---- decoder conv-transposes ----
        for lp in dec_plans:
            a_ref, w_ref, b_ref = refs[pos:pos + 3]
            pos += 3
            if lp.mode == "roll":
                x = _conv_roll(x, a_ref, w_ref, b_ref, lp)
            else:
                x = _conv_matmul(x, a_ref, w_ref, b_ref, lp)

        o_ref[...] = x.astype(o_ref.dtype)

    return kernel


# --------------------------------------------------------------------------
# Parameter preparation (all layout / flip / transpose work hoisted offline)
# --------------------------------------------------------------------------
def _build_tap_selectors(hin, win, k, stride, pad_lo, pad_hi, lhs_dil):
    """0/1 selection matrices S[t, q, p] for a (possibly dilated) padded conv."""
    hd = (hin - 1) * lhs_dil + 1
    wd = (win - 1) * lhs_dil + 1
    oh = (hd + pad_lo + pad_hi - k) // stride + 1
    ow = (wd + pad_lo + pad_hi - k) // stride + 1
    s = np.zeros((k * k, oh * ow, hin * win), np.float32)
    for di in range(k):
        for dj in range(k):
            t = di * k + dj
            for oy in range(oh):
                yy = oy * stride + di - pad_lo
                if yy < 0 or yy >= hd or yy % lhs_dil:
                    continue
                iy = yy // lhs_dil
                for ox in range(ow):
                    xx = ox * stride + dj - pad_lo
                    if xx < 0 or xx >= wd or xx % lhs_dil:
                        continue
                    s[t, oy * ow + ox, iy * win + xx // lhs_dil] = 1.0
    return s, oh, ow


def _build_roll_taps(h, w, k, pad_lo):
    """Lane-roll amounts and boundary masks for a stride-1 'same' conv."""
    hw = h * w
    oy, ox = np.meshgrid(np.arange(h), np.arange(w), indexing="ij")
    shifts, masks = [], []
    for di in range(k):
        for dj in range(k):
            dy, dx = di - pad_lo, dj - pad_lo
            valid = ((oy + dy >= 0) & (oy + dy < h) &
                     (ox + dx >= 0) & (ox + dx < w)).astype(np.float32)
            masks.append(valid.reshape(1, hw))
            shifts.append(int((-(dy * w + dx)) % hw))      # out[q] = in[q + dy*w + dx]
    return shifts, np.stack(masks, axis=0)                  # (k*k, 1, hw)


def prepare_autoencoder(params, cfg, b_tile):
    """Precompute every kernel operand for B_TILE samples stacked on sublanes."""
    pad = 1
    ops = []
    enc_plans, dec_plans = [], []
    h, w = cfg["in_h"], cfg["in_w"]

    assert (b_tile * cfg["in_c"]) % 8 == 0, "b_tile*in_c must be a multiple of 8"
    assert (b_tile * cfg["dec_c"][-1]) % 8 == 0, "b_tile*out_c must be a multiple of 8"

    def _blockdiag_taps(wtapsT):          # (T, Cout, Cin) -> (T, B*Cout, B*Cin)
        eye = np.eye(b_tile, dtype=np.float32)
        return np.stack([np.kron(eye, wtapsT[t]) for t in range(wtapsT.shape[0])], 0)

    def _bias_col(bias, cout):
        return np.tile(np.asarray(bias, np.float32), b_tile).reshape(b_tile * cout, 1)

    # ---- encoder convs ----
    for (wt, bias), k, st in zip(params["enc_conv"], cfg["enc_k"], cfg["enc_s"]):
        wt = np.asarray(wt, np.float32)
        cout, cin = wt.shape[0], wt.shape[1]
        sel, oh, ow = _build_tap_selectors(h, w, k, st, pad, pad, 1)
        sel_T = np.ascontiguousarray(np.transpose(sel, (0, 2, 1)))        # (T, HWin, OHW)
        wtapsT = np.ascontiguousarray(wt.transpose(2, 3, 0, 1)).reshape(k * k, cout, cin)
        ops += [jnp.asarray(sel_T, jnp.float32),
                jnp.asarray(_blockdiag_taps(wtapsT), jnp.float32),
                jnp.asarray(_bias_col(bias, cout), jnp.float32)]
        enc_plans.append(LayerPlan("matmul", cout <= cin, "leaky_relu", k * k, None, None))
        h, w = oh, ow

    # ---- bottleneck linears (PyTorch flatten order: idx = c*HW + p) ----
    hw2 = h * w
    c_enc, c_dec0, z = cfg["enc_c"][-1], cfg["dec_c"][0], cfg["z_dim"]
    we, be_ = (np.asarray(a, np.float32) for a in params["enc_out"])   # (z, c*hw2), (z,)
    wd, bd = (np.asarray(a, np.float32) for a in params["dec_in"])     # (c*hw2, z), (c*hw2,)
    ops += [jnp.asarray(we.reshape(z, c_enc, hw2), jnp.float32),
            jnp.asarray(be_.reshape(1, z), jnp.float32),
            jnp.asarray(wd.reshape(c_dec0, hw2, z).transpose(2, 0, 1), jnp.float32),
            jnp.asarray(bd.reshape(c_dec0, hw2), jnp.float32)]

    # ---- decoder conv-transposes ----
    n_dec = len(cfg["dec_c"])
    for i, ((wt, bias), k, st) in enumerate(zip(params["dec_convt"],
                                                cfg["dec_k"], cfg["dec_s"])):
        wt = np.asarray(wt, np.float32)
        cin, cout = wt.shape[0], wt.shape[1]
        out_pad = st - 1
        pad_lo, pad_hi = k - 1 - pad, k - 1 - pad + out_pad
        wflip = wt[:, :, ::-1, ::-1]
        wtapsT = np.ascontiguousarray(wflip.transpose(2, 3, 1, 0)).reshape(k * k, cout, cin)
        wblk = jnp.asarray(_blockdiag_taps(wtapsT), jnp.float32)
        bcol = jnp.asarray(_bias_col(bias, cout), jnp.float32)
        act = "leaky_relu" if i < n_dec - 1 else "sigmoid"

        same_spatial = (st == 1 and (h + pad_lo + pad_hi - k + 1) == h
                        and (w + pad_lo + pad_hi - k + 1) == w)
        if same_spatial:
            # stride-1 "same" conv-transpose: XLU rolls + masks instead of S matmuls
            shifts, masks = _build_roll_taps(h, w, k, pad_lo)
            ops += [jnp.asarray(masks, jnp.float32), wblk, bcol]
            dec_plans.append(LayerPlan(
                "roll", True, act, k * k, tuple(shifts),
                tuple(bool((masks[t] != 1.0).any()) for t in range(k * k))))
            # spatial size unchanged
        else:
            sel, oh, ow = _build_tap_selectors(h, w, k, 1, pad_lo, pad_hi, st)
            sel_T = np.ascontiguousarray(np.transpose(sel, (0, 2, 1)))
            ops += [jnp.asarray(sel_T, jnp.float32), wblk, bcol]
            dec_plans.append(LayerPlan("matmul", cout <= cin, act, k * k, None, None))
            h, w = oh, ow

    plan = dict(enc=tuple(enc_plans), dec=tuple(dec_plans), b_tile=b_tile,
                z_dim=z, c_enc=c_enc, c_dec0=c_dec0,
                out_geom=(h, w, cfg["dec_c"][-1]))
    assert len(ops) == 3 * len(enc_plans) + 4 + 3 * len(dec_plans)
    return tuple(ops), plan


# --------------------------------------------------------------------------
# Forward: one pallas_call, grid over batch tiles (B_TILE samples per step)
# --------------------------------------------------------------------------
def autoencoder_forward(x, ops, plan):
    b_tile = plan["b_tile"]
    n, cin, h, w = x.shape
    assert n % b_tile == 0, (n, b_tile)
    hw = h * w
    oh, ow, cout_last = plan["out_geom"]
    ohw = oh * ow

    x2d = x.reshape(n * cin, hw)                 # NCHW -> (N*C, HW): free reshape

    kernel = _make_fused_kernel(plan)

    def _const_spec(a):
        nd = a.ndim
        return pl.BlockSpec(a.shape, lambda g, _nd=nd: (0,) * _nd)

    in_specs = [pl.BlockSpec((b_tile * cin, hw), lambda g: (g, 0))]
    in_specs += [_const_spec(a) for a in ops]
    out_spec = pl.BlockSpec((b_tile * cout_last, ohw), lambda g: (g, 0))

    out = pl.pallas_call(
        kernel,
        out_shape=jax.ShapeDtypeStruct((n * cout_last, ohw), jnp.float32),
        grid=(n // b_tile,),
        in_specs=in_specs,
        out_specs=out_spec,
        compiler_params=pltpu.CompilerParams(
            dimension_semantics=("parallel",)),
    )(x2d, *ops)

    return out.reshape(n, cout_last, oh, ow)     # (N*C, HW) -> NCHW: free reshape


# --------------------------------------------------------------------------
# Pure-JAX (XLA) reference for correctness checking
# --------------------------------------------------------------------------
def _leaky_ref(x):
    return jnp.where(x >= 0, x, 0.01 * x)


def autoencoder_reference(x, params, cfg):
    dn = ("NCHW", "OIHW", "NCHW")
    for (w, b), s in zip(params["enc_conv"], cfg["enc_s"]):
        x = lax.conv_general_dilated(x, w, (s, s), [(1, 1), (1, 1)],
                                     dimension_numbers=dn)
        x = _leaky_ref(x + b.reshape(1, -1, 1, 1))
    x = x.reshape(-1, cfg["encode_linear"])
    w, b = params["enc_out"]; x = x @ w.T + b
    w, b = params["dec_in"];  x = x @ w.T + b
    x = x.reshape(-1, cfg["dec_c"][0], cfg["pre_reshape_h"], cfg["pre_reshape_w"])
    n_dec = len(params["dec_convt"])
    for i, ((w, b), k, s) in enumerate(zip(params["dec_convt"],
                                           cfg["dec_k"], cfg["dec_s"])):
        lo = k - 1 - 1
        hi = k - 1 - 1 + (s - 1)
        w_conv = jnp.flip(w, axis=(2, 3)).transpose(1, 0, 2, 3)
        x = lax.conv_general_dilated(x, w_conv, (1, 1), [(lo, hi), (lo, hi)],
                                     lhs_dilation=(s, s), dimension_numbers=dn)
        x = x + b.reshape(1, -1, 1, 1)
        x = _leaky_ref(x) if i < n_dec - 1 else jax.nn.sigmoid(x)
    return x


# --------------------------------------------------------------------------
# Deterministic parameter construction (matches the PyTorch module layout)
# --------------------------------------------------------------------------
def make_params(key, cfg):
    keys = iter(jax.random.split(key, 64))

    def rnd(shape, scale=0.1):
        return scale * jax.random.normal(next(keys), shape, dtype=jnp.float32)

    params = {"enc_conv": [], "dec_convt": []}
    cin = cfg["in_c"]
    for cout, k in zip(cfg["enc_c"], cfg["enc_k"]):
        params["enc_conv"].append((rnd((cout, cin, k, k)), rnd((cout,))))
        cin = cout
    params["enc_out"] = (rnd((cfg["z_dim"], cfg["encode_linear"])),
                         rnd((cfg["z_dim"],)))
    params["dec_in"] = (rnd((cfg["encode_linear"], cfg["z_dim"])),
                        rnd((cfg["encode_linear"],)))
    cin = cfg["dec_c"][0]
    for cout, k in zip(cfg["dec_c"], cfg["dec_k"]):
        params["dec_convt"].append((rnd((cin, cout, k, k)), rnd((cout,))))
        cin = cout
    return params


if __name__ == "__main__":
    # Config analogous to:
    # Autoencoder(input_dim=(4,16,16), encoder_conv_channels=[8,16],
    #             encoder_conv_kernel_size=[3,3], encoder_conv_strides=[2,2],
    #             decoder_conv_t_channels=[16,8,4],
    #             decoder_conv_t_kernel_size=[3,3,3],
    #             decoder_conv_t_strides=[2,2,1], z_dim=3)
    in_c, H, W = 4, 16, 16
    enc_c, enc_k, enc_s = [8, 16], [3, 3], [2, 2]
    dec_c, dec_k, dec_s = [16, 8, 4], [3, 3, 3], [2, 2, 1]
    z_dim = 3
    batch, b_tile = 4, 2      # 2 samples per grid step -> grid=2 (both v7x TCs busy,
                              # per-step overhead amortized on v5e/v6e)

    oh, ow = H, W
    for k, s in zip(enc_k, enc_s):
        oh = int(np.floor((oh + 2 - (k - 1) - 1) / s + 1))
        ow = int(np.floor((ow + 2 - (k - 1) - 1) / s + 1))

    cfg = dict(in_c=in_c, in_h=H, in_w=W,
               enc_c=enc_c, enc_k=enc_k, enc_s=enc_s,
               dec_c=dec_c, dec_k=dec_k, dec_s=dec_s, z_dim=z_dim,
               pre_reshape_h=oh, pre_reshape_w=ow,
               encode_linear=enc_c[-1] * oh * ow)

    key = jax.random.PRNGKey(0)
    kx, kp = jax.random.split(key)
    x = jax.random.normal(kx, (batch, in_c, H, W), dtype=jnp.float32)
    params = make_params(kp, cfg)

    # All layout / weight-prep work is done once, outside the forward path.
    ops, plan = prepare_autoencoder(params, cfg, b_tile=b_tile)
    fwd = jax.jit(functools.partial(autoencoder_forward, plan=plan))

    out = jax.block_until_ready(fwd(x, ops))
    assert out.shape == (batch, dec_c[-1], H, W), out.shape

    ref = jax.block_until_ready(autoencoder_reference(x, params, cfg))
    np.testing.assert_allclose(np.asarray(out), np.asarray(ref),
                               atol=2e-4, rtol=2e-4)
    print("KERNEL_OK")
</pallas_src>

<mosaic_0001>
module attributes {stable_mosaic.version = 11 : i64} {
  func.func @kernel(%arg0: i32, %arg1: memref<8x256xf32, #tpu.memory_space<vmem>>, %arg2: memref<9x256x64xf32, #tpu.memory_space<vmem>>, %arg3: memref<9x16x8xf32, #tpu.memory_space<vmem>>, %arg4: memref<16x1xf32, #tpu.memory_space<vmem>>, %arg5: memref<9x64x16xf32, #tpu.memory_space<vmem>>, %arg6: memref<9x32x16xf32, #tpu.memory_space<vmem>>, %arg7: memref<32x1xf32, #tpu.memory_space<vmem>>, %arg8: memref<3x16x16xf32, #tpu.memory_space<vmem>>, %arg9: memref<1x3xf32, #tpu.memory_space<vmem>>, %arg10: memref<3x16x16xf32, #tpu.memory_space<vmem>>, %arg11: memref<16x16xf32, #tpu.memory_space<vmem>>, %arg12: memref<9x16x64xf32, #tpu.memory_space<vmem>>, %arg13: memref<9x32x32xf32, #tpu.memory_space<vmem>>, %arg14: memref<32x1xf32, #tpu.memory_space<vmem>>, %arg15: memref<9x64x256xf32, #tpu.memory_space<vmem>>, %arg16: memref<9x16x32xf32, #tpu.memory_space<vmem>>, %arg17: memref<16x1xf32, #tpu.memory_space<vmem>>, %arg18: memref<9x1x256xf32, #tpu.memory_space<vmem>>, %arg19: memref<9x8x16xf32, #tpu.memory_space<vmem>>, %arg20: memref<8x1xf32, #tpu.memory_space<vmem>>, %arg21: memref<8x256xf32, #tpu.memory_space<vmem>>) attributes {dimension_semantics = [#tpu.dimension_semantics<parallel>], iteration_bounds = array<i64: 2>, scalar_prefetch = 0 : i64, scratch_operands = 0 : i64, tpu.core_type = #tpu.core_type<tc>, window_params = [{transform_indices = @transform_0, window_bounds = array<i64: 8, 256>}, {pipeline_mode = #tpu.pipeline_mode<synchronous>, transform_indices = @transform_1, window_bounds = array<i64: 9, 256, 64>}, {pipeline_mode = #tpu.pipeline_mode<synchronous>, transform_indices = @transform_2, window_bounds = array<i64: 9, 16, 8>}, {pipeline_mode = #tpu.pipeline_mode<synchronous>, transform_indices = @transform_3, window_bounds = array<i64: 16, 1>}, {pipeline_mode = #tpu.pipeline_mode<synchronous>, transform_indices = @transform_4, window_bounds = array<i64: 9, 64, 16>}, {pipeline_mode = #tpu.pipeline_mode<synchronous>, transform_indices = @transform_5, window_bounds = array<i64: 9, 32, 16>}, {pipeline_mode = #tpu.pipeline_mode<synchronous>, transform_indices = @transform_6, window_bounds = array<i64: 32, 1>}, {pipeline_mode = #tpu.pipeline_mode<synchronous>, transform_indices = @transform_7, window_bounds = array<i64: 3, 16, 16>}, {pipeline_mode = #tpu.pipeline_mode<synchronous>, transform_indices = @transform_8, window_bounds = array<i64: 1, 3>}, {pipeline_mode = #tpu.pipeline_mode<synchronous>, transform_indices = @transform_9, window_bounds = array<i64: 3, 16, 16>}, {pipeline_mode = #tpu.pipeline_mode<synchronous>, transform_indices = @transform_10, window_bounds = array<i64: 16, 16>}, {pipeline_mode = #tpu.pipeline_mode<synchronous>, transform_indices = @transform_11, window_bounds = array<i64: 9, 16, 64>}, {pipeline_mode = #tpu.pipeline_mode<synchronous>, transform_indices = @transform_12, window_bounds = array<i64: 9, 32, 32>}, {pipeline_mode = #tpu.pipeline_mode<synchronous>, transform_indices = @transform_13, window_bounds = array<i64: 32, 1>}, {pipeline_mode = #tpu.pipeline_mode<synchronous>, transform_indices = @transform_14, window_bounds = array<i64: 9, 64, 256>}, {pipeline_mode = #tpu.pipeline_mode<synchronous>, transform_indices = @transform_15, window_bounds = array<i64: 9, 16, 32>}, {pipeline_mode = #tpu.pipeline_mode<synchronous>, transform_indices = @transform_16, window_bounds = array<i64: 16, 1>}, {pipeline_mode = #tpu.pipeline_mode<synchronous>, transform_indices = @transform_17, window_bounds = array<i64: 9, 1, 256>}, {pipeline_mode = #tpu.pipeline_mode<synchronous>, transform_indices = @transform_18, window_bounds = array<i64: 9, 8, 16>}, {pipeline_mode = #tpu.pipeline_mode<synchronous>, transform_indices = @transform_19, window_bounds = array<i64: 8, 1>}, {transform_indices = @transform_20, window_bounds = array<i64: 8, 256>}]} {
    %c0 = arith.constant 0 : index
    %c0_0 = arith.constant 0 : index
    %0 = vector.load %arg1[%c0, %c0_0] : memref<8x256xf32, #tpu.memory_space<vmem>>, vector<8x256xf32>
    %c0_1 = arith.constant 0 : index
    %c0_2 = arith.constant 0 : index
    %c0_3 = arith.constant 0 : index
    %1 = vector.load %arg3[%c0_1, %c0_2, %c0_3] : memref<9x16x8xf32, #tpu.memory_space<vmem>>, vector<1x16x8xf32>
    %2 = vector.shape_cast %1 : vector<1x16x8xf32> to vector<16x8xf32>
    %c0_4 = arith.constant 0 : index
    %c0_5 = arith.constant 0 : index
    %c0_6 = arith.constant 0 : index
    %3 = vector.load %arg2[%c0_4, %c0_5, %c0_6] : memref<9x256x64xf32, #tpu.memory_space<vmem>>, vector<1x256x64xf32>
    %4 = vector.shape_cast %3 : vector<1x256x64xf32> to vector<256x64xf32>
    %cst = arith.constant dense<0.000000e+00> : vector<8x64xf32>
    %5 = tpu.matmul %0, %4, %cst {dimension_numbers = #tpu.dot_dimension_numbers<[1], [0], [0], [1], [0, 0, 1, 1], [], []>} : vector<8x256xf32>, vector<256x64xf32>, vector<8x64xf32> -> vector<8x64xf32>
    %cst_7 = arith.constant dense<0.000000e+00> : vector<16x64xf32>
    %6 = tpu.matmul %2, %5, %cst_7 {dimension_numbers = #tpu.dot_dimension_numbers<[1], [0], [0], [1], [0, 0, 1, 1], [], []>} : vector<16x8xf32>, vector<8x64xf32>, vector<16x64xf32> -> vector<16x64xf32>
    %c1 = arith.constant 1 : index
    %c0_8 = arith.constant 0 : index
    %c0_9 = arith.constant 0 : index
    %7 = vector.load %arg3[%c1, %c0_8, %c0_9] : memref<9x16x8xf32, #tpu.memory_space<vmem>>, vector<1x16x8xf32>
    %8 = vector.shape_cast %7 : vector<1x16x8xf32> to vector<16x8xf32>
    %c1_10 = arith.constant 1 : index
    %c0_11 = arith.constant 0 : index
    %c0_12 = arith.constant 0 : index
    %9 = vector.load %arg2[%c1_10, %c0_11, %c0_12] : memref<9x256x64xf32, #tpu.memory_space<vmem>>, vector<1x256x64xf32>
    %10 = vector.shape_cast %9 : vector<1x256x64xf32> to vector<256x64xf32>
    %cst_13 = arith.constant dense<0.000000e+00> : vector<8x64xf32>
    %11 = tpu.matmul %0, %10, %cst_13 {dimension_numbers = #tpu.dot_dimension_numbers<[1], [0], [0], [1], [0, 0, 1, 1], [], []>} : vector<8x256xf32>, vector<256x64xf32>, vector<8x64xf32> -> vector<8x64xf32>
    %cst_14 = arith.constant dense<0.000000e+00> : vector<16x64xf32>
    %12 = tpu.matmul %8, %11, %cst_14 {dimension_numbers = #tpu.dot_dimension_numbers<[1], [0], [0], [1], [0, 0, 1, 1], [], []>} : vector<16x8xf32>, vector<8x64xf32>, vector<16x64xf32> -> vector<16x64xf32>
    %13 = arith.addf %6, %12 : vector<16x64xf32>
    %c2 = arith.constant 2 : index
    %c0_15 = arith.constant 0 : index
    %c0_16 = arith.constant 0 : index
    %14 = vector.load %arg3[%c2, %c0_15, %c0_16] : memref<9x16x8xf32, #tpu.memory_space<vmem>>, vector<1x16x8xf32>
    %15 = vector.shape_cast %14 : vector<1x16x8xf32> to vector<16x8xf32>
    %c2_17 = arith.constant 2 : index
    %c0_18 = arith.constant 0 : index
    %c0_19 = arith.constant 0 : index
    %16 = vector.load %arg2[%c2_17, %c0_18, %c0_19] : memref<9x256x64xf32, #tpu.memory_space<vmem>>, vector<1x256x64xf32>
    %17 = vector.shape_cast %16 : vector<1x256x64xf32> to vector<256x64xf32>
    %cst_20 = arith.constant dense<0.000000e+00> : vector<8x64xf32>
    %18 = tpu.matmul %0, %17, %cst_20 {dimension_numbers = #tpu.dot_dimension_numbers<[1], [0], [0], [1], [0, 0, 1, 1], [], []>} : vector<8x256xf32>, vector<256x64xf32>, vector<8x64xf32> -> vector<8x64xf32>
    %cst_21 = arith.constant dense<0.000000e+00> : vector<16x64xf32>
    %19 = tpu.matmul %15, %18, %cst_21 {dimension_numbers = #tpu.dot_dimension_numbers<[1], [0], [0], [1], [0, 0, 1, 1], [], []>} : vector<16x8xf32>, vector<8x64xf32>, vector<16x64xf32> -> vector<16x64xf32>
    %20 = arith.addf %13, %19 : vector<16x64xf32>
    %c3 = arith.constant 3 : index
    %c0_22 = arith.constant 0 : index
    %c0_23 = arith.constant 0 : index
    %21 = vector.load %arg3[%c3, %c0_22, %c0_23] : memref<9x16x8xf32, #tpu.memory_space<vmem>>, vector<1x16x8xf32>
    %22 = vector.shape_cast %21 : vector<1x16x8xf32> to vector<16x8xf32>
    %c3_24 = arith.constant 3 : index
    %c0_25 = arith.constant 0 : index
    %c0_26 = arith.constant 0 : index
    %23 = vector.load %arg2[%c3_24, %c0_25, %c0_26] : memref<9x256x64xf32, #tpu.memory_space<vmem>>, vector<1x256x64xf32>
    %24 = vector.shape_cast %23 : vector<1x256x64xf32> to vector<256x64xf32>
    %cst_27 = arith.constant dense<0.000000e+00> : vector<8x64xf32>
    %25 = tpu.matmul %0, %24, %cst_27 {dimension_numbers = #tpu.dot_dimension_numbers<[1], [0], [0], [1], [0, 0, 1, 1], [], []>} : vector<8x256xf32>, vector<256x64xf32>, vector<8x64xf32> -> vector<8x64xf32>
    %cst_28 = arith.constant dense<0.000000e+00> : vector<16x64xf32>
    %26 = tpu.matmul %22, %25, %cst_28 {dimension_numbers = #tpu.dot_dimension_numbers<[1], [0], [0], [1], [0, 0, 1, 1], [], []>} : vector<16x8xf32>, vector<8x64xf32>, vector<16x64xf32> -> vector<16x64xf32>
    %27 = arith.addf %20, %26 : vector<16x64xf32>
    %c4 = arith.constant 4 : index
    %c0_29 = arith.constant 0 : index
    %c0_30 = arith.constant 0 : index
    %28 = vector.load %arg3[%c4, %c0_29, %c0_30] : memref<9x16x8xf32, #tpu.memory_space<vmem>>, vector<1x16x8xf32>
    %29 = vector.shape_cast %28 : vector<1x16x8xf32> to vector<16x8xf32>
    %c4_31 = arith.constant 4 : index
    %c0_32 = arith.constant 0 : index
    %c0_33 = arith.constant 0 : index
    %30 = vector.load %arg2[%c4_31, %c0_32, %c0_33] : memref<9x256x64xf32, #tpu.memory_space<vmem>>, vector<1x256x64xf32>
    %31 = vector.shape_cast %30 : vector<1x256x64xf32> to vector<256x64xf32>
    %cst_34 = arith.constant dense<0.000000e+00> : vector<8x64xf32>
    %32 = tpu.matmul %0, %31, %cst_34 {dimension_numbers = #tpu.dot_dimension_numbers<[1], [0], [0], [1], [0, 0, 1, 1], [], []>} : vector<8x256xf32>, vector<256x64xf32>, vector<8x64xf32> -> vector<8x64xf32>
    %cst_35 = arith.constant dense<0.000000e+00> : vector<16x64xf32>
    %33 = tpu.matmul %29, %32, %cst_35 {dimension_numbers = #tpu.dot_dimension_numbers<[1], [0], [0], [1], [0, 0, 1, 1], [], []>} : vector<16x8xf32>, vector<8x64xf32>, vector<16x64xf32> -> vector<16x64xf32>
    %34 = arith.addf %27, %33 : vector<16x64xf32>
    %c5 = arith.constant 5 : index
    %c0_36 = arith.constant 0 : index
    %c0_37 = arith.constant 0 : index
    %35 = vector.load %arg3[%c5, %c0_36, %c0_37] : memref<9x16x8xf32, #tpu.memory_space<vmem>>, vector<1x16x8xf32>
    %36 = vector.shape_cast %35 : vector<1x16x8xf32> to vector<16x8xf32>
    %c5_38 = arith.constant 5 : index
    %c0_39 = arith.constant 0 : index
    %c0_40 = arith.constant 0 : index
    %37 = vector.load %arg2[%c5_38, %c0_39, %c0_40] : memref<9x256x64xf32, #tpu.memory_space<vmem>>, vector<1x256x64xf32>
    %38 = vector.shape_cast %37 : vector<1x256x64xf32> to vector<256x64xf32>
    %cst_41 = arith.constant dense<0.000000e+00> : vector<8x64xf32>
    %39 = tpu.matmul %0, %38, %cst_41 {dimension_numbers = #tpu.dot_dimension_numbers<[1], [0], [0], [1], [0, 0, 1, 1], [], []>} : vector<8x256xf32>, vector<256x64xf32>, vector<8x64xf32> -> vector<8x64xf32>
    %cst_42 = arith.constant dense<0.000000e+00> : vector<16x64xf32>
    %40 = tpu.matmul %36, %39, %cst_42 {dimension_numbers = #tpu.dot_dimension_numbers<[1], [0], [0], [1], [0, 0, 1, 1], [], []>} : vector<16x8xf32>, vector<8x64xf32>, vector<16x64xf32> -> vector<16x64xf32>
    %41 = arith.addf %34, %40 : vector<16x64xf32>
    %c6 = arith.constant 6 : index
    %c0_43 = arith.constant 0 : index
    %c0_44 = arith.constant 0 : index
    %42 = vector.load %arg3[%c6, %c0_43, %c0_44] : memref<9x16x8xf32, #tpu.memory_space<vmem>>, vector<1x16x8xf32>
    %43 = vector.shape_cast %42 : vector<1x16x8xf32> to vector<16x8xf32>
    %c6_45 = arith.constant 6 : index
    %c0_46 = arith.constant 0 : index
    %c0_47 = arith.constant 0 : index
    %44 = vector.load %arg2[%c6_45, %c0_46, %c0_47] : memref<9x256x64xf32, #tpu.memory_space<vmem>>, vector<1x256x64xf32>
    %45 = vector.shape_cast %44 : vector<1x256x64xf32> to vector<256x64xf32>
    %cst_48 = arith.constant dense<0.000000e+00> : vector<8x64xf32>
    %46 = tpu.matmul %0, %45, %cst_48 {dimension_numbers = #tpu.dot_dimension_numbers<[1], [0], [0], [1], [0, 0, 1, 1], [], []>} : vector<8x256xf32>, vector<256x64xf32>, vector<8x64xf32> -> vector<8x64xf32>
    %cst_49 = arith.constant dense<0.000000e+00> : vector<16x64xf32>
    %47 = tpu.matmul %43, %46, %cst_49 {dimension_numbers = #tpu.dot_dimension_numbers<[1], [0], [0], [1], [0, 0, 1, 1], [], []>} : vector<16x8xf32>, vector<8x64xf32>, vector<16x64xf32> -> vector<16x64xf32>
    %48 = arith.addf %41, %47 : vector<16x64xf32>
    %c7 = arith.constant 7 : index
    %c0_50 = arith.constant 0 : index
    %c0_51 = arith.constant 0 : index
    %49 = vector.load %arg3[%c7, %c0_50, %c0_51] : memref<9x16x8xf32, #tpu.memory_space<vmem>>, vector<1x16x8xf32>
    %50 = vector.shape_cast %49 : vector<1x16x8xf32> to vector<16x8xf32>
    %c7_52 = arith.constant 7 : index
    %c0_53 = arith.constant 0 : index
    %c0_54 = arith.constant 0 : index
    %51 = vector.load %arg2[%c7_52, %c0_53, %c0_54] : memref<9x256x64xf32, #tpu.memory_space<vmem>>, vector<1x256x64xf32>
    %52 = vector.shape_cast %51 : vector<1x256x64xf32> to vector<256x64xf32>
    %cst_55 = arith.constant dense<0.000000e+00> : vector<8x64xf32>
    %53 = tpu.matmul %0, %52, %cst_55 {dimension_numbers = #tpu.dot_dimension_numbers<[1], [0], [0], [1], [0, 0, 1, 1], [], []>} : vector<8x256xf32>, vector<256x64xf32>, vector<8x64xf32> -> vector<8x64xf32>
    %cst_56 = arith.constant dense<0.000000e+00> : vector<16x64xf32>
    %54 = tpu.matmul %50, %53, %cst_56 {dimension_numbers = #tpu.dot_dimension_numbers<[1], [0], [0], [1], [0, 0, 1, 1], [], []>} : vector<16x8xf32>, vector<8x64xf32>, vector<16x64xf32> -> vector<16x64xf32>
    %55 = arith.addf %48, %54 : vector<16x64xf32>
    %c8 = arith.constant 8 : index
    %c0_57 = arith.constant 0 : index
    %c0_58 = arith.constant 0 : index
    %56 = vector.load %arg3[%c8, %c0_57, %c0_58] : memref<9x16x8xf32, #tpu.memory_space<vmem>>, vector<1x16x8xf32>
    %57 = vector.shape_cast %56 : vector<1x16x8xf32> to vector<16x8xf32>
    %c8_59 = arith.constant 8 : index
    %c0_60 = arith.constant 0 : index
    %c0_61 = arith.constant 0 : index
    %58 = vector.load %arg2[%c8_59, %c0_60, %c0_61] : memref<9x256x64xf32, #tpu.memory_space<vmem>>, vector<1x256x64xf32>
    %59 = vector.shape_cast %58 : vector<1x256x64xf32> to vector<256x64xf32>
    %cst_62 = arith.constant dense<0.000000e+00> : vector<8x64xf32>
    %60 = tpu.matmul %0, %59, %cst_62 {dimension_numbers = #tpu.dot_dimension_numbers<[1], [0], [0], [1], [0, 0, 1, 1], [], []>} : vector<8x256xf32>, vector<256x64xf32>, vector<8x64xf32> -> vector<8x64xf32>
    %cst_63 = arith.constant dense<0.000000e+00> : vector<16x64xf32>
    %61 = tpu.matmul %57, %60, %cst_63 {dimension_numbers = #tpu.dot_dimension_numbers<[1], [0], [0], [1], [0, 0, 1, 1], [], []>} : vector<16x8xf32>, vector<8x64xf32>, vector<16x64xf32> -> vector<16x64xf32>
    %62 = arith.addf %55, %61 : vector<16x64xf32>
    %c0_64 = arith.constant 0 : index
    %c0_65 = arith.constant 0 : index
    %63 = vector.load %arg4[%c0_64, %c0_65] : memref<16x1xf32, #tpu.memory_space<vmem>>, vector<16x1xf32>
    %64 = vector.broadcast %63 : vector<16x1xf32> to vector<16x64xf32>
    %65 = arith.addf %62, %64 : vector<16x64xf32>
    %cst_66 = arith.constant 0.000000e+00 : f32
    %66 = vector.broadcast %cst_66 : f32 to vector<16x64xf32>
    %67 = arith.cmpf oge, %65, %66 : vector<16x64xf32>
    %cst_67 = arith.constant 0.00999999977 : f32
    %68 = vector.broadcast %cst_67 : f32 to vector<16x64xf32>
    %69 = arith.mulf %68, %65 : vector<16x64xf32>
    %70 = arith.select %67, %65, %69 : vector<16x64xi1>, vector<16x64xf32>
    %c0_68 = arith.constant 0 : index
    %c0_69 = arith.constant 0 : index
    %c0_70 = arith.constant 0 : index
    %71 = vector.load %arg6[%c0_68, %c0_69, %c0_70] : memref<9x32x16xf32, #tpu.memory_space<vmem>>, vector<1x32x16xf32>
    %72 = vector.shape_cast %71 : vector<1x32x16xf32> to vector<32x16xf32>
    %c0_71 = arith.constant 0 : index
    %c0_72 = arith.constant 0 : index
    %c0_73 = arith.constant 0 : index
    %73 = vector.load %arg5[%c0_71, %c0_72, %c0_73] : memref<9x64x16xf32, #tpu.memory_space<vmem>>, vector<1x64x16xf32>
    %74 = vector.shape_cast %73 : vector<1x64x16xf32> to vector<64x16xf32>
    %cst_74 = arith.constant dense<0.000000e+00> : vector<16x16xf32>
    %75 = tpu.matmul %70, %74, %cst_74 {dimension_numbers = #tpu.dot_dimension_numbers<[1], [0], [0], [1], [0, 0, 1, 1], [], []>} : vector<16x64xf32>, vector<64x16xf32>, vector<16x16xf32> -> vector<16x16xf32>
    %cst_75 = arith.constant dense<0.000000e+00> : vector<32x16xf32>
    %76 = tpu.matmul %72, %75, %cst_75 {dimension_numbers = #tpu.dot_dimension_numbers<[1], [0], [0], [1], [0, 0, 1, 1], [], []>} : vector<32x16xf32>, vector<16x16xf32>, vector<32x16xf32> -> vector<32x16xf32>
    %c1_76 = arith.constant 1 : index
    %c0_77 = arith.constant 0 : index
    %c0_78 = arith.constant 0 : index
    %77 = vector.load %arg6[%c1_76, %c0_77, %c0_78] : memref<9x32x16xf32, #tpu.memory_space<vmem>>, vector<1x32x16xf32>
    %78 = vector.shape_cast %77 : vector<1x32x16xf32> to vector<32x16xf32>
    %c1_79 = arith.constant 1 : index
    %c0_80 = arith.constant 0 : index
    %c0_81 = arith.constant 0 : index
    %79 = vector.load %arg5[%c1_79, %c0_80, %c0_81] : memref<9x64x16xf32, #tpu.memory_space<vmem>>, vector<1x64x16xf32>
    %80 = vector.shape_cast %79 : vector<1x64x16xf32> to vector<64x16xf32>
    %cst_82 = arith.constant dense<0.000000e+00> : vector<16x16xf32>
    %81 = tpu.matmul %70, %80, %cst_82 {dimension_numbers = #tpu.dot_dimension_numbers<[1], [0], [0], [1], [0, 0, 1, 1], [], []>} : vector<16x64xf32>, vector<64x16xf32>, vector<16x16xf32> -> vector<16x16xf32>
    %cst_83 = arith.constant dense<0.000000e+00> : vector<32x16xf32>
    %82 = tpu.matmul %78, %81, %cst_83 {dimension_numbers = #tpu.dot_dimension_numbers<[1], [0], [0], [1], [0, 0, 1, 1], [], []>} : vector<32x16xf32>, vector<16x16xf32>, vector<32x16xf32> -> vector<32x16xf32>
    %83 = arith.addf %76, %82 : vector<32x16xf32>
    %c2_84 = arith.constant 2 : index
    %c0_85 = arith.constant 0 : index
    %c0_86 = arith.constant 0 : index
    %84 = vector.load %arg6[%c2_84, %c0_85, %c0_86] : memref<9x32x16xf32, #tpu.memory_space<vmem>>, vector<1x32x16xf32>
    %85 = vector.shape_cast %84 : vector<1x32x16xf32> to vector<32x16xf32>
    %c2_87 = arith.constant 2 : index
    %c0_88 = arith.constant 0 : index
    %c0_89 = arith.constant 0 : index
    %86 = vector.load %arg5[%c2_87, %c0_88, %c0_89] : memref<9x64x16xf32, #tpu.memory_space<vmem>>, vector<1x64x16xf32>
    %87 = vector.shape_cast %86 : vector<1x64x16xf32> to vector<64x16xf32>
    %cst_90 = arith.constant dense<0.000000e+00> : vector<16x16xf32>
    %88 = tpu.matmul %70, %87, %cst_90 {dimension_numbers = #tpu.dot_dimension_numbers<[1], [0], [0], [1], [0, 0, 1, 1], [], []>} : vector<16x64xf32>, vector<64x16xf32>, vector<16x16xf32> -> vector<16x16xf32>
    %cst_91 = arith.constant dense<0.000000e+00> : vector<32x16xf32>
    %89 = tpu.matmul %85, %88, %cst_91 {dimension_numbers = #tpu.dot_dimension_numbers<[1], [0], [0], [1], [0, 0, 1, 1], [], []>} : vector<32x16xf32>, vector<16x16xf32>, vector<32x16xf32> -> vector<32x16xf32>
    %90 = arith.addf %83, %89 : vector<32x16xf32>
    %c3_92 = arith.constant 3 : index
    %c0_93 = arith.constant 0 : index
    %c0_94 = arith.constant 0 : index
    %91 = vector.load %arg6[%c3_92, %c0_93, %c0_94] : memref<9x32x16xf32, #tpu.memory_space<vmem>>, vector<1x32x16xf32>
    %92 = vector.shape_cast %91 : vector<1x32x16xf32> to vector<32x16xf32>
    %c3_95 = arith.constant 3 : index
    %c0_96 = arith.constant 0 : index
    %c0_97 = arith.constant 0 : index
    %93 = vector.load %arg5[%c3_95, %c0_96, %c0_97] : memref<9x64x16xf32, #tpu.memory_space<vmem>>, vector<1x64x16xf32>
    %94 = vector.shape_cast %93 : vector<1x64x16xf32> to vector<64x16xf32>
    %cst_98 = arith.constant dense<0.000000e+00> : vector<16x16xf32>
    %95 = tpu.matmul %70, %94, %cst_98 {dimension_numbers = #tpu.dot_dimension_numbers<[1], [0], [0], [1], [0, 0, 1, 1], [], []>} : vector<16x64xf32>, vector<64x16xf32>, vector<16x16xf32> -> vector<16x16xf32>
    %cst_99 = arith.constant dense<0.000000e+00> : vector<32x16xf32>
    %96 = tpu.matmul %92, %95, %cst_99 {dimension_numbers = #tpu.dot_dimension_numbers<[1], [0], [0], [1], [0, 0, 1, 1], [], []>} : vector<32x16xf32>, vector<16x16xf32>, vector<32x16xf32> -> vector<32x16xf32>
    %97 = arith.addf %90, %96 : vector<32x16xf32>
    %c4_100 = arith.constant 4 : index
    %c0_101 = arith.constant 0 : index
    %c0_102 = arith.constant 0 : index
    %98 = vector.load %arg6[%c4_100, %c0_101, %c0_102] : memref<9x32x16xf32, #tpu.memory_space<vmem>>, vector<1x32x16xf32>
    %99 = vector.shape_cast %98 : vector<1x32x16xf32> to vector<32x16xf32>
    %c4_103 = arith.constant 4 : index
    %c0_104 = arith.constant 0 : index
    %c0_105 = arith.constant 0 : index
    %100 = vector.load %arg5[%c4_103, %c0_104, %c0_105] : memref<9x64x16xf32, #tpu.memory_space<vmem>>, vector<1x64x16xf32>
    %101 = vector.shape_cast %100 : vector<1x64x16xf32> to vector<64x16xf32>
    %cst_106 = arith.constant dense<0.000000e+00> : vector<16x16xf32>
    %102 = tpu.matmul %70, %101, %cst_106 {dimension_numbers = #tpu.dot_dimension_numbers<[1], [0], [0], [1], [0, 0, 1, 1], [], []>} : vector<16x64xf32>, vector<64x16xf32>, vector<16x16xf32> -> vector<16x16xf32>
    %cst_107 = arith.constant dense<0.000000e+00> : vector<32x16xf32>
    %103 = tpu.matmul %99, %102, %cst_107 {dimension_numbers = #tpu.dot_dimension_numbers<[1], [0], [0], [1], [0, 0, 1, 1], [], []>} : vector<32x16xf32>, vector<16x16xf32>, vector<32x16xf32> -> vector<32x16xf32>
    %104 = arith.addf %97, %103 : vector<32x16xf32>
    %c5_108 = arith.constant 5 : index
    %c0_109 = arith.constant 0 : index
    %c0_110 = arith.constant 0 : index
    %105 = vector.load %arg6[%c5_108, %c0_109, %c0_110] : memref<9x32x16xf32, #tpu.memory_space<vmem>>, vector<1x32x16xf32>
    %106 = vector.shape_cast %105 : vector<1x32x16xf32> to vector<32x16xf32>
    %c5_111 = arith.constant 5 : index
    %c0_112 = arith.constant 0 : index
    %c0_113 = arith.constant 0 : index
    %107 = vector.load %arg5[%c5_111, %c0_112, %c0_113] : memref<9x64x16xf32, #tpu.memory_space<vmem>>, vector<1x64x16xf32>
    %108 = vector.shape_cast %107 : vector<1x64x16xf32> to vector<64x16xf32>
    %cst_114 = arith.constant dense<0.000000e+00> : vector<16x16xf32>
    %109 = tpu.matmul %70, %108, %cst_114 {dimension_numbers = #tpu.dot_dimension_numbers<[1], [0], [0], [1], [0, 0, 1, 1], [], []>} : vector<16x64xf32>, vector<64x16xf32>, vector<16x16xf32> -> vector<16x16xf32>
    %cst_115 = arith.constant dense<0.000000e+00> : vector<32x16xf32>
    %110 = tpu.matmul %106, %109, %cst_115 {dimension_numbers = #tpu.dot_dimension_numbers<[1], [0], [0], [1], [0, 0, 1, 1], [], []>} : vector<32x16xf32>, vector<16x16xf32>, vector<32x16xf32> -> vector<32x16xf32>
    %111 = arith.addf %104, %110 : vector<32x16xf32>
    %c6_116 = arith.constant 6 : index
    %c0_117 = arith.constant 0 : index
    %c0_118 = arith.constant 0 : index
    %112 = vector.load %arg6[%c6_116, %c0_117, %c0_118] : memref<9x32x16xf32, #tpu.memory_space<vmem>>, vector<1x32x16xf32>
    %113 = vector.shape_cast %112 : vector<1x32x16xf32> to vector<32x16xf32>
    %c6_119 = arith.constant 6 : index
    %c0_120 = arith.constant 0 : index
    %c0_121 = arith.constant 0 : index
    %114 = vector.load %arg5[%c6_119, %c0_120, %c0_121] : memref<9x64x16xf32, #tpu.memory_space<vmem>>, vector<1x64x16xf32>
    %115 = vector.shape_cast %114 : vector<1x64x16xf32> to vector<64x16xf32>
    %cst_122 = arith.constant dense<0.000000e+00> : vector<16x16xf32>
    %116 = tpu.matmul %70, %115, %cst_122 {dimension_numbers = #tpu.dot_dimension_numbers<[1], [0], [0], [1], [0, 0, 1, 1], [], []>} : vector<16x64xf32>, vector<64x16xf32>, vector<16x16xf32> -> vector<16x16xf32>
    %cst_123 = arith.constant dense<0.000000e+00> : vector<32x16xf32>
    %117 = tpu.matmul %113, %116, %cst_123 {dimension_numbers = #tpu.dot_dimension_numbers<[1], [0], [0], [1], [0, 0, 1, 1], [], []>} : vector<32x16xf32>, vector<16x16xf32>, vector<32x16xf32> -> vector<32x16xf32>
    %118 = arith.addf %111, %117 : vector<32x16xf32>
    %c7_124 = arith.constant 7 : index
    %c0_125 = arith.constant 0 : index
    %c0_126 = arith.constant 0 : index
    %119 = vector.load %arg6[%c7_124, %c0_125, %c0_126] : memref<9x32x16xf32, #tpu.memory_space<vmem>>, vector<1x32x16xf32>
    %120 = vector.shape_cast %119 : vector<1x32x16xf32> to vector<32x16xf32>
    %c7_127 = arith.constant 7 : index
    %c0_128 = arith.constant 0 : index
    %c0_129 = arith.constant 0 : index
    %121 = vector.load %arg5[%c7_127, %c0_128, %c0_129] : memref<9x64x16xf32, #tpu.memory_space<vmem>>, vector<1x64x16xf32>
    %122 = vector.shape_cast %121 : vector<1x64x16xf32> to vector<64x16xf32>
    %cst_130 = arith.constant dense<0.000000e+00> : vector<16x16xf32>
    %123 = tpu.matmul %70, %122, %cst_130 {dimension_numbers = #tpu.dot_dimension_numbers<[1], [0], [0], [1], [0, 0, 1, 1], [], []>} : vector<16x64xf32>, vector<64x16xf32>, vector<16x16xf32> -> vector<16x16xf32>
    %cst_131 = arith.constant dense<0.000000e+00> : vector<32x16xf32>
    %124 = tpu.matmul %120, %123, %cst_131 {dimension_numbers = #tpu.dot_dimension_numbers<[1], [0], [0], [1], [0, 0, 1, 1], [], []>} : vector<32x16xf32>, vector<16x16xf32>, vector<32x16xf32> -> vector<32x16xf32>
    %125 = arith.addf %118, %124 : vector<32x16xf32>
    %c8_132 = arith.constant 8 : index
    %c0_133 = arith.constant 0 : index
    %c0_134 = arith.constant 0 : index
    %126 = vector.load %arg6[%c8_132, %c0_133, %c0_134] : memref<9x32x16xf32, #tpu.memory_space<vmem>>, vector<1x32x16xf32>
    %127 = vector.shape_cast %126 : vector<1x32x16xf32> to vector<32x16xf32>
    %c8_135 = arith.constant 8 : index
    %c0_136 = arith.constant 0 : index
    %c0_137 = arith.constant 0 : index
    %128 = vector.load %arg5[%c8_135, %c0_136, %c0_137] : memref<9x64x16xf32, #tpu.memory_space<vmem>>, vector<1x64x16xf32>
    %129 = vector.shape_cast %128 : vector<1x64x16xf32> to vector<64x16xf32>
    %cst_138 = arith.constant dense<0.000000e+00> : vector<16x16xf32>
    %130 = tpu.matmul %70, %129, %cst_138 {dimension_numbers = #tpu.dot_dimension_numbers<[1], [0], [0], [1], [0, 0, 1, 1], [], []>} : vector<16x64xf32>, vector<64x16xf32>, vector<16x16xf32> -> vector<16x16xf32>
    %cst_139 = arith.constant dense<0.000000e+00> : vector<32x16xf32>
    %131 = tpu.matmul %127, %130, %cst_139 {dimension_numbers = #tpu.dot_dimension_numbers<[1], [0], [0], [1], [0, 0, 1, 1], [], []>} : vector<32x16xf32>, vector<16x16xf32>, vector<32x16xf32> -> vector<32x16xf32>
    %132 = arith.addf %125, %131 : vector<32x16xf32>
    %c0_140 = arith.constant 0 : index
    %c0_141 = arith.constant 0 : index
    %133 = vector.load %arg7[%c0_140, %c0_141] : memref<32x1xf32, #tpu.memory_space<vmem>>, vector<32x1xf32>
    %134 = vector.broadcast %133 : vector<32x1xf32> to vector<32x16xf32>
    %135 = arith.addf %132, %134 : vector<32x16xf32>
    %cst_142 = arith.constant 0.000000e+00 : f32
    %136 = vector.broadcast %cst_142 : f32 to vector<32x16xf32>
    %137 = arith.cmpf oge, %135, %136 : vector<32x16xf32>
    %cst_143 = arith.constant 0.00999999977 : f32
    %138 = vector.broadcast %cst_143 : f32 to vector<32x16xf32>
    %139 = arith.mulf %138, %135 : vector<32x16xf32>
    %140 = arith.select %137, %135, %139 : vector<32x16xi1>, vector<32x16xf32>
    %c0_144 = arith.constant 0 : index
    %c0_145 = arith.constant 0 : index
    %141 = vector.load %arg11[%c0_144, %c0_145] : memref<16x16xf32, #tpu.memory_space<vmem>>, vector<16x16xf32>
    %142 = vector.extract_strided_slice %140 {offsets = [0, 0], sizes = [16, 16], strides = [1, 1]} : vector<32x16xf32> to vector<16x16xf32>
    %c0_146 = arith.constant 0 : index
    %c0_147 = arith.constant 0 : index
    %c0_148 = arith.constant 0 : index
    %143 = vector.load %arg8[%c0_146, %c0_147, %c0_148] : memref<3x16x16xf32, #tpu.memory_space<vmem>>, vector<1x16x16xf32>
    %144 = vector.shape_cast %143 : vector<1x16x16xf32> to vector<16x16xf32>
    %145 = arith.mulf %142, %144 : vector<16x16xf32>
    %cst_149 = arith.constant dense<0.000000e+00> : vector<16xf32>
    %146 = vector.multi_reduction <add>, %145, %cst_149 [1] : vector<16x16xf32> to vector<16xf32>
    %147 = vector.shape_cast %146 : vector<16xf32> to vector<16x1xf32>
    %cst_150 = arith.constant dense<0.000000e+00> : vector<1xf32>
    %148 = vector.multi_reduction <add>, %147, %cst_150 [0] : vector<16x1xf32> to vector<1xf32>
    %149 = vector.shape_cast %148 : vector<1xf32> to vector<1x1xf32>
    %c0_151 = arith.constant 0 : index
    %c0_152 = arith.constant 0 : index
    %150 = vector.load %arg9[%c0_151, %c0_152] : memref<1x3xf32, #tpu.memory_space<vmem>>, vector<1x1xf32>
    %151 = arith.addf %149, %150 : vector<1x1xf32>
    %c0_153 = arith.constant 0 : index
    %c0_154 = arith.constant 0 : index
    %c0_155 = arith.constant 0 : index
    %152 = vector.load %arg10[%c0_153, %c0_154, %c0_155] : memref<3x16x16xf32, #tpu.memory_space<vmem>>, vector<1x16x16xf32>
    %153 = vector.shape_cast %152 : vector<1x16x16xf32> to vector<16x16xf32>
    %154 = vector.broadcast %151 : vector<1x1xf32> to vector<16x16xf32>
    %155 = arith.mulf %154, %153 : vector<16x16xf32>
    %156 = arith.addf %141, %155 : vector<16x16xf32>
    %c1_156 = arith.constant 1 : index
    %c0_157 = arith.constant 0 : index
    %c0_158 = arith.constant 0 : index
    %157 = vector.load %arg8[%c1_156, %c0_157, %c0_158] : memref<3x16x16xf32, #tpu.memory_space<vmem>>, vector<1x16x16xf32>
    %158 = vector.shape_cast %157 : vector<1x16x16xf32> to vector<16x16xf32>
    %159 = arith.mulf %142, %158 : vector<16x16xf32>
    %cst_159 = arith.constant dense<0.000000e+00> : vector<16xf32>
    %160 = vector.multi_reduction <add>, %159, %cst_159 [1] : vector<16x16xf32> to vector<16xf32>
    %161 = vector.shape_cast %160 : vector<16xf32> to vector<16x1xf32>
    %cst_160 = arith.constant dense<0.000000e+00> : vector<1xf32>
    %162 = vector.multi_reduction <add>, %161, %cst_160 [0] : vector<16x1xf32> to vector<1xf32>
    %163 = vector.shape_cast %162 : vector<1xf32> to vector<1x1xf32>
    %c0_161 = arith.constant 0 : index
    %c1_162 = arith.constant 1 : index
    %164 = vector.load %arg9[%c0_161, %c1_162] : memref<1x3xf32, #tpu.memory_space<vmem>>, vector<1x1xf32>
    %165 = arith.addf %163, %164 : vector<1x1xf32>
    %c1_163 = arith.constant 1 : index
    %c0_164 = arith.constant 0 : index
    %c0_165 = arith.constant 0 : index
    %166 = vector.load %arg10[%c1_163, %c0_164, %c0_165] : memref<3x16x16xf32, #tpu.memory_space<vmem>>, vector<1x16x16xf32>
    %167 = vector.shape_cast %166 : vector<1x16x16xf32> to vector<16x16xf32>
    %168 = vector.broadcast %165 : vector<1x1xf32> to vector<16x16xf32>
    %169 = arith.mulf %168, %167 : vector<16x16xf32>
    %170 = arith.addf %156, %169 : vector<16x16xf32>
    %c2_166 = arith.constant 2 : index
    %c0_167 = arith.constant 0 : index
    %c0_168 = arith.constant 0 : index
    %171 = vector.load %arg8[%c2_166, %c0_167, %c0_168] : memref<3x16x16xf32, #tpu.memory_space<vmem>>, vector<1x16x16xf32>
    %172 = vector.shape_cast %171 : vector<1x16x16xf32> to vector<16x16xf32>
    %173 = arith.mulf %142, %172 : vector<16x16xf32>
    %cst_169 = arith.constant dense<0.000000e+00> : vector<16xf32>
    %174 = vector.multi_reduction <add>, %173, %cst_169 [1] : vector<16x16xf32> to vector<16xf32>
    %175 = vector.shape_cast %174 : vector<16xf32> to vector<16x1xf32>
    %cst_170 = arith.constant dense<0.000000e+00> : vector<1xf32>
    %176 = vector.multi_reduction <add>, %175, %cst_170 [0] : vector<16x1xf32> to vector<1xf32>
    %177 = vector.shape_cast %176 : vector<1xf32> to vector<1x1xf32>
    %c0_171 = arith.constant 0 : index
    %c2_172 = arith.constant 2 : index
    %178 = vector.load %arg9[%c0_171, %c2_172] : memref<1x3xf32, #tpu.memory_space<vmem>>, vector<1x1xf32>
    %179 = arith.addf %177, %178 : vector<1x1xf32>
    %c2_173 = arith.constant 2 : index
    %c0_174 = arith.constant 0 : index
    %c0_175 = arith.constant 0 : index
    %180 = vector.load %arg10[%c2_173, %c0_174, %c0_175] : memref<3x16x16xf32, #tpu.memory_space<vmem>>, vector<1x16x16xf32>
    %181 = vector.shape_cast %180 : vector<1x16x16xf32> to vector<16x16xf32>
    %182 = vector.broadcast %179 : vector<1x1xf32> to vector<16x16xf32>
    %183 = arith.mulf %182, %181 : vector<16x16xf32>
    %184 = arith.addf %170, %183 : vector<16x16xf32>
    %185 = vector.extract_strided_slice %140 {offsets = [16, 0], sizes = [16, 16], strides = [1, 1]} : vector<32x16xf32> to vector<16x16xf32>
    %c0_176 = arith.constant 0 : index
    %c0_177 = arith.constant 0 : index
    %c0_178 = arith.constant 0 : index
    %186 = vector.load %arg8[%c0_176, %c0_177, %c0_178] : memref<3x16x16xf32, #tpu.memory_space<vmem>>, vector<1x16x16xf32>
    %187 = vector.shape_cast %186 : vector<1x16x16xf32> to vector<16x16xf32>
    %188 = arith.mulf %185, %187 : vector<16x16xf32>
    %cst_179 = arith.constant dense<0.000000e+00> : vector<16xf32>
    %189 = vector.multi_reduction <add>, %188, %cst_179 [1] : vector<16x16xf32> to vector<16xf32>
    %190 = vector.shape_cast %189 : vector<16xf32> to vector<16x1xf32>
    %cst_180 = arith.constant dense<0.000000e+00> : vector<1xf32>
    %191 = vector.multi_reduction <add>, %190, %cst_180 [0] : vector<16x1xf32> to vector<1xf32>
    %192 = vector.shape_cast %191 : vector<1xf32> to vector<1x1xf32>
    %c0_181 = arith.constant 0 : index
    %c0_182 = arith.constant 0 : index
    %193 = vector.load %arg9[%c0_181, %c0_182] : memref<1x3xf32, #tpu.memory_space<vmem>>, vector<1x1xf32>
    %194 = arith.addf %192, %193 : vector<1x1xf32>
    %c0_183 = arith.constant 0 : index
    %c0_184 = arith.constant 0 : index
    %c0_185 = arith.constant 0 : index
    %195 = vector.load %arg10[%c0_183, %c0_184, %c0_185] : memref<3x16x16xf32, #tpu.memory_space<vmem>>, vector<1x16x16xf32>
    %196 = vector.shape_cast %195 : vector<1x16x16xf32> to vector<16x16xf32>
    %197 = vector.broadcast %194 : vector<1x1xf32> to vector<16x16xf32>
    %198 = arith.mulf %197, %196 : vector<16x16xf32>
    %199 = arith.addf %141, %198 : vector<16x16xf32>
    %c1_186 = arith.constant 1 : index
    %c0_187 = arith.constant 0 : index
    %c0_188 = arith.constant 0 : index
    %200 = vector.load %arg8[%c1_186, %c0_187, %c0_188] : memref<3x16x16xf32, #tpu.memory_space<vmem>>, vector<1x16x16xf32>
    %201 = vector.shape_cast %200 : vector<1x16x16xf32> to vector<16x16xf32>
    %202 = arith.mulf %185, %201 : vector<16x16xf32>
    %cst_189 = arith.constant dense<0.000000e+00> : vector<16xf32>
    %203 = vector.multi_reduction <add>, %202, %cst_189 [1] : vector<16x16xf32> to vector<16xf32>
    %204 = vector.shape_cast %203 : vector<16xf32> to vector<16x1xf32>
    %cst_190 = arith.constant dense<0.000000e+00> : vector<1xf32>
    %205 = vector.multi_reduction <add>, %204, %cst_190 [0] : vector<16x1xf32> to vector<1xf32>
    %206 = vector.shape_cast %205 : vector<1xf32> to vector<1x1xf32>
    %c0_191 = arith.constant 0 : index
    %c1_192 = arith.constant 1 : index
    %207 = vector.load %arg9[%c0_191, %c1_192] : memref<1x3xf32, #tpu.memory_space<vmem>>, vector<1x1xf32>
    %208 = arith.addf %206, %207 : vector<1x1xf32>
    %c1_193 = arith.constant 1 : index
    %c0_194 = arith.constant 0 : index
    %c0_195 = arith.constant 0 : index
    %209 = vector.load %arg10[%c1_193, %c0_194, %c0_195] : memref<3x16x16xf32, #tpu.memory_space<vmem>>, vector<1x16x16xf32>
    %210 = vector.shape_cast %209 : vector<1x16x16xf32> to vector<16x16xf32>
    %211 = vector.broadcast %208 : vector<1x1xf32> to vector<16x16xf32>
    %212 = arith.mulf %211, %210 : vector<16x16xf32>
    %213 = arith.addf %199, %212 : vector<16x16xf32>
    %c2_196 = arith.constant 2 : index
    %c0_197 = arith.constant 0 : index
    %c0_198 = arith.constant 0 : index
    %214 = vector.load %arg8[%c2_196, %c0_197, %c0_198] : memref<3x16x16xf32, #tpu.memory_space<vmem>>, vector<1x16x16xf32>
    %215 = vector.shape_cast %214 : vector<1x16x16xf32> to vector<16x16xf32>
    %216 = arith.mulf %185, %215 : vector<16x16xf32>
    %cst_199 = arith.constant dense<0.000000e+00> : vector<16xf32>
    %217 = vector.multi_reduction <add>, %216, %cst_199 [1] : vector<16x16xf32> to vector<16xf32>
    %218 = vector.shape_cast %217 : vector<16xf32> to vector<16x1xf32>
    %cst_200 = arith.constant dense<0.000000e+00> : vector<1xf32>
    %219 = vector.multi_reduction <add>, %218, %cst_200 [0] : vector<16x1xf32> to vector<1xf32>
    %220 = vector.shape_cast %219 : vector<1xf32> to vector<1x1xf32>
    %c0_201 = arith.constant 0 : index
    %c2_202 = arith.constant 2 : index
    %221 = vector.load %arg9[%c0_201, %c2_202] : memref<1x3xf32, #tpu.memory_space<vmem>>, vector<1x1xf32>
    %222 = arith.addf %220, %221 : vector<1x1xf32>
    %c2_203 = arith.constant 2 : index
    %c0_204 = arith.constant 0 : index
    %c0_205 = arith.constant 0 : index
    %223 = vector.load %arg10[%c2_203, %c0_204, %c0_205] : memref<3x16x16xf32, #tpu.memory_space<vmem>>, vector<1x16x16xf32>
    %224 = vector.shape_cast %223 : vector<1x16x16xf32> to vector<16x16xf32>
    %225 = vector.broadcast %222 : vector<1x1xf32> to vector<16x16xf32>
    %226 = arith.mulf %225, %224 : vector<16x16xf32>
    %227 = arith.addf %213, %226 : vector<16x16xf32>
    %228 = tpu.concatenate %184, %227 in 0 : vector<16x16xf32>, vector<16x16xf32> -> vector<32x16xf32>
    %c0_206 = arith.constant 0 : index
    %c0_207 = arith.constant 0 : index
    %c0_208 = arith.constant 0 : index
    %229 = vector.load %arg13[%c0_206, %c0_207, %c0_208] : memref<9x32x32xf32, #tpu.memory_space<vmem>>, vector<1x32x32xf32>
    %230 = vector.shape_cast %229 : vector<1x32x32xf32> to vector<32x32xf32>
    %cst_209 = arith.constant dense<0.000000e+00> : vector<32x16xf32>
    %231 = tpu.matmul %230, %228, %cst_209 {dimension_numbers = #tpu.dot_dimension_numbers<[1], [0], [0], [1], [0, 0, 1, 1], [], []>} : vector<32x32xf32>, vector<32x16xf32>, vector<32x16xf32> -> vector<32x16xf32>
    %c0_210 = arith.constant 0 : index
    %c0_211 = arith.constant 0 : index
    %c0_212 = arith.constant 0 : index
    %232 = vector.load %arg12[%c0_210, %c0_211, %c0_212] : memref<9x16x64xf32, #tpu.memory_space<vmem>>, vector<1x16x64xf32>
    %233 = vector.shape_cast %232 : vector<1x16x64xf32> to vector<16x64xf32>
    %cst_213 = arith.constant dense<0.000000e+00> : vector<32x64xf32>
    %234 = tpu.matmul %231, %233, %cst_213 {dimension_numbers = #tpu.dot_dimension_numbers<[1], [0], [0], [1], [0, 0, 1, 1], [], []>} : vector<32x16xf32>, vector<16x64xf32>, vector<32x64xf32> -> vector<32x64xf32>
    %c1_214 = arith.constant 1 : index
    %c0_215 = arith.constant 0 : index
    %c0_216 = arith.constant 0 : index
    %235 = vector.load %arg13[%c1_214, %c0_215, %c0_216] : memref<9x32x32xf32, #tpu.memory_space<vmem>>, vector<1x32x32xf32>
    %236 = vector.shape_cast %235 : vector<1x32x32xf32> to vector<32x32xf32>
    %cst_217 = arith.constant dense<0.000000e+00> : vector<32x16xf32>
    %237 = tpu.matmul %236, %228, %cst_217 {dimension_numbers = #tpu.dot_dimension_numbers<[1], [0], [0], [1], [0, 0, 1, 1], [], []>} : vector<32x32xf32>, vector<32x16xf32>, vector<32x16xf32> -> vector<32x16xf32>
    %c1_218 = arith.constant 1 : index
    %c0_219 = arith.constant 0 : index
    %c0_220 = arith.constant 0 : index
    %238 = vector.load %arg12[%c1_218, %c0_219, %c0_220] : memref<9x16x64xf32, #tpu.memory_space<vmem>>, vector<1x16x64xf32>
    %239 = vector.shape_cast %238 : vector<1x16x64xf32> to vector<16x64xf32>
    %cst_221 = arith.constant dense<0.000000e+00> : vector<32x64xf32>
    %240 = tpu.matmul %237, %239, %cst_221 {dimension_numbers = #tpu.dot_dimension_numbers<[1], [0], [0], [1], [0, 0, 1, 1], [], []>} : vector<32x16xf32>, vector<16x64xf32>, vector<32x64xf32> -> vector<32x64xf32>
    %241 = arith.addf %234, %240 : vector<32x64xf32>
    %c2_222 = arith.constant 2 : index
    %c0_223 = arith.constant 0 : index
    %c0_224 = arith.constant 0 : index
    %242 = vector.load %arg13[%c2_222, %c0_223, %c0_224] : memref<9x32x32xf32, #tpu.memory_space<vmem>>, vector<1x32x32xf32>
    %243 = vector.shape_cast %242 : vector<1x32x32xf32> to vector<32x32xf32>
    %cst_225 = arith.constant dense<0.000000e+00> : vector<32x16xf32>
    %244 = tpu.matmul %243, %228, %cst_225 {dimension_numbers = #tpu.dot_dimension_numbers<[1], [0], [0], [1], [0, 0, 1, 1], [], []>} : vector<32x32xf32>, vector<32x16xf32>, vector<32x16xf32> -> vector<32x16xf32>
    %c2_226 = arith.constant 2 : index
    %c0_227 = arith.constant 0 : index
    %c0_228 = arith.constant 0 : index
    %245 = vector.load %arg12[%c2_226, %c0_227, %c0_228] : memref<9x16x64xf32, #tpu.memory_space<vmem>>, vector<1x16x64xf32>
    %246 = vector.shape_cast %245 : vector<1x16x64xf32> to vector<16x64xf32>
    %cst_229 = arith.constant dense<0.000000e+00> : vector<32x64xf32>
    %247 = tpu.matmul %244, %246, %cst_229 {dimension_numbers = #tpu.dot_dimension_numbers<[1], [0], [0], [1], [0, 0, 1, 1], [], []>} : vector<32x16xf32>, vector<16x64xf32>, vector<32x64xf32> -> vector<32x64xf32>
    %248 = arith.addf %241, %247 : vector<32x64xf32>
    %c3_230 = arith.constant 3 : index
    %c0_231 = arith.constant 0 : index
    %c0_232 = arith.constant 0 : index
    %249 = vector.load %arg13[%c3_230, %c0_231, %c0_232] : memref<9x32x32xf32, #tpu.memory_space<vmem>>, vector<1x32x32xf32>
    %250 = vector.shape_cast %249 : vector<1x32x32xf32> to vector<32x32xf32>
    %cst_233 = arith.constant dense<0.000000e+00> : vector<32x16xf32>
    %251 = tpu.matmul %250, %228, %cst_233 {dimension_numbers = #tpu.dot_dimension_numbers<[1], [0], [0], [1], [0, 0, 1, 1], [], []>} : vector<32x32xf32>, vector<32x16xf32>, vector<32x16xf32> -> vector<32x16xf32>
    %c3_234 = arith.constant 3 : index
    %c0_235 = arith.constant 0 : index
    %c0_236 = arith.constant 0 : index
    %252 = vector.load %arg12[%c3_234, %c0_235, %c0_236] : memref<9x16x64xf32, #tpu.memory_space<vmem>>, vector<1x16x64xf32>
    %253 = vector.shape_cast %252 : vector<1x16x64xf32> to vector<16x64xf32>
    %cst_237 = arith.constant dense<0.000000e+00> : vector<32x64xf32>
    %254 = tpu.matmul %251, %253, %cst_237 {dimension_numbers = #tpu.dot_dimension_numbers<[1], [0], [0], [1], [0, 0, 1, 1], [], []>} : vector<32x16xf32>, vector<16x64xf32>, vector<32x64xf32> -> vector<32x64xf32>
    %255 = arith.addf %248, %254 : vector<32x64xf32>
    %c4_238 = arith.constant 4 : index
    %c0_239 = arith.constant 0 : index
    %c0_240 = arith.constant 0 : index
    %256 = vector.load %arg13[%c4_238, %c0_239, %c0_240] : memref<9x32x32xf32, #tpu.memory_space<vmem>>, vector<1x32x32xf32>
    %257 = vector.shape_cast %256 : vector<1x32x32xf32> to vector<32x32xf32>
    %cst_241 = arith.constant dense<0.000000e+00> : vector<32x16xf32>
    %258 = tpu.matmul %257, %228, %cst_241 {dimension_numbers = #tpu.dot_dimension_numbers<[1], [0], [0], [1], [0, 0, 1, 1], [], []>} : vector<32x32xf32>, vector<32x16xf32>, vector<32x16xf32> -> vector<32x16xf32>
    %c4_242 = arith.constant 4 : index
    %c0_243 = arith.constant 0 : index
    %c0_244 = arith.constant 0 : index
    %259 = vector.load %arg12[%c4_242, %c0_243, %c0_244] : memref<9x16x64xf32, #tpu.memory_space<vmem>>, vector<1x16x64xf32>
    %260 = vector.shape_cast %259 : vector<1x16x64xf32> to vector<16x64xf32>
    %cst_245 = arith.constant dense<0.000000e+00> : vector<32x64xf32>
    %261 = tpu.matmul %258, %260, %cst_245 {dimension_numbers = #tpu.dot_dimension_numbers<[1], [0], [0], [1], [0, 0, 1, 1], [], []>} : vector<32x16xf32>, vector<16x64xf32>, vector<32x64xf32> -> vector<32x64xf32>
    %262 = arith.addf %255, %261 : vector<32x64xf32>
    %c5_246 = arith.constant 5 : index
    %c0_247 = arith.constant 0 : index
    %c0_248 = arith.constant 0 : index
    %263 = vector.load %arg13[%c5_246, %c0_247, %c0_248] : memref<9x32x32xf32, #tpu.memory_space<vmem>>, vector<1x32x32xf32>
    %264 = vector.shape_cast %263 : vector<1x32x32xf32> to vector<32x32xf32>
    %cst_249 = arith.constant dense<0.000000e+00> : vector<32x16xf32>
    %265 = tpu.matmul %264, %228, %cst_249 {dimension_numbers = #tpu.dot_dimension_numbers<[1], [0], [0], [1], [0, 0, 1, 1], [], []>} : vector<32x32xf32>, vector<32x16xf32>, vector<32x16xf32> -> vector<32x16xf32>
    %c5_250 = arith.constant 5 : index
    %c0_251 = arith.constant 0 : index
    %c0_252 = arith.constant 0 : index
    %266 = vector.load %arg12[%c5_250, %c0_251, %c0_252] : memref<9x16x64xf32, #tpu.memory_space<vmem>>, vector<1x16x64xf32>
    %267 = vector.shape_cast %266 : vector<1x16x64xf32> to vector<16x64xf32>
    %cst_253 = arith.constant dense<0.000000e+00> : vector<32x64xf32>
    %268 = tpu.matmul %265, %267, %cst_253 {dimension_numbers = #tpu.dot_dimension_numbers<[1], [0], [0], [1], [0, 0, 1, 1], [], []>} : vector<32x16xf32>, vector<16x64xf32>, vector<32x64xf32> -> vector<32x64xf32>
    %269 = arith.addf %262, %268 : vector<32x64xf32>
    %c6_254 = arith.constant 6 : index
    %c0_255 = arith.constant 0 : index
    %c0_256 = arith.constant 0 : index
    %270 = vector.load %arg13[%c6_254, %c0_255, %c0_256] : memref<9x32x32xf32, #tpu.memory_space<vmem>>, vector<1x32x32xf32>
    %271 = vector.shape_cast %270 : vector<1x32x32xf32> to vector<32x32xf32>
    %cst_257 = arith.constant dense<0.000000e+00> : vector<32x16xf32>
    %272 = tpu.matmul %271, %228, %cst_257 {dimension_numbers = #tpu.dot_dimension_numbers<[1], [0], [0], [1], [0, 0, 1, 1], [], []>} : vector<32x32xf32>, vector<32x16xf32>, vector<32x16xf32> -> vector<32x16xf32>
    %c6_258 = arith.constant 6 : index
    %c0_259 = arith.constant 0 : index
    %c0_260 = arith.constant 0 : index
    %273 = vector.load %arg12[%c6_258, %c0_259, %c0_260] : memref<9x16x64xf32, #tpu.memory_space<vmem>>, vector<1x16x64xf32>
    %274 = vector.shape_cast %273 : vector<1x16x64xf32> to vector<16x64xf32>
    %cst_261 = arith.constant dense<0.000000e+00> : vector<32x64xf32>
    %275 = tpu.matmul %272, %274, %cst_261 {dimension_numbers = #tpu.dot_dimension_numbers<[1], [0], [0], [1], [0, 0, 1, 1], [], []>} : vector<32x16xf32>, vector<16x64xf32>, vector<32x64xf32> -> vector<32x64xf32>
    %276 = arith.addf %269, %275 : vector<32x64xf32>
    %c7_262 = arith.constant 7 : index
    %c0_263 = arith.constant 0 : index
    %c0_264 = arith.constant 0 : index
    %277 = vector.load %arg13[%c7_262, %c0_263, %c0_264] : memref<9x32x32xf32, #tpu.memory_space<vmem>>, vector<1x32x32xf32>
    %278 = vector.shape_cast %277 : vector<1x32x32xf32> to vector<32x32xf32>
    %cst_265 = arith.constant dense<0.000000e+00> : vector<32x16xf32>
    %279 = tpu.matmul %278, %228, %cst_265 {dimension_numbers = #tpu.dot_dimension_numbers<[1], [0], [0], [1], [0, 0, 1, 1], [], []>} : vector<32x32xf32>, vector<32x16xf32>, vector<32x16xf32> -> vector<32x16xf32>
    %c7_266 = arith.constant 7 : index
    %c0_267 = arith.constant 0 : index
    %c0_268 = arith.constant 0 : index
    %280 = vector.load %arg12[%c7_266, %c0_267, %c0_268] : memref<9x16x64xf32, #tpu.memory_space<vmem>>, vector<1x16x64xf32>
    %281 = vector.shape_cast %280 : vector<1x16x64xf32> to vector<16x64xf32>
    %cst_269 = arith.constant dense<0.000000e+00> : vector<32x64xf32>
    %282 = tpu.matmul %279, %281, %cst_269 {dimension_numbers = #tpu.dot_dimension_numbers<[1], [0], [0], [1], [0, 0, 1, 1], [], []>} : vector<32x16xf32>, vector<16x64xf32>, vector<32x64xf32> -> vector<32x64xf32>
    %283 = arith.addf %276, %282 : vector<32x64xf32>
    %c8_270 = arith.constant 8 : index
    %c0_271 = arith.constant 0 : index
    %c0_272 = arith.constant 0 : index
    %284 = vector.load %arg13[%c8_270, %c0_271, %c0_272] : memref<9x32x32xf32, #tpu.memory_space<vmem>>, vector<1x32x32xf32>
    %285 = vector.shape_cast %284 : vector<1x32x32xf32> to vector<32x32xf32>
    %cst_273 = arith.constant dense<0.000000e+00> : vector<32x16xf32>
    %286 = tpu.matmul %285, %228, %cst_273 {dimension_numbers = #tpu.dot_dimension_numbers<[1], [0], [0], [1], [0, 0, 1, 1], [], []>} : vector<32x32xf32>, vector<32x16xf32>, vector<32x16xf32> -> vector<32x16xf32>
    %c8_274 = arith.constant 8 : index
    %c0_275 = arith.constant 0 : index
    %c0_276 = arith.constant 0 : index
    %287 = vector.load %arg12[%c8_274, %c0_275, %c0_276] : memref<9x16x64xf32, #tpu.memory_space<vmem>>, vector<1x16x64xf32>
    %288 = vector.shape_cast %287 : vector<1x16x64xf32> to vector<16x64xf32>
    %cst_277 = arith.constant dense<0.000000e+00> : vector<32x64xf32>
    %289 = tpu.matmul %286, %288, %cst_277 {dimension_numbers = #tpu.dot_dimension_numbers<[1], [0], [0], [1], [0, 0, 1, 1], [], []>} : vector<32x16xf32>, vector<16x64xf32>, vector<32x64xf32> -> vector<32x64xf32>
    %290 = arith.addf %283, %289 : vector<32x64xf32>
    %c0_278 = arith.constant 0 : index
    %c0_279 = arith.constant 0 : index
    %291 = vector.load %arg14[%c0_278, %c0_279] : memref<32x1xf32, #tpu.memory_space<vmem>>, vector<32x1xf32>
    %292 = vector.broadcast %291 : vector<32x1xf32> to vector<32x64xf32>
    %293 = arith.addf %290, %292 : vector<32x64xf32>
    %cst_280 = arith.constant 0.000000e+00 : f32
    %294 = vector.broadcast %cst_280 : f32 to vector<32x64xf32>
    %295 = arith.cmpf oge, %293, %294 : vector<32x64xf32>
    %cst_281 = arith.constant 0.00999999977 : f32
    %296 = vector.broadcast %cst_281 : f32 to vector<32x64xf32>
    %297 = arith.mulf %296, %293 : vector<32x64xf32>
    %298 = arith.select %295, %293, %297 : vector<32x64xi1>, vector<32x64xf32>
    %c0_282 = arith.constant 0 : index
    %c0_283 = arith.constant 0 : index
    %c0_284 = arith.constant 0 : index
    %299 = vector.load %arg16[%c0_282, %c0_283, %c0_284] : memref<9x16x32xf32, #tpu.memory_space<vmem>>, vector<1x16x32xf32>
    %300 = vector.shape_cast %299 : vector<1x16x32xf32> to vector<16x32xf32>
    %cst_285 = arith.constant dense<0.000000e+00> : vector<16x64xf32>
    %301 = tpu.matmul %300, %298, %cst_285 {dimension_numbers = #tpu.dot_dimension_numbers<[1], [0], [0], [1], [0, 0, 1, 1], [], []>} : vector<16x32xf32>, vector<32x64xf32>, vector<16x64xf32> -> vector<16x64xf32>
    %c0_286 = arith.constant 0 : index
    %c0_287 = arith.constant 0 : index
    %c0_288 = arith.constant 0 : index
    %302 = vector.load %arg15[%c0_286, %c0_287, %c0_288] : memref<9x64x256xf32, #tpu.memory_space<vmem>>, vector<1x64x256xf32>
    %303 = vector.shape_cast %302 : vector<1x64x256xf32> to vector<64x256xf32>
    %cst_289 = arith.constant dense<0.000000e+00> : vector<16x256xf32>
    %304 = tpu.matmul %301, %303, %cst_289 {dimension_numbers = #tpu.dot_dimension_numbers<[1], [0], [0], [1], [0, 0, 1, 1], [], []>} : vector<16x64xf32>, vector<64x256xf32>, vector<16x256xf32> -> vector<16x256xf32>
    %c1_290 = arith.constant 1 : index
    %c0_291 = arith.constant 0 : index
    %c0_292 = arith.constant 0 : index
    %305 = vector.load %arg16[%c1_290, %c0_291, %c0_292] : memref<9x16x32xf32, #tpu.memory_space<vmem>>, vector<1x16x32xf32>
    %306 = vector.shape_cast %305 : vector<1x16x32xf32> to vector<16x32xf32>
    %cst_293 = arith.constant dense<0.000000e+00> : vector<16x64xf32>
    %307 = tpu.matmul %306, %298, %cst_293 {dimension_numbers = #tpu.dot_dimension_numbers<[1], [0], [0], [1], [0, 0, 1, 1], [], []>} : vector<16x32xf32>, vector<32x64xf32>, vector<16x64xf32> -> vector<16x64xf32>
    %c1_294 = arith.constant 1 : index
    %c0_295 = arith.constant 0 : index
    %c0_296 = arith.constant 0 : index
    %308 = vector.load %arg15[%c1_294, %c0_295, %c0_296] : memref<9x64x256xf32, #tpu.memory_space<vmem>>, vector<1x64x256xf32>
    %309 = vector.shape_cast %308 : vector<1x64x256xf32> to vector<64x256xf32>
    %cst_297 = arith.constant dense<0.000000e+00> : vector<16x256xf32>
    %310 = tpu.matmul %307, %309, %cst_297 {dimension_numbers = #tpu.dot_dimension_numbers<[1], [0], [0], [1], [0, 0, 1, 1], [], []>} : vector<16x64xf32>, vector<64x256xf32>, vector<16x256xf32> -> vector<16x256xf32>
    %311 = arith.addf %304, %310 : vector<16x256xf32>
    %c2_298 = arith.constant 2 : index
    %c0_299 = arith.constant 0 : index
    %c0_300 = arith.constant 0 : index
    %312 = vector.load %arg16[%c2_298, %c0_299, %c0_300] : memref<9x16x32xf32, #tpu.memory_space<vmem>>, vector<1x16x32xf32>
    %313 = vector.shape_cast %312 : vector<1x16x32xf32> to vector<16x32xf32>
    %cst_301 = arith.constant dense<0.000000e+00> : vector<16x64xf32>
    %314 = tpu.matmul %313, %298, %cst_301 {dimension_numbers = #tpu.dot_dimension_numbers<[1], [0], [0], [1], [0, 0, 1, 1], [], []>} : vector<16x32xf32>, vector<32x64xf32>, vector<16x64xf32> -> vector<16x64xf32>
    %c2_302 = arith.constant 2 : index
    %c0_303 = arith.constant 0 : index
    %c0_304 = arith.constant 0 : index
    %315 = vector.load %arg15[%c2_302, %c0_303, %c0_304] : memref<9x64x256xf32, #tpu.memory_space<vmem>>, vector<1x64x256xf32>
    %316 = vector.shape_cast %315 : vector<1x64x256xf32> to vector<64x256xf32>
    %cst_305 = arith.constant dense<0.000000e+00> : vector<16x256xf32>
    %317 = tpu.matmul %314, %316, %cst_305 {dimension_numbers = #tpu.dot_dimension_numbers<[1], [0], [0], [1], [0, 0, 1, 1], [], []>} : vector<16x64xf32>, vector<64x256xf32>, vector<16x256xf32> -> vector<16x256xf32>
    %318 = arith.addf %311, %317 : vector<16x256xf32>
    %c3_306 = arith.constant 3 : index
    %c0_307 = arith.constant 0 : index
    %c0_308 = arith.constant 0 : index
    %319 = vector.load %arg16[%c3_306, %c0_307, %c0_308] : memref<9x16x32xf32, #tpu.memory_space<vmem>>, vector<1x16x32xf32>
    %320 = vector.shape_cast %319 : vector<1x16x32xf32> to vector<16x32xf32>
    %cst_309 = arith.constant dense<0.000000e+00> : vector<16x64xf32>
    %321 = tpu.matmul %320, %298, %cst_309 {dimension_numbers = #tpu.dot_dimension_numbers<[1], [0], [0], [1], [0, 0, 1, 1], [], []>} : vector<16x32xf32>, vector<32x64xf32>, vector<16x64xf32> -> vector<16x64xf32>
    %c3_310 = arith.constant 3 : index
    %c0_311 = arith.constant 0 : index
    %c0_312 = arith.constant 0 : index
    %322 = vector.load %arg15[%c3_310, %c0_311, %c0_312] : memref<9x64x256xf32, #tpu.memory_space<vmem>>, vector<1x64x256xf32>
    %323 = vector.shape_cast %322 : vector<1x64x256xf32> to vector<64x256xf32>
    %cst_313 = arith.constant dense<0.000000e+00> : vector<16x256xf32>
    %324 = tpu.matmul %321, %323, %cst_313 {dimension_numbers = #tpu.dot_dimension_numbers<[1], [0], [0], [1], [0, 0, 1, 1], [], []>} : vector<16x64xf32>, vector<64x256xf32>, vector<16x256xf32> -> vector<16x256xf32>
    %325 = arith.addf %318, %324 : vector<16x256xf32>
    %c4_314 = arith.constant 4 : index
    %c0_315 = arith.constant 0 : index
    %c0_316 = arith.constant 0 : index
    %326 = vector.load %arg16[%c4_314, %c0_315, %c0_316] : memref<9x16x32xf32, #tpu.memory_space<vmem>>, vector<1x16x32xf32>
    %327 = vector.shape_cast %326 : vector<1x16x32xf32> to vector<16x32xf32>
    %cst_317 = arith.constant dense<0.000000e+00> : vector<16x64xf32>
    %328 = tpu.matmul %327, %298, %cst_317 {dimension_numbers = #tpu.dot_dimension_numbers<[1], [0], [0], [1], [0, 0, 1, 1], [], []>} : vector<16x32xf32>, vector<32x64xf32>, vector<16x64xf32> -> vector<16x64xf32>
    %c4_318 = arith.constant 4 : index
    %c0_319 = arith.constant 0 : index
    %c0_320 = arith.constant 0 : index
    %329 = vector.load %arg15[%c4_318, %c0_319, %c0_320] : memref<9x64x256xf32, #tpu.memory_space<vmem>>, vector<1x64x256xf32>
    %330 = vector.shape_cast %329 : vector<1x64x256xf32> to vector<64x256xf32>
    %cst_321 = arith.constant dense<0.000000e+00> : vector<16x256xf32>
    %331 = tpu.matmul %328, %330, %cst_321 {dimension_numbers = #tpu.dot_dimension_numbers<[1], [0], [0], [1], [0, 0, 1, 1], [], []>} : vector<16x64xf32>, vector<64x256xf32>, vector<16x256xf32> -> vector<16x256xf32>
    %332 = arith.addf %325, %331 : vector<16x256xf32>
    %c5_322 = arith.constant 5 : index
    %c0_323 = arith.constant 0 : index
    %c0_324 = arith.constant 0 : index
    %333 = vector.load %arg16[%c5_322, %c0_323, %c0_324] : memref<9x16x32xf32, #tpu.memory_space<vmem>>, vector<1x16x32xf32>
    %334 = vector.shape_cast %333 : vector<1x16x32xf32> to vector<16x32xf32>
    %cst_325 = arith.constant dense<0.000000e+00> : vector<16x64xf32>
    %335 = tpu.matmul %334, %298, %cst_325 {dimension_numbers = #tpu.dot_dimension_numbers<[1], [0], [0], [1], [0, 0, 1, 1], [], []>} : vector<16x32xf32>, vector<32x64xf32>, vector<16x64xf32> -> vector<16x64xf32>
    %c5_326 = arith.constant 5 : index
    %c0_327 = arith.constant 0 : index
    %c0_328 = arith.constant 0 : index
    %336 = vector.load %arg15[%c5_326, %c0_327, %c0_328] : memref<9x64x256xf32, #tpu.memory_space<vmem>>, vector<1x64x256xf32>
    %337 = vector.shape_cast %336 : vector<1x64x256xf32> to vector<64x256xf32>
    %cst_329 = arith.constant dense<0.000000e+00> : vector<16x256xf32>
    %338 = tpu.matmul %335, %337, %cst_329 {dimension_numbers = #tpu.dot_dimension_numbers<[1], [0], [0], [1], [0, 0, 1, 1], [], []>} : vector<16x64xf32>, vector<64x256xf32>, vector<16x256xf32> -> vector<16x256xf32>
    %339 = arith.addf %332, %338 : vector<16x256xf32>
    %c6_330 = arith.constant 6 : index
    %c0_331 = arith.constant 0 : index
    %c0_332 = arith.constant 0 : index
    %340 = vector.load %arg16[%c6_330, %c0_331, %c0_332] : memref<9x16x32xf32, #tpu.memory_space<vmem>>, vector<1x16x32xf32>
    %341 = vector.shape_cast %340 : vector<1x16x32xf32> to vector<16x32xf32>
    %cst_333 = arith.constant dense<0.000000e+00> : vector<16x64xf32>
    %342 = tpu.matmul %341, %298, %cst_333 {dimension_numbers = #tpu.dot_dimension_numbers<[1], [0], [0], [1], [0, 0, 1, 1], [], []>} : vector<16x32xf32>, vector<32x64xf32>, vector<16x64xf32> -> vector<16x64xf32>
    %c6_334 = arith.constant 6 : index
    %c0_335 = arith.constant 0 : index
    %c0_336 = arith.constant 0 : index
    %343 = vector.load %arg15[%c6_334, %c0_335, %c0_336] : memref<9x64x256xf32, #tpu.memory_space<vmem>>, vector<1x64x256xf32>
    %344 = vector.shape_cast %343 : vector<1x64x256xf32> to vector<64x256xf32>
    %cst_337 = arith.constant dense<0.000000e+00> : vector<16x256xf32>
    %345 = tpu.matmul %342, %344, %cst_337 {dimension_numbers = #tpu.dot_dimension_numbers<[1], [0], [0], [1], [0, 0, 1, 1], [], []>} : vector<16x64xf32>, vector<64x256xf32>, vector<16x256xf32> -> vector<16x256xf32>
    %346 = arith.addf %339, %345 : vector<16x256xf32>
    %c7_338 = arith.constant 7 : index
    %c0_339 = arith.constant 0 : index
    %c0_340 = arith.constant 0 : index
    %347 = vector.load %arg16[%c7_338, %c0_339, %c0_340] : memref<9x16x32xf32, #tpu.memory_space<vmem>>, vector<1x16x32xf32>
    %348 = vector.shape_cast %347 : vector<1x16x32xf32> to vector<16x32xf32>
    %cst_341 = arith.constant dense<0.000000e+00> : vector<16x64xf32>
    %349 = tpu.matmul %348, %298, %cst_341 {dimension_numbers = #tpu.dot_dimension_numbers<[1], [0], [0], [1], [0, 0, 1, 1], [], []>} : vector<16x32xf32>, vector<32x64xf32>, vector<16x64xf32> -> vector<16x64xf32>
    %c7_342 = arith.constant 7 : index
    %c0_343 = arith.constant 0 : index
    %c0_344 = arith.constant 0 : index
    %350 = vector.load %arg15[%c7_342, %c0_343, %c0_344] : memref<9x64x256xf32, #tpu.memory_space<vmem>>, vector<1x64x256xf32>
    %351 = vector.shape_cast %350 : vector<1x64x256xf32> to vector<64x256xf32>
    %cst_345 = arith.constant dense<0.000000e+00> : vector<16x256xf32>
    %352 = tpu.matmul %349, %351, %cst_345 {dimension_numbers = #tpu.dot_dimension_numbers<[1], [0], [0], [1], [0, 0, 1, 1], [], []>} : vector<16x64xf32>, vector<64x256xf32>, vector<16x256xf32> -> vector<16x256xf32>
    %353 = arith.addf %346, %352 : vector<16x256xf32>
    %c8_346 = arith.constant 8 : index
    %c0_347 = arith.constant 0 : index
    %c0_348 = arith.constant 0 : index
    %354 = vector.load %arg16[%c8_346, %c0_347, %c0_348] : memref<9x16x32xf32, #tpu.memory_space<vmem>>, vector<1x16x32xf32>
    %355 = vector.shape_cast %354 : vector<1x16x32xf32> to vector<16x32xf32>
    %cst_349 = arith.constant dense<0.000000e+00> : vector<16x64xf32>
    %356 = tpu.matmul %355, %298, %cst_349 {dimension_numbers = #tpu.dot_dimension_numbers<[1], [0], [0], [1], [0, 0, 1, 1], [], []>} : vector<16x32xf32>, vector<32x64xf32>, vector<16x64xf32> -> vector<16x64xf32>
    %c8_350 = arith.constant 8 : index
    %c0_351 = arith.constant 0 : index
    %c0_352 = arith.constant 0 : index
    %357 = vector.load %arg15[%c8_350, %c0_351, %c0_352] : memref<9x64x256xf32, #tpu.memory_space<vmem>>, vector<1x64x256xf32>
    %358 = vector.shape_cast %357 : vector<1x64x256xf32> to vector<64x256xf32>
    %cst_353 = arith.constant dense<0.000000e+00> : vector<16x256xf32>
    %359 = tpu.matmul %356, %358, %cst_353 {dimension_numbers = #tpu.dot_dimension_numbers<[1], [0], [0], [1], [0, 0, 1, 1], [], []>} : vector<16x64xf32>, vector<64x256xf32>, vector<16x256xf32> -> vector<16x256xf32>
    %360 = arith.addf %353, %359 : vector<16x256xf32>
    %c0_354 = arith.constant 0 : index
    %c0_355 = arith.constant 0 : index
    %361 = vector.load %arg17[%c0_354, %c0_355] : memref<16x1xf32, #tpu.memory_space<vmem>>, vector<16x1xf32>
    %362 = vector.broadcast %361 : vector<16x1xf32> to vector<16x256xf32>
    %363 = arith.addf %360, %362 : vector<16x256xf32>
    %cst_356 = arith.constant 0.000000e+00 : f32
    %364 = vector.broadcast %cst_356 : f32 to vector<16x256xf32>
    %365 = arith.cmpf oge, %363, %364 : vector<16x256xf32>
    %cst_357 = arith.constant 0.00999999977 : f32
    %366 = vector.broadcast %cst_357 : f32 to vector<16x256xf32>
    %367 = arith.mulf %366, %363 : vector<16x256xf32>
    %368 = arith.select %365, %363, %367 : vector<16x256xi1>, vector<16x256xf32>
    %c0_358 = arith.constant 0 : index
    %c0_359 = arith.constant 0 : index
    %c0_360 = arith.constant 0 : index
    %369 = vector.load %arg19[%c0_358, %c0_359, %c0_360] : memref<9x8x16xf32, #tpu.memory_space<vmem>>, vector<1x8x16xf32>
    %370 = vector.shape_cast %369 : vector<1x8x16xf32> to vector<8x16xf32>
    %cst_361 = arith.constant dense<0.000000e+00> : vector<8x256xf32>
    %371 = tpu.matmul %370, %368, %cst_361 {dimension_numbers = #tpu.dot_dimension_numbers<[1], [0], [0], [1], [0, 0, 1, 1], [], []>} : vector<8x16xf32>, vector<16x256xf32>, vector<8x256xf32> -> vector<8x256xf32>
    %c17_i32 = arith.constant 17 : i32
    %372 = tpu.dynamic_rotate %371 by %c17_i32 dim 1 : vector<8x256xf32>, i32 -> vector<8x256xf32>
    %c0_362 = arith.constant 0 : index
    %c0_363 = arith.constant 0 : index
    %c0_364 = arith.constant 0 : index
    %373 = vector.load %arg18[%c0_362, %c0_363, %c0_364] : memref<9x1x256xf32, #tpu.memory_space<vmem>>, vector<1x1x256xf32>
    %374 = vector.shape_cast %373 : vector<1x1x256xf32> to vector<1x256xf32>
    %375 = vector.broadcast %374 : vector<1x256xf32> to vector<8x256xf32>
    %376 = arith.mulf %372, %375 : vector<8x256xf32>
    %c1_365 = arith.constant 1 : index
    %c0_366 = arith.constant 0 : index
    %c0_367 = arith.constant 0 : index
    %377 = vector.load %arg19[%c1_365, %c0_366, %c0_367] : memref<9x8x16xf32, #tpu.memory_space<vmem>>, vector<1x8x16xf32>
    %378 = vector.shape_cast %377 : vector<1x8x16xf32> to vector<8x16xf32>
    %cst_368 = arith.constant dense<0.000000e+00> : vector<8x256xf32>
    %379 = tpu.matmul %378, %368, %cst_368 {dimension_numbers = #tpu.dot_dimension_numbers<[1], [0], [0], [1], [0, 0, 1, 1], [], []>} : vector<8x16xf32>, vector<16x256xf32>, vector<8x256xf32> -> vector<8x256xf32>
    %c16_i32 = arith.constant 16 : i32
    %380 = tpu.dynamic_rotate %379 by %c16_i32 dim 1 : vector<8x256xf32>, i32 -> vector<8x256xf32>
    %c1_369 = arith.constant 1 : index
    %c0_370 = arith.constant 0 : index
    %c0_371 = arith.constant 0 : index
    %381 = vector.load %arg18[%c1_369, %c0_370, %c0_371] : memref<9x1x256xf32, #tpu.memory_space<vmem>>, vector<1x1x256xf32>
    %382 = vector.shape_cast %381 : vector<1x1x256xf32> to vector<1x256xf32>
    %383 = vector.broadcast %382 : vector<1x256xf32> to vector<8x256xf32>
    %384 = arith.mulf %380, %383 : vector<8x256xf32>
    %385 = arith.addf %376, %384 : vector<8x256xf32>
    %c2_372 = arith.constant 2 : index
    %c0_373 = arith.constant 0 : index
    %c0_374 = arith.constant 0 : index
    %386 = vector.load %arg19[%c2_372, %c0_373, %c0_374] : memref<9x8x16xf32, #tpu.memory_space<vmem>>, vector<1x8x16xf32>
    %387 = vector.shape_cast %386 : vector<1x8x16xf32> to vector<8x16xf32>
    %cst_375 = arith.constant dense<0.000000e+00> : vector<8x256xf32>
    %388 = tpu.matmul %387, %368, %cst_375 {dimension_numbers = #tpu.dot_dimension_numbers<[1], [0], [0], [1], [0, 0, 1, 1], [], []>} : vector<8x16xf32>, vector<16x256xf32>, vector<8x256xf32> -> vector<8x256xf32>
    %c15_i32 = arith.constant 15 : i32
    %389 = tpu.dynamic_rotate %388 by %c15_i32 dim 1 : vector<8x256xf32>, i32 -> vector<8x256xf32>
    %c2_376 = arith.constant 2 : index
    %c0_377 = arith.constant 0 : index
    %c0_378 = arith.constant 0 : index
    %390 = vector.load %arg18[%c2_376, %c0_377, %c0_378] : memref<9x1x256xf32, #tpu.memory_space<vmem>>, vector<1x1x256xf32>
    %391 = vector.shape_cast %390 : vector<1x1x256xf32> to vector<1x256xf32>
    %392 = vector.broadcast %391 : vector<1x256xf32> to vector<8x256xf32>
    %393 = arith.mulf %389, %392 : vector<8x256xf32>
    %394 = arith.addf %385, %393 : vector<8x256xf32>
    %c3_379 = arith.constant 3 : index
    %c0_380 = arith.constant 0 : index
    %c0_381 = arith.constant 0 : index
    %395 = vector.load %arg19[%c3_379, %c0_380, %c0_381] : memref<9x8x16xf32, #tpu.memory_space<vmem>>, vector<1x8x16xf32>
    %396 = vector.shape_cast %395 : vector<1x8x16xf32> to vector<8x16xf32>
    %cst_382 = arith.constant dense<0.000000e+00> : vector<8x256xf32>
    %397 = tpu.matmul %396, %368, %cst_382 {dimension_numbers = #tpu.dot_dimension_numbers<[1], [0], [0], [1], [0, 0, 1, 1], [], []>} : vector<8x16xf32>, vector<16x256xf32>, vector<8x256xf32> -> vector<8x256xf32>
    %c1_i32 = arith.constant 1 : i32
    %398 = tpu.dynamic_rotate %397 by %c1_i32 dim 1 : vector<8x256xf32>, i32 -> vector<8x256xf32>
    %c3_383 = arith.constant 3 : index
    %c0_384 = arith.constant 0 : index
    %c0_385 = arith.constant 0 : index
    %399 = vector.load %arg18[%c3_383, %c0_384, %c0_385] : memref<9x1x256xf32, #tpu.memory_space<vmem>>, vector<1x1x256xf32>
    %400 = vector.shape_cast %399 : vector<1x1x256xf32> to vector<1x256xf32>
    %401 = vector.broadcast %400 : vector<1x256xf32> to vector<8x256xf32>
    %402 = arith.mulf %398, %401 : vector<8x256xf32>
    %403 = arith.addf %394, %402 : vector<8x256xf32>
    %c4_386 = arith.constant 4 : index
    %c0_387 = arith.constant 0 : index
    %c0_388 = arith.constant 0 : index
    %404 = vector.load %arg19[%c4_386, %c0_387, %c0_388] : memref<9x8x16xf32, #tpu.memory_space<vmem>>, vector<1x8x16xf32>
    %405 = vector.shape_cast %404 : vector<1x8x16xf32> to vector<8x16xf32>
    %cst_389 = arith.constant dense<0.000000e+00> : vector<8x256xf32>
    %406 = tpu.matmul %405, %368, %cst_389 {dimension_numbers = #tpu.dot_dimension_numbers<[1], [0], [0], [1], [0, 0, 1, 1], [], []>} : vector<8x16xf32>, vector<16x256xf32>, vector<8x256xf32> -> vector<8x256xf32>
    %407 = arith.addf %403, %406 : vector<8x256xf32>
    %c5_390 = arith.constant 5 : index
    %c0_391 = arith.constant 0 : index
    %c0_392 = arith.constant 0 : index
    %408 = vector.load %arg19[%c5_390, %c0_391, %c0_392] : memref<9x8x16xf32, #tpu.memory_space<vmem>>, vector<1x8x16xf32>
    %409 = vector.shape_cast %408 : vector<1x8x16xf32> to vector<8x16xf32>
    %cst_393 = arith.constant dense<0.000000e+00> : vector<8x256xf32>
    %410 = tpu.matmul %409, %368, %cst_393 {dimension_numbers = #tpu.dot_dimension_numbers<[1], [0], [0], [1], [0, 0, 1, 1], [], []>} : vector<8x16xf32>, vector<16x256xf32>, vector<8x256xf32> -> vector<8x256xf32>
    %c255_i32 = arith.constant 255 : i32
    %411 = tpu.dynamic_rotate %410 by %c255_i32 dim 1 : vector<8x256xf32>, i32 -> vector<8x256xf32>
    %c5_394 = arith.constant 5 : index
    %c0_395 = arith.constant 0 : index
    %c0_396 = arith.constant 0 : index
    %412 = vector.load %arg18[%c5_394, %c0_395, %c0_396] : memref<9x1x256xf32, #tpu.memory_space<vmem>>, vector<1x1x256xf32>
    %413 = vector.shape_cast %412 : vector<1x1x256xf32> to vector<1x256xf32>
    %414 = vector.broadcast %413 : vector<1x256xf32> to vector<8x256xf32>
    %415 = arith.mulf %411, %414 : vector<8x256xf32>
    %416 = arith.addf %407, %415 : vector<8x256xf32>
    %c6_397 = arith.constant 6 : index
    %c0_398 = arith.constant 0 : index
    %c0_399 = arith.constant 0 : index
    %417 = vector.load %arg19[%c6_397, %c0_398, %c0_399] : memref<9x8x16xf32, #tpu.memory_space<vmem>>, vector<1x8x16xf32>
    %418 = vector.shape_cast %417 : vector<1x8x16xf32> to vector<8x16xf32>
    %cst_400 = arith.constant dense<0.000000e+00> : vector<8x256xf32>
    %419 = tpu.matmul %418, %368, %cst_400 {dimension_numbers = #tpu.dot_dimension_numbers<[1], [0], [0], [1], [0, 0, 1, 1], [], []>} : vector<8x16xf32>, vector<16x256xf32>, vector<8x256xf32> -> vector<8x256xf32>
    %c241_i32 = arith.constant 241 : i32
    %420 = tpu.dynamic_rotate %419 by %c241_i32 dim 1 : vector<8x256xf32>, i32 -> vector<8x256xf32>
    %c6_401 = arith.constant 6 : index
    %c0_402 = arith.constant 0 : index
    %c0_403 = arith.constant 0 : index
    %421 = vector.load %arg18[%c6_401, %c0_402, %c0_403] : memref<9x1x256xf32, #tpu.memory_space<vmem>>, vector<1x1x256xf32>
    %422 = vector.shape_cast %421 : vector<1x1x256xf32> to vector<1x256xf32>
    %423 = vector.broadcast %422 : vector<1x256xf32> to vector<8x256xf32>
    %424 = arith.mulf %420, %423 : vector<8x256xf32>
    %425 = arith.addf %416, %424 : vector<8x256xf32>
    %c7_404 = arith.constant 7 : index
    %c0_405 = arith.constant 0 : index
    %c0_406 = arith.constant 0 : index
    %426 = vector.load %arg19[%c7_404, %c0_405, %c0_406] : memref<9x8x16xf32, #tpu.memory_space<vmem>>, vector<1x8x16xf32>
    %427 = vector.shape_cast %426 : vector<1x8x16xf32> to vector<8x16xf32>
    %cst_407 = arith.constant dense<0.000000e+00> : vector<8x256xf32>
    %428 = tpu.matmul %427, %368, %cst_407 {dimension_numbers = #tpu.dot_dimension_numbers<[1], [0], [0], [1], [0, 0, 1, 1], [], []>} : vector<8x16xf32>, vector<16x256xf32>, vector<8x256xf32> -> vector<8x256xf32>
    %c240_i32 = arith.constant 240 : i32
    %429 = tpu.dynamic_rotate %428 by %c240_i32 dim 1 : vector<8x256xf32>, i32 -> vector<8x256xf32>
    %c7_408 = arith.constant 7 : index
    %c0_409 = arith.constant 0 : index
    %c0_410 = arith.constant 0 : index
    %430 = vector.load %arg18[%c7_408, %c0_409, %c0_410] : memref<9x1x256xf32, #tpu.memory_space<vmem>>, vector<1x1x256xf32>
    %431 = vector.shape_cast %430 : vector<1x1x256xf32> to vector<1x256xf32>
    %432 = vector.broadcast %431 : vector<1x256xf32> to vector<8x256xf32>
    %433 = arith.mulf %429, %432 : vector<8x256xf32>
    %434 = arith.addf %425, %433 : vector<8x256xf32>
    %c8_411 = arith.constant 8 : index
    %c0_412 = arith.constant 0 : index
    %c0_413 = arith.constant 0 : index
    %435 = vector.load %arg19[%c8_411, %c0_412, %c0_413] : memref<9x8x16xf32, #tpu.memory_space<vmem>>, vector<1x8x16xf32>
    %436 = vector.shape_cast %435 : vector<1x8x16xf32> to vector<8x16xf32>
    %cst_414 = arith.constant dense<0.000000e+00> : vector<8x256xf32>
    %437 = tpu.matmul %436, %368, %cst_414 {dimension_numbers = #tpu.dot_dimension_numbers<[1], [0], [0], [1], [0, 0, 1, 1], [], []>} : vector<8x16xf32>, vector<16x256xf32>, vector<8x256xf32> -> vector<8x256xf32>
    %c239_i32 = arith.constant 239 : i32
    %438 = tpu.dynamic_rotate %437 by %c239_i32 dim 1 : vector<8x256xf32>, i32 -> vector<8x256xf32>
    %c8_415 = arith.constant 8 : index
    %c0_416 = arith.constant 0 : index
    %c0_417 = arith.constant 0 : index
    %439 = vector.load %arg18[%c8_415, %c0_416, %c0_417] : memref<9x1x256xf32, #tpu.memory_space<vmem>>, vector<1x1x256xf32>
    %440 = vector.shape_cast %439 : vector<1x1x256xf32> to vector<1x256xf32>
    %441 = vector.broadcast %440 : vector<1x256xf32> to vector<8x256xf32>
    %442 = arith.mulf %438, %441 : vector<8x256xf32>
    %443 = arith.addf %434, %442 : vector<8x256xf32>
    %c0_418 = arith.constant 0 : index
    %c0_419 = arith.constant 0 : index
    %444 = vector.load %arg20[%c0_418, %c0_419] : memref<8x1xf32, #tpu.memory_space<vmem>>, vector<8x1xf32>
    %445 = vector.broadcast %444 : vector<8x1xf32> to vector<8x256xf32>
    %446 = arith.addf %443, %445 : vector<8x256xf32>
    %447 = arith.negf %446 : vector<8x256xf32>
    %448 = math.exp %447 : vector<8x256xf32>
    %cst_420 = arith.constant 1.000000e+00 : f32
    %449 = vector.broadcast %cst_420 : f32 to vector<8x256xf32>
    %450 = arith.addf %449, %448 : vector<8x256xf32>
    %451 = arith.divf %449, %450 : vector<8x256xf32>
    %c0_421 = arith.constant 0 : index
    %c0_422 = arith.constant 0 : index
    %452 = vector.load %arg21[%c0_421, %c0_422] : memref<8x256xf32, #tpu.memory_space<vmem>>, vector<8x256xf32>
    tpu.vector_store %arg21[%c0_421, %c0_422], %451 {strides = array<i32>} : memref<8x256xf32, #tpu.memory_space<vmem>>, vector<8x256xf32>,
    return
  }
  func.func @transform_0(%arg0: i32) -> (i32, i32) {
    %c0_i32 = arith.constant 0 : i32
    %c0_i32_0 = arith.constant 0 : i32
    return %arg0, %c0_i32 : i32, i32
  }
  func.func @transform_1(%arg0: i32) -> (i32, i32, i32) {
    %c0_i32 = arith.constant 0 : i32
    %c0_i32_0 = arith.constant 0 : i32
    %c0_i32_1 = arith.constant 0 : i32
    %c0_i32_2 = arith.constant 0 : i32
    return %c0_i32, %c0_i32_0, %c0_i32_1 : i32, i32, i32
  }
  func.func @transform_2(%arg0: i32) -> (i32, i32, i32) {
    %c0_i32 = arith.constant 0 : i32
    %c0_i32_0 = arith.constant 0 : i32
    %c0_i32_1 = arith.constant 0 : i32
    %c0_i32_2 = arith.constant 0 : i32
    return %c0_i32, %c0_i32_0, %c0_i32_1 : i32, i32, i32
  }
  func.func @transform_3(%arg0: i32) -> (i32, i32) {
    %c0_i32 = arith.constant 0 : i32
    %c0_i32_0 = arith.constant 0 : i32
    %c0_i32_1 = arith.constant 0 : i32
    return %c0_i32, %c0_i32_0 : i32, i32
  }
  func.func @transform_4(%arg0: i32) -> (i32, i32, i32) {
    %c0_i32 = arith.constant 0 : i32
    %c0_i32_0 = arith.constant 0 : i32
    %c0_i32_1 = arith.constant 0 : i32
    %c0_i32_2 = arith.constant 0 : i32
    return %c0_i32, %c0_i32_0, %c0_i32_1 : i32, i32, i32
  }
  func.func @transform_5(%arg0: i32) -> (i32, i32, i32) {
    %c0_i32 = arith.constant 0 : i32
    %c0_i32_0 = arith.constant 0 : i32
    %c0_i32_1 = arith.constant 0 : i32
    %c0_i32_2 = arith.constant 0 : i32
    return %c0_i32, %c0_i32_0, %c0_i32_1 : i32, i32, i32
  }
  func.func @transform_6(%arg0: i32) -> (i32, i32) {
    %c0_i32 = arith.constant 0 : i32
    %c0_i32_0 = arith.constant 0 : i32
    %c0_i32_1 = arith.constant 0 : i32
    return %c0_i32, %c0_i32_0 : i32, i32
  }
  func.func @transform_7(%arg0: i32) -> (i32, i32, i32) {
    %c0_i32 = arith.constant 0 : i32
    %c0_i32_0 = arith.constant 0 : i32
    %c0_i32_1 = arith.constant 0 : i32
    %c0_i32_2 = arith.constant 0 : i32
    return %c0_i32, %c0_i32_0, %c0_i32_1 : i32, i32, i32
  }
  func.func @transform_8(%arg0: i32) -> (i32, i32) {
    %c0_i32 = arith.constant 0 : i32
    %c0_i32_0 = arith.constant 0 : i32
    %c0_i32_1 = arith.constant 0 : i32
    return %c0_i32, %c0_i32_0 : i32, i32
  }
  func.func @transform_9(%arg0: i32) -> (i32, i32, i32) {
    %c0_i32 = arith.constant 0 : i32
    %c0_i32_0 = arith.constant 0 : i32
    %c0_i32_1 = arith.constant 0 : i32
    %c0_i32_2 = arith.constant 0 : i32
    return %c0_i32, %c0_i32_0, %c0_i32_1 : i32, i32, i32
  }
  func.func @transform_10(%arg0: i32) -> (i32, i32) {
    %c0_i32 = arith.constant 0 : i32
    %c0_i32_0 = arith.constant 0 : i32
    %c0_i32_1 = arith.constant 0 : i32
    return %c0_i32, %c0_i32_0 : i32, i32
  }
  func.func @transform_11(%arg0: i32) -> (i32, i32, i32) {
    %c0_i32 = arith.constant 0 : i32
    %c0_i32_0 = arith.constant 0 : i32
    %c0_i32_1 = arith.constant 0 : i32
    %c0_i32_2 = arith.constant 0 : i32
    return %c0_i32, %c0_i32_0, %c0_i32_1 : i32, i32, i32
  }
  func.func @transform_12(%arg0: i32) -> (i32, i32, i32) {
    %c0_i32 = arith.constant 0 : i32
    %c0_i32_0 = arith.constant 0 : i32
    %c0_i32_1 = arith.constant 0 : i32
    %c0_i32_2 = arith.constant 0 : i32
    return %c0_i32, %c0_i32_0, %c0_i32_1 : i32, i32, i32
  }
  func.func @transform_13(%arg0: i32) -> (i32, i32) {
    %c0_i32 = arith.constant 0 : i32
    %c0_i32_0 = arith.constant 0 : i32
    %c0_i32_1 = arith.constant 0 : i32
    return %c0_i32, %c0_i32_0 : i32, i32
  }
  func.func @transform_14(%arg0: i32) -> (i32, i32, i32) {
    %c0_i32 = arith.constant 0 : i32
    %c0_i32_0 = arith.constant 0 : i32
    %c0_i32_1 = arith.constant 0 : i32
    %c0_i32_2 = arith.constant 0 : i32
    return %c0_i32, %c0_i32_0, %c0_i32_1 : i32, i32, i32
  }
  func.func @transform_15(%arg0: i32) -> (i32, i32, i32) {
    %c0_i32 = arith.constant 0 : i32
    %c0_i32_0 = arith.constant 0 : i32
    %c0_i32_1 = arith.constant 0 : i32
    %c0_i32_2 = arith.constant 0 : i32
    return %c0_i32, %c0_i32_0, %c0_i32_1 : i32, i32, i32
  }
  func.func @transform_16(%arg0: i32) -> (i32, i32) {
    %c0_i32 = arith.constant 0 : i32
    %c0_i32_0 = arith.constant 0 : i32
    %c0_i32_1 = arith.constant 0 : i32
    return %c0_i32, %c0_i32_0 : i32, i32
  }
  func.func @transform_17(%arg0: i32) -> (i32, i32, i32) {
    %c0_i32 = arith.constant 0 : i32
    %c0_i32_0 = arith.constant 0 : i32
    %c0_i32_1 = arith.constant 0 : i32
    %c0_i32_2 = arith.constant 0 : i32
    return %c0_i32, %c0_i32_0, %c0_i32_1 : i32, i32, i32
  }
  func.func @transform_18(%arg0: i32) -> (i32, i32, i32) {
    %c0_i32 = arith.constant 0 : i32
    %c0_i32_0 = arith.constant 0 : i32
    %c0_i32_1 = arith.constant 0 : i32
    %c0_i32_2 = arith.constant 0 : i32
    return %c0_i32, %c0_i32_0, %c0_i32_1 : i32, i32, i32
  }
  func.func @transform_19(%arg0: i32) -> (i32, i32) {
    %c0_i32 = arith.constant 0 : i32
    %c0_i32_0 = arith.constant 0 : i32
    %c0_i32_1 = arith.constant 0 : i32
    return %c0_i32, %c0_i32_0 : i32, i32
  }
  func.func @transform_20(%arg0: i32) -> (i32, i32) {
    %c0_i32 = arith.constant 0 : i32
    %c0_i32_0 = arith.constant 0 : i32
    return %arg0, %c0_i32 : i32, i32
  }
}

</mosaic_0001>

<llo_original>
// kernel: autoencoder_forward.1
$region0: #{autoencoder_forward.1}
  #allocation0 [shape = 'u32[]', space=smem, size = 0x4, offset = 0x4, fixed_abs, tag = 'smem constant byte address 0x4 - core index']
  #allocation1 [shape = 'u32[144,128]{1,0:T(1,128)}', space=vmem, size = 0x12000, scoped, tag = 'internal scratch']
  %s0 = inlined_call_operand.vmem [shape: f32[16,256], index: 0, kind: input, shape index: {}]
  %s1 = inlined_call_operand.vmem [shape: f32[9,256,64], index: 1, kind: input, shape index: {}]
  %s2 = inlined_call_operand.vmem [shape: f32[9,16,8], index: 2, kind: input, shape index: {}]
  %s3 = inlined_call_operand.vmem [shape: f32[16,1], index: 3, kind: input, shape index: {}]
  %s4 = inlined_call_operand.vmem [shape: f32[9,64,16], index: 4, kind: input, shape index: {}]
  %s5 = inlined_call_operand.vmem [shape: f32[9,32,16], index: 5, kind: input, shape index: {}]
  %s6 = inlined_call_operand.vmem [shape: f32[32,1], index: 6, kind: input, shape index: {}]
  %s7 = inlined_call_operand.vmem [shape: f32[3,16,16], index: 7, kind: input, shape index: {}]
  %s8 = inlined_call_operand.vmem [shape: f32[1,3], index: 8, kind: input, shape index: {}]
  %s9 = inlined_call_operand.vmem [shape: f32[3,16,16], index: 9, kind: input, shape index: {}]
  %s10 = inlined_call_operand.vmem [shape: f32[16,16], index: 10, kind: input, shape index: {}]
  %s11 = inlined_call_operand.vmem [shape: f32[9,16,64], index: 11, kind: input, shape index: {}]
  %s12 = inlined_call_operand.vmem [shape: f32[9,32,32], index: 12, kind: input, shape index: {}]
  %s13 = inlined_call_operand.vmem [shape: f32[32,1], index: 13, kind: input, shape index: {}]
  %s14 = inlined_call_operand.vmem [shape: f32[9,64,256], index: 14, kind: input, shape index: {}]
  %s15 = inlined_call_operand.vmem [shape: f32[9,16,32], index: 15, kind: input, shape index: {}]
  %s16 = inlined_call_operand.vmem [shape: f32[16,1], index: 16, kind: input, shape index: {}]
  %s17 = inlined_call_operand.vmem [shape: f32[9,1,256], index: 17, kind: input, shape index: {}]
  %s18 = inlined_call_operand.vmem [shape: f32[9,8,16], index: 18, kind: input, shape index: {}]
  %s19 = inlined_call_operand.vmem [shape: f32[8,1], index: 19, kind: input, shape index: {}]
  %s20 = inlined_call_operand.vmem [shape: f32[16,256], index: 20, kind: output, shape index: {}]
  %s21 = sld [smem:[#allocation0]]
  $region113: #{autoencoder_forward.1} parent=0
    _
  %s23 = ssub.s32 1, %s21
  %s24 = scalar_select 0, %s23, %s21
  loop: start=0, step=1, limit=4
  $region2: #{autoencoder_forward.1} parent=0 // loop_pre_header
    _
  $region3: #{autoencoder_forward.1} parent=0 // loop_header
    %s26 = sphi 0, %s30
    %p27 = scmp.ge.s32.totalorder %s26, 4
    %s36 = sphi 0, %s38
    %s39 = sphi 0, %s36
    %s40 = sphi 0, %s39
    %s56 = sphi 0, %s40
    %s60 = sphi 0, %s60
    %s62 = sphi 0, %s60
    %s63 = sphi 0, %s62
    %s77 = sphi 0, %s63
    %s81 = sphi 0, %s81
    %s83 = sphi 0, %s81
    %s84 = sphi 0, %s83
    %s98 = sphi 0, %s84
    %s102 = sphi 0, %s102
    %s104 = sphi 0, %s102
    %s105 = sphi 0, %s104
    %s119 = sphi 0, %s105
    %s123 = sphi 0, %s123
    %s125 = sphi 0, %s123
    %s126 = sphi 0, %s125
    %s140 = sphi 0, %s126
    %s144 = sphi 0, %s144
    %s146 = sphi 0, %s144
    %s147 = sphi 0, %s146
    %s161 = sphi 0, %s147
    %s165 = sphi 0, %s165
    %s167 = sphi 0, %s165
    %s168 = sphi 0, %s167
    %s182 = sphi 0, %s168
    %s186 = sphi 0, %s186
    %s188 = sphi 0, %s186
    %s189 = sphi 0, %s188
    %s203 = sphi 0, %s189
    %s207 = sphi 0, %s207
    %s209 = sphi 0, %s207
    %s210 = sphi 0, %s209
    %s224 = sphi 0, %s210
    %s228 = sphi 0, %s228
    %s230 = sphi 0, %s228
    %s231 = sphi 0, %s230
    %s245 = sphi 0, %s231
    %s249 = sphi 0, %s249
    %s251 = sphi 0, %s249
    %s252 = sphi 0, %s251
    %s266 = sphi 0, %s252
    %s270 = sphi 0, %s270
    %s272 = sphi 0, %s270
    %s273 = sphi 0, %s272
    %s287 = sphi 0, %s273
    %s291 = sphi 0, %s291
    %s293 = sphi 0, %s291
    %s294 = sphi 0, %s293
    %s308 = sphi 0, %s294
    %s312 = sphi 0, %s312
    %s314 = sphi 0, %s312
    %s315 = sphi 0, %s314
    %s329 = sphi 0, %s315
    %s333 = sphi 0, %s333
    %s335 = sphi 0, %s333
    %s336 = sphi 0, %s335
    %s350 = sphi 0, %s336
    %s354 = sphi 0, %s354
    %s356 = sphi 0, %s354
    %s357 = sphi 0, %s356
    %s371 = sphi 0, %s357
    %s375 = sphi 0, %s375
    %s377 = sphi 0, %s375
    %s378 = sphi 0, %s377
    %s392 = sphi 0, %s378
    %s396 = sphi 0, %s396
    %s398 = sphi 0, %s396
    %s399 = sphi 0, %s398
    %s413 = sphi 0, %s399
    %s417 = sphi 0, %s417
    %s419 = sphi 0, %s417
    %s420 = sphi 0, %s419
    %s434 = sphi 0, %s420
    %s438 = sphi 0, %s438
    %s440 = sphi 0, %s438
    %s441 = sphi 0, %s440
    %s455 = sphi 0, %s441
    %s461 = sphi 0, %s463
    %s464 = sphi 0, %s461
    %s465 = sphi 0, %s464
    %s481 = sphi 0, %s465
  $region4: #{autoencoder_forward.1} parent=0 // loop_header_branch
    %29 = sbr.rel (%p27) target = $region8
  $region5: #{autoencoder_forward.1} parent=0 // loop_body
    %s31 = ssub.s32 %s26, 1
    %s32 = ssub.s32 %s26, 2
    %s33 = sadd.s32 %s26, 1
    %s34 = ssub.s32 %s26, %s33
    %p35 = scmp.eq.s32.totalorder %s34, 0
    %s37 = sadd.s32 %s36, 1
    %s38 = scalar_select %p35, %s36, %s37
    %p41 = pneg %p35
    %p42 = scmp.eq.s32.totalorder %s26, 1
    %p43 = por %p41, %p42
    %p44 = scmp.ne.s32.totalorder %s36, %s39
    %p45 = scmp.eq.s32.totalorder %s26, 0
    %p46 = por %p44, %p45
    %p47 = scmp.ne.s32.totalorder %s36, %s39
    %p48 = scmp.eq.s32.totalorder %s31, 1
    %p49 = por %p47, %p48
    %p50 = scmp.ne.s32.totalorder %s39, %s40
    %p51 = scmp.eq.s32.totalorder %s31, 0
    %p52 = por %p50, %p51
    %p53 = scmp.ne.s32.totalorder %s39, %s40
    %p54 = scmp.eq.s32.totalorder %s32, 1
    %p55 = por %p53, %p54
    %p57 = scmp.ne.s32.totalorder %s40, %s56
    %p58 = scmp.eq.s32.totalorder %s32, 0
    %p59 = por %p57, %p58
    %s61 = sadd.s32 %s60, 1
    %p64 = scmp.eq.s32.totalorder %s26, 1
    %p65 = scmp.ne.s32.totalorder %s60, %s62
    %p66 = scmp.eq.s32.totalorder %s26, 0
    %p67 = por %p65, %p66
    %p68 = scmp.ne.s32.totalorder %s60, %s62
    %p69 = scmp.eq.s32.totalorder %s31, 1
    %p70 = por %p68, %p69
    %p71 = scmp.ne.s32.totalorder %s62, %s63
    %p72 = scmp.eq.s32.totalorder %s31, 0
    %p73 = por %p71, %p72
    %p74 = scmp.ne.s32.totalorder %s62, %s63
    %p75 = scmp.eq.s32.totalorder %s32, 1
    %p76 = por %p74, %p75
    %p78 = scmp.ne.s32.totalorder %s63, %s77
    %p79 = scmp.eq.s32.totalorder %s32, 0
    %p80 = por %p78, %p79
    %s82 = sadd.s32 %s81, 1
    %p85 = scmp.eq.s32.totalorder %s26, 1
    %p86 = scmp.ne.s32.totalorder %s81, %s83
    %p87 = scmp.eq.s32.totalorder %s26, 0
    %p88 = por %p86, %p87
    %p89 = scmp.ne.s32.totalorder %s81, %s83
    %p90 = scmp.eq.s32.totalorder %s31, 1
    %p91 = por %p89, %p90
    %p92 = scmp.ne.s32.totalorder %s83, %s84
    %p93 = scmp.eq.s32.totalorder %s31, 0
    %p94 = por %p92, %p93
    %p95 = scmp.ne.s32.totalorder %s83, %s84
    %p96 = scmp.eq.s32.totalorder %s32, 1
    %p97 = por %p95, %p96
    %p99 = scmp.ne.s32.totalorder %s84, %s98
    %p100 = scmp.eq.s32.totalorder %s32, 0
    %p101 = por %p99, %p100
    %s103 = sadd.s32 %s102, 1
    %p106 = scmp.eq.s32.totalorder %s26, 1
    %p107 = scmp.ne.s32.totalorder %s102, %s104
    %p108 = scmp.eq.s32.totalorder %s26, 0
    %p109 = por %p107, %p108
    %p110 = scmp.ne.s32.totalorder %s102, %s104
    %p111 = scmp.eq.s32.totalorder %s31, 1
    %p112 = por %p110, %p111
    %p113 = scmp.ne.s32.totalorder %s104, %s105
    %p114 = scmp.eq.s32.totalorder %s31, 0
    %p115 = por %p113, %p114
    %p116 = scmp.ne.s32.totalorder %s104, %s105
    %p117 = scmp.eq.s32.totalorder %s32, 1
    %p118 = por %p116, %p117
    %p120 = scmp.ne.s32.totalorder %s105, %s119
    %p121 = scmp.eq.s32.totalorder %s32, 0
    %p122 = por %p120, %p121
    %s124 = sadd.s32 %s123, 1
    %p127 = scmp.eq.s32.totalorder %s26, 1
    %p128 = scmp.ne.s32.totalorder %s123, %s125
    %p129 = scmp.eq.s32.totalorder %s26, 0
    %p130 = por %p128, %p129
    %p131 = scmp.ne.s32.totalorder %s123, %s125
    %p132 = scmp.eq.s32.totalorder %s31, 1
    %p133 = por %p131, %p132
    %p134 = scmp.ne.s32.totalorder %s125, %s126
    %p135 = scmp.eq.s32.totalorder %s31, 0
    %p136 = por %p134, %p135
    %p137 = scmp.ne.s32.totalorder %s125, %s126
    %p138 = scmp.eq.s32.totalorder %s32, 1
    %p139 = por %p137, %p138
    %p141 = scmp.ne.s32.totalorder %s126, %s140
    %p142 = scmp.eq.s32.totalorder %s32, 0
    %p143 = por %p141, %p142
    %s145 = sadd.s32 %s144, 1
    %p148 = scmp.eq.s32.totalorder %s26, 1
    %p149 = scmp.ne.s32.totalorder %s144, %s146
    %p150 = scmp.eq.s32.totalorder %s26, 0
    %p151 = por %p149, %p150
    %p152 = scmp.ne.s32.totalorder %s144, %s146
    %p153 = scmp.eq.s32.totalorder %s31, 1
    %p154 = por %p152, %p153
    %p155 = scmp.ne.s32.totalorder %s146, %s147
    %p156 = scmp.eq.s32.totalorder %s31, 0
    %p157 = por %p155, %p156
    %p158 = scmp.ne.s32.totalorder %s146, %s147
    %p159 = scmp.eq.s32.totalorder %s32, 1
    %p160 = por %p158, %p159
    %p162 = scmp.ne.s32.totalorder %s147, %s161
    %p163 = scmp.eq.s32.totalorder %s32, 0
    %p164 = por %p162, %p163
    %s166 = sadd.s32 %s165, 1
    %p169 = scmp.eq.s32.totalorder %s26, 1
    %p170 = scmp.ne.s32.totalorder %s165, %s167
    %p171 = scmp.eq.s32.totalorder %s26, 0
    %p172 = por %p170, %p171
    %p173 = scmp.ne.s32.totalorder %s165, %s167
    %p174 = scmp.eq.s32.totalorder %s31, 1
    %p175 = por %p173, %p174
    %p176 = scmp.ne.s32.totalorder %s167, %s168
    %p177 = scmp.eq.s32.totalorder %s31, 0
    %p178 = por %p176, %p177
    %p179 = scmp.ne.s32.totalorder %s167, %s168
    %p180 = scmp.eq.s32.totalorder %s32, 1
    %p181 = por %p179, %p180
    %p183 = scmp.ne.s32.totalorder %s168, %s182
    %p184 = scmp.eq.s32.totalorder %s32, 0
    %p185 = por %p183, %p184
    %s187 = sadd.s32 %s186, 1
    %p190 = scmp.eq.s32.totalorder %s26, 1
    %p191 = scmp.ne.s32.totalorder %s186, %s188
    %p192 = scmp.eq.s32.totalorder %s26, 0
    %p193 = por %p191, %p192
    %p194 = scmp.ne.s32.totalorder %s186, %s188
    %p195 = scmp.eq.s32.totalorder %s31, 1
    %p196 = por %p194, %p195
    %p197 = scmp.ne.s32.totalorder %s188, %s189
    %p198 = scmp.eq.s32.totalorder %s31, 0
    %p199 = por %p197, %p198
    %p200 = scmp.ne.s32.totalorder %s188, %s189
    %p201 = scmp.eq.s32.totalorder %s32, 1
    %p202 = por %p200, %p201
    %p204 = scmp.ne.s32.totalorder %s189, %s203
    %p205 = scmp.eq.s32.totalorder %s32, 0
    %p206 = por %p204, %p205
    %s208 = sadd.s32 %s207, 1
    %p211 = scmp.eq.s32.totalorder %s26, 1
    %p212 = scmp.ne.s32.totalorder %s207, %s209
    %p213 = scmp.eq.s32.totalorder %s26, 0
    %p214 = por %p212, %p213
    %p215 = scmp.ne.s32.totalorder %s207, %s209
    %p216 = scmp.eq.s32.totalorder %s31, 1
    %p217 = por %p215, %p216
    %p218 = scmp.ne.s32.totalorder %s209, %s210
    %p219 = scmp.eq.s32.totalorder %s31, 0
    %p220 = por %p218, %p219
    %p221 = scmp.ne.s32.totalorder %s209, %s210
    %p222 = scmp.eq.s32.totalorder %s32, 1
    %p223 = por %p221, %p222
    %p225 = scmp.ne.s32.totalorder %s210, %s224
    %p226 = scmp.eq.s32.totalorder %s32, 0
    %p227 = por %p225, %p226
    %s229 = sadd.s32 %s228, 1
    %p232 = scmp.eq.s32.totalorder %s26, 1
    %p233 = scmp.ne.s32.totalorder %s228, %s230
    %p234 = scmp.eq.s32.totalorder %s26, 0
    %p235 = por %p233, %p234
    %p236 = scmp.ne.s32.totalorder %s228, %s230
    %p237 = scmp.eq.s32.totalorder %s31, 1
    %p238 = por %p236, %p237
    %p239 = scmp.ne.s32.totalorder %s230, %s231
    %p240 = scmp.eq.s32.totalorder %s31, 0
    %p241 = por %p239, %p240
    %p242 = scmp.ne.s32.totalorder %s230, %s231
    %p243 = scmp.eq.s32.totalorder %s32, 1
    %p244 = por %p242, %p243
    %p246 = scmp.ne.s32.totalorder %s231, %s245
    %p247 = scmp.eq.s32.totalorder %s32, 0
    %p248 = por %p246, %p247
    %s250 = sadd.s32 %s249, 1
    %p253 = scmp.eq.s32.totalorder %s26, 1
    %p254 = scmp.ne.s32.totalorder %s249, %s251
    %p255 = scmp.eq.s32.totalorder %s26, 0
    %p256 = por %p254, %p255
    %p257 = scmp.ne.s32.totalorder %s249, %s251
    %p258 = scmp.eq.s32.totalorder %s31, 1
    %p259 = por %p257, %p258
    %p260 = scmp.ne.s32.totalorder %s251, %s252
    %p261 = scmp.eq.s32.totalorder %s31, 0
    %p262 = por %p260, %p261
    %p263 = scmp.ne.s32.totalorder %s251, %s252
    %p264 = scmp.eq.s32.totalorder %s32, 1
    %p265 = por %p263, %p264
    %p267 = scmp.ne.s32.totalorder %s252, %s266
    %p268 = scmp.eq.s32.totalorder %s32, 0
    %p269 = por %p267, %p268
    %s271 = sadd.s32 %s270, 1
    %p274 = scmp.eq.s32.totalorder %s26, 1
    %p275 = scmp.ne.s32.totalorder %s270, %s272
    %p276 = scmp.eq.s32.totalorder %s26, 0
    %p277 = por %p275, %p276
    %p278 = scmp.ne.s32.totalorder %s270, %s272
    %p279 = scmp.eq.s32.totalorder %s31, 1
    %p280 = por %p278, %p279
    %p281 = scmp.ne.s32.totalorder %s272, %s273
    %p282 = scmp.eq.s32.totalorder %s31, 0
    %p283 = por %p281, %p282
    %p284 = scmp.ne.s32.totalorder %s272, %s273
    %p285 = scmp.eq.s32.totalorder %s32, 1
    %p286 = por %p284, %p285
    %p288 = scmp.ne.s32.totalorder %s273, %s287
    %p289 = scmp.eq.s32.totalorder %s32, 0
    %p290 = por %p288, %p289
    %s292 = sadd.s32 %s291, 1
    %p295 = scmp.eq.s32.totalorder %s26, 1
    %p296 = scmp.ne.s32.totalorder %s291, %s293
    %p297 = scmp.eq.s32.totalorder %s26, 0
    %p298 = por %p296, %p297
    %p299 = scmp.ne.s32.totalorder %s291, %s293
    %p300 = scmp.eq.s32.totalorder %s31, 1
    %p301 = por %p299, %p300
    %p302 = scmp.ne.s32.totalorder %s293, %s294
    %p303 = scmp.eq.s32.totalorder %s31, 0
    %p304 = por %p302, %p303
    %p305 = scmp.ne.s32.totalorder %s293, %s294
    %p306 = scmp.eq.s32.totalorder %s32, 1
    %p307 = por %p305, %p306
    %p309 = scmp.ne.s32.totalorder %s294, %s308
    %p310 = scmp.eq.s32.totalorder %s32, 0
    %p311 = por %p309, %p310
    %s313 = sadd.s32 %s312, 1
    %p316 = scmp.eq.s32.totalorder %s26, 1
    %p317 = scmp.ne.s32.totalorder %s312, %s314
    %p318 = scmp.eq.s32.totalorder %s26, 0
    %p319 = por %p317, %p318
    %p320 = scmp.ne.s32.totalorder %s312, %s314
    %p321 = scmp.eq.s32.totalorder %s31, 1
    %p322 = por %p320, %p321
    %p323 = scmp.ne.s32.totalorder %s314, %s315
    %p324 = scmp.eq.s32.totalorder %s31, 0
    %p325 = por %p323, %p324
    %p326 = scmp.ne.s32.totalorder %s314, %s315
    %p327 = scmp.eq.s32.totalorder %s32, 1
    %p328 = por %p326, %p327
    %p330 = scmp.ne.s32.totalorder %s315, %s329
    %p331 = scmp.eq.s32.totalorder %s32, 0
    %p332 = por %p330, %p331
    %s334 = sadd.s32 %s333, 1
    %p337 = scmp.eq.s32.totalorder %s26, 1
    %p338 = scmp.ne.s32.totalorder %s333, %s335
    %p339 = scmp.eq.s32.totalorder %s26, 0
    %p340 = por %p338, %p339
    %p341 = scmp.ne.s32.totalorder %s333, %s335
    %p342 = scmp.eq.s32.totalorder %s31, 1
    %p343 = por %p341, %p342
    %p344 = scmp.ne.s32.totalorder %s335, %s336
    %p345 = scmp.eq.s32.totalorder %s31, 0
    %p346 = por %p344, %p345
    %p347 = scmp.ne.s32.totalorder %s335, %s336
    %p348 = scmp.eq.s32.totalorder %s32, 1
    %p349 = por %p347, %p348
    %p351 = scmp.ne.s32.totalorder %s336, %s350
    %p352 = scmp.eq.s32.totalorder %s32, 0
    %p353 = por %p351, %p352
    %s355 = sadd.s32 %s354, 1
    %p358 = scmp.eq.s32.totalorder %s26, 1
    %p359 = scmp.ne.s32.totalorder %s354, %s356
    %p360 = scmp.eq.s32.totalorder %s26, 0
    %p361 = por %p359, %p360
    %p362 = scmp.ne.s32.totalorder %s354, %s356
    %p363 = scmp.eq.s32.totalorder %s31, 1
    %p364 = por %p362, %p363
    %p365 = scmp.ne.s32.totalorder %s356, %s357
    %p366 = scmp.eq.s32.totalorder %s31, 0
    %p367 = por %p365, %p366
    %p368 = scmp.ne.s32.totalorder %s356, %s357
    %p369 = scmp.eq.s32.totalorder %s32, 1
    %p370 = por %p368, %p369
    %p372 = scmp.ne.s32.totalorder %s357, %s371
    %p373 = scmp.eq.s32.totalorder %s32, 0
    %p374 = por %p372, %p373
    %s376 = sadd.s32 %s375, 1
    %p379 = scmp.eq.s32.totalorder %s26, 1
    %p380 = scmp.ne.s32.totalorder %s375, %s377
    %p381 = scmp.eq.s32.totalorder %s26, 0
    %p382 = por %p380, %p381
    %p383 = scmp.ne.s32.totalorder %s375, %s377
    %p384 = scmp.eq.s32.totalorder %s31, 1
    %p385 = por %p383, %p384
    %p386 = scmp.ne.s32.totalorder %s377, %s378
    %p387 = scmp.eq.s32.totalorder %s31, 0
    %p388 = por %p386, %p387
    %p389 = scmp.ne.s32.totalorder %s377, %s378
    %p390 = scmp.eq.s32.totalorder %s32, 1
    %p391 = por %p389, %p390
    %p393 = scmp.ne.s32.totalorder %s378, %s392
    %p394 = scmp.eq.s32.totalorder %s32, 0
    %p395 = por %p393, %p394
    %s397 = sadd.s32 %s396, 1
    %p400 = scmp.eq.s32.totalorder %s26, 1
    %p401 = scmp.ne.s32.totalorder %s396, %s398
    %p402 = scmp.eq.s32.totalorder %s26, 0
    %p403 = por %p401, %p402
    %p404 = scmp.ne.s32.totalorder %s396, %s398
    %p405 = scmp.eq.s32.totalorder %s31, 1
    %p406 = por %p404, %p405
    %p407 = scmp.ne.s32.totalorder %s398, %s399
    %p408 = scmp.eq.s32.totalorder %s31, 0
    %p409 = por %p407, %p408
    %p410 = scmp.ne.s32.totalorder %s398, %s399
    %p411 = scmp.eq.s32.totalorder %s32, 1
    %p412 = por %p410, %p411
    %p414 = scmp.ne.s32.totalorder %s399, %s413
    %p415 = scmp.eq.s32.totalorder %s32, 0
    %p416 = por %p414, %p415
    %s418 = sadd.s32 %s417, 1
    %p421 = scmp.eq.s32.totalorder %s26, 1
    %p422 = scmp.ne.s32.totalorder %s417, %s419
    %p423 = scmp.eq.s32.totalorder %s26, 0
    %p424 = por %p422, %p423
    %p425 = scmp.ne.s32.totalorder %s417, %s419
    %p426 = scmp.eq.s32.totalorder %s31, 1
    %p427 = por %p425, %p426
    %p428 = scmp.ne.s32.totalorder %s419, %s420
    %p429 = scmp.eq.s32.totalorder %s31, 0
    %p430 = por %p428, %p429
    %p431 = scmp.ne.s32.totalorder %s419, %s420
    %p432 = scmp.eq.s32.totalorder %s32, 1
    %p433 = por %p431, %p432
    %p435 = scmp.ne.s32.totalorder %s420, %s434
    %p436 = scmp.eq.s32.totalorder %s32, 0
    %p437 = por %p435, %p436
    %s439 = sadd.s32 %s438, 1
    %p442 = scmp.eq.s32.totalorder %s26, 1
    %p443 = scmp.ne.s32.totalorder %s438, %s440
    %p444 = scmp.eq.s32.totalorder %s26, 0
    %p445 = por %p443, %p444
    %p446 = scmp.ne.s32.totalorder %s438, %s440
    %p447 = scmp.eq.s32.totalorder %s31, 1
    %p448 = por %p446, %p447
    %p449 = scmp.ne.s32.totalorder %s440, %s441
    %p450 = scmp.eq.s32.totalorder %s31, 0
    %p451 = por %p449, %p450
    %p452 = scmp.ne.s32.totalorder %s440, %s441
    %p453 = scmp.eq.s32.totalorder %s32, 1
    %p454 = por %p452, %p453
    %p456 = scmp.ne.s32.totalorder %s441, %s455
    %p457 = scmp.eq.s32.totalorder %s32, 0
    %p458 = por %p456, %p457
    %s459 = ssub.s32 %s26, %s33
    %p460 = scmp.eq.s32.totalorder %s459, 0
    %s462 = sadd.s32 %s461, 1
    %s463 = scalar_select %p460, %s461, %s462
    %p466 = pneg %p460
    %p467 = scmp.eq.s32.totalorder %s26, 1
    %p468 = por %p466, %p467
    %p469 = scmp.ne.s32.totalorder %s461, %s464
    %p470 = scmp.eq.s32.totalorder %s26, 0
    %p471 = por %p469, %p470
    %p472 = scmp.ne.s32.totalorder %s461, %s464
    %p473 = scmp.eq.s32.totalorder %s31, 1
    %p474 = por %p472, %p473
    %p475 = scmp.ne.s32.totalorder %s464, %s465
    %p476 = scmp.eq.s32.totalorder %s31, 0
    %p477 = por %p475, %p476
    %p478 = scmp.ne.s32.totalorder %s464, %s465
    %p479 = scmp.eq.s32.totalorder %s32, 1
    %p480 = por %p478, %p479
    %p482 = scmp.ne.s32.totalorder %s465, %s481
    %p483 = scmp.eq.s32.totalorder %s32, 0
    %p484 = por %p482, %p483
    %p485 = scmp.le.s32.totalorder 1, %s26
    %p486 = scmp.lt.s32.totalorder %s26, 3
    %p487 = pnand %p485, %p486
    %p488 = pneg %p487
    // Predicated region
    $region9: #{autoencoder_forward.1} parent=5 // pred_check
      _
    $region10: #{autoencoder_forward.1} parent=5 // pred_check_branch
      %490 = sbr.rel (%p487) target = $region12
    $region11: #{autoencoder_forward.1} parent=5 // pred_region
      %s491 = ssub.s32 %s26, 1
      // Predicated region
      $region13: #{autoencoder_forward.1} parent=11 // pred_check
        %p492 = pneg %p73
      $region14: #{autoencoder_forward.1} parent=11 // pred_check_branch
        %494 = sbr.rel (%p492) target = $region16
      $region15: #{autoencoder_forward.1} parent=11 // pred_region
        _
      $region16: #{autoencoder_forward.1} parent=11 // pred_fallthru
        _
      // Predicated region
      $region17: #{autoencoder_forward.1} parent=11 // pred_check
        %p495 = pneg %p94
      $region18: #{autoencoder_forward.1} parent=11 // pred_check_branch
        %497 = sbr.rel (%p495) target = $region20
      $region19: #{autoencoder_forward.1} parent=11 // pred_region
        _
      $region20: #{autoencoder_forward.1} parent=11 // pred_fallthru
        _
      // Predicated region
      $region21: #{autoencoder_forward.1} parent=11 // pred_check
        %p498 = pneg %p115
      $region22: #{autoencoder_forward.1} parent=11 // pred_check_branch
        %500 = sbr.rel (%p498) target = $region24
      $region23: #{autoencoder_forward.1} parent=11 // pred_region
        _
      $region24: #{autoencoder_forward.1} parent=11 // pred_fallthru
        _
      // Predicated region
      $region25: #{autoencoder_forward.1} parent=11 // pred_check
        %p501 = pneg %p136
      $region26: #{autoencoder_forward.1} parent=11 // pred_check_branch
        %503 = sbr.rel (%p501) target = $region28
      $region27: #{autoencoder_forward.1} parent=11 // pred_region
        _
      $region28: #{autoencoder_forward.1} parent=11 // pred_fallthru
        _
      // Predicated region
      $region29: #{autoencoder_forward.1} parent=11 // pred_check
        %p504 = pneg %p157
      $region30: #{autoencoder_forward.1} parent=11 // pred_check_branch
        %506 = sbr.rel (%p504) target = $region32
      $region31: #{autoencoder_forward.1} parent=11 // pred_region
        _
      $region32: #{autoencoder_forward.1} parent=11 // pred_fallthru
        _
      // Predicated region
      $region33: #{autoencoder_forward.1} parent=11 // pred_check
        %p507 = pneg %p178
      $region34: #{autoencoder_forward.1} parent=11 // pred_check_branch
        %509 = sbr.rel (%p507) target = $region36
      $region35: #{autoencoder_forward.1} parent=11 // pred_region
        _
      $region36: #{autoencoder_forward.1} parent=11 // pred_fallthru
        _
      // Predicated region
      $region37: #{autoencoder_forward.1} parent=11 // pred_check
        %p510 = pneg %p199
      $region38: #{autoencoder_forward.1} parent=11 // pred_check_branch
        %512 = sbr.rel (%p510) target = $region40
      $region39: #{autoencoder_forward.1} parent=11 // pred_region
        _
      $region40: #{autoencoder_forward.1} parent=11 // pred_fallthru
        _
      // Predicated region
      $region41: #{autoencoder_forward.1} parent=11 // pred_check
        %p513 = pneg %p220
      $region42: #{autoencoder_forward.1} parent=11 // pred_check_branch
        %515 = sbr.rel (%p513) target = $region44
      $region43: #{autoencoder_forward.1} parent=11 // pred_region
        _
      $region44: #{autoencoder_forward.1} parent=11 // pred_fallthru
        _
      // Predicated region
      $region45: #{autoencoder_forward.1} parent=11 // pred_check
        %p516 = pneg %p241
      $region46: #{autoencoder_forward.1} parent=11 // pred_check_branch
        %518 = sbr.rel (%p516) target = $region48
      $region47: #{autoencoder_forward.1} parent=11 // pred_region
        _
      $region48: #{autoencoder_forward.1} parent=11 // pred_fallthru
        _
      // Predicated region
      $region49: #{autoencoder_forward.1} parent=11 // pred_check
        %p519 = pneg %p262
      $region50: #{autoencoder_forward.1} parent=11 // pred_check_branch
        %521 = sbr.rel (%p519) target = $region52
      $region51: #{autoencoder_forward.1} parent=11 // pred_region
        _
      $region52: #{autoencoder_forward.1} parent=11 // pred_fallthru
        _
      // Predicated region
      $region53: #{autoencoder_forward.1} parent=11 // pred_check
        %p522 = pneg %p283
      $region54: #{autoencoder_forward.1} parent=11 // pred_check_branch
        %524 = sbr.rel (%p522) target = $region56
      $region55: #{autoencoder_forward.1} parent=11 // pred_region
        _
      $region56: #{autoencoder_forward.1} parent=11 // pred_fallthru
        _
      // Predicated region
      $region57: #{autoencoder_forward.1} parent=11 // pred_check
        %p525 = pneg %p304
      $region58: #{autoencoder_forward.1} parent=11 // pred_check_branch
        %527 = sbr.rel (%p525) target = $region60
      $region59: #{autoencoder_forward.1} parent=11 // pred_region
        _
      $region60: #{autoencoder_forward.1} parent=11 // pred_fallthru
        _
      // Predicated region
      $region61: #{autoencoder_forward.1} parent=11 // pred_check
        %p528 = pneg %p325
      $region62: #{autoencoder_forward.1} parent=11 // pred_check_branch
        %530 = sbr.rel (%p528) target = $region64
      $region63: #{autoencoder_forward.1} parent=11 // pred_region
        _
      $region64: #{autoencoder_forward.1} parent=11 // pred_fallthru
        _
      // Predicated region
      $region65: #{autoencoder_forward.1} parent=11 // pred_check
        %p531 = pneg %p346
      $region66: #{autoencoder_forward.1} parent=11 // pred_check_branch
        %533 = sbr.rel (%p531) target = $region68
      $region67: #{autoencoder_forward.1} parent=11 // pred_region
        _
      $region68: #{autoencoder_forward.1} parent=11 // pred_fallthru
        _
      // Predicated region
      $region69: #{autoencoder_forward.1} parent=11 // pred_check
        %p534 = pneg %p367
      $region70: #{autoencoder_forward.1} parent=11 // pred_check_branch
        %536 = sbr.rel (%p534) target = $region72
      $region71: #{autoencoder_forward.1} parent=11 // pred_region
        _
      $region72: #{autoencoder_forward.1} parent=11 // pred_fallthru
        _
      // Predicated region
      $region73: #{autoencoder_forward.1} parent=11 // pred_check
        %p537 = pneg %p388
      $region74: #{autoencoder_forward.1} parent=11 // pred_check_branch
        %539 = sbr.rel (%p537) target = $region76
      $region75: #{autoencoder_forward.1} parent=11 // pred_region
        _
      $region76: #{autoencoder_forward.1} parent=11 // pred_fallthru
        _
      // Predicated region
      $region77: #{autoencoder_forward.1} parent=11 // pred_check
        %p540 = pneg %p409
      $region78: #{autoencoder_forward.1} parent=11 // pred_check_branch
        %542 = sbr.rel (%p540) target = $region80
      $region79: #{autoencoder_forward.1} parent=11 // pred_region
        _
      $region80: #{autoencoder_forward.1} parent=11 // pred_fallthru
        _
      // Predicated region
      $region81: #{autoencoder_forward.1} parent=11 // pred_check
        %p543 = pneg %p430
      $region82: #{autoencoder_forward.1} parent=11 // pred_check_branch
        %545 = sbr.rel (%p543) target = $region84
      $region83: #{autoencoder_forward.1} parent=11 // pred_region
        _
      $region84: #{autoencoder_forward.1} parent=11 // pred_fallthru
        _
      // Predicated region
      $region85: #{autoencoder_forward.1} parent=11 // pred_check
        %p546 = pneg %p451
      $region86: #{autoencoder_forward.1} parent=11 // pred_check_branch
        %548 = sbr.rel (%p546) target = $region88
      $region87: #{autoencoder_forward.1} parent=11 // pred_region
        _
      $region88: #{autoencoder_forward.1} parent=11 // pred_fallthru
        _
    $region12: #{autoencoder_forward.1} parent=5 // pred_fallthru
      _
    %p549 = scmp.lt.s32.totalorder %s26, 2
    // Predicated region
    $region89: #{autoencoder_forward.1} parent=5 // pred_check
      %p550 = pneg %p549
    $region90: #{autoencoder_forward.1} parent=5 // pred_check_branch
      %552 = sbr.rel (%p550) target = $region92
    $region91: #{autoencoder_forward.1} parent=5 // pred_region
      // Predicated region
      $region93: #{autoencoder_forward.1} parent=91 // pred_check
        %p553 = pneg %p46
      $region94: #{autoencoder_forward.1} parent=91 // pred_check_branch
        %555 = sbr.rel (%p553) target = $region96
      $region95: #{autoencoder_forward.1} parent=91 // pred_region
        %p556 = scmp.lt.s32.totalorder %s26, 1
        %s557 = scalar_select %p556, %s26, 1
        %s558 = smul.addr %s557, 2
        %s559 = smul.addr %s558, 8
        %s560 = scalar_lea.vmem %s0, %s559
      $region96: #{autoencoder_forward.1} parent=91 // pred_fallthru
        _
    $region92: #{autoencoder_forward.1} parent=5 // pred_fallthru
      _
    %p561 = scmp.le.s32.totalorder 1, %s26
    %p562 = scmp.lt.s32.totalorder %s26, 3
    %p563 = pnand %p561, %p562
    %p564 = pneg %p563
    // Predicated region
    $region97: #{autoencoder_forward.1} parent=5 // pred_check
      _
    $region98: #{autoencoder_forward.1} parent=5 // pred_check_branch
      %566 = sbr.rel (%p563) target = $region100
    $region99: #{autoencoder_forward.1} parent=5 // pred_region
      %s567 = ssub.s32 %s26, 1
      %p568 = scmp.lt.s32.totalorder %s31, 1
      %s569 = scalar_select %p568, %s31, 1
      %s570 = smul.addr %s569, 2
      %s571 = smul.addr %s570, 8
      %s572 = scalar_lea.vmem %s0, %s571
      %p573 = pneg %p52
      %p574 = pneg %p49
      %p575 = pneg %p73
      %p576 = pneg %p70
      %p577 = pneg %p94
      %p578 = pneg %p91
      %p579 = pneg %p115
      %p580 = pneg %p112
      %p581 = pneg %p136
      %p582 = pneg %p133
      %p583 = pneg %p157
      %p584 = pneg %p154
      %p585 = pneg %p178
      %p586 = pneg %p175
      %p587 = pneg %p199
      %p588 = pneg %p196
      %p589 = pneg %p220
      %p590 = pneg %p217
      %p591 = pneg %p241
      %p592 = pneg %p238
      %p593 = pneg %p262
      %p594 = pneg %p259
      %p595 = pneg %p283
      %p596 = pneg %p280
      %p597 = pneg %p304
      %p598 = pneg %p301
      %p599 = pneg %p325
      %p600 = pneg %p322
      %p601 = pneg %p346
      %p602 = pneg %p343
      %p603 = pneg %p367
      %p604 = pneg %p364
      %p605 = pneg %p388
      %p606 = pneg %p385
      %p607 = pneg %p409
      %p608 = pneg %p406
      %p609 = pneg %p430
      %p610 = pneg %p427
      %p611 = pneg %p451
      %p612 = pneg %p448
      %p613 = pneg %p477
      %p614 = pneg %p474
      %p615 = scmp.lt.s32.totalorder %s31, 1
      %s616 = scalar_select %p615, %s31, 1
      %s617 = smul.addr %s616, 2
      %s618 = smul.addr %s617, 8
      %s619 = scalar_lea.vmem %s20, %s618
      %p620 = scmp.lt.s32.totalorder %s31, 1
      %s621 = scalar_select %p620, %s31, 1
      %s622 = smul.addr %s621, 2
      %s623 = smul.addr %s622, 8
      %s624 = scalar_lea.vmem %s0, %s623
      %p625 = scmp.lt.s32.totalorder %s31, 1
      %s626 = scalar_select %p625, %s31, 1
      %s627 = smul.addr %s626, 2
      %s628 = smul.addr %s627, 8
      %s629 = scalar_lea.vmem %s20, %s628
      %v630 = vld [vmem:[%s624] sm:$0xff]
      %v631 = vld [vmem:[%s624 + $0x8] sm:$0xff]
      %v632 = vld [vmem:[%s2] sm:$0xff]
      %v633 = vld [vmem:[%s2 + $0x8] sm:$0xff]
      %v634 = vld [vmem:[%s1] sm:$0xff]
      %v635 = vld [vmem:[%s1 + $0x8] sm:$0xff]
      %v636 = vld [vmem:[%s1 + $0x10] sm:$0xff]
      %v637 = vld [vmem:[%s1 + $0x18] sm:$0xff]
      %v638 = vld [vmem:[%s1 + $0x20] sm:$0xff]
      %v639 = vld [vmem:[%s1 + $0x28] sm:$0xff]
      %v640 = vld [vmem:[%s1 + $0x30] sm:$0xff]
      %v641 = vld [vmem:[%s1 + $0x38] sm:$0xff]
      %v642 = vld [vmem:[%s1 + $0x40] sm:$0xff]
      %v643 = vld [vmem:[%s1 + $0x48] sm:$0xff]
      %v644 = vld [vmem:[%s1 + $0x50] sm:$0xff]
      %v645 = vld [vmem:[%s1 + $0x58] sm:$0xff]
      %v646 = vld [vmem:[%s1 + $0x60] sm:$0xff]
      %v647 = vld [vmem:[%s1 + $0x68] sm:$0xff]
      %v648 = vld [vmem:[%s1 + $0x70] sm:$0xff]
      %v649 = vld [vmem:[%s1 + $0x78] sm:$0xff]
      %v650 = vld [vmem:[%s1 + $0x80] sm:$0xff]
      %v651 = vld [vmem:[%s1 + $0x88] sm:$0xff]
      %v652 = vld [vmem:[%s1 + $0x90] sm:$0xff]
      %v653 = vld [vmem:[%s1 + $0x98] sm:$0xff]
      %v654 = vld [vmem:[%s1 + $0xa0] sm:$0xff]
      %v655 = vld [vmem:[%s1 + $0xa8] sm:$0xff]
      %v656 = vld [vmem:[%s1 + $0xb0] sm:$0xff]
      %v657 = vld [vmem:[%s1 + $0xb8] sm:$0xff]
      %v658 = vld [vmem:[%s1 + $0xc0] sm:$0xff]
      %v659 = vld [vmem:[%s1 + $0xc8] sm:$0xff]
      %v660 = vld [vmem:[%s1 + $0xd0] sm:$0xff]
      %v661 = vld [vmem:[%s1 + $0xd8] sm:$0xff]
      %v662 = vld [vmem:[%s1 + $0xe0] sm:$0xff]
      %v663 = vld [vmem:[%s1 + $0xe8] sm:$0xff]
      %v664 = vld [vmem:[%s1 + $0xf0] sm:$0xff]
      %v665 = vld [vmem:[%s1 + $0xf8] sm:$0xff]
      %666 = vmatprep.subr.mxu0 0.0
      %667 = vmatpush1.msra.mxu0 %v649
      %668 = vmatprep.subr.mxu0 0.0
      %669 = vmatpush1.msra.mxu0 %v648
      %670 = vmatprep.subr.mxu0 0.0
      %671 = vmatpush1.msra.mxu0 %v647
      %672 = vmatprep.subr.mxu0 0.0
      %673 = vmatpush1.msra.mxu0 %v646
      %674 = vmatprep.subr.mxu0 0.0
      %675 = vmatpush1.msra.mxu0 %v645
      %676 = vmatprep.subr.mxu0 0.0
      %677 = vmatpush1.msra.mxu0 %v644
      %678 = vmatprep.subr.mxu0 0.0
      %679 = vmatpush1.msra.mxu0 %v643
      %680 = vmatprep.subr.mxu0 0.0
      %681 = vmatpush1.msra.mxu0 %v642
      %682 = vmatprep.subr.mxu0 0.0
      %683 = vmatpush1.msra.mxu0 %v641
      %684 = vmatprep.subr.mxu0 0.0
      %685 = vmatpush1.msra.mxu0 %v640
      %686 = vmatprep.subr.mxu0 0.0
      %687 = vmatpush1.msra.mxu0 %v639
      %688 = vmatprep.subr.mxu0 0.0
      %689 = vmatpush1.msra.mxu0 %v638
      %690 = vmatprep.subr.mxu0 0.0
      %691 = vmatpush1.msra.mxu0 %v637
      %692 = vmatprep.subr.mxu0 0.0
      %693 = vmatpush1.msra.mxu0 %v636
      %694 = vmatprep.subr.mxu0 0.0
      %695 = vmatpush1.msra.mxu0 %v635
      %696 = vmatprep.subr.mxu0 0.0
      %697 = vmatpush1.msra.mxu0 %v634
      %698 = vmatprep.subr.mxu0 0.0
      %699 = vmatpush2.msra.mxu0 %v665
      %700 = vmatprep.subr.mxu0 0.0
      %701 = vmatpush2.msra.mxu0 %v664
      %702 = vmatprep.subr.mxu0 0.0
      %703 = vmatpush2.msra.mxu0 %v663
      %704 = vmatprep.subr.mxu0 0.0
      %705 = vmatpush2.msra.mxu0 %v662
      %706 = vmatprep.subr.mxu0 0.0
      %707 = vmatpush2.msra.mxu0 %v661
      %708 = vmatprep.subr.mxu0 0.0
      %709 = vmatpush2.msra.mxu0 %v660
      %710 = vmatprep.subr.mxu0 0.0
      %711 = vmatpush2.msra.mxu0 %v659
      %712 = vmatprep.subr.mxu0 0.0
      %713 = vmatpush2.msra.mxu0 %v658
      %714 = vmatprep.subr.mxu0 0.0
      %715 = vmatpush2.msra.mxu0 %v657
      %716 = vmatprep.subr.mxu0 0.0
      %717 = vmatpush2.msra.mxu0 %v656
      %718 = vmatprep.subr.mxu0 0.0
      %719 = vmatpush2.msra.mxu0 %v655
      %720 = vmatprep.subr.mxu0 0.0
      %721 = vmatpush2.msra.mxu0 %v654
      %722 = vmatprep.subr.mxu0 0.0
      %723 = vmatpush2.msra.mxu0 %v653
      %724 = vmatprep.subr.mxu0 0.0
      %725 = vmatpush2.msra.mxu0 %v652
      %726 = vmatprep.subr.mxu0 0.0
      %727 = vmatpush2.msra.mxu0 %v651
      %728 = vmatprep.subr.mxu0 0.0
      %729 = vmatpush2.msra.mxu0 %v650
      %730 = vmatprep.mubr.f32.mxu0 %v631
      %731 = vmatmul.mubr.f32.gmra.mxu0 %v630
      %v732 = vpop.f32.mrf.mxu0
      %v733 = vadd.f32 0.0, %v732
      %v734 = vpop.f32.mrf.mxu0
      %735 = vdwg.mxu0
      %s736 = scalar_lea.vmem %s2, 16
      %v737 = vld [vmem:[%s736] sm:$0xff]
      %v738 = vld [vmem:[%s736 + $0x8] sm:$0xff]
      %s739 = scalar_lea.vmem %s1, 256
      %v740 = vld [vmem:[%s739] sm:$0xff]
      %v741 = vld [vmem:[%s739 + $0x8] sm:$0xff]
      %v742 = vld [vmem:[%s739 + $0x10] sm:$0xff]
      %v743 = vld [vmem:[%s739 + $0x18] sm:$0xff]
      %v744 = vld [vmem:[%s739 + $0x20] sm:$0xff]
      %v745 = vld [vmem:[%s739 + $0x28] sm:$0xff]
      %v746 = vld [vmem:[%s739 + $0x30] sm:$0xff]
      %v747 = vld [vmem:[%s739 + $0x38] sm:$0xff]
      %v748 = vld [vmem:[%s739 + $0x40] sm:$0xff]
      %v749 = vld [vmem:[%s739 + $0x48] sm:$0xff]
      %v750 = vld [vmem:[%s739 + $0x50] sm:$0xff]
      %v751 = vld [vmem:[%s739 + $0x58] sm:$0xff]
      %v752 = vld [vmem:[%s739 + $0x60] sm:$0xff]
      %v753 = vld [vmem:[%s739 + $0x68] sm:$0xff]
      %v754 = vld [vmem:[%s739 + $0x70] sm:$0xff]
      %v755 = vld [vmem:[%s739 + $0x78] sm:$0xff]
      %v756 = vld [vmem:[%s739 + $0x80] sm:$0xff]
      %v757 = vld [vmem:[%s739 + $0x88] sm:$0xff]
      %v758 = vld [vmem:[%s739 + $0x90] sm:$0xff]
      %v759 = vld [vmem:[%s739 + $0x98] sm:$0xff]
      %v760 = vld [vmem:[%s739 + $0xa0] sm:$0xff]
      %v761 = vld [vmem:[%s739 + $0xa8] sm:$0xff]
      %v762 = vld [vmem:[%s739 + $0xb0] sm:$0xff]
      %v763 = vld [vmem:[%s739 + $0xb8] sm:$0xff]
      %v764 = vld [vmem:[%s739 + $0xc0] sm:$0xff]
      %v765 = vld [vmem:[%s739 + $0xc8] sm:$0xff]
      %v766 = vld [vmem:[%s739 + $0xd0] sm:$0xff]
      %v767 = vld [vmem:[%s739 + $0xd8] sm:$0xff]
      %v768 = vld [vmem:[%s739 + $0xe0] sm:$0xff]
      %v769 = vld [vmem:[%s739 + $0xe8] sm:$0xff]
      %v770 = vld [vmem:[%s739 + $0xf0] sm:$0xff]
      %v771 = vld [vmem:[%s739 + $0xf8] sm:$0xff]
      %772 = vmatprep.subr.mxu0 0.0
      %773 = vmatpush1.msra.mxu0 %v755
      %774 = vmatprep.subr.mxu0 0.0
      %775 = vmatpush1.msra.mxu0 %v754
      %776 = vmatprep.subr.mxu0 0.0
      %777 = vmatpush1.msra.mxu0 %v753
      %778 = vmatprep.subr.mxu0 0.0
      %779 = vmatpush1.msra.mxu0 %v752
      %780 = vmatprep.subr.mxu0 0.0
      %781 = vmatpush1.msra.mxu0 %v751
      %782 = vmatprep.subr.mxu0 0.0
      %783 = vmatpush1.msra.mxu0 %v750
      %784 = vmatprep.subr.mxu0 0.0
      %785 = vmatpush1.msra.mxu0 %v749
      %786 = vmatprep.subr.mxu0 0.0
      %787 = vmatpush1.msra.mxu0 %v748
      %788 = vmatprep.subr.mxu0 0.0
      %789 = vmatpush1.msra.mxu0 %v747
      %790 = vmatprep.subr.mxu0 0.0
      %791 = vmatpush1.msra.mxu0 %v746
      %792 = vmatprep.subr.mxu0 0.0
      %793 = vmatpush1.msra.mxu0 %v745
      %794 = vmatprep.subr.mxu0 0.0
      %795 = vmatpush1.msra.mxu0 %v744
      %796 = vmatprep.subr.mxu0 0.0
      %797 = vmatpush1.msra.mxu0 %v743
      %798 = vmatprep.subr.mxu0 0.0
      %799 = vmatpush1.msra.mxu0 %v742
      %800 = vmatprep.subr.mxu0 0.0
      %801 = vmatpush1.msra.mxu0 %v741
      %802 = vmatprep.subr.mxu0 0.0
      %803 = vmatpush1.msra.mxu0 %v740
      %804 = vmatprep.subr.mxu0 0.0
      %805 = vmatpush2.msra.mxu0 %v771
      %806 = vmatprep.subr.mxu0 0.0
      %807 = vmatpush2.msra.mxu0 %v770
      %808 = vmatprep.subr.mxu0 0.0
      %809 = vmatpush2.msra.mxu0 %v769
      %810 = vmatprep.subr.mxu0 0.0
      %811 = vmatpush2.msra.mxu0 %v768
      %812 = vmatprep.subr.mxu0 0.0
      %813 = vmatpush2.msra.mxu0 %v767
      %814 = vmatprep.subr.mxu0 0.0
      %815 = vmatpush2.msra.mxu0 %v766
      %816 = vmatprep.subr.mxu0 0.0
      %817 = vmatpush2.msra.mxu0 %v765
      %818 = vmatprep.subr.mxu0 0.0
      %819 = vmatpush2.msra.mxu0 %v764
      %820 = vmatprep.subr.mxu0 0.0
      %821 = vmatpush2.msra.mxu0 %v763
      %822 = vmatprep.subr.mxu0 0.0
      %823 = vmatpush2.msra.mxu0 %v762
      %824 = vmatprep.subr.mxu0 0.0
      %825 = vmatpush2.msra.mxu0 %v761
      %826 = vmatprep.subr.mxu0 0.0
      %827 = vmatpush2.msra.mxu0 %v760
      %828 = vmatprep.subr.mxu0 0.0
      %829 = vmatpush2.msra.mxu0 %v759
      %830 = vmatprep.subr.mxu0 0.0
      %831 = vmatpush2.msra.mxu0 %v758
      %832 = vmatprep.subr.mxu0 0.0
      %833 = vmatpush2.msra.mxu0 %v757
      %834 = vmatprep.subr.mxu0 0.0
      %835 = vmatpush2.msra.mxu0 %v756
      %836 = vmatprep.mubr.f32.mxu0 %v631
      %837 = vmatmul.mubr.f32.gmra.mxu0 %v630
      %v838 = vpop.f32.mrf.mxu0
      %v839 = vadd.f32 0.0, %v838
      %v840 = vpop.f32.mrf.mxu0
      %841 = vdwg.mxu0
      %vm842 = vcmask 64512
      %v844 = vsel %vm842, %v737, 0
      %v847 = vsel %vm842, %v738, 0
      %849 = vmatprep.subr.mxu0 0.0
      %850 = vmatpush1.msra.mxu0 0.0
      %851 = vmatprep.subr.mxu0 0.0
      %852 = vmatpush1.msra.mxu0 0.0
      %853 = vmatprep.subr.mxu0 0.0
      %854 = vmatpush1.msra.mxu0 0.0
      %855 = vmatprep.subr.mxu0 0.0
      %856 = vmatpush1.msra.mxu0 0.0
      %857 = vmatprep.subr.mxu0 0.0
      %858 = vmatpush1.msra.mxu0 0.0
      %859 = vmatprep.subr.mxu0 0.0
      %860 = vmatpush1.msra.mxu0 0.0
      %861 = vmatprep.subr.mxu0 0.0
      %862 = vmatpush1.msra.mxu0 0.0
      %863 = vmatprep.subr.mxu0 0.0
      %864 = vmatpush1.msra.mxu0 0.0
      %865 = vmatprep.subr.mxu0 0.0
      %866 = vmatpush1.msra.mxu0 0.0
      %867 = vmatprep.subr.mxu0 0.0
      %868 = vmatpush1.msra.mxu0 0.0
      %869 = vmatprep.subr.mxu0 0.0
      %870 = vmatpush1.msra.mxu0 0.0
      %871 = vmatprep.subr.mxu0 0.0
      %872 = vmatpush1.msra.mxu0 0.0
      %873 = vmatprep.subr.mxu0 0.0
      %874 = vmatpush1.msra.mxu0 0.0
      %875 = vmatprep.subr.mxu0 0.0
      %876 = vmatpush1.msra.mxu0 0.0
      %877 = vmatprep.subr.mxu0 0.0
      %878 = vmatpush1.msra.mxu0 0.0
      %879 = vmatprep.subr.mxu0 0.0
      %880 = vmatpush1.msra.mxu0 %v839
      %881 = vmatprep.subr.mxu0 0.0
      %882 = vmatpush2.msra.mxu0 0.0
      %883 = vmatprep.subr.mxu0 0.0
      %884 = vmatpush2.msra.mxu0 0.0
      %885 = vmatprep.subr.mxu0 0.0
      %886 = vmatpush2.msra.mxu0 0.0
      %887 = vmatprep.subr.mxu0 0.0
      %888 = vmatpush2.msra.mxu0 0.0
      %889 = vmatprep.subr.mxu0 0.0
      %890 = vmatpush2.msra.mxu0 0.0
      %891 = vmatprep.subr.mxu0 0.0
      %892 = vmatpush2.msra.mxu0 0.0
      %893 = vmatprep.subr.mxu0 0.0
      %894 = vmatpush2.msra.mxu0 0.0
      %895 = vmatprep.subr.mxu0 0.0
      %896 = vmatpush2.msra.mxu0 0.0
      %897 = vmatprep.subr.mxu0 0.0
      %898 = vmatpush2.msra.mxu0 0.0
      %899 = vmatprep.subr.mxu0 0.0
      %900 = vmatpush2.msra.mxu0 0.0
      %901 = vmatprep.subr.mxu0 0.0
      %902 = vmatpush2.msra.mxu0 0.0
      %903 = vmatprep.subr.mxu0 0.0
      %904 = vmatpush2.msra.mxu0 0.0
      %905 = vmatprep.subr.mxu0 0.0
      %906 = vmatpush2.msra.mxu0 0.0
      %907 = vmatprep.subr.mxu0 0.0
      %908 = vmatpush2.msra.mxu0 0.0
      %909 = vmatprep.subr.mxu0 0.0
      %910 = vmatpush2.msra.mxu0 0.0
      %911 = vmatprep.subr.mxu0 0.0
      %912 = vmatpush2.msra.mxu0 0.0
      %913 = vmatprep.mubr.f32.mxu0 0.0
      %914 = vmatmul.mubr.f32.gmra.mxu0 %v844
      %v915 = vpop.f32.mrf.mxu0
      %v916 = vadd.f32 0.0, %v915
      %v917 = vpop.f32.mrf.mxu0
      %918 = vmatprep.mubr.f32.mxu0 0.0
      %919 = vmatmul.mubr.f32.gmra.mxu0 %v847
      %v920 = vpop.f32.mrf.mxu0
      %v921 = vadd.f32 0.0, %v920
      %v922 = vpop.f32.mrf.mxu0
      %923 = vdwg.mxu0
      %v925 = vsel %vm842, %v632, 0
      %v928 = vsel %vm842, %v633, 0
      %930 = vmatprep.subr.mxu0 0.0
      %931 = vmatpush1.msra.mxu0 0.0
      %932 = vmatprep.subr.mxu0 0.0
      %933 = vmatpush1.msra.mxu0 0.0
      %934 = vmatprep.subr.mxu0 0.0
      %935 = vmatpush1.msra.mxu0 0.0
      %936 = vmatprep.subr.mxu0 0.0
      %937 = vmatpush1.msra.mxu0 0.0
      %938 = vmatprep.subr.mxu0 0.0
      %939 = vmatpush1.msra.mxu0 0.0
      %940 = vmatprep.subr.mxu0 0.0
      %941 = vmatpush1.msra.mxu0 0.0
      %942 = vmatprep.subr.mxu0 0.0
      %943 = vmatpush1.msra.mxu0 0.0
      %944 = vmatprep.subr.mxu0 0.0
      %945 = vmatpush1.msra.mxu0 0.0
      %946 = vmatprep.subr.mxu0 0.0
      %947 = vmatpush1.msra.mxu0 0.0
      %948 = vmatprep.subr.mxu0 0.0
      %949 = vmatpush1.msra.mxu0 0.0
      %950 = vmatprep.subr.mxu0 0.0
      %951 = vmatpush1.msra.mxu0 0.0
      %952 = vmatprep.subr.mxu0 0.0
      %953 = vmatpush1.msra.mxu0 0.0
      %954 = vmatprep.subr.mxu0 0.0
      %955 = vmatpush1.msra.mxu0 0.0
      %956 = vmatprep.subr.mxu0 0.0
      %957 = vmatpush1.msra.mxu0 0.0
      %958 = vmatprep.subr.mxu0 0.0
      %959 = vmatpush1.msra.mxu0 0.0
      %960 = vmatprep.subr.mxu0 0.0
      %961 = vmatpush1.msra.mxu0 %v733
      %962 = vmatprep.subr.mxu0 0.0
      %963 = vmatpush2.msra.mxu0 0.0
      %964 = vmatprep.subr.mxu0 0.0
      %965 = vmatpush2.msra.mxu0 0.0
      %966 = vmatprep.subr.mxu0 0.0
      %967 = vmatpush2.msra.mxu0 0.0
      %968 = vmatprep.subr.mxu0 0.0
      %969 = vmatpush2.msra.mxu0 0.0
      %970 = vmatprep.subr.mxu0 0.0
      %971 = vmatpush2.msra.mxu0 0.0
      %972 = vmatprep.subr.mxu0 0.0
      %973 = vmatpush2.msra.mxu0 0.0
      %974 = vmatprep.subr.mxu0 0.0
      %975 = vmatpush2.msra.mxu0 0.0
      %976 = vmatprep.subr.mxu0 0.0
      %977 = vmatpush2.msra.mxu0 0.0
      %978 = vmatprep.subr.mxu0 0.0
      %979 = vmatpush2.msra.mxu0 0.0
      %980 = vmatprep.subr.mxu0 0.0
      %981 = vmatpush2.msra.mxu0 0.0
      %982 = vmatprep.subr.mxu0 0.0
      %983 = vmatpush2.msra.mxu0 0.0
      %984 = vmatprep.subr.mxu0 0.0
      %985 = vmatpush2.msra.mxu0 0.0
      %986 = vmatprep.subr.mxu0 0.0
      %987 = vmatpush2.msra.mxu0 0.0
      %988 = vmatprep.subr.mxu0 0.0
      %989 = vmatpush2.msra.mxu0 0.0
      %990 = vmatprep.subr.mxu0 0.0
      %991 = vmatpush2.msra.mxu0 0.0
      %992 = vmatprep.subr.mxu0 0.0
      %993 = vmatpush2.msra.mxu0 0.0
      %994 = vmatprep.mubr.f32.mxu0 0.0
      %995 = vmatmul.mubr.f32.gmra.mxu0 %v925
      %v996 = vpop.f32.mrf.mxu0
      %v997 = vadd.f32 %v916, %v996
      %v998 = vpop.f32.mrf.mxu0
      %999 = vmatprep.mubr.f32.mxu0 0.0
      %1000 = vmatmul.mubr.f32.gmra.mxu0 %v928
      %v1001 = vpop.f32.mrf.mxu0
      %v1002 = vadd.f32 %v921, %v1001
      %v1003 = vpop.f32.mrf.mxu0
      %1004 = vdwg.mxu0
      %s1005 = scalar_lea.vmem %s2, 32
      %v1006 = vld [vmem:[%s1005] sm:$0xff]
      %v1007 = vld [vmem:[%s1005 + $0x8] sm:$0xff]
      %s1008 = scalar_lea.vmem %s1, 512
      %v1009 = vld [vmem:[%s1008] sm:$0xff]
      %v1010 = vld [vmem:[%s1008 + $0x8] sm:$0xff]
      %v1011 = vld [vmem:[%s1008 + $0x10] sm:$0xff]
      %v1012 = vld [vmem:[%s1008 + $0x18] sm:$0xff]
      %v1013 = vld [vmem:[%s1008 + $0x20] sm:$0xff]
      %v1014 = vld [vmem:[%s1008 + $0x28] sm:$0xff]
      %v1015 = vld [vmem:[%s1008 + $0x30] sm:$0xff]
      %v1016 = vld [vmem:[%s1008 + $0x38] sm:$0xff]
      %v1017 = vld [vmem:[%s1008 + $0x40] sm:$0xff]
      %v1018 = vld [vmem:[%s1008 + $0x48] sm:$0xff]
      %v1019 = vld [vmem:[%s1008 + $0x50] sm:$0xff]
      %v1020 = vld [vmem:[%s1008 + $0x58] sm:$0xff]
      %v1021 = vld [vmem:[%s1008 + $0x60] sm:$0xff]
      %v1022 = vld [vmem:[%s1008 + $0x68] sm:$0xff]
      %v1023 = vld [vmem:[%s1008 + $0x70] sm:$0xff]
      %v1024 = vld [vmem:[%s1008 + $0x78] sm:$0xff]
      %v1025 = vld [vmem:[%s1008 + $0x80] sm:$0xff]
      %v1026 = vld [vmem:[%s1008 + $0x88] sm:$0xff]
      %v1027 = vld [vmem:[%s1008 + $0x90] sm:$0xff]
      %v1028 = vld [vmem:[%s1008 + $0x98] sm:$0xff]
      %v1029 = vld [vmem:[%s1008 + $0xa0] sm:$0xff]
      %v1030 = vld [vmem:[%s1008 + $0xa8] sm:$0xff]
      %v1031 = vld [vmem:[%s1008 + $0xb0] sm:$0xff]
      %v1032 = vld [vmem:[%s1008 + $0xb8] sm:$0xff]
      %v1033 = vld [vmem:[%s1008 + $0xc0] sm:$0xff]
      %v1034 = vld [vmem:[%s1008 + $0xc8] sm:$0xff]
      %v1035 = vld [vmem:[%s1008 + $0xd0] sm:$0xff]
      %v1036 = vld [vmem:[%s1008 + $0xd8] sm:$0xff]
      %v1037 = vld [vmem:[%s1008 + $0xe0] sm:$0xff]
      %v1038 = vld [vmem:[%s1008 + $0xe8] sm:$0xff]
      %v1039 = vld [vmem:[%s1008 + $0xf0] sm:$0xff]
      %v1040 = vld [vmem:[%s1008 + $0xf8] sm:$0xff]
      %1041 = vmatprep.subr.mxu0 0.0
      %1042 = vmatpush1.msra.mxu0 %v1024
      %1043 = vmatprep.subr.mxu0 0.0
      %1044 = vmatpush1.msra.mxu0 %v1023
      %1045 = vmatprep.subr.mxu0 0.0
      %1046 = vmatpush1.msra.mxu0 %v1022
      %1047 = vmatprep.subr.mxu0 0.0
      %1048 = vmatpush1.msra.mxu0 %v1021
      %1049 = vmatprep.subr.mxu0 0.0
      %1050 = vmatpush1.msra.mxu0 %v1020
      %1051 = vmatprep.subr.mxu0 0.0
      %1052 = vmatpush1.msra.mxu0 %v1019
      %1053 = vmatprep.subr.mxu0 0.0
      %1054 = vmatpush1.msra.mxu0 %v1018
      %1055 = vmatprep.subr.mxu0 0.0
      %1056 = vmatpush1.msra.mxu0 %v1017
      %1057 = vmatprep.subr.mxu0 0.0
      %1058 = vmatpush1.msra.mxu0 %v1016
      %1059 = vmatprep.subr.mxu0 0.0
      %1060 = vmatpush1.msra.mxu0 %v1015
      %1061 = vmatprep.subr.mxu0 0.0
      %1062 = vmatpush1.msra.mxu0 %v1014
      %1063 = vmatprep.subr.mxu0 0.0
      %1064 = vmatpush1.msra.mxu0 %v1013
      %1065 = vmatprep.subr.mxu0 0.0
      %1066 = vmatpush1.msra.mxu0 %v1012
      %1067 = vmatprep.subr.mxu0 0.0
      %1068 = vmatpush1.msra.mxu0 %v1011
      %1069 = vmatprep.subr.mxu0 0.0
      %1070 = vmatpush1.msra.mxu0 %v1010
      %1071 = vmatprep.subr.mxu0 0.0
      %1072 = vmatpush1.msra.mxu0 %v1009
      %1073 = vmatprep.subr.mxu0 0.0
      %1074 = vmatpush2.msra.mxu0 %v1040
      %1075 = vmatprep.subr.mxu0 0.0
      %1076 = vmatpush2.msra.mxu0 %v1039
      %1077 = vmatprep.subr.mxu0 0.0
      %1078 = vmatpush2.msra.mxu0 %v1038
      %1079 = vmatprep.subr.mxu0 0.0
      %1080 = vmatpush2.msra.mxu0 %v1037
      %1081 = vmatprep.subr.mxu0 0.0
      %1082 = vmatpush2.msra.mxu0 %v1036
      %1083 = vmatprep.subr.mxu0 0.0
      %1084 = vmatpush2.msra.mxu0 %v1035
      %1085 = vmatprep.subr.mxu0 0.0
      %1086 = vmatpush2.msra.mxu0 %v1034
      %1087 = vmatprep.subr.mxu0 0.0
      %1088 = vmatpush2.msra.mxu0 %v1033
      %1089 = vmatprep.subr.mxu0 0.0
      %1090 = vmatpush2.msra.mxu0 %v1032
      %1091 = vmatprep.subr.mxu0 0.0
      %1092 = vmatpush2.msra.mxu0 %v1031
      %1093 = vmatprep.subr.mxu0 0.0
      %1094 = vmatpush2.msra.mxu0 %v1030
      %1095 = vmatprep.subr.mxu0 0.0
      %1096 = vmatpush2.msra.mxu0 %v1029
      %1097 = vmatprep.subr.mxu0 0.0
      %1098 = vmatpush2.msra.mxu0 %v1028
      %1099 = vmatprep.subr.mxu0 0.0
      %1100 = vmatpush2.msra.mxu0 %v1027
      %1101 = vmatprep.subr.mxu0 0.0
      %1102 = vmatpush2.msra.mxu0 %v1026
      %1103 = vmatprep.subr.mxu0 0.0
      %1104 = vmatpush2.msra.mxu0 %v1025
      %1105 = vmatprep.mubr.f32.mxu0 %v631
      %1106 = vmatmul.mubr.f32.gmra.mxu0 %v630
      %v1107 = vpop.f32.mrf.mxu0
      %v1108 = vadd.f32 0.0, %v1107
      %v1109 = vpop.f32.mrf.mxu0
      %1110 = vdwg.mxu0
      %v1112 = vsel %vm842, %v1006, 0
      %v1115 = vsel %vm842, %v1007, 0
      %1117 = vmatprep.subr.mxu0 0.0
      %1118 = vmatpush1.msra.mxu0 0.0
      %1119 = vmatprep.subr.mxu0 0.0
      %1120 = vmatpush1.msra.mxu0 0.0
      %1121 = vmatprep.subr.mxu0 0.0
      %1122 = vmatpush1.msra.mxu0 0.0
      %1123 = vmatprep.subr.mxu0 0.0
      %1124 = vmatpush1.msra.mxu0 0.0
      %1125 = vmatprep.subr.mxu0 0.0
      %1126 = vmatpush1.msra.mxu0 0.0
      %1127 = vmatprep.subr.mxu0 0.0
      %1128 = vmatpush1.msra.mxu0 0.0
      %1129 = vmatprep.subr.mxu0 0.0
      %1130 = vmatpush1.msra.mxu0 0.0
      %1131 = vmatprep.subr.mxu0 0.0
      %1132 = vmatpush1.msra.mxu0 0.0
      %1133 = vmatprep.subr.mxu0 0.0
      %1134 = vmatpush1.msra.mxu0 0.0
      %1135 = vmatprep.subr.mxu0 0.0
      %1136 = vmatpush1.msra.mxu0 0.0
      %1137 = vmatprep.subr.mxu0 0.0
      %1138 = vmatpush1.msra.mxu0 0.0
      %1139 = vmatprep.subr.mxu0 0.0
      %1140 = vmatpush1.msra.mxu0 0.0
      %1141 = vmatprep.subr.mxu0 0.0
      %1142 = vmatpush1.msra.mxu0 0.0
      %1143 = vmatprep.subr.mxu0 0.0
      %1144 = vmatpush1.msra.mxu0 0.0
      %1145 = vmatprep.subr.mxu0 0.0
      %1146 = vmatpush1.msra.mxu0 0.0
      %1147 = vmatprep.subr.mxu0 0.0
      %1148 = vmatpush1.msra.mxu0 %v1108
      %1149 = vmatprep.subr.mxu0 0.0
      %1150 = vmatpush2.msra.mxu0 0.0
      %1151 = vmatprep.subr.mxu0 0.0
      %1152 = vmatpush2.msra.mxu0 0.0
      %1153 = vmatprep.subr.mxu0 0.0
      %1154 = vmatpush2.msra.mxu0 0.0
      %1155 = vmatprep.subr.mxu0 0.0
      %1156 = vmatpush2.msra.mxu0 0.0
      %1157 = vmatprep.subr.mxu0 0.0
      %1158 = vmatpush2.msra.mxu0 0.0
      %1159 = vmatprep.subr.mxu0 0.0
      %1160 = vmatpush2.msra.mxu0 0.0
      %1161 = vmatprep.subr.mxu0 0.0
      %1162 = vmatpush2.msra.mxu0 0.0
      %1163 = vmatprep.subr.mxu0 0.0
      %1164 = vmatpush2.msra.mxu0 0.0
      %1165 = vmatprep.subr.mxu0 0.0
      %1166 = vmatpush2.msra.mxu0 0.0
      %1167 = vmatprep.subr.mxu0 0.0
      %1168 = vmatpush2.msra.mxu0 0.0
      %1169 = vmatprep.subr.mxu0 0.0
      %1170 = vmatpush2.msra.mxu0 0.0
      %1171 = vmatprep.subr.mxu0 0.0
      %1172 = vmatpush2.msra.mxu0 0.0
      %1173 = vmatprep.subr.mxu0 0.0
      %1174 = vmatpush2.msra.mxu0 0.0
      %1175 = vmatprep.subr.mxu0 0.0
      %1176 = vmatpush2.msra.mxu0 0.0
      %1177 = vmatprep.subr.mxu0 0.0
      %1178 = vmatpush2.msra.mxu0 0.0
      %1179 = vmatprep.subr.mxu0 0.0
      %1180 = vmatpush2.msra.mxu0 0.0
      %1181 = vmatprep.mubr.f32.mxu0 0.0
      %1182 = vmatmul.mubr.f32.gmra.mxu0 %v1112
      %v1183 = vpop.f32.mrf.mxu0
      %v1184 = vadd.f32 0.0, %v1183
      %v1185 = vpop.f32.mrf.mxu0
      %1186 = vmatprep.mubr.f32.mxu0 0.0
      %1187 = vmatmul.mubr.f32.gmra.mxu0 %v1115
      %v1188 = vpop.f32.mrf.mxu0
      %v1189 = vadd.f32 0.0, %v1188
      %v1190 = vpop.f32.mrf.mxu0
      %1191 = vdwg.mxu0
      %v1192 = vadd.f32 %v997, %v1184
      %v1193 = vadd.f32 %v1002, %v1189
      %s1194 = scalar_lea.vmem %s2, 48
      %v1195 = vld [vmem:[%s1194] sm:$0xff]
      %v1196 = vld [vmem:[%s1194 + $0x8] sm:$0xff]
      %s1197 = scalar_lea.vmem %s1, 768
      %v1198 = vld [vmem:[%s1197] sm:$0xff]
      %v1199 = vld [vmem:[%s1197 + $0x8] sm:$0xff]
      %v1200 = vld [vmem:[%s1197 + $0x10] sm:$0xff]
      %v1201 = vld [vmem:[%s1197 + $0x18] sm:$0xff]
      %v1202 = vld [vmem:[%s1197 + $0x20] sm:$0xff]
      %v1203 = vld [vmem:[%s1197 + $0x28] sm:$0xff]
      %v1204 = vld [vmem:[%s1197 + $0x30] sm:$0xff]
      %v1205 = vld [vmem:[%s1197 + $0x38] sm:$0xff]
      %v1206 = vld [vmem:[%s1197 + $0x40] sm:$0xff]
      %v1207 = vld [vmem:[%s1197 + $0x48] sm:$0xff]
      %v1208 = vld [vmem:[%s1197 + $0x50] sm:$0xff]
      %v1209 = vld [vmem:[%s1197 + $0x58] sm:$0xff]
      %v1210 = vld [vmem:[%s1197 + $0x60] sm:$0xff]
      %v1211 = vld [vmem:[%s1197 + $0x68] sm:$0xff]
      %v1212 = vld [vmem:[%s1197 + $0x70] sm:$0xff]
      %v1213 = vld [vmem:[%s1197 + $0x78] sm:$0xff]
      %v1214 = vld [vmem:[%s1197 + $0x80] sm:$0xff]
      %v1215 = vld [vmem:[%s1197 + $0x88] sm:$0xff]
      %v1216 = vld [vmem:[%s1197 + $0x90] sm:$0xff]
      %v1217 = vld [vmem:[%s1197 + $0x98] sm:$0xff]
      %v1218 = vld [vmem:[%s1197 + $0xa0] sm:$0xff]
      %v1219 = vld [vmem:[%s1197 + $0xa8] sm:$0xff]
      %v1220 = vld [vmem:[%s1197 + $0xb0] sm:$0xff]
      %v1221 = vld [vmem:[%s1197 + $0xb8] sm:$0xff]
      %v1222 = vld [vmem:[%s1197 + $0xc0] sm:$0xff]
      %v1223 = vld [vmem:[%s1197 + $0xc8] sm:$0xff]
      %v1224 = vld [vmem:[%s1197 + $0xd0] sm:$0xff]
      %v1225 = vld [vmem:[%s1197 + $0xd8] sm:$0xff]
      %v1226 = vld [vmem:[%s1197 + $0xe0] sm:$0xff]
      %v1227 = vld [vmem:[%s1197 + $0xe8] sm:$0xff]
      %v1228 = vld [vmem:[%s1197 + $0xf0] sm:$0xff]
      %v1229 = vld [vmem:[%s1197 + $0xf8] sm:$0xff]
      %1230 = vmatprep.subr.mxu0 0.0
      %1231 = vmatpush1.msra.mxu0 %v1213
      %1232 = vmatprep.subr.mxu0 0.0
      %1233 = vmatpush1.msra.mxu0 %v1212
      %1234 = vmatprep.subr.mxu0 0.0
      %1235 = vmatpush1.msra.mxu0 %v1211
      %1236 = vmatprep.subr.mxu0 0.0
      %1237 = vmatpush1.msra.mxu0 %v1210
      %1238 = vmatprep.subr.mxu0 0.0
      %1239 = vmatpush1.msra.mxu0 %v1209
      %1240 = vmatprep.subr.mxu0 0.0
      %1241 = vmatpush1.msra.mxu0 %v1208
      %1242 = vmatprep.subr.mxu0 0.0
      %1243 = vmatpush1.msra.mxu0 %v1207
      %1244 = vmatprep.subr.mxu0 0.0
      %1245 = vmatpush1.msra.mxu0 %v1206
      %1246 = vmatprep.subr.mxu0 0.0
      %1247 = vmatpush1.msra.mxu0 %v1205
      %1248 = vmatprep.subr.mxu0 0.0
      %1249 = vmatpush1.msra.mxu0 %v1204
      %1250 = vmatprep.subr.mxu0 0.0
      %1251 = vmatpush1.msra.mxu0 %v1203
      %1252 = vmatprep.subr.mxu0 0.0
      %1253 = vmatpush1.msra.mxu0 %v1202
      %1254 = vmatprep.subr.mxu0 0.0
      %1255 = vmatpush1.msra.mxu0 %v1201
      %1256 = vmatprep.subr.mxu0 0.0
      %1257 = vmatpush1.msra.mxu0 %v1200
      %1258 = vmatprep.subr.mxu0 0.0
      %1259 = vmatpush1.msra.mxu0 %v1199
      %1260 = vmatprep.subr.mxu0 0.0
      %1261 = vmatpush1.msra.mxu0 %v1198
      %1262 = vmatprep.subr.mxu0 0.0
      %1263 = vmatpush2.msra.mxu0 %v1229
      %1264 = vmatprep.subr.mxu0 0.0
      %1265 = vmatpush2.msra.mxu0 %v1228
      %1266 = vmatprep.subr.mxu0 0.0
      %1267 = vmatpush2.msra.mxu0 %v1227
      %1268 = vmatprep.subr.mxu0 0.0
      %1269 = vmatpush2.msra.mxu0 %v1226
      %1270 = vmatprep.subr.mxu0 0.0
      %1271 = vmatpush2.msra.mxu0 %v1225
      %1272 = vmatprep.subr.mxu0 0.0
      %1273 = vmatpush2.msra.mxu0 %v1224
      %1274 = vmatprep.subr.mxu0 0.0
      %1275 = vmatpush2.msra.mxu0 %v1223
      %1276 = vmatprep.subr.mxu0 0.0
      %1277 = vmatpush2.msra.mxu0 %v1222
      %1278 = vmatprep.subr.mxu0 0.0
      %1279 = vmatpush2.msra.mxu0 %v1221
      %1280 = vmatprep.subr.mxu0 0.0
      %1281 = vmatpush2.msra.mxu0 %v1220
      %1282 = vmatprep.subr.mxu0 0.0
      %1283 = vmatpush2.msra.mxu0 %v1219
      %1284 = vmatprep.subr.mxu0 0.0
      %1285 = vmatpush2.msra.mxu0 %v1218
      %1286 = vmatprep.subr.mxu0 0.0
      %1287 = vmatpush2.msra.mxu0 %v1217
      %1288 = vmatprep.subr.mxu0 0.0
      %1289 = vmatpush2.msra.mxu0 %v1216
      %1290 = vmatprep.subr.mxu0 0.0
      %1291 = vmatpush2.msra.mxu0 %v1215
      %1292 = vmatprep.subr.mxu0 0.0
      %1293 = vmatpush2.msra.mxu0 %v1214
      %1294 = vmatprep.mubr.f32.mxu0 %v631
      %1295 = vmatmul.mubr.f32.gmra.mxu0 %v630
      %v1296 = vpop.f32.mrf.mxu0
      %v1297 = vadd.f32 0.0, %v1296
      %v1298 = vpop.f32.mrf.mxu0
      %1299 = vdwg.mxu0
      %v1301 = vsel %vm842, %v1195, 0
      %v1304 = vsel %vm842, %v1196, 0
      %1306 = vmatprep.subr.mxu0 0.0
      %1307 = vmatpush1.msra.mxu0 0.0
      %1308 = vmatprep.subr.mxu0 0.0
      %1309 = vmatpush1.msra.mxu0 0.0
      %1310 = vmatprep.subr.mxu0 0.0
      %1311 = vmatpush1.msra.mxu0 0.0
      %1312 = vmatprep.subr.mxu0 0.0
      %1313 = vmatpush1.msra.mxu0 0.0
      %1314 = vmatprep.subr.mxu0 0.0
      %1315 = vmatpush1.msra.mxu0 0.0
      %1316 = vmatprep.subr.mxu0 0.0
      %1317 = vmatpush1.msra.mxu0 0.0
      %1318 = vmatprep.subr.mxu0 0.0
      %1319 = vmatpush1.msra.mxu0 0.0
      %1320 = vmatprep.subr.mxu0 0.0
      %1321 = vmatpush1.msra.mxu0 0.0
      %1322 = vmatprep.subr.mxu0 0.0
      %1323 = vmatpush1.msra.mxu0 0.0
      %1324 = vmatprep.subr.mxu0 0.0
      %1325 = vmatpush1.msra.mxu0 0.0
      %1326 = vmatprep.subr.mxu0 0.0
      %1327 = vmatpush1.msra.mxu0 0.0
      %1328 = vmatprep.subr.mxu0 0.0
      %1329 = vmatpush1.msra.mxu0 0.0
      %1330 = vmatprep.subr.mxu0 0.0
      %1331 = vmatpush1.msra.mxu0 0.0
      %1332 = vmatprep.subr.mxu0 0.0
      %1333 = vmatpush1.msra.mxu0 0.0
      %1334 = vmatprep.subr.mxu0 0.0
      %1335 = vmatpush1.msra.mxu0 0.0
      %1336 = vmatprep.subr.mxu0 0.0
      %1337 = vmatpush1.msra.mxu0 %v1297
      %1338 = vmatprep.subr.mxu0 0.0
      %1339 = vmatpush2.msra.mxu0 0.0
      %1340 = vmatprep.subr.mxu0 0.0
      %1341 = vmatpush2.msra.mxu0 0.0
      %1342 = vmatprep.subr.mxu0 0.0
      %1343 = vmatpush2.msra.mxu0 0.0
      %1344 = vmatprep.subr.mxu0 0.0
      %1345 = vmatpush2.msra.mxu0 0.0
      %1346 = vmatprep.subr.mxu0 0.0
      %1347 = vmatpush2.msra.mxu0 0.0
      %1348 = vmatprep.subr.mxu0 0.0
      %1349 = vmatpush2.msra.mxu0 0.0
      %1350 = vmatprep.subr.mxu0 0.0
      %1351 = vmatpush2.msra.mxu0 0.0
      %1352 = vmatprep.subr.mxu0 0.0
      %1353 = vmatpush2.msra.mxu0 0.0
      %1354 = vmatprep.subr.mxu0 0.0
      %1355 = vmatpush2.msra.mxu0 0.0
      %1356 = vmatprep.subr.mxu0 0.0
      %1357 = vmatpush2.msra.mxu0 0.0
      %1358 = vmatprep.subr.mxu0 0.0
      %1359 = vmatpush2.msra.mxu0 0.0
      %1360 = vmatprep.subr.mxu0 0.0
      %1361 = vmatpush2.msra.mxu0 0.0
      %1362 = vmatprep.subr.mxu0 0.0
      %1363 = vmatpush2.msra.mxu0 0.0
      %1364 = vmatprep.subr.mxu0 0.0
      %1365 = vmatpush2.msra.mxu0 0.0
      %1366 = vmatprep.subr.mxu0 0.0
      %1367 = vmatpush2.msra.mxu0 0.0
      %1368 = vmatprep.subr.mxu0 0.0
      %1369 = vmatpush2.msra.mxu0 0.0
      %1370 = vmatprep.mubr.f32.mxu0 0.0
      %1371 = vmatmul.mubr.f32.gmra.mxu0 %v1301
      %v1372 = vpop.f32.mrf.mxu0
      %v1373 = vadd.f32 0.0, %v1372
      %v1374 = vpop.f32.mrf.mxu0
      %1375 = vmatprep.mubr.f32.mxu0 0.0
      %1376 = vmatmul.mubr.f32.gmra.mxu0 %v1304
      %v1377 = vpop.f32.mrf.mxu0
      %v1378 = vadd.f32 0.0, %v1377
      %v1379 = vpop.f32.mrf.mxu0
      %1380 = vdwg.mxu0
      %v1381 = vadd.f32 %v1192, %v1373
      %v1382 = vadd.f32 %v1193, %v1378
      %s1383 = scalar_lea.vmem %s2, 64
      %v1384 = vld [vmem:[%s1383] sm:$0xff]
      %v1385 = vld [vmem:[%s1383 + $0x8] sm:$0xff]
      %s1386 = scalar_lea.vmem %s1, 1024
      %v1387 = vld [vmem:[%s1386] sm:$0xff]
      %v1388 = vld [vmem:[%s1386 + $0x8] sm:$0xff]
      %v1389 = vld [vmem:[%s1386 + $0x10] sm:$0xff]
      %v1390 = vld [vmem:[%s1386 + $0x18] sm:$0xff]
      %v1391 = vld [vmem:[%s1386 + $0x20] sm:$0xff]
      %v1392 = vld [vmem:[%s1386 + $0x28] sm:$0xff]
      %v1393 = vld [vmem:[%s1386 + $0x30] sm:$0xff]
      %v1394 = vld [vmem:[%s1386 + $0x38] sm:$0xff]
      %v1395 = vld [vmem:[%s1386 + $0x40] sm:$0xff]
      %v1396 = vld [vmem:[%s1386 + $0x48] sm:$0xff]
      %v1397 = vld [vmem:[%s1386 + $0x50] sm:$0xff]
      %v1398 = vld [vmem:[%s1386 + $0x58] sm:$0xff]
      %v1399 = vld [vmem:[%s1386 + $0x60] sm:$0xff]
      %v1400 = vld [vmem:[%s1386 + $0x68] sm:$0xff]
      %v1401 = vld [vmem:[%s1386 + $0x70] sm:$0xff]
      %v1402 = vld [vmem:[%s1386 + $0x78] sm:$0xff]
      %v1403 = vld [vmem:[%s1386 + $0x80] sm:$0xff]
      %v1404 = vld [vmem:[%s1386 + $0x88] sm:$0xff]
      %v1405 = vld [vmem:[%s1386 + $0x90] sm:$0xff]
      %v1406 = vld [vmem:[%s1386 + $0x98] sm:$0xff]
      %v1407 = vld [vmem:[%s1386 + $0xa0] sm:$0xff]
      %v1408 = vld [vmem:[%s1386 + $0xa8] sm:$0xff]
      %v1409 = vld [vmem:[%s1386 + $0xb0] sm:$0xff]
      %v1410 = vld [vmem:[%s1386 + $0xb8] sm:$0xff]
      %v1411 = vld [vmem:[%s1386 + $0xc0] sm:$0xff]
      %v1412 = vld [vmem:[%s1386 + $0xc8] sm:$0xff]
      %v1413 = vld [vmem:[%s1386 + $0xd0] sm:$0xff]
      %v1414 = vld [vmem:[%s1386 + $0xd8] sm:$0xff]
      %v1415 = vld [vmem:[%s1386 + $0xe0] sm:$0xff]
      %v1416 = vld [vmem:[%s1386 + $0xe8] sm:$0xff]
      %v1417 = vld [vmem:[%s1386 + $0xf0] sm:$0xff]
      %v1418 = vld [vmem:[%s1386 + $0xf8] sm:$0xff]
      %1419 = vmatprep.subr.mxu0 0.0
      %1420 = vmatpush1.msra.mxu0 %v1402
      %1421 = vmatprep.subr.mxu0 0.0
      %1422 = vmatpush1.msra.mxu0 %v1401
      %1423 = vmatprep.subr.mxu0 0.0
      %1424 = vmatpush1.msra.mxu0 %v1400
      %1425 = vmatprep.subr.mxu0 0.0
      %1426 = vmatpush1.msra.mxu0 %v1399
      %1427 = vmatprep.subr.mxu0 0.0
      %1428 = vmatpush1.msra.mxu0 %v1398
      %1429 = vmatprep.subr.mxu0 0.0
      %1430 = vmatpush1.msra.mxu0 %v1397
      %1431 = vmatprep.subr.mxu0 0.0
      %1432 = vmatpush1.msra.mxu0 %v1396
      %1433 = vmatprep.subr.mxu0 0.0
      %1434 = vmatpush1.msra.mxu0 %v1395
      %1435 = vmatprep.subr.mxu0 0.0
      %1436 = vmatpush1.msra.mxu0 %v1394
      %1437 = vmatprep.subr.mxu0 0.0
      %1438 = vmatpush1.msra.mxu0 %v1393
      %1439 = vmatprep.subr.mxu0 0.0
      %1440 = vmatpush1.msra.mxu0 %v1392
      %1441 = vmatprep.subr.mxu0 0.0
      %1442 = vmatpush1.msra.mxu0 %v1391
      %1443 = vmatprep.subr.mxu0 0.0
      %1444 = vmatpush1.msra.mxu0 %v1390
      %1445 = vmatprep.subr.mxu0 0.0
      %1446 = vmatpush1.msra.mxu0 %v1389
      %1447 = vmatprep.subr.mxu0 0.0
      %1448 = vmatpush1.msra.mxu0 %v1388
      %1449 = vmatprep.subr.mxu0 0.0
      %1450 = vmatpush1.msra.mxu0 %v1387
      %1451 = vmatprep.subr.mxu0 0.0
      %1452 = vmatpush2.msra.mxu0 %v1418
      %1453 = vmatprep.subr.mxu0 0.0
      %1454 = vmatpush2.msra.mxu0 %v1417
      %1455 = vmatprep.subr.mxu0 0.0
      %1456 = vmatpush2.msra.mxu0 %v1416
      %1457 = vmatprep.subr.mxu0 0.0
      %1458 = vmatpush2.msra.mxu0 %v1415
      %1459 = vmatprep.subr.mxu0 0.0
      %1460 = vmatpush2.msra.mxu0 %v1414
      %1461 = vmatprep.subr.mxu0 0.0
      %1462 = vmatpush2.msra.mxu0 %v1413
      %1463 = vmatprep.subr.mxu0 0.0
      %1464 = vmatpush2.msra.mxu0 %v1412
      %1465 = vmatprep.subr.mxu0 0.0
      %1466 = vmatpush2.msra.mxu0 %v1411
      %1467 = vmatprep.subr.mxu0 0.0
      %1468 = vmatpush2.msra.mxu0 %v1410
      %1469 = vmatprep.subr.mxu0 0.0
      %1470 = vmatpush2.msra.mxu0 %v1409
      %1471 = vmatprep.subr.mxu0 0.0
      %1472 = vmatpush2.msra.mxu0 %v1408
      %1473 = vmatprep.subr.mxu0 0.0
      %1474 = vmatpush2.msra.mxu0 %v1407
      %1475 = vmatprep.subr.mxu0 0.0
      %1476 = vmatpush2.msra.mxu0 %v1406
      %1477 = vmatprep.subr.mxu0 0.0
      %1478 = vmatpush2.msra.mxu0 %v1405
      %1479 = vmatprep.subr.mxu0 0.0
      %1480 = vmatpush2.msra.mxu0 %v1404
      %1481 = vmatprep.subr.mxu0 0.0
      %1482 = vmatpush2.msra.mxu0 %v1403
      %1483 = vmatprep.mubr.f32.mxu0 %v631
      %1484 = vmatmul.mubr.f32.gmra.mxu0 %v630
      %v1485 = vpop.f32.mrf.mxu0
      %v1486 = vadd.f32 0.0, %v1485
      %v1487 = vpop.f32.mrf.mxu0
      %1488 = vdwg.mxu0
      %v1490 = vsel %vm842, %v1384, 0
      %v1493 = vsel %vm842, %v1385, 0
      %1495 = vmatprep.subr.mxu0 0.0
      %1496 = vmatpush1.msra.mxu0 0.0
      %1497 = vmatprep.subr.mxu0 0.0
      %1498 = vmatpush1.msra.mxu0 0.0
      %1499 = vmatprep.subr.mxu0 0.0
      %1500 = vmatpush1.msra.mxu0 0.0
      %1501 = vmatprep.subr.mxu0 0.0
      %1502 = vmatpush1.msra.mxu0 0.0
      %1503 = vmatprep.subr.mxu0 0.0
      %1504 = vmatpush1.msra.mxu0 0.0
      %1505 = vmatprep.subr.mxu0 0.0
      %1506 = vmatpush1.msra.mxu0 0.0
      %1507 = vmatprep.subr.mxu0 0.0
      %1508 = vmatpush1.msra.mxu0 0.0
      %1509 = vmatprep.subr.mxu0 0.0
      %1510 = vmatpush1.msra.mxu0 0.0
      %1511 = vmatprep.subr.mxu0 0.0
      %1512 = vmatpush1.msra.mxu0 0.0
      %1513 = vmatprep.subr.mxu0 0.0
      %1514 = vmatpush1.msra.mxu0 0.0
      %1515 = vmatprep.subr.mxu0 0.0
      %1516 = vmatpush1.msra.mxu0 0.0
      %1517 = vmatprep.subr.mxu0 0.0
      %1518 = vmatpush1.msra.mxu0 0.0
      %1519 = vmatprep.subr.mxu0 0.0
      %1520 = vmatpush1.msra.mxu0 0.0
      %1521 = vmatprep.subr.mxu0 0.0
      %1522 = vmatpush1.msra.mxu0 0.0
      %1523 = vmatprep.subr.mxu0 0.0
      %1524 = vmatpush1.msra.mxu0 0.0
      %1525 = vmatprep.subr.mxu0 0.0
      %1526 = vmatpush1.msra.mxu0 %v1486
      %1527 = vmatprep.subr.mxu0 0.0
      %1528 = vmatpush2.msra.mxu0 0.0
      %1529 = vmatprep.subr.mxu0 0.0
      %1530 = vmatpush2.msra.mxu0 0.0
      %1531 = vmatprep.subr.mxu0 0.0
      %1532 = vmatpush2.msra.mxu0 0.0
      %1533 = vmatprep.subr.mxu0 0.0
      %1534 = vmatpush2.msra.mxu0 0.0
      %1535 = vmatprep.subr.mxu0 0.0
      %1536 = vmatpush2.msra.mxu0 0.0
      %1537 = vmatprep.subr.mxu0 0.0
      %1538 = vmatpush2.msra.mxu0 0.0
      %1539 = vmatprep.subr.mxu0 0.0
      %1540 = vmatpush2.msra.mxu0 0.0
      %1541 = vmatprep.subr.mxu0 0.0
      %1542 = vmatpush2.msra.mxu0 0.0
      %1543 = vmatprep.subr.mxu0 0.0
      %1544 = vmatpush2.msra.mxu0 0.0
      %1545 = vmatprep.subr.mxu0 0.0
      %1546 = vmatpush2.msra.mxu0 0.0
      %1547 = vmatprep.subr.mxu0 0.0
      %1548 = vmatpush2.msra.mxu0 0.0
      %1549 = vmatprep.subr.mxu0 0.0
      %1550 = vmatpush2.msra.mxu0 0.0
      %1551 = vmatprep.subr.mxu0 0.0
      %1552 = vmatpush2.msra.mxu0 0.0
      %1553 = vmatprep.subr.mxu0 0.0
      %1554 = vmatpush2.msra.mxu0 0.0
      %1555 = vmatprep.subr.mxu0 0.0
      %1556 = vmatpush2.msra.mxu0 0.0
      %1557 = vmatprep.subr.mxu0 0.0
      %1558 = vmatpush2.msra.mxu0 0.0
      %1559 = vmatprep.mubr.f32.mxu0 0.0
      %1560 = vmatmul.mubr.f32.gmra.mxu0 %v1490
      %v1561 = vpop.f32.mrf.mxu0
      %v1562 = vadd.f32 0.0, %v1561
      %v1563 = vpop.f32.mrf.mxu0
      %1564 = vmatprep.mubr.f32.mxu0 0.0
      %1565 = vmatmul.mubr.f32.gmra.mxu0 %v1493
      %v1566 = vpop.f32.mrf.mxu0
      %v1567 = vadd.f32 0.0, %v1566
      %v1568 = vpop.f32.mrf.mxu0
      %1569 = vdwg.mxu0
      %v1570 = vadd.f32 %v1381, %v1562
      %v1571 = vadd.f32 %v1382, %v1567
      %s1572 = scalar_lea.vmem %s2, 80
      %v1573 = vld [vmem:[%s1572] sm:$0xff]
      %v1574 = vld [vmem:[%s1572 + $0x8] sm:$0xff]
      %s1575 = scalar_lea.vmem %s1, 1280
      %v1576 = vld [vmem:[%s1575] sm:$0xff]
      %v1577 = vld [vmem:[%s1575 + $0x8] sm:$0xff]
      %v1578 = vld [vmem:[%s1575 + $0x10] sm:$0xff]
      %v1579 = vld [vmem:[%s1575 + $0x18] sm:$0xff]
      %v1580 = vld [vmem:[%s1575 + $0x20] sm:$0xff]
      %v1581 = vld [vmem:[%s1575 + $0x28] sm:$0xff]
      %v1582 = vld [vmem:[%s1575 + $0x30] sm:$0xff]
      %v1583 = vld [vmem:[%s1575 + $0x38] sm:$0xff]
      %v1584 = vld [vmem:[%s1575 + $0x40] sm:$0xff]
      %v1585 = vld [vmem:[%s1575 + $0x48] sm:$0xff]
      %v1586 = vld [vmem:[%s1575 + $0x50] sm:$0xff]
      %v1587 = vld [vmem:[%s1575 + $0x58] sm:$0xff]
      %v1588 = vld [vmem:[%s1575 + $0x60] sm:$0xff]
      %v1589 = vld [vmem:[%s1575 + $0x68] sm:$0xff]
      %v1590 = vld [vmem:[%s1575 + $0x70] sm:$0xff]
      %v1591 = vld [vmem:[%s1575 + $0x78] sm:$0xff]
      %v1592 = vld [vmem:[%s1575 + $0x80] sm:$0xff]
      %v1593 = vld [vmem:[%s1575 + $0x88] sm:$0xff]
      %v1594 = vld [vmem:[%s1575 + $0x90] sm:$0xff]
      %v1595 = vld [vmem:[%s1575 + $0x98] sm:$0xff]
      %v1596 = vld [vmem:[%s1575 + $0xa0] sm:$0xff]
      %v1597 = vld [vmem:[%s1575 + $0xa8] sm:$0xff]
      %v1598 = vld [vmem:[%s1575 + $0xb0] sm:$0xff]
      %v1599 = vld [vmem:[%s1575 + $0xb8] sm:$0xff]
      %v1600 = vld [vmem:[%s1575 + $0xc0] sm:$0xff]
      %v1601 = vld [vmem:[%s1575 + $0xc8] sm:$0xff]
      %v1602 = vld [vmem:[%s1575 + $0xd0] sm:$0xff]
      %v1603 = vld [vmem:[%s1575 + $0xd8] sm:$0xff]
      %v1604 = vld [vmem:[%s1575 + $0xe0] sm:$0xff]
      %v1605 = vld [vmem:[%s1575 + $0xe8] sm:$0xff]
      %v1606 = vld [vmem:[%s1575 + $0xf0] sm:$0xff]
      %v1607 = vld [vmem:[%s1575 + $0xf8] sm:$0xff]
      %1608 = vmatprep.subr.mxu0 0.0
      %1609 = vmatpush1.msra.mxu0 %v1591
      %1610 = vmatprep.subr.mxu0 0.0
      %1611 = vmatpush1.msra.mxu0 %v1590
      %1612 = vmatprep.subr.mxu0 0.0
      %1613 = vmatpush1.msra.mxu0 %v1589
      %1614 = vmatprep.subr.mxu0 0.0
      %1615 = vmatpush1.msra.mxu0 %v1588
      %1616 = vmatprep.subr.mxu0 0.0
      %1617 = vmatpush1.msra.mxu0 %v1587
      %1618 = vmatprep.subr.mxu0 0.0
      %1619 = vmatpush1.msra.mxu0 %v1586
      %1620 = vmatprep.subr.mxu0 0.0
      %1621 = vmatpush1.msra.mxu0 %v1585
      %1622 = vmatprep.subr.mxu0 0.0
      %1623 = vmatpush1.msra.mxu0 %v1584
      %1624 = vmatprep.subr.mxu0 0.0
      %1625 = vmatpush1.msra.mxu0 %v1583
      %1626 = vmatprep.subr.mxu0 0.0
      %1627 = vmatpush1.msra.mxu0 %v1582
      %1628 = vmatprep.subr.mxu0 0.0
      %1629 = vmatpush1.msra.mxu0 %v1581
      %1630 = vmatprep.subr.mxu0 0.0
      %1631 = vmatpush1.msra.mxu0 %v1580
      %1632 = vmatprep.subr.mxu0 0.0
      %1633 = vmatpush1.msra.mxu0 %v1579
      %1634 = vmatprep.subr.mxu0 0.0
      %1635 = vmatpush1.msra.mxu0 %v1578
      %1636 = vmatprep.subr.mxu0 0.0
      %1637 = vmatpush1.msra.mxu0 %v1577
      %1638 = vmatprep.subr.mxu0 0.0
      %1639 = vmatpush1.msra.mxu0 %v1576
      %1640 = vmatprep.subr.mxu0 0.0
      %1641 = vmatpush2.msra.mxu0 %v1607
      %1642 = vmatprep.subr.mxu0 0.0
      %1643 = vmatpush2.msra.mxu0 %v1606
      %1644 = vmatprep.subr.mxu0 0.0
      %1645 = vmatpush2.msra.mxu0 %v1605
      %1646 = vmatprep.subr.mxu0 0.0
      %1647 = vmatpush2.msra.mxu0 %v1604
      %1648 = vmatprep.subr.mxu0 0.0
      %1649 = vmatpush2.msra.mxu0 %v1603
      %1650 = vmatprep.subr.mxu0 0.0
      %1651 = vmatpush2.msra.mxu0 %v1602
      %1652 = vmatprep.subr.mxu0 0.0
      %1653 = vmatpush2.msra.mxu0 %v1601
      %1654 = vmatprep.subr.mxu0 0.0
      %1655 = vmatpush2.msra.mxu0 %v1600
      %1656 = vmatprep.subr.mxu0 0.0
      %1657 = vmatpush2.msra.mxu0 %v1599
      %1658 = vmatprep.subr.mxu0 0.0
      %1659 = vmatpush2.msra.mxu0 %v1598
      %1660 = vmatprep.subr.mxu0 0.0
      %1661 = vmatpush2.msra.mxu0 %v1597
      %1662 = vmatprep.subr.mxu0 0.0
      %1663 = vmatpush2.msra.mxu0 %v1596
      %1664 = vmatprep.subr.mxu0 0.0
      %1665 = vmatpush2.msra.mxu0 %v1595
      %1666 = vmatprep.subr.mxu0 0.0
      %1667 = vmatpush2.msra.mxu0 %v1594
      %1668 = vmatprep.subr.mxu0 0.0
      %1669 = vmatpush2.msra.mxu0 %v1593
      %1670 = vmatprep.subr.mxu0 0.0
      %1671 = vmatpush2.msra.mxu0 %v1592
      %1672 = vmatprep.mubr.f32.mxu0 %v631
      %1673 = vmatmul.mubr.f32.gmra.mxu0 %v630
      %v1674 = vpop.f32.mrf.mxu0
      %v1675 = vadd.f32 0.0, %v1674
      %v1676 = vpop.f32.mrf.mxu0
      %1677 = vdwg.mxu0
      %v1679 = vsel %vm842, %v1573, 0
      %v1682 = vsel %vm842, %v1574, 0
      %1684 = vmatprep.subr.mxu0 0.0
      %1685 = vmatpush1.msra.mxu0 0.0
      %1686 = vmatprep.subr.mxu0 0.0
      %1687 = vmatpush1.msra.mxu0 0.0
      %1688 = vmatprep.subr.mxu0 0.0
      %1689 = vmatpush1.msra.mxu0 0.0
      %1690 = vmatprep.subr.mxu0 0.0
      %1691 = vmatpush1.msra.mxu0 0.0
      %1692 = vmatprep.subr.mxu0 0.0
      %1693 = vmatpush1.msra.mxu0 0.0
      %1694 = vmatprep.subr.mxu0 0.0
      %1695 = vmatpush1.msra.mxu0 0.0
      %1696 = vmatprep.subr.mxu0 0.0
      %1697 = vmatpush1.msra.mxu0 0.0
      %1698 = vmatprep.subr.mxu0 0.0
      %1699 = vmatpush1.msra.mxu0 0.0
      %1700 = vmatprep.subr.mxu0 0.0
      %1701 = vmatpush1.msra.mxu0 0.0
      %1702 = vmatprep.subr.mxu0 0.0
      %1703 = vmatpush1.msra.mxu0 0.0
      %1704 = vmatprep.subr.mxu0 0.0
      %1705 = vmatpush1.msra.mxu0 0.0
      %1706 = vmatprep.subr.mxu0 0.0
      %1707 = vmatpush1.msra.mxu0 0.0
      %1708 = vmatprep.subr.mxu0 0.0
      %1709 = vmatpush1.msra.mxu0 0.0
      %1710 = vmatprep.subr.mxu0 0.0
      %1711 = vmatpush1.msra.mxu0 0.0
      %1712 = vmatprep.subr.mxu0 0.0
      %1713 = vmatpush1.msra.mxu0 0.0
      %1714 = vmatprep.subr.mxu0 0.0
      %1715 = vmatpush1.msra.mxu0 %v1675
      %1716 = vmatprep.subr.mxu0 0.0
      %1717 = vmatpush2.msra.mxu0 0.0
      %1718 = vmatprep.subr.mxu0 0.0
      %1719 = vmatpush2.msra.mxu0 0.0
      %1720 = vmatprep.subr.mxu0 0.0
      %1721 = vmatpush2.msra.mxu0 0.0
      %1722 = vmatprep.subr.mxu0 0.0
      %1723 = vmatpush2.msra.mxu0 0.0
      %1724 = vmatprep.subr.mxu0 0.0
      %1725 = vmatpush2.msra.mxu0 0.0
      %1726 = vmatprep.subr.mxu0 0.0
      %1727 = vmatpush2.msra.mxu0 0.0
      %1728 = vmatprep.subr.mxu0 0.0
      %1729 = vmatpush2.msra.mxu0 0.0
      %1730 = vmatprep.subr.mxu0 0.0
      %1731 = vmatpush2.msra.mxu0 0.0
      %1732 = vmatprep.subr.mxu0 0.0
      %1733 = vmatpush2.msra.mxu0 0.0
      %1734 = vmatprep.subr.mxu0 0.0
      %1735 = vmatpush2.msra.mxu0 0.0
      %1736 = vmatprep.subr.mxu0 0.0
      %1737 = vmatpush2.msra.mxu0 0.0
      %1738 = vmatprep.subr.mxu0 0.0
      %1739 = vmatpush2.msra.mxu0 0.0
      %1740 = vmatprep.subr.mxu0 0.0
      %1741 = vmatpush2.msra.mxu0 0.0
      %1742 = vmatprep.subr.mxu0 0.0
      %1743 = vmatpush2.msra.mxu0 0.0
      %1744 = vmatprep.subr.mxu0 0.0
      %1745 = vmatpush2.msra.mxu0 0.0
      %1746 = vmatprep.subr.mxu0 0.0
      %1747 = vmatpush2.msra.mxu0 0.0
      %1748 = vmatprep.mubr.f32.mxu0 0.0
      %1749 = vmatmul.mubr.f32.gmra.mxu0 %v1679
      %v1750 = vpop.f32.mrf.mxu0
      %v1751 = vadd.f32 0.0, %v1750
      %v1752 = vpop.f32.mrf.mxu0
      %1753 = vmatprep.mubr.f32.mxu0 0.0
      %1754 = vmatmul.mubr.f32.gmra.mxu0 %v1682
      %v1755 = vpop.f32.mrf.mxu0
      %v1756 = vadd.f32 0.0, %v1755
      %v1757 = vpop.f32.mrf.mxu0
      %1758 = vdwg.mxu0
      %v1759 = vadd.f32 %v1570, %v1751
      %v1760 = vadd.f32 %v1571, %v1756
      %s1761 = scalar_lea.vmem %s2, 96
      %v1762 = vld [vmem:[%s1761] sm:$0xff]
      %v1763 = vld [vmem:[%s1761 + $0x8] sm:$0xff]
      %s1764 = scalar_lea.vmem %s1, 1536
      %v1765 = vld [vmem:[%s1764] sm:$0xff]
      %v1766 = vld [vmem:[%s1764 + $0x8] sm:$0xff]
      %v1767 = vld [vmem:[%s1764 + $0x10] sm:$0xff]
      %v1768 = vld [vmem:[%s1764 + $0x18] sm:$0xff]
      %v1769 = vld [vmem:[%s1764 + $0x20] sm:$0xff]
      %v1770 = vld [vmem:[%s1764 + $0x28] sm:$0xff]
      %v1771 = vld [vmem:[%s1764 + $0x30] sm:$0xff]
      %v1772 = vld [vmem:[%s1764 + $0x38] sm:$0xff]
      %v1773 = vld [vmem:[%s1764 + $0x40] sm:$0xff]
      %v1774 = vld [vmem:[%s1764 + $0x48] sm:$0xff]
      %v1775 = vld [vmem:[%s1764 + $0x50] sm:$0xff]
      %v1776 = vld [vmem:[%s1764 + $0x58] sm:$0xff]
      %v1777 = vld [vmem:[%s1764 + $0x60] sm:$0xff]
      %v1778 = vld [vmem:[%s1764 + $0x68] sm:$0xff]
      %v1779 = vld [vmem:[%s1764 + $0x70] sm:$0xff]
      %v1780 = vld [vmem:[%s1764 + $0x78] sm:$0xff]
      %v1781 = vld [vmem:[%s1764 + $0x80] sm:$0xff]
      %v1782 = vld [vmem:[%s1764 + $0x88] sm:$0xff]
      %v1783 = vld [vmem:[%s1764 + $0x90] sm:$0xff]
      %v1784 = vld [vmem:[%s1764 + $0x98] sm:$0xff]
      %v1785 = vld [vmem:[%s1764 + $0xa0] sm:$0xff]
      %v1786 = vld [vmem:[%s1764 + $0xa8] sm:$0xff]
      %v1787 = vld [vmem:[%s1764 + $0xb0] sm:$0xff]
      %v1788 = vld [vmem:[%s1764 + $0xb8] sm:$0xff]
      %v1789 = vld [vmem:[%s1764 + $0xc0] sm:$0xff]
      %v1790 = vld [vmem:[%s1764 + $0xc8] sm:$0xff]
      %v1791 = vld [vmem:[%s1764 + $0xd0] sm:$0xff]
      %v1792 = vld [vmem:[%s1764 + $0xd8] sm:$0xff]
      %v1793 = vld [vmem:[%s1764 + $0xe0] sm:$0xff]
      %v1794 = vld [vmem:[%s1764 + $0xe8] sm:$0xff]
      %v1795 = vld [vmem:[%s1764 + $0xf0] sm:$0xff]
      %v1796 = vld [vmem:[%s1764 + $0xf8] sm:$0xff]
      %1797 = vmatprep.subr.mxu0 0.0
      %1798 = vmatpush1.msra.mxu0 %v1780
      %1799 = vmatprep.subr.mxu0 0.0
      %1800 = vmatpush1.msra.mxu0 %v1779
      %1801 = vmatprep.subr.mxu0 0.0
      %1802 = vmatpush1.msra.mxu0 %v1778
      %1803 = vmatprep.subr.mxu0 0.0
      %1804 = vmatpush1.msra.mxu0 %v1777
      %1805 = vmatprep.subr.mxu0 0.0
      %1806 = vmatpush1.msra.mxu0 %v1776
      %1807 = vmatprep.subr.mxu0 0.0
      %1808 = vmatpush1.msra.mxu0 %v1775
      %1809 = vmatprep.subr.mxu0 0.0
      %1810 = vmatpush1.msra.mxu0 %v1774
      %1811 = vmatprep.subr.mxu0 0.0
      %1812 = vmatpush1.msra.mxu0 %v1773
      %1813 = vmatprep.subr.mxu0 0.0
      %1814 = vmatpush1.msra.mxu0 %v1772
      %1815 = vmatprep.subr.mxu0 0.0
      %1816 = vmatpush1.msra.mxu0 %v1771
      %1817 = vmatprep.subr.mxu0 0.0
      %1818 = vmatpush1.msra.mxu0 %v1770
      %1819 = vmatprep.subr.mxu0 0.0
      %1820 = vmatpush1.msra.mxu0 %v1769
      %1821 = vmatprep.subr.mxu0 0.0
      %1822 = vmatpush1.msra.mxu0 %v1768
      %1823 = vmatprep.subr.mxu0 0.0
      %1824 = vmatpush1.msra.mxu0 %v1767
      %1825 = vmatprep.subr.mxu0 0.0
      %1826 = vmatpush1.msra.mxu0 %v1766
      %1827 = vmatprep.subr.mxu0 0.0
      %1828 = vmatpush1.msra.mxu0 %v1765
      %1829 = vmatprep.subr.mxu0 0.0
      %1830 = vmatpush2.msra.mxu0 %v1796
      %1831 = vmatprep.subr.mxu0 0.0
      %1832 = vmatpush2.msra.mxu0 %v1795
      %1833 = vmatprep.subr.mxu0 0.0
      %1834 = vmatpush2.msra.mxu0 %v1794
      %1835 = vmatprep.subr.mxu0 0.0
      %1836 = vmatpush2.msra.mxu0 %v1793
      %1837 = vmatprep.subr.mxu0 0.0
      %1838 = vmatpush2.msra.mxu0 %v1792
      %1839 = vmatprep.subr.mxu0 0.0
      %1840 = vmatpush2.msra.mxu0 %v1791
      %1841 = vmatprep.subr.mxu0 0.0
      %1842 = vmatpush2.msra.mxu0 %v1790
      %1843 = vmatprep.subr.mxu0 0.0
      %1844 = vmatpush2.msra.mxu0 %v1789
      %1845 = vmatprep.subr.mxu0 0.0
      %1846 = vmatpush2.msra.mxu0 %v1788
      %1847 = vmatprep.subr.mxu0 0.0
      %1848 = vmatpush2.msra.mxu0 %v1787
      %1849 = vmatprep.subr.mxu0 0.0
      %1850 = vmatpush2.msra.mxu0 %v1786
      %1851 = vmatprep.subr.mxu0 0.0
      %1852 = vmatpush2.msra.mxu0 %v1785
      %1853 = vmatprep.subr.mxu0 0.0
      %1854 = vmatpush2.msra.mxu0 %v1784
      %1855 = vmatprep.subr.mxu0 0.0
      %1856 = vmatpush2.msra.mxu0 %v1783
      %1857 = vmatprep.subr.mxu0 0.0
      %1858 = vmatpush2.msra.mxu0 %v1782
      %1859 = vmatprep.subr.mxu0 0.0
      %1860 = vmatpush2.msra.mxu0 %v1781
      %1861 = vmatprep.mubr.f32.mxu0 %v631
      %1862 = vmatmul.mubr.f32.gmra.mxu0 %v630
      %v1863 = vpop.f32.mrf.mxu0
      %v1864 = vadd.f32 0.0, %v1863
      %v1865 = vpop.f32.mrf.mxu0
      %1866 = vdwg.mxu0
      %v1868 = vsel %vm842, %v1762, 0
      %v1871 = vsel %vm842, %v1763, 0
      %1873 = vmatprep.subr.mxu0 0.0
      %1874 = vmatpush1.msra.mxu0 0.0
      %1875 = vmatprep.subr.mxu0 0.0
      %1876 = vmatpush1.msra.mxu0 0.0
      %1877 = vmatprep.subr.mxu0 0.0
      %1878 = vmatpush1.msra.mxu0 0.0
      %1879 = vmatprep.subr.mxu0 0.0
      %1880 = vmatpush1.msra.mxu0 0.0
      %1881 = vmatprep.subr.mxu0 0.0
      %1882 = vmatpush1.msra.mxu0 0.0
      %1883 = vmatprep.subr.mxu0 0.0
      %1884 = vmatpush1.msra.mxu0 0.0
      %1885 = vmatprep.subr.mxu0 0.0
      %1886 = vmatpush1.msra.mxu0 0.0
      %1887 = vmatprep.subr.mxu0 0.0
      %1888 = vmatpush1.msra.mxu0 0.0
      %1889 = vmatprep.subr.mxu0 0.0
      %1890 = vmatpush1.msra.mxu0 0.0
      %1891 = vmatprep.subr.mxu0 0.0
      %1892 = vmatpush1.msra.mxu0 0.0
      %1893 = vmatprep.subr.mxu0 0.0
      %1894 = vmatpush1.msra.mxu0 0.0
      %1895 = vmatprep.subr.mxu0 0.0
      %1896 = vmatpush1.msra.mxu0 0.0
      %1897 = vmatprep.subr.mxu0 0.0
      %1898 = vmatpush1.msra.mxu0 0.0
      %1899 = vmatprep.subr.mxu0 0.0
      %1900 = vmatpush1.msra.mxu0 0.0
      %1901 = vmatprep.subr.mxu0 0.0
      %1902 = vmatpush1.msra.mxu0 0.0
      %1903 = vmatprep.subr.mxu0 0.0
      %1904 = vmatpush1.msra.mxu0 %v1864
      %1905 = vmatprep.subr.mxu0 0.0
      %1906 = vmatpush2.msra.mxu0 0.0
      %1907 = vmatprep.subr.mxu0 0.0
      %1908 = vmatpush2.msra.mxu0 0.0
      %1909 = vmatprep.subr.mxu0 0.0
      %1910 = vmatpush2.msra.mxu0 0.0
      %1911 = vmatprep.subr.mxu0 0.0
      %1912 = vmatpush2.msra.mxu0 0.0
      %1913 = vmatprep.subr.mxu0 0.0
      %1914 = vmatpush2.msra.mxu0 0.0
      %1915 = vmatprep.subr.mxu0 0.0
      %1916 = vmatpush2.msra.mxu0 0.0
      %1917 = vmatprep.subr.mxu0 0.0
      %1918 = vmatpush2.msra.mxu0 0.0
      %1919 = vmatprep.subr.mxu0 0.0
      %1920 = vmatpush2.msra.mxu0 0.0
      %1921 = vmatprep.subr.mxu0 0.0
      %1922 = vmatpush2.msra.mxu0 0.0
      %1923 = vmatprep.subr.mxu0 0.0
      %1924 = vmatpush2.msra.mxu0 0.0
      %1925 = vmatprep.subr.mxu0 0.0
      %1926 = vmatpush2.msra.mxu0 0.0
      %1927 = vmatprep.subr.mxu0 0.0
      %1928 = vmatpush2.msra.mxu0 0.0
      %1929 = vmatprep.subr.mxu0 0.0
      %1930 = vmatpush2.msra.mxu0 0.0
      %1931 = vmatprep.subr.mxu0 0.0
      %1932 = vmatpush2.msra.mxu0 0.0
      %1933 = vmatprep.subr.mxu0 0.0
      %1934 = vmatpush2.msra.mxu0 0.0
      %1935 = vmatprep.subr.mxu0 0.0
      %1936 = vmatpush2.msra.mxu0 0.0
      %1937 = vmatprep.mubr.f32.mxu0 0.0
      %1938 = vmatmul.mubr.f32.gmra.mxu0 %v1868
      %v1939 = vpop.f32.mrf.mxu0
      %v1940 = vadd.f32 0.0, %v1939
      %v1941 = vpop.f32.mrf.mxu0
      %1942 = vmatprep.mubr.f32.mxu0 0.0
      %1943 = vmatmul.mubr.f32.gmra.mxu0 %v1871
      %v1944 = vpop.f32.mrf.mxu0
      %v1945 = vadd.f32 0.0, %v1944
      %v1946 = vpop.f32.mrf.mxu0
      %1947 = vdwg.mxu0
      %v1948 = vadd.f32 %v1759, %v1940
      %v1949 = vadd.f32 %v1760, %v1945
      %s1950 = scalar_lea.vmem %s2, 112
      %v1951 = vld [vmem:[%s1950] sm:$0xff]
      %v1952 = vld [vmem:[%s1950 + $0x8] sm:$0xff]
      %s1953 = scalar_lea.vmem %s1, 1792
      %v1954 = vld [vmem:[%s1953] sm:$0xff]
      %v1955 = vld [vmem:[%s1953 + $0x8] sm:$0xff]
      %v1956 = vld [vmem:[%s1953 + $0x10] sm:$0xff]
      %v1957 = vld [vmem:[%s1953 + $0x18] sm:$0xff]
      %v1958 = vld [vmem:[%s1953 + $0x20] sm:$0xff]
      %v1959 = vld [vmem:[%s1953 + $0x28] sm:$0xff]
      %v1960 = vld [vmem:[%s1953 + $0x30] sm:$0xff]
      %v1961 = vld [vmem:[%s1953 + $0x38] sm:$0xff]
      %v1962 = vld [vmem:[%s1953 + $0x40] sm:$0xff]
      %v1963 = vld [vmem:[%s1953 + $0x48] sm:$0xff]
      %v1964 = vld [vmem:[%s1953 + $0x50] sm:$0xff]
      %v1965 = vld [vmem:[%s1953 + $0x58] sm:$0xff]
      %v1966 = vld [vmem:[%s1953 + $0x60] sm:$0xff]
      %v1967 = vld [vmem:[%s1953 + $0x68] sm:$0xff]
      %v1968 = vld [vmem:[%s1953 + $0x70] sm:$0xff]
      %v1969 = vld [vmem:[%s1953 + $0x78] sm:$0xff]
      %v1970 = vld [vmem:[%s1953 + $0x80] sm:$0xff]
      %v1971 = vld [vmem:[%s1953 + $0x88] sm:$0xff]
      %v1972 = vld [vmem:[%s1953 + $0x90] sm:$0xff]
      %v1973 = vld [vmem:[%s1953 + $0x98] sm:$0xff]
      %v1974 = vld [vmem:[%s1953 + $0xa0] sm:$0xff]
      %v1975 = vld [vmem:[%s1953 + $0xa8] sm:$0xff]
      %v1976 = vld [vmem:[%s1953 + $0xb0] sm:$0xff]
      %v1977 = vld [vmem:[%s1953 + $0xb8] sm:$0xff]
      %v1978 = vld [vmem:[%s1953 + $0xc0] sm:$0xff]
      %v1979 = vld [vmem:[%s1953 + $0xc8] sm:$0xff]
      %v1980 = vld [vmem:[%s1953 + $0xd0] sm:$0xff]
      %v1981 = vld [vmem:[%s1953 + $0xd8] sm:$0xff]
      %v1982 = vld [vmem:[%s1953 + $0xe0] sm:$0xff]
      %v1983 = vld [vmem:[%s1953 + $0xe8] sm:$0xff]
      %v1984 = vld [vmem:[%s1953 + $0xf0] sm:$0xff]
      %v1985 = vld [vmem:[%s1953 + $0xf8] sm:$0xff]
      %1986 = vmatprep.subr.mxu0 0.0
      %1987 = vmatpush1.msra.mxu0 %v1969
      %1988 = vmatprep.subr.mxu0 0.0
      %1989 = vmatpush1.msra.mxu0 %v1968
      %1990 = vmatprep.subr.mxu0 0.0
      %1991 = vmatpush1.msra.mxu0 %v1967
      %1992 = vmatprep.subr.mxu0 0.0
      %1993 = vmatpush1.msra.mxu0 %v1966
      %1994 = vmatprep.subr.mxu0 0.0
      %1995 = vmatpush1.msra.mxu0 %v1965
      %1996 = vmatprep.subr.mxu0 0.0
      %1997 = vmatpush1.msra.mxu0 %v1964
      %1998 = vmatprep.subr.mxu0 0.0
      %1999 = vmatpush1.msra.mxu0 %v1963
      %2000 = vmatprep.subr.mxu0 0.0
      %2001 = vmatpush1.msra.mxu0 %v1962
      %2002 = vmatprep.subr.mxu0 0.0
      %2003 = vmatpush1.msra.mxu0 %v1961
      %2004 = vmatprep.subr.mxu0 0.0
      %2005 = vmatpush1.msra.mxu0 %v1960
      %2006 = vmatprep.subr.mxu0 0.0
      %2007 = vmatpush1.msra.mxu0 %v1959
      %2008 = vmatprep.subr.mxu0 0.0
      %2009 = vmatpush1.msra.mxu0 %v1958
      %2010 = vmatprep.subr.mxu0 0.0
      %2011 = vmatpush1.msra.mxu0 %v1957
      %2012 = vmatprep.subr.mxu0 0.0
      %2013 = vmatpush1.msra.mxu0 %v1956
      %2014 = vmatprep.subr.mxu0 0.0
      %2015 = vmatpush1.msra.mxu0 %v1955
      %2016 = vmatprep.subr.mxu0 0.0
      %2017 = vmatpush1.msra.mxu0 %v1954
      %2018 = vmatprep.subr.mxu0 0.0
      %2019 = vmatpush2.msra.mxu0 %v1985
      %2020 = vmatprep.subr.mxu0 0.0
      %2021 = vmatpush2.msra.mxu0 %v1984
      %2022 = vmatprep.subr.mxu0 0.0
      %2023 = vmatpush2.msra.mxu0 %v1983
      %2024 = vmatprep.subr.mxu0 0.0
      %2025 = vmatpush2.msra.mxu0 %v1982
      %2026 = vmatprep.subr.mxu0 0.0
      %2027 = vmatpush2.msra.mxu0 %v1981
      %2028 = vmatprep.subr.mxu0 0.0
      %2029 = vmatpush2.msra.mxu0 %v1980
      %2030 = vmatprep.subr.mxu0 0.0
      %2031 = vmatpush2.msra.mxu0 %v1979
      %2032 = vmatprep.subr.mxu0 0.0
      %2033 = vmatpush2.msra.mxu0 %v1978
      %2034 = vmatprep.subr.mxu0 0.0
      %2035 = vmatpush2.msra.mxu0 %v1977
      %2036 = vmatprep.subr.mxu0 0.0
      %2037 = vmatpush2.msra.mxu0 %v1976
      %2038 = vmatprep.subr.mxu0 0.0
      %2039 = vmatpush2.msra.mxu0 %v1975
      %2040 = vmatprep.subr.mxu0 0.0
      %2041 = vmatpush2.msra.mxu0 %v1974
      %2042 = vmatprep.subr.mxu0 0.0
      %2043 = vmatpush2.msra.mxu0 %v1973
      %2044 = vmatprep.subr.mxu0 0.0
      %2045 = vmatpush2.msra.mxu0 %v1972
      %2046 = vmatprep.subr.mxu0 0.0
      %2047 = vmatpush2.msra.mxu0 %v1971
      %2048 = vmatprep.subr.mxu0 0.0
      %2049 = vmatpush2.msra.mxu0 %v1970
      %2050 = vmatprep.mubr.f32.mxu0 %v631
      %2051 = vmatmul.mubr.f32.gmra.mxu0 %v630
      %v2052 = vpop.f32.mrf.mxu0
      %v2053 = vadd.f32 0.0, %v2052
      %v2054 = vpop.f32.mrf.mxu0
      %2055 = vdwg.mxu0
      %v2057 = vsel %vm842, %v1951, 0
      %v2060 = vsel %vm842, %v1952, 0
      %2062 = vmatprep.subr.mxu0 0.0
      %2063 = vmatpush1.msra.mxu0 0.0
      %2064 = vmatprep.subr.mxu0 0.0
      %2065 = vmatpush1.msra.mxu0 0.0
      %2066 = vmatprep.subr.mxu0 0.0
      %2067 = vmatpush1.msra.mxu0 0.0
      %2068 = vmatprep.subr.mxu0 0.0
      %2069 = vmatpush1.msra.mxu0 0.0
      %2070 = vmatprep.subr.mxu0 0.0
      %2071 = vmatpush1.msra.mxu0 0.0
      %2072 = vmatprep.subr.mxu0 0.0
      %2073 = vmatpush1.msra.mxu0 0.0
      %2074 = vmatprep.subr.mxu0 0.0
      %2075 = vmatpush1.msra.mxu0 0.0
      %2076 = vmatprep.subr.mxu0 0.0
      %2077 = vmatpush1.msra.mxu0 0.0
      %2078 = vmatprep.subr.mxu0 0.0
      %2079 = vmatpush1.msra.mxu0 0.0
      %2080 = vmatprep.subr.mxu0 0.0
      %2081 = vmatpush1.msra.mxu0 0.0
      %2082 = vmatprep.subr.mxu0 0.0
      %2083 = vmatpush1.msra.mxu0 0.0
      %2084 = vmatprep.subr.mxu0 0.0
      %2085 = vmatpush1.msra.mxu0 0.0
      %2086 = vmatprep.subr.mxu0 0.0
      %2087 = vmatpush1.msra.mxu0 0.0
      %2088 = vmatprep.subr.mxu0 0.0
      %2089 = vmatpush1.msra.mxu0 0.0
      %2090 = vmatprep.subr.mxu0 0.0
      %2091 = vmatpush1.msra.mxu0 0.0
      %2092 = vmatprep.subr.mxu0 0.0
      %2093 = vmatpush1.msra.mxu0 %v2053
      %2094 = vmatprep.subr.mxu0 0.0
      %2095 = vmatpush2.msra.mxu0 0.0
      %2096 = vmatprep.subr.mxu0 0.0
      %2097 = vmatpush2.msra.mxu0 0.0
      %2098 = vmatprep.subr.mxu0 0.0
      %2099 = vmatpush2.msra.mxu0 0.0
      %2100 = vmatprep.subr.mxu0 0.0
      %2101 = vmatpush2.msra.mxu0 0.0
      %2102 = vmatprep.subr.mxu0 0.0
      %2103 = vmatpush2.msra.mxu0 0.0
      %2104 = vmatprep.subr.mxu0 0.0
      %2105 = vmatpush2.msra.mxu0 0.0
      %2106 = vmatprep.subr.mxu0 0.0
      %2107 = vmatpush2.msra.mxu0 0.0
      %2108 = vmatprep.subr.mxu0 0.0
      %2109 = vmatpush2.msra.mxu0 0.0
      %2110 = vmatprep.subr.mxu0 0.0
      %2111 = vmatpush2.msra.mxu0 0.0
      %2112 = vmatprep.subr.mxu0 0.0
      %2113 = vmatpush2.msra.mxu0 0.0
      %2114 = vmatprep.subr.mxu0 0.0
      %2115 = vmatpush2.msra.mxu0 0.0
      %2116 = vmatprep.subr.mxu0 0.0
      %2117 = vmatpush2.msra.mxu0 0.0
      %2118 = vmatprep.subr.mxu0 0.0
      %2119 = vmatpush2.msra.mxu0 0.0
      %2120 = vmatprep.subr.mxu0 0.0
      %2121 = vmatpush2.msra.mxu0 0.0
      %2122 = vmatprep.subr.mxu0 0.0
      %2123 = vmatpush2.msra.mxu0 0.0
      %2124 = vmatprep.subr.mxu0 0.0
      %2125 = vmatpush2.msra.mxu0 0.0
      %2126 = vmatprep.mubr.f32.mxu0 0.0
      %2127 = vmatmul.mubr.f32.gmra.mxu0 %v2057
      %v2128 = vpop.f32.mrf.mxu0
      %v2129 = vadd.f32 0.0, %v2128
      %v2130 = vpop.f32.mrf.mxu0
      %2131 = vmatprep.mubr.f32.mxu0 0.0
      %2132 = vmatmul.mubr.f32.gmra.mxu0 %v2060
      %v2133 = vpop.f32.mrf.mxu0
      %v2134 = vadd.f32 0.0, %v2133
      %v2135 = vpop.f32.mrf.mxu0
      %2136 = vdwg.mxu0
      %v2137 = vadd.f32 %v1948, %v2129
      %v2138 = vadd.f32 %v1949, %v2134
      %s2139 = scalar_lea.vmem %s2, 128
      %v2140 = vld [vmem:[%s2139] sm:$0xff]
      %v2141 = vld [vmem:[%s2139 + $0x8] sm:$0xff]
      %s2142 = scalar_lea.vmem %s1, 2048
      %v2143 = vld [vmem:[%s2142] sm:$0xff]
      %v2144 = vld [vmem:[%s2142 + $0x8] sm:$0xff]
      %v2145 = vld [vmem:[%s2142 + $0x10] sm:$0xff]
      %v2146 = vld [vmem:[%s2142 + $0x18] sm:$0xff]
      %v2147 = vld [vmem:[%s2142 + $0x20] sm:$0xff]
      %v2148 = vld [vmem:[%s2142 + $0x28] sm:$0xff]
      %v2149 = vld [vmem:[%s2142 + $0x30] sm:$0xff]
      %v2150 = vld [vmem:[%s2142 + $0x38] sm:$0xff]
      %v2151 = vld [vmem:[%s2142 + $0x40] sm:$0xff]
      %v2152 = vld [vmem:[%s2142 + $0x48] sm:$0xff]
      %v2153 = vld [vmem:[%s2142 + $0x50] sm:$0xff]
      %v2154 = vld [vmem:[%s2142 + $0x58] sm:$0xff]
      %v2155 = vld [vmem:[%s2142 + $0x60] sm:$0xff]
      %v2156 = vld [vmem:[%s2142 + $0x68] sm:$0xff]
      %v2157 = vld [vmem:[%s2142 + $0x70] sm:$0xff]
      %v2158 = vld [vmem:[%s2142 + $0x78] sm:$0xff]
      %v2159 = vld [vmem:[%s2142 + $0x80] sm:$0xff]
      %v2160 = vld [vmem:[%s2142 + $0x88] sm:$0xff]
      %v2161 = vld [vmem:[%s2142 + $0x90] sm:$0xff]
      %v2162 = vld [vmem:[%s2142 + $0x98] sm:$0xff]
      %v2163 = vld [vmem:[%s2142 + $0xa0] sm:$0xff]
      %v2164 = vld [vmem:[%s2142 + $0xa8] sm:$0xff]
      %v2165 = vld [vmem:[%s2142 + $0xb0] sm:$0xff]
      %v2166 = vld [vmem:[%s2142 + $0xb8] sm:$0xff]
      %v2167 = vld [vmem:[%s2142 + $0xc0] sm:$0xff]
      %v2168 = vld [vmem:[%s2142 + $0xc8] sm:$0xff]
      %v2169 = vld [vmem:[%s2142 + $0xd0] sm:$0xff]
      %v2170 = vld [vmem:[%s2142 + $0xd8] sm:$0xff]
      %v2171 = vld [vmem:[%s2142 + $0xe0] sm:$0xff]
      %v2172 = vld [vmem:[%s2142 + $0xe8] sm:$0xff]
      %v2173 = vld [vmem:[%s2142 + $0xf0] sm:$0xff]
      %v2174 = vld [vmem:[%s2142 + $0xf8] sm:$0xff]
      %2175 = vmatprep.subr.mxu0 0.0
      %2176 = vmatpush1.msra.mxu0 %v2158
      %2177 = vmatprep.subr.mxu0 0.0
      %2178 = vmatpush1.msra.mxu0 %v2157
      %2179 = vmatprep.subr.mxu0 0.0
      %2180 = vmatpush1.msra.mxu0 %v2156
      %2181 = vmatprep.subr.mxu0 0.0
      %2182 = vmatpush1.msra.mxu0 %v2155
      %2183 = vmatprep.subr.mxu0 0.0
      %2184 = vmatpush1.msra.mxu0 %v2154
      %2185 = vmatprep.subr.mxu0 0.0
      %2186 = vmatpush1.msra.mxu0 %v2153
      %2187 = vmatprep.subr.mxu0 0.0
      %2188 = vmatpush1.msra.mxu0 %v2152
      %2189 = vmatprep.subr.mxu0 0.0
      %2190 = vmatpush1.msra.mxu0 %v2151
      %2191 = vmatprep.subr.mxu0 0.0
      %2192 = vmatpush1.msra.mxu0 %v2150
      %2193 = vmatprep.subr.mxu0 0.0
      %2194 = vmatpush1.msra.mxu0 %v2149
      %2195 = vmatprep.subr.mxu0 0.0
      %2196 = vmatpush1.msra.mxu0 %v2148
      %2197 = vmatprep.subr.mxu0 0.0
      %2198 = vmatpush1.msra.mxu0 %v2147
      %2199 = vmatprep.subr.mxu0 0.0
      %2200 = vmatpush1.msra.mxu0 %v2146
      %2201 = vmatprep.subr.mxu0 0.0
      %2202 = vmatpush1.msra.mxu0 %v2145
      %2203 = vmatprep.subr.mxu0 0.0
      %2204 = vmatpush1.msra.mxu0 %v2144
      %2205 = vmatprep.subr.mxu0 0.0
      %2206 = vmatpush1.msra.mxu0 %v2143
      %2207 = vmatprep.subr.mxu0 0.0
      %2208 = vmatpush2.msra.mxu0 %v2174
      %2209 = vmatprep.subr.mxu0 0.0
      %2210 = vmatpush2.msra.mxu0 %v2173
      %2211 = vmatprep.subr.mxu0 0.0
      %2212 = vmatpush2.msra.mxu0 %v2172
      %2213 = vmatprep.subr.mxu0 0.0
      %2214 = vmatpush2.msra.mxu0 %v2171
      %2215 = vmatprep.subr.mxu0 0.0
      %2216 = vmatpush2.msra.mxu0 %v2170
      %2217 = vmatprep.subr.mxu0 0.0
      %2218 = vmatpush2.msra.mxu0 %v2169
      %2219 = vmatprep.subr.mxu0 0.0
      %2220 = vmatpush2.msra.mxu0 %v2168
      %2221 = vmatprep.subr.mxu0 0.0
      %2222 = vmatpush2.msra.mxu0 %v2167
      %2223 = vmatprep.subr.mxu0 0.0
      %2224 = vmatpush2.msra.mxu0 %v2166
      %2225 = vmatprep.subr.mxu0 0.0
      %2226 = vmatpush2.msra.mxu0 %v2165
      %2227 = vmatprep.subr.mxu0 0.0
      %2228 = vmatpush2.msra.mxu0 %v2164
      %2229 = vmatprep.subr.mxu0 0.0
      %2230 = vmatpush2.msra.mxu0 %v2163
      %2231 = vmatprep.subr.mxu0 0.0
      %2232 = vmatpush2.msra.mxu0 %v2162
      %2233 = vmatprep.subr.mxu0 0.0
      %2234 = vmatpush2.msra.mxu0 %v2161
      %2235 = vmatprep.subr.mxu0 0.0
      %2236 = vmatpush2.msra.mxu0 %v2160
      %2237 = vmatprep.subr.mxu0 0.0
      %2238 = vmatpush2.msra.mxu0 %v2159
      %2239 = vmatprep.mubr.f32.mxu0 %v631
      %2240 = vmatmul.mubr.f32.gmra.mxu0 %v630
      %v2241 = vpop.f32.mrf.mxu0
      %v2242 = vadd.f32 0.0, %v2241
      %v2243 = vpop.f32.mrf.mxu0
      %2244 = vdwg.mxu0
      %v2246 = vsel %vm842, %v2140, 0
      %v2249 = vsel %vm842, %v2141, 0
      %2251 = vmatprep.subr.mxu0 0.0
      %2252 = vmatpush1.msra.mxu0 0.0
      %2253 = vmatprep.subr.mxu0 0.0
      %2254 = vmatpush1.msra.mxu0 0.0
      %2255 = vmatprep.subr.mxu0 0.0
      %2256 = vmatpush1.msra.mxu0 0.0
      %2257 = vmatprep.subr.mxu0 0.0
      %2258 = vmatpush1.msra.mxu0 0.0
      %2259 = vmatprep.subr.mxu0 0.0
      %2260 = vmatpush1.msra.mxu0 0.0
      %2261 = vmatprep.subr.mxu0 0.0
      %2262 = vmatpush1.msra.mxu0 0.0
      %2263 = vmatprep.subr.mxu0 0.0
      %2264 = vmatpush1.msra.mxu0 0.0
      %2265 = vmatprep.subr.mxu0 0.0
      %2266 = vmatpush1.msra.mxu0 0.0
      %2267 = vmatprep.subr.mxu0 0.0
      %2268 = vmatpush1.msra.mxu0 0.0
      %2269 = vmatprep.subr.mxu0 0.0
      %2270 = vmatpush1.msra.mxu0 0.0
      %2271 = vmatprep.subr.mxu0 0.0
      %2272 = vmatpush1.msra.mxu0 0.0
      %2273 = vmatprep.subr.mxu0 0.0
      %2274 = vmatpush1.msra.mxu0 0.0
      %2275 = vmatprep.subr.mxu0 0.0
      %2276 = vmatpush1.msra.mxu0 0.0
      %2277 = vmatprep.subr.mxu0 0.0
      %2278 = vmatpush1.msra.mxu0 0.0
      %2279 = vmatprep.subr.mxu0 0.0
      %2280 = vmatpush1.msra.mxu0 0.0
      %2281 = vmatprep.subr.mxu0 0.0
      %2282 = vmatpush1.msra.mxu0 %v2242
      %2283 = vmatprep.subr.mxu0 0.0
      %2284 = vmatpush2.msra.mxu0 0.0
      %2285 = vmatprep.subr.mxu0 0.0
      %2286 = vmatpush2.msra.mxu0 0.0
      %2287 = vmatprep.subr.mxu0 0.0
      %2288 = vmatpush2.msra.mxu0 0.0
      %2289 = vmatprep.subr.mxu0 0.0
      %2290 = vmatpush2.msra.mxu0 0.0
      %2291 = vmatprep.subr.mxu0 0.0
      %2292 = vmatpush2.msra.mxu0 0.0
      %2293 = vmatprep.subr.mxu0 0.0
      %2294 = vmatpush2.msra.mxu0 0.0
      %2295 = vmatprep.subr.mxu0 0.0
      %2296 = vmatpush2.msra.mxu0 0.0
      %2297 = vmatprep.subr.mxu0 0.0
      %2298 = vmatpush2.msra.mxu0 0.0
      %2299 = vmatprep.subr.mxu0 0.0
      %2300 = vmatpush2.msra.mxu0 0.0
      %2301 = vmatprep.subr.mxu0 0.0
      %2302 = vmatpush2.msra.mxu0 0.0
      %2303 = vmatprep.subr.mxu0 0.0
      %2304 = vmatpush2.msra.mxu0 0.0
      %2305 = vmatprep.subr.mxu0 0.0
      %2306 = vmatpush2.msra.mxu0 0.0
      %2307 = vmatprep.subr.mxu0 0.0
      %2308 = vmatpush2.msra.mxu0 0.0
      %2309 = vmatprep.subr.mxu0 0.0
      %2310 = vmatpush2.msra.mxu0 0.0
      %2311 = vmatprep.subr.mxu0 0.0
      %2312 = vmatpush2.msra.mxu0 0.0
      %2313 = vmatprep.subr.mxu0 0.0
      %2314 = vmatpush2.msra.mxu0 0.0
      %2315 = vmatprep.mubr.f32.mxu0 0.0
      %2316 = vmatmul.mubr.f32.gmra.mxu0 %v2246
      %v2317 = vpop.f32.mrf.mxu0
      %v2318 = vadd.f32 0.0, %v2317
      %v2319 = vpop.f32.mrf.mxu0
      %2320 = vmatprep.mubr.f32.mxu0 0.0
      %2321 = vmatmul.mubr.f32.gmra.mxu0 %v2249
      %v2322 = vpop.f32.mrf.mxu0
      %v2323 = vadd.f32 0.0, %v2322
      %v2324 = vpop.f32.mrf.mxu0
      %2325 = vdwg.mxu0
      %v2326 = vadd.f32 %v2137, %v2318
      %v2327 = vadd.f32 %v2138, %v2323
      %v2328 = vld [vmem:[%s3] sm:$0xff]
      %v2329 = vld [vmem:[%s3 + $0x8] sm:$0xff]
      %2331 = vset.pattern.permute.xlu0 0
      %2332 = vperm.xlu0 %2331, %v2328
      %v2333 = vpop.permute.xlu0 %2332
      %2336 = vset.pattern.permute.xlu0 0
      %2337 = vperm.xlu0 %2336, %v2329
      %v2338 = vpop.permute.xlu0 %2337
      %v2340 = vadd.f32 %v2326, %v2333
      %v2341 = vadd.f32 %v2327, %v2338
      %vm2342 = vcmp.ge.f32.partialorder %v2340, 0.0
      %vm2343 = vcmp.ge.f32.partialorder %v2341, 0.0
      %v2344 = vmul.f32 %v2340, 0.01
      %v2345 = vmul.f32 %v2341, 0.01
      %v2346 = vsel %vm2342, %v2340, %v2344
      %v2347 = vsel %vm2343, %v2341, %v2345
      %v2348 = vld [vmem:[%s5] sm:$0xff]
      %v2349 = vld [vmem:[%s5 + $0x8] sm:$0xff]
      %v2350 = vld [vmem:[%s5 + $0x10] sm:$0xff]
      %v2351 = vld [vmem:[%s5 + $0x18] sm:$0xff]
      %v2352 = vld [vmem:[%s4] sm:$0xff]
      %v2353 = vld [vmem:[%s4 + $0x8] sm:$0xff]
      %v2354 = vld [vmem:[%s4 + $0x10] sm:$0xff]
      %v2355 = vld [vmem:[%s4 + $0x18] sm:$0xff]
      %v2356 = vld [vmem:[%s4 + $0x20] sm:$0xff]
      %v2357 = vld [vmem:[%s4 + $0x28] sm:$0xff]
      %v2358 = vld [vmem:[%s4 + $0x30] sm:$0xff]
      %v2359 = vld [vmem:[%s4 + $0x38] sm:$0xff]
      %vm2360 = vcmask 523264
      %v2362 = vsel %vm2360, %v2346, 0
      %v2365 = vsel %vm2360, %v2347, 0
      %2367 = vmatprep.subr.mxu0 0.0
      %2368 = vmatpush1.msra.mxu0 0.0
      %2369 = vmatprep.subr.mxu0 0.0
      %2370 = vmatpush1.msra.mxu0 0.0
      %2371 = vmatprep.subr.mxu0 0.0
      %2372 = vmatpush1.msra.mxu0 0.0
      %2373 = vmatprep.subr.mxu0 0.0
      %2374 = vmatpush1.msra.mxu0 0.0
      %2375 = vmatprep.subr.mxu0 0.0
      %2376 = vmatpush1.msra.mxu0 0.0
      %2377 = vmatprep.subr.mxu0 0.0
      %2378 = vmatpush1.msra.mxu0 0.0
      %2379 = vmatprep.subr.mxu0 0.0
      %2380 = vmatpush1.msra.mxu0 0.0
      %2381 = vmatprep.subr.mxu0 0.0
      %2382 = vmatpush1.msra.mxu0 0.0
      %2383 = vmatprep.subr.mxu0 0.0
      %2384 = vmatpush1.msra.mxu0 %v2359
      %2385 = vmatprep.subr.mxu0 0.0
      %2386 = vmatpush1.msra.mxu0 %v2358
      %2387 = vmatprep.subr.mxu0 0.0
      %2388 = vmatpush1.msra.mxu0 %v2357
      %2389 = vmatprep.subr.mxu0 0.0
      %2390 = vmatpush1.msra.mxu0 %v2356
      %2391 = vmatprep.subr.mxu0 0.0
      %2392 = vmatpush1.msra.mxu0 %v2355
      %2393 = vmatprep.subr.mxu0 0.0
      %2394 = vmatpush1.msra.mxu0 %v2354
      %2395 = vmatprep.subr.mxu0 0.0
      %2396 = vmatpush1.msra.mxu0 %v2353
      %2397 = vmatprep.subr.mxu0 0.0
      %2398 = vmatpush1.msra.mxu0 %v2352
      %2399 = vmatprep.subr.mxu0 0.0
      %2400 = vmatpush2.msra.mxu0 0.0
      %2401 = vmatprep.subr.mxu0 0.0
      %2402 = vmatpush2.msra.mxu0 0.0
      %2403 = vmatprep.subr.mxu0 0.0
      %2404 = vmatpush2.msra.mxu0 0.0
      %2405 = vmatprep.subr.mxu0 0.0
      %2406 = vmatpush2.msra.mxu0 0.0
      %2407 = vmatprep.subr.mxu0 0.0
      %2408 = vmatpush2.msra.mxu0 0.0
      %2409 = vmatprep.subr.mxu0 0.0
      %2410 = vmatpush2.msra.mxu0 0.0
      %2411 = vmatprep.subr.mxu0 0.0
      %2412 = vmatpush2.msra.mxu0 0.0
      %2413 = vmatprep.subr.mxu0 0.0
      %2414 = vmatpush2.msra.mxu0 0.0
      %2415 = vmatprep.subr.mxu0 0.0
      %2416 = vmatpush2.msra.mxu0 0.0
      %2417 = vmatprep.subr.mxu0 0.0
      %2418 = vmatpush2.msra.mxu0 0.0
      %2419 = vmatprep.subr.mxu0 0.0
      %2420 = vmatpush2.msra.mxu0 0.0
      %2421 = vmatprep.subr.mxu0 0.0
      %2422 = vmatpush2.msra.mxu0 0.0
      %2423 = vmatprep.subr.mxu0 0.0
      %2424 = vmatpush2.msra.mxu0 0.0
      %2425 = vmatprep.subr.mxu0 0.0
      %2426 = vmatpush2.msra.mxu0 0.0
      %2427 = vmatprep.subr.mxu0 0.0
      %2428 = vmatpush2.msra.mxu0 0.0
      %2429 = vmatprep.subr.mxu0 0.0
      %2430 = vmatpush2.msra.mxu0 0.0
      %2431 = vmatprep.mubr.f32.mxu0 0.0
      %2432 = vmatmul.mubr.f32.gmra.mxu0 %v2362
      %v2433 = vpop.f32.mrf.mxu0
      %v2434 = vadd.f32 0.0, %v2433
      %v2435 = vpop.f32.mrf.mxu0
      %2436 = vmatprep.mubr.f32.mxu0 0.0
      %2437 = vmatmul.mubr.f32.gmra.mxu0 %v2365
      %v2438 = vpop.f32.mrf.mxu0
      %v2439 = vadd.f32 0.0, %v2438
      %v2440 = vpop.f32.mrf.mxu0
      %2441 = vdwg.mxu0
      %s2442 = scalar_lea.vmem %s5, 32
      %v2443 = vld [vmem:[%s2442] sm:$0xff]
      %v2444 = vld [vmem:[%s2442 + $0x8] sm:$0xff]
      %v2445 = vld [vmem:[%s2442 + $0x10] sm:$0xff]
      %v2446 = vld [vmem:[%s2442 + $0x18] sm:$0xff]
      %s2447 = scalar_lea.vmem %s4, 64
      %v2448 = vld [vmem:[%s2447] sm:$0xff]
      %v2449 = vld [vmem:[%s2447 + $0x8] sm:$0xff]
      %v2450 = vld [vmem:[%s2447 + $0x10] sm:$0xff]
      %v2451 = vld [vmem:[%s2447 + $0x18] sm:$0xff]
      %v2452 = vld [vmem:[%s2447 + $0x20] sm:$0xff]
      %v2453 = vld [vmem:[%s2447 + $0x28] sm:$0xff]
      %v2454 = vld [vmem:[%s2447 + $0x30] sm:$0xff]
      %v2455 = vld [vmem:[%s2447 + $0x38] sm:$0xff]
      %2456 = vmatprep.subr.mxu0 0.0
      %2457 = vmatpush1.msra.mxu0 0.0
      %2458 = vmatprep.subr.mxu0 0.0
      %2459 = vmatpush1.msra.mxu0 0.0
      %2460 = vmatprep.subr.mxu0 0.0
      %2461 = vmatpush1.msra.mxu0 0.0
      %2462 = vmatprep.subr.mxu0 0.0
      %2463 = vmatpush1.msra.mxu0 0.0
      %2464 = vmatprep.subr.mxu0 0.0
      %2465 = vmatpush1.msra.mxu0 0.0
      %2466 = vmatprep.subr.mxu0 0.0
      %2467 = vmatpush1.msra.mxu0 0.0
      %2468 = vmatprep.subr.mxu0 0.0
      %2469 = vmatpush1.msra.mxu0 0.0
      %2470 = vmatprep.subr.mxu0 0.0
      %2471 = vmatpush1.msra.mxu0 0.0
      %2472 = vmatprep.subr.mxu0 0.0
      %2473 = vmatpush1.msra.mxu0 %v2455
      %2474 = vmatprep.subr.mxu0 0.0
      %2475 = vmatpush1.msra.mxu0 %v2454
      %2476 = vmatprep.subr.mxu0 0.0
      %2477 = vmatpush1.msra.mxu0 %v2453
      %2478 = vmatprep.subr.mxu0 0.0
      %2479 = vmatpush1.msra.mxu0 %v2452
      %2480 = vmatprep.subr.mxu0 0.0
      %2481 = vmatpush1.msra.mxu0 %v2451
      %2482 = vmatprep.subr.mxu0 0.0
      %2483 = vmatpush1.msra.mxu0 %v2450
      %2484 = vmatprep.subr.mxu0 0.0
      %2485 = vmatpush1.msra.mxu0 %v2449
      %2486 = vmatprep.subr.mxu0 0.0
      %2487 = vmatpush1.msra.mxu0 %v2448
      %2488 = vmatprep.subr.mxu0 0.0
      %2489 = vmatpush2.msra.mxu0 0.0
      %2490 = vmatprep.subr.mxu0 0.0
      %2491 = vmatpush2.msra.mxu0 0.0
      %2492 = vmatprep.subr.mxu0 0.0
      %2493 = vmatpush2.msra.mxu0 0.0
      %2494 = vmatprep.subr.mxu0 0.0
      %2495 = vmatpush2.msra.mxu0 0.0
      %2496 = vmatprep.subr.mxu0 0.0
      %2497 = vmatpush2.msra.mxu0 0.0
      %2498 = vmatprep.subr.mxu0 0.0
      %2499 = vmatpush2.msra.mxu0 0.0
      %2500 = vmatprep.subr.mxu0 0.0
      %2501 = vmatpush2.msra.mxu0 0.0
      %2502 = vmatprep.subr.mxu0 0.0
      %2503 = vmatpush2.msra.mxu0 0.0
      %2504 = vmatprep.subr.mxu0 0.0
      %2505 = vmatpush2.msra.mxu0 0.0
      %2506 = vmatprep.subr.mxu0 0.0
      %2507 = vmatpush2.msra.mxu0 0.0
      %2508 = vmatprep.subr.mxu0 0.0
      %2509 = vmatpush2.msra.mxu0 0.0
      %2510 = vmatprep.subr.mxu0 0.0
      %2511 = vmatpush2.msra.mxu0 0.0
      %2512 = vmatprep.subr.mxu0 0.0
      %2513 = vmatpush2.msra.mxu0 0.0
      %2514 = vmatprep.subr.mxu0 0.0
      %2515 = vmatpush2.msra.mxu0 0.0
      %2516 = vmatprep.subr.mxu0 0.0
      %2517 = vmatpush2.msra.mxu0 0.0
      %2518 = vmatprep.subr.mxu0 0.0
      %2519 = vmatpush2.msra.mxu0 0.0
      %2520 = vmatprep.mubr.f32.mxu0 0.0
      %2521 = vmatmul.mubr.f32.gmra.mxu0 %v2362
      %v2522 = vpop.f32.mrf.mxu0
      %v2523 = vadd.f32 0.0, %v2522
      %v2524 = vpop.f32.mrf.mxu0
      %2525 = vmatprep.mubr.f32.mxu0 0.0
      %2526 = vmatmul.mubr.f32.gmra.mxu0 %v2365
      %v2527 = vpop.f32.mrf.mxu0
      %v2528 = vadd.f32 0.0, %v2527
      %v2529 = vpop.f32.mrf.mxu0
      %2530 = vdwg.mxu0
      %vm2531 = vcmask 130048
      %v2533 = vsel %vm2531, %v2443, 0
      %v2536 = vsel %vm2531, %v2444, 0
      %v2539 = vsel %vm2531, %v2445, 0
      %v2542 = vsel %vm2531, %v2446, 0
      %2544 = vmatprep.subr.mxu0 0.0
      %2545 = vmatpush1.msra.mxu0 0.0
      %2546 = vmatprep.subr.mxu0 0.0
      %2547 = vmatpush1.msra.mxu0 0.0
      %2548 = vmatprep.subr.mxu0 0.0
      %2549 = vmatpush1.msra.mxu0 0.0
      %2550 = vmatprep.subr.mxu0 0.0
      %2551 = vmatpush1.msra.mxu0 0.0
      %2552 = vmatprep.subr.mxu0 0.0
      %2553 = vmatpush1.msra.mxu0 0.0
      %2554 = vmatprep.subr.mxu0 0.0
      %2555 = vmatpush1.msra.mxu0 0.0
      %2556 = vmatprep.subr.mxu0 0.0
      %2557 = vmatpush1.msra.mxu0 0.0
      %2558 = vmatprep.subr.mxu0 0.0
      %2559 = vmatpush1.msra.mxu0 0.0
      %2560 = vmatprep.subr.mxu0 0.0
      %2561 = vmatpush1.msra.mxu0 0.0
      %2562 = vmatprep.subr.mxu0 0.0
      %2563 = vmatpush1.msra.mxu0 0.0
      %2564 = vmatprep.subr.mxu0 0.0
      %2565 = vmatpush1.msra.mxu0 0.0
      %2566 = vmatprep.subr.mxu0 0.0
      %2567 = vmatpush1.msra.mxu0 0.0
      %2568 = vmatprep.subr.mxu0 0.0
      %2569 = vmatpush1.msra.mxu0 0.0
      %2570 = vmatprep.subr.mxu0 0.0
      %2571 = vmatpush1.msra.mxu0 0.0
      %2572 = vmatprep.subr.mxu0 0.0
      %2573 = vmatpush1.msra.mxu0 %v2528
      %2574 = vmatprep.subr.mxu0 0.0
      %2575 = vmatpush1.msra.mxu0 %v2523
      %2576 = vmatprep.subr.mxu0 0.0
      %2577 = vmatpush2.msra.mxu0 0.0
      %2578 = vmatprep.subr.mxu0 0.0
      %2579 = vmatpush2.msra.mxu0 0.0
      %2580 = vmatprep.subr.mxu0 0.0
      %2581 = vmatpush2.msra.mxu0 0.0
      %2582 = vmatprep.subr.mxu0 0.0
      %2583 = vmatpush2.msra.mxu0 0.0
      %2584 = vmatprep.subr.mxu0 0.0
      %2585 = vmatpush2.msra.mxu0 0.0
      %2586 = vmatprep.subr.mxu0 0.0
      %2587 = vmatpush2.msra.mxu0 0.0
      %2588 = vmatprep.subr.mxu0 0.0
      %2589 = vmatpush2.msra.mxu0 0.0
      %2590 = vmatprep.subr.mxu0 0.0
      %2591 = vmatpush2.msra.mxu0 0.0
      %2592 = vmatprep.subr.mxu0 0.0
      %2593 = vmatpush2.msra.mxu0 0.0
      %2594 = vmatprep.subr.mxu0 0.0
      %2595 = vmatpush2.msra.mxu0 0.0
      %2596 = vmatprep.subr.mxu0 0.0
      %2597 = vmatpush2.msra.mxu0 0.0
      %2598 = vmatprep.subr.mxu0 0.0
      %2599 = vmatpush2.msra.mxu0 0.0
      %2600 = vmatprep.subr.mxu0 0.0
      %2601 = vmatpush2.msra.mxu0 0.0
      %2602 = vmatprep.subr.mxu0 0.0
      %2603 = vmatpush2.msra.mxu0 0.0
      %2604 = vmatprep.subr.mxu0 0.0
      %2605 = vmatpush2.msra.mxu0 0.0
      %2606 = vmatprep.subr.mxu0 0.0
      %2607 = vmatpush2.msra.mxu0 0.0
      %2608 = vmatprep.mubr.f32.mxu0 0.0
      %2609 = vmatmul.mubr.f32.gmra.mxu0 %v2533
      %v2610 = vpop.f32.mrf.mxu0
      %v2611 = vadd.f32 0.0, %v2610
      %v2612 = vpop.f32.mrf.mxu0
      %2613 = vmatprep.mubr.f32.mxu0 0.0
      %2614 = vmatmul.mubr.f32.gmra.mxu0 %v2536
      %v2615 = vpop.f32.mrf.mxu0
      %v2616 = vadd.f32 0.0, %v2615
      %v2617 = vpop.f32.mrf.mxu0
      %2618 = vmatprep.mubr.f32.mxu0 0.0
      %2619 = vmatmul.mubr.f32.gmra.mxu0 %v2539
      %v2620 = vpop.f32.mrf.mxu0
      %v2621 = vadd.f32 0.0, %v2620
      %v2622 = vpop.f32.mrf.mxu0
      %2623 = vmatprep.mubr.f32.mxu0 0.0
      %2624 = vmatmul.mubr.f32.gmra.mxu0 %v2542
      %v2625 = vpop.f32.mrf.mxu0
      %v2626 = vadd.f32 0.0, %v2625
      %v2627 = vpop.f32.mrf.mxu0
      %2628 = vdwg.mxu0
      %v2630 = vsel %vm2531, %v2348, 0
      %v2633 = vsel %vm2531, %v2349, 0
      %v2636 = vsel %vm2531, %v2350, 0
      %v2639 = vsel %vm2531, %v2351, 0
      %2641 = vmatprep.subr.mxu0 0.0
      %2642 = vmatpush1.msra.mxu0 0.0
      %2643 = vmatprep.subr.mxu0 0.0
      %2644 = vmatpush1.msra.mxu0 0.0
      %2645 = vmatprep.subr.mxu0 0.0
      %2646 = vmatpush1.msra.mxu0 0.0
      %2647 = vmatprep.subr.mxu0 0.0
      %2648 = vmatpush1.msra.mxu0 0.0
      %2649 = vmatprep.subr.mxu0 0.0
      %2650 = vmatpush1.msra.mxu0 0.0
      %2651 = vmatprep.subr.mxu0 0.0
      %2652 = vmatpush1.msra.mxu0 0.0
      %2653 = vmatprep.subr.mxu0 0.0
      %2654 = vmatpush1.msra.mxu0 0.0
      %2655 = vmatprep.subr.mxu0 0.0
      %2656 = vmatpush1.msra.mxu0 0.0
      %2657 = vmatprep.subr.mxu0 0.0
      %2658 = vmatpush1.msra.mxu0 0.0
      %2659 = vmatprep.subr.mxu0 0.0
      %2660 = vmatpush1.msra.mxu0 0.0
      %2661 = vmatprep.subr.mxu0 0.0
      %2662 = vmatpush1.msra.mxu0 0.0
      %2663 = vmatprep.subr.mxu0 0.0
      %2664 = vmatpush1.msra.mxu0 0.0
      %2665 = vmatprep.subr.mxu0 0.0
      %2666 = vmatpush1.msra.mxu0 0.0
      %2667 = vmatprep.subr.mxu0 0.0
      %2668 = vmatpush1.msra.mxu0 0.0
      %2669 = vmatprep.subr.mxu0 0.0
      %2670 = vmatpush1.msra.mxu0 %v2439
      %2671 = vmatprep.subr.mxu0 0.0
      %2672 = vmatpush1.msra.mxu0 %v2434
      %2673 = vmatprep.subr.mxu0 0.0
      %2674 = vmatpush2.msra.mxu0 0.0
      %2675 = vmatprep.subr.mxu0 0.0
      %2676 = vmatpush2.msra.mxu0 0.0
      %2677 = vmatprep.subr.mxu0 0.0
      %2678 = vmatpush2.msra.mxu0 0.0
      %2679 = vmatprep.subr.mxu0 0.0
      %2680 = vmatpush2.msra.mxu0 0.0
      %2681 = vmatprep.subr.mxu0 0.0
      %2682 = vmatpush2.msra.mxu0 0.0
      %2683 = vmatprep.subr.mxu0 0.0
      %2684 = vmatpush2.msra.mxu0 0.0
      %2685 = vmatprep.subr.mxu0 0.0
      %2686 = vmatpush2.msra.mxu0 0.0
      %2687 = vmatprep.subr.mxu0 0.0
      %2688 = vmatpush2.msra.mxu0 0.0
      %2689 = vmatprep.subr.mxu0 0.0
      %2690 = vmatpush2.msra.mxu0 0.0
      %2691 = vmatprep.subr.mxu0 0.0
      %2692 = vmatpush2.msra.mxu0 0.0
      %2693 = vmatprep.subr.mxu0 0.0
      %2694 = vmatpush2.msra.mxu0 0.0
      %2695 = vmatprep.subr.mxu0 0.0
      %2696 = vmatpush2.msra.mxu0 0.0
      %2697 = vmatprep.subr.mxu0 0.0
      %2698 = vmatpush2.msra.mxu0 0.0
      %2699 = vmatprep.subr.mxu0 0.0
      %2700 = vmatpush2.msra.mxu0 0.0
      %2701 = vmatprep.subr.mxu0 0.0
      %2702 = vmatpush2.msra.mxu0 0.0
      %2703 = vmatprep.subr.mxu0 0.0
      %2704 = vmatpush2.msra.mxu0 0.0
      %2705 = vmatprep.mubr.f32.mxu0 0.0
      %2706 = vmatmul.mubr.f32.gmra.mxu0 %v2630
      %v2707 = vpop.f32.mrf.mxu0
      %v2708 = vadd.f32 %v2611, %v2707
      %v2709 = vpop.f32.mrf.mxu0
      %2710 = vmatprep.mubr.f32.mxu0 0.0
      %2711 = vmatmul.mubr.f32.gmra.mxu0 %v2633
      %v2712 = vpop.f32.mrf.mxu0
      %v2713 = vadd.f32 %v2616, %v2712
      %v2714 = vpop.f32.mrf.mxu0
      %2715 = vmatprep.mubr.f32.mxu0 0.0
      %2716 = vmatmul.mubr.f32.gmra.mxu0 %v2636
      %v2717 = vpop.f32.mrf.mxu0
      %v2718 = vadd.f32 %v2621, %v2717
      %v2719 = vpop.f32.mrf.mxu0
      %2720 = vmatprep.mubr.f32.mxu0 0.0
      %2721 = vmatmul.mubr.f32.gmra.mxu0 %v2639
      %v2722 = vpop.f32.mrf.mxu0
      %v2723 = vadd.f32 %v2626, %v2722
      %v2724 = vpop.f32.mrf.mxu0
      %2725 = vdwg.mxu0
      %s2726 = scalar_lea.vmem %s5, 64
      %v2727 = vld [vmem:[%s2726] sm:$0xff]
      %v2728 = vld [vmem:[%s2726 + $0x8] sm:$0xff]
      %v2729 = vld [vmem:[%s2726 + $0x10] sm:$0xff]
      %v2730 = vld [vmem:[%s2726 + $0x18] sm:$0xff]
      %s2731 = scalar_lea.vmem %s4, 128
      %v2732 = vld [vmem:[%s2731] sm:$0xff]
      %v2733 = vld [vmem:[%s2731 + $0x8] sm:$0xff]
      %v2734 = vld [vmem:[%s2731 + $0x10] sm:$0xff]
      %v2735 = vld [vmem:[%s2731 + $0x18] sm:$0xff]
      %v2736 = vld [vmem:[%s2731 + $0x20] sm:$0xff]
      %v2737 = vld [vmem:[%s2731 + $0x28] sm:$0xff]
      %v2738 = vld [vmem:[%s2731 + $0x30] sm:$0xff]
      %v2739 = vld [vmem:[%s2731 + $0x38] sm:$0xff]
      %2740 = vmatprep.subr.mxu0 0.0
      %2741 = vmatpush1.msra.mxu0 0.0
      %2742 = vmatprep.subr.mxu0 0.0
      %2743 = vmatpush1.msra.mxu0 0.0
      %2744 = vmatprep.subr.mxu0 0.0
      %2745 = vmatpush1.msra.mxu0 0.0
      %2746 = vmatprep.subr.mxu0 0.0
      %2747 = vmatpush1.msra.mxu0 0.0
      %2748 = vmatprep.subr.mxu0 0.0
      %2749 = vmatpush1.msra.mxu0 0.0
      %2750 = vmatprep.subr.mxu0 0.0
      %2751 = vmatpush1.msra.mxu0 0.0
      %2752 = vmatprep.subr.mxu0 0.0
      %2753 = vmatpush1.msra.mxu0 0.0
      %2754 = vmatprep.subr.mxu0 0.0
      %2755 = vmatpush1.msra.mxu0 0.0
      %2756 = vmatprep.subr.mxu0 0.0
      %2757 = vmatpush1.msra.mxu0 %v2739
      %2758 = vmatprep.subr.mxu0 0.0
      %2759 = vmatpush1.msra.mxu0 %v2738
      %2760 = vmatprep.subr.mxu0 0.0
      %2761 = vmatpush1.msra.mxu0 %v2737
      %2762 = vmatprep.subr.mxu0 0.0
      %2763 = vmatpush1.msra.mxu0 %v2736
      %2764 = vmatprep.subr.mxu0 0.0
      %2765 = vmatpush1.msra.mxu0 %v2735
      %2766 = vmatprep.subr.mxu0 0.0
      %2767 = vmatpush1.msra.mxu0 %v2734
      %2768 = vmatprep.subr.mxu0 0.0
      %2769 = vmatpush1.msra.mxu0 %v2733
      %2770 = vmatprep.subr.mxu0 0.0
      %2771 = vmatpush1.msra.mxu0 %v2732
      %2772 = vmatprep.subr.mxu0 0.0
      %2773 = vmatpush2.msra.mxu0 0.0
      %2774 = vmatprep.subr.mxu0 0.0
      %2775 = vmatpush2.msra.mxu0 0.0
      %2776 = vmatprep.subr.mxu0 0.0
      %2777 = vmatpush2.msra.mxu0 0.0
      %2778 = vmatprep.subr.mxu0 0.0
      %2779 = vmatpush2.msra.mxu0 0.0
      %2780 = vmatprep.subr.mxu0 0.0
      %2781 = vmatpush2.msra.mxu0 0.0
      %2782 = vmatprep.subr.mxu0 0.0
      %2783 = vmatpush2.msra.mxu0 0.0
      %2784 = vmatprep.subr.mxu0 0.0
      %2785 = vmatpush2.msra.mxu0 0.0
      %2786 = vmatprep.subr.mxu0 0.0
      %2787 = vmatpush2.msra.mxu0 0.0
      %2788 = vmatprep.subr.mxu0 0.0
      %2789 = vmatpush2.msra.mxu0 0.0
      %2790 = vmatprep.subr.mxu0 0.0
      %2791 = vmatpush2.msra.mxu0 0.0
      %2792 = vmatprep.subr.mxu0 0.0
      %2793 = vmatpush2.msra.mxu0 0.0
      %2794 = vmatprep.subr.mxu0 0.0
      %2795 = vmatpush2.msra.mxu0 0.0
      %2796 = vmatprep.subr.mxu0 0.0
      %2797 = vmatpush2.msra.mxu0 0.0
      %2798 = vmatprep.subr.mxu0 0.0
      %2799 = vmatpush2.msra.mxu0 0.0
      %2800 = vmatprep.subr.mxu0 0.0
      %2801 = vmatpush2.msra.mxu0 0.0
      %2802 = vmatprep.subr.mxu0 0.0
      %2803 = vmatpush2.msra.mxu0 0.0
      %2804 = vmatprep.mubr.f32.mxu0 0.0
      %2805 = vmatmul.mubr.f32.gmra.mxu0 %v2362
      %v2806 = vpop.f32.mrf.mxu0
      %v2807 = vadd.f32 0.0, %v2806
      %v2808 = vpop.f32.mrf.mxu0
      %2809 = vmatprep.mubr.f32.mxu0 0.0
      %2810 = vmatmul.mubr.f32.gmra.mxu0 %v2365
      %v2811 = vpop.f32.mrf.mxu0
      %v2812 = vadd.f32 0.0, %v2811
      %v2813 = vpop.f32.mrf.mxu0
      %2814 = vdwg.mxu0
      %v2816 = vsel %vm2531, %v2727, 0
      %v2819 = vsel %vm2531, %v2728, 0
      %v2822 = vsel %vm2531, %v2729, 0
      %v2825 = vsel %vm2531, %v2730, 0
      %2827 = vmatprep.subr.mxu0 0.0
      %2828 = vmatpush1.msra.mxu0 0.0
      %2829 = vmatprep.subr.mxu0 0.0
      %2830 = vmatpush1.msra.mxu0 0.0
      %2831 = vmatprep.subr.mxu0 0.0
      %2832 = vmatpush1.msra.mxu0 0.0
      %2833 = vmatprep.subr.mxu0 0.0
      %2834 = vmatpush1.msra.mxu0 0.0
      %2835 = vmatprep.subr.mxu0 0.0
      %2836 = vmatpush1.msra.mxu0 0.0
      %2837 = vmatprep.subr.mxu0 0.0
      %2838 = vmatpush1.msra.mxu0 0.0
      %2839 = vmatprep.subr.mxu0 0.0
      %2840 = vmatpush1.msra.mxu0 0.0
      %2841 = vmatprep.subr.mxu0 0.0
      %2842 = vmatpush1.msra.mxu0 0.0
      %2843 = vmatprep.subr.mxu0 0.0
      %2844 = vmatpush1.msra.mxu0 0.0
      %2845 = vmatprep.subr.mxu0 0.0
      %2846 = vmatpush1.msra.mxu0 0.0
      %2847 = vmatprep.subr.mxu0 0.0
      %2848 = vmatpush1.msra.mxu0 0.0
      %2849 = vmatprep.subr.mxu0 0.0
      %2850 = vmatpush1.msra.mxu0 0.0
      %2851 = vmatprep.subr.mxu0 0.0
      %2852 = vmatpush1.msra.mxu0 0.0
      %2853 = vmatprep.subr.mxu0 0.0
      %2854 = vmatpush1.msra.mxu0 0.0
      %2855 = vmatprep.subr.mxu0 0.0
      %2856 = vmatpush1.msra.mxu0 %v2812
      %2857 = vmatprep.subr.mxu0 0.0
      %2858 = vmatpush1.msra.mxu0 %v2807
      %2859 = vmatprep.subr.mxu0 0.0
      %2860 = vmatpush2.msra.mxu0 0.0
      %2861 = vmatprep.subr.mxu0 0.0
      %2862 = vmatpush2.msra.mxu0 0.0
      %2863 = vmatprep.subr.mxu0 0.0
      %2864 = vmatpush2.msra.mxu0 0.0
      %2865 = vmatprep.subr.mxu0 0.0
      %2866 = vmatpush2.msra.mxu0 0.0
      %2867 = vmatprep.subr.mxu0 0.0
      %2868 = vmatpush2.msra.mxu0 0.0
      %2869 = vmatprep.subr.mxu0 0.0
      %2870 = vmatpush2.msra.mxu0 0.0
      %2871 = vmatprep.subr.mxu0 0.0
      %2872 = vmatpush2.msra.mxu0 0.0
      %2873 = vmatprep.subr.mxu0 0.0
      %2874 = vmatpush2.msra.mxu0 0.0
      %2875 = vmatprep.subr.mxu0 0.0
      %2876 = vmatpush2.msra.mxu0 0.0
      %2877 = vmatprep.subr.mxu0 0.0
      %2878 = vmatpush2.msra.mxu0 0.0
      %2879 = vmatprep.subr.mxu0 0.0
      %2880 = vmatpush2.msra.mxu0 0.0
      %2881 = vmatprep.subr.mxu0 0.0
      %2882 = vmatpush2.msra.mxu0 0.0
      %2883 = vmatprep.subr.mxu0 0.0
      %2884 = vmatpush2.msra.mxu0 0.0
      %2885 = vmatprep.subr.mxu0 0.0
      %2886 = vmatpush2.msra.mxu0 0.0
      %2887 = vmatprep.subr.mxu0 0.0
      %2888 = vmatpush2.msra.mxu0 0.0
      %2889 = vmatprep.subr.mxu0 0.0
      %2890 = vmatpush2.msra.mxu0 0.0
      %2891 = vmatprep.mubr.f32.mxu0 0.0
      %2892 = vmatmul.mubr.f32.gmra.mxu0 %v2816
      %v2893 = vpop.f32.mrf.mxu0
      %v2894 = vadd.f32 0.0, %v2893
      %v2895 = vpop.f32.mrf.mxu0
      %2896 = vmatprep.mubr.f32.mxu0 0.0
      %2897 = vmatmul.mubr.f32.gmra.mxu0 %v2819
      %v2898 = vpop.f32.mrf.mxu0
      %v2899 = vadd.f32 0.0, %v2898
      %v2900 = vpop.f32.mrf.mxu0
      %2901 = vmatprep.mubr.f32.mxu0 0.0
      %2902 = vmatmul.mubr.f32.gmra.mxu0 %v2822
      %v2903 = vpop.f32.mrf.mxu0
      %v2904 = vadd.f32 0.0, %v2903
      %v2905 = vpop.f32.mrf.mxu0
      %2906 = vmatprep.mubr.f32.mxu0 0.0
      %2907 = vmatmul.mubr.f32.gmra.mxu0 %v2825
      %v2908 = vpop.f32.mrf.mxu0
      %v2909 = vadd.f32 0.0, %v2908
      %v2910 = vpop.f32.mrf.mxu0
      %2911 = vdwg.mxu0
      %v2912 = vadd.f32 %v2708, %v2894
      %v2913 = vadd.f32 %v2713, %v2899
      %v2914 = vadd.f32 %v2718, %v2904
      %v2915 = vadd.f32 %v2723, %v2909
      %s2916 = scalar_lea.vmem %s5, 96
      %v2917 = vld [vmem:[%s2916] sm:$0xff]
      %v2918 = vld [vmem:[%s2916 + $0x8] sm:$0xff]
      %v2919 = vld [vmem:[%s2916 + $0x10] sm:$0xff]
      %v2920 = vld [vmem:[%s2916 + $0x18] sm:$0xff]
      %s2921 = scalar_lea.vmem %s4, 192
      %v2922 = vld [vmem:[%s2921] sm:$0xff]
      %v2923 = vld [vmem:[%s2921 + $0x8] sm:$0xff]
      %v2924 = vld [vmem:[%s2921 + $0x10] sm:$0xff]
      %v2925 = vld [vmem:[%s2921 + $0x18] sm:$0xff]
      %v2926 = vld [vmem:[%s2921 + $0x20] sm:$0xff]
      %v2927 = vld [vmem:[%s2921 + $0x28] sm:$0xff]
      %v2928 = vld [vmem:[%s2921 + $0x30] sm:$0xff]
      %v2929 = vld [vmem:[%s2921 + $0x38] sm:$0xff]
      %2930 = vmatprep.subr.mxu0 0.0
      %2931 = vmatpush1.msra.mxu0 0.0
      %2932 = vmatprep.subr.mxu0 0.0
      %2933 = vmatpush1.msra.mxu0 0.0
      %2934 = vmatprep.subr.mxu0 0.0
      %2935 = vmatpush1.msra.mxu0 0.0
      %2936 = vmatprep.subr.mxu0 0.0
      %2937 = vmatpush1.msra.mxu0 0.0
      %2938 = vmatprep.subr.mxu0 0.0
      %2939 = vmatpush1.msra.mxu0 0.0
      %2940 = vmatprep.subr.mxu0 0.0
      %2941 = vmatpush1.msra.mxu0 0.0
      %2942 = vmatprep.subr.mxu0 0.0
      %2943 = vmatpush1.msra.mxu0 0.0
      %2944 = vmatprep.subr.mxu0 0.0
      %2945 = vmatpush1.msra.mxu0 0.0
      %2946 = vmatprep.subr.mxu0 0.0
      %2947 = vmatpush1.msra.mxu0 %v2929
      %2948 = vmatprep.subr.mxu0 0.0
      %2949 = vmatpush1.msra.mxu0 %v2928
      %2950 = vmatprep.subr.mxu0 0.0
      %2951 = vmatpush1.msra.mxu0 %v2927
      %2952 = vmatprep.subr.mxu0 0.0
      %2953 = vmatpush1.msra.mxu0 %v2926
      %2954 = vmatprep.subr.mxu0 0.0
      %2955 = vmatpush1.msra.mxu0 %v2925
      %2956 = vmatprep.subr.mxu0 0.0
      %2957 = vmatpush1.msra.mxu0 %v2924
      %2958 = vmatprep.subr.mxu0 0.0
      %2959 = vmatpush1.msra.mxu0 %v2923
      %2960 = vmatprep.subr.mxu0 0.0
      %2961 = vmatpush1.msra.mxu0 %v2922
      %2962 = vmatprep.subr.mxu0 0.0
      %2963 = vmatpush2.msra.mxu0 0.0
      %2964 = vmatprep.subr.mxu0 0.0
      %2965 = vmatpush2.msra.mxu0 0.0
      %2966 = vmatprep.subr.mxu0 0.0
      %2967 = vmatpush2.msra.mxu0 0.0
      %2968 = vmatprep.subr.mxu0 0.0
      %2969 = vmatpush2.msra.mxu0 0.0
      %2970 = vmatprep.subr.mxu0 0.0
      %2971 = vmatpush2.msra.mxu0 0.0
      %2972 = vmatprep.subr.mxu0 0.0
      %2973 = vmatpush2.msra.mxu0 0.0
      %2974 = vmatprep.subr.mxu0 0.0
      %2975 = vmatpush2.msra.mxu0 0.0
      %2976 = vmatprep.subr.mxu0 0.0
      %2977 = vmatpush2.msra.mxu0 0.0
      %2978 = vmatprep.subr.mxu0 0.0
      %2979 = vmatpush2.msra.mxu0 0.0
      %2980 = vmatprep.subr.mxu0 0.0
      %2981 = vmatpush2.msra.mxu0 0.0
      %2982 = vmatprep.subr.mxu0 0.0
      %2983 = vmatpush2.msra.mxu0 0.0
      %2984 = vmatprep.subr.mxu0 0.0
      %2985 = vmatpush2.msra.mxu0 0.0
      %2986 = vmatprep.subr.mxu0 0.0
      %2987 = vmatpush2.msra.mxu0 0.0
      %2988 = vmatprep.subr.mxu0 0.0
      %2989 = vmatpush2.msra.mxu0 0.0
      %2990 = vmatprep.subr.mxu0 0.0
      %2991 = vmatpush2.msra.mxu0 0.0
      %2992 = vmatprep.subr.mxu0 0.0
      %2993 = vmatpush2.msra.mxu0 0.0
      %2994 = vmatprep.mubr.f32.mxu0 0.0
      %2995 = vmatmul.mubr.f32.gmra.mxu0 %v2362
      %v2996 = vpop.f32.mrf.mxu0
      %v2997 = vadd.f32 0.0, %v2996
      %v2998 = vpop.f32.mrf.mxu0
      %2999 = vmatprep.mubr.f32.mxu0 0.0
      %3000 = vmatmul.mubr.f32.gmra.mxu0 %v2365
      %v3001 = vpop.f32.mrf.mxu0
      %v3002 = vadd.f32 0.0, %v3001
      %v3003 = vpop.f32.mrf.mxu0
      %3004 = vdwg.mxu0
      %v3006 = vsel %vm2531, %v2917, 0
      %v3009 = vsel %vm2531, %v2918, 0
      %v3012 = vsel %vm2531, %v2919, 0
      %v3015 = vsel %vm2531, %v2920, 0
      %3017 = vmatprep.subr.mxu0 0.0
      %3018 = vmatpush1.msra.mxu0 0.0
      %3019 = vmatprep.subr.mxu0 0.0
      %3020 = vmatpush1.msra.mxu0 0.0
      %3021 = vmatprep.subr.mxu0 0.0
      %3022 = vmatpush1.msra.mxu0 0.0
      %3023 = vmatprep.subr.mxu0 0.0
      %3024 = vmatpush1.msra.mxu0 0.0
      %3025 = vmatprep.subr.mxu0 0.0
      %3026 = vmatpush1.msra.mxu0 0.0
      %3027 = vmatprep.subr.mxu0 0.0
      %3028 = vmatpush1.msra.mxu0 0.0
      %3029 = vmatprep.subr.mxu0 0.0
      %3030 = vmatpush1.msra.mxu0 0.0
      %3031 = vmatprep.subr.mxu0 0.0
      %3032 = vmatpush1.msra.mxu0 0.0
      %3033 = vmatprep.subr.mxu0 0.0
      %3034 = vmatpush1.msra.mxu0 0.0
      %3035 = vmatprep.subr.mxu0 0.0
      %3036 = vmatpush1.msra.mxu0 0.0
      %3037 = vmatprep.subr.mxu0 0.0
      %3038 = vmatpush1.msra.mxu0 0.0
      %3039 = vmatprep.subr.mxu0 0.0
      %3040 = vmatpush1.msra.mxu0 0.0
      %3041 = vmatprep.subr.mxu0 0.0
      %3042 = vmatpush1.msra.mxu0 0.0
      %3043 = vmatprep.subr.mxu0 0.0
      %3044 = vmatpush1.msra.mxu0 0.0
      %3045 = vmatprep.subr.mxu0 0.0
      %3046 = vmatpush1.msra.mxu0 %v3002
      %3047 = vmatprep.subr.mxu0 0.0
      %3048 = vmatpush1.msra.mxu0 %v2997
      %3049 = vmatprep.subr.mxu0 0.0
      %3050 = vmatpush2.msra.mxu0 0.0
      %3051 = vmatprep.subr.mxu0 0.0
      %3052 = vmatpush2.msra.mxu0 0.0
      %3053 = vmatprep.subr.mxu0 0.0
      %3054 = vmatpush2.msra.mxu0 0.0
      %3055 = vmatprep.subr.mxu0 0.0
      %3056 = vmatpush2.msra.mxu0 0.0
      %3057 = vmatprep.subr.mxu0 0.0
      %3058 = vmatpush2.msra.mxu0 0.0
      %3059 = vmatprep.subr.mxu0 0.0
      %3060 = vmatpush2.msra.mxu0 0.0
      %3061 = vmatprep.subr.mxu0 0.0
      %3062 = vmatpush2.msra.mxu0 0.0
      %3063 = vmatprep.subr.mxu0 0.0
      %3064 = vmatpush2.msra.mxu0 0.0
      %3065 = vmatprep.subr.mxu0 0.0
      %3066 = vmatpush2.msra.mxu0 0.0
      %3067 = vmatprep.subr.mxu0 0.0
      %3068 = vmatpush2.msra.mxu0 0.0
      %3069 = vmatprep.subr.mxu0 0.0
      %3070 = vmatpush2.msra.mxu0 0.0
      %3071 = vmatprep.subr.mxu0 0.0
      %3072 = vmatpush2.msra.mxu0 0.0
      %3073 = vmatprep.subr.mxu0 0.0
      %3074 = vmatpush2.msra.mxu0 0.0
      %3075 = vmatprep.subr.mxu0 0.0
      %3076 = vmatpush2.msra.mxu0 0.0
      %3077 = vmatprep.subr.mxu0 0.0
      %3078 = vmatpush2.msra.mxu0 0.0
      %3079 = vmatprep.subr.mxu0 0.0
      %3080 = vmatpush2.msra.mxu0 0.0
      %3081 = vmatprep.mubr.f32.mxu0 0.0
      %3082 = vmatmul.mubr.f32.gmra.mxu0 %v3006
      %v3083 = vpop.f32.mrf.mxu0
      %v3084 = vadd.f32 0.0, %v3083
      %v3085 = vpop.f32.mrf.mxu0
      %3086 = vmatprep.mubr.f32.mxu0 0.0
      %3087 = vmatmul.mubr.f32.gmra.mxu0 %v3009
      %v3088 = vpop.f32.mrf.mxu0
      %v3089 = vadd.f32 0.0, %v3088
      %v3090 = vpop.f32.mrf.mxu0
      %3091 = vmatprep.mubr.f32.mxu0 0.0
      %3092 = vmatmul.mubr.f32.gmra.mxu0 %v3012
      %v3093 = vpop.f32.mrf.mxu0
      %v3094 = vadd.f32 0.0, %v3093
      %v3095 = vpop.f32.mrf.mxu0
      %3096 = vmatprep.mubr.f32.mxu0 0.0
      %3097 = vmatmul.mubr.f32.gmra.mxu0 %v3015
      %v3098 = vpop.f32.mrf.mxu0
      %v3099 = vadd.f32 0.0, %v3098
      %v3100 = vpop.f32.mrf.mxu0
      %3101 = vdwg.mxu0
      %v3102 = vadd.f32 %v2912, %v3084
      %v3103 = vadd.f32 %v2913, %v3089
      %v3104 = vadd.f32 %v2914, %v3094
      %v3105 = vadd.f32 %v2915, %v3099
      %s3106 = scalar_lea.vmem %s5, 128
      %v3107 = vld [vmem:[%s3106] sm:$0xff]
      %v3108 = vld [vmem:[%s3106 + $0x8] sm:$0xff]
      %v3109 = vld [vmem:[%s3106 + $0x10] sm:$0xff]
      %v3110 = vld [vmem:[%s3106 + $0x18] sm:$0xff]
      %s3111 = scalar_lea.vmem %s4, 256
      %v3112 = vld [vmem:[%s3111] sm:$0xff]
      %v3113 = vld [vmem:[%s3111 + $0x8] sm:$0xff]
      %v3114 = vld [vmem:[%s3111 + $0x10] sm:$0xff]
      %v3115 = vld [vmem:[%s3111 + $0x18] sm:$0xff]
      %v3116 = vld [vmem:[%s3111 + $0x20] sm:$0xff]
      %v3117 = vld [vmem:[%s3111 + $0x28] sm:$0xff]
      %v3118 = vld [vmem:[%s3111 + $0x30] sm:$0xff]
      %v3119 = vld [vmem:[%s3111 + $0x38] sm:$0xff]
      %3120 = vmatprep.subr.mxu0 0.0
      %3121 = vmatpush1.msra.mxu0 0.0
      %3122 = vmatprep.subr.mxu0 0.0
      %3123 = vmatpush1.msra.mxu0 0.0
      %3124 = vmatprep.subr.mxu0 0.0
      %3125 = vmatpush1.msra.mxu0 0.0
      %3126 = vmatprep.subr.mxu0 0.0
      %3127 = vmatpush1.msra.mxu0 0.0
      %3128 = vmatprep.subr.mxu0 0.0
      %3129 = vmatpush1.msra.mxu0 0.0
      %3130 = vmatprep.subr.mxu0 0.0
      %3131 = vmatpush1.msra.mxu0 0.0
      %3132 = vmatprep.subr.mxu0 0.0
      %3133 = vmatpush1.msra.mxu0 0.0
      %3134 = vmatprep.subr.mxu0 0.0
      %3135 = vmatpush1.msra.mxu0 0.0
      %3136 = vmatprep.subr.mxu0 0.0
      %3137 = vmatpush1.msra.mxu0 %v3119
      %3138 = vmatprep.subr.mxu0 0.0
      %3139 = vmatpush1.msra.mxu0 %v3118
      %3140 = vmatprep.subr.mxu0 0.0
      %3141 = vmatpush1.msra.mxu0 %v3117
      %3142 = vmatprep.subr.mxu0 0.0
      %3143 = vmatpush1.msra.mxu0 %v3116
      %3144 = vmatprep.subr.mxu0 0.0
      %3145 = vmatpush1.msra.mxu0 %v3115
      %3146 = vmatprep.subr.mxu0 0.0
      %3147 = vmatpush1.msra.mxu0 %v3114
      %3148 = vmatprep.subr.mxu0 0.0
      %3149 = vmatpush1.msra.mxu0 %v3113
      %3150 = vmatprep.subr.mxu0 0.0
      %3151 = vmatpush1.msra.mxu0 %v3112
      %3152 = vmatprep.subr.mxu0 0.0
      %3153 = vmatpush2.msra.mxu0 0.0
      %3154 = vmatprep.subr.mxu0 0.0
      %3155 = vmatpush2.msra.mxu0 0.0
      %3156 = vmatprep.subr.mxu0 0.0
      %3157 = vmatpush2.msra.mxu0 0.0
      %3158 = vmatprep.subr.mxu0 0.0
      %3159 = vmatpush2.msra.mxu0 0.0
      %3160 = vmatprep.subr.mxu0 0.0
      %3161 = vmatpush2.msra.mxu0 0.0
      %3162 = vmatprep.subr.mxu0 0.0
      %3163 = vmatpush2.msra.mxu0 0.0
      %3164 = vmatprep.subr.mxu0 0.0
      %3165 = vmatpush2.msra.mxu0 0.0
      %3166 = vmatprep.subr.mxu0 0.0
      %3167 = vmatpush2.msra.mxu0 0.0
      %3168 = vmatprep.subr.mxu0 0.0
      %3169 = vmatpush2.msra.mxu0 0.0
      %3170 = vmatprep.subr.mxu0 0.0
      %3171 = vmatpush2.msra.mxu0 0.0
      %3172 = vmatprep.subr.mxu0 0.0
      %3173 = vmatpush2.msra.mxu0 0.0
      %3174 = vmatprep.subr.mxu0 0.0
      %3175 = vmatpush2.msra.mxu0 0.0
      %3176 = vmatprep.subr.mxu0 0.0
      %3177 = vmatpush2.msra.mxu0 0.0
      %3178 = vmatprep.subr.mxu0 0.0
      %3179 = vmatpush2.msra.mxu0 0.0
      %3180 = vmatprep.subr.mxu0 0.0
      %3181 = vmatpush2.msra.mxu0 0.0
      %3182 = vmatprep.subr.mxu0 0.0
      %3183 = vmatpush2.msra.mxu0 0.0
      %3184 = vmatprep.mubr.f32.mxu0 0.0
      %3185 = vmatmul.mubr.f32.gmra.mxu0 %v2362
      %v3186 = vpop.f32.mrf.mxu0
      %v3187 = vadd.f32 0.0, %v3186
      %v3188 = vpop.f32.mrf.mxu0
      %3189 = vmatprep.mubr.f32.mxu0 0.0
      %3190 = vmatmul.mubr.f32.gmra.mxu0 %v2365
      %v3191 = vpop.f32.mrf.mxu0
      %v3192 = vadd.f32 0.0, %v3191
      %v3193 = vpop.f32.mrf.mxu0
      %3194 = vdwg.mxu0
      %v3196 = vsel %vm2531, %v3107, 0
      %v3199 = vsel %vm2531, %v3108, 0
      %v3202 = vsel %vm2531, %v3109, 0
      %v3205 = vsel %vm2531, %v3110, 0
      %3207 = vmatprep.subr.mxu0 0.0
      %3208 = vmatpush1.msra.mxu0 0.0
      %3209 = vmatprep.subr.mxu0 0.0
      %3210 = vmatpush1.msra.mxu0 0.0
      %3211 = vmatprep.subr.mxu0 0.0
      %3212 = vmatpush1.msra.mxu0 0.0
      %3213 = vmatprep.subr.mxu0 0.0
      %3214 = vmatpush1.msra.mxu0 0.0
      %3215 = vmatprep.subr.mxu0 0.0
      %3216 = vmatpush1.msra.mxu0 0.0
      %3217 = vmatprep.subr.mxu0 0.0
      %3218 = vmatpush1.msra.mxu0 0.0
      %3219 = vmatprep.subr.mxu0 0.0
      %3220 = vmatpush1.msra.mxu0 0.0
      %3221 = vmatprep.subr.mxu0 0.0
      %3222 = vmatpush1.msra.mxu0 0.0
      %3223 = vmatprep.subr.mxu0 0.0
      %3224 = vmatpush1.msra.mxu0 0.0
      %3225 = vmatprep.subr.mxu0 0.0
      %3226 = vmatpush1.msra.mxu0 0.0
      %3227 = vmatprep.subr.mxu0 0.0
      %3228 = vmatpush1.msra.mxu0 0.0
      %3229 = vmatprep.subr.mxu0 0.0
      %3230 = vmatpush1.msra.mxu0 0.0
      %3231 = vmatprep.subr.mxu0 0.0
      %3232 = vmatpush1.msra.mxu0 0.0
      %3233 = vmatprep.subr.mxu0 0.0
      %3234 = vmatpush1.msra.mxu0 0.0
      %3235 = vmatprep.subr.mxu0 0.0
      %3236 = vmatpush1.msra.mxu0 %v3192
      %3237 = vmatprep.subr.mxu0 0.0
      %3238 = vmatpush1.msra.mxu0 %v3187
      %3239 = vmatprep.subr.mxu0 0.0
      %3240 = vmatpush2.msra.mxu0 0.0
      %3241 = vmatprep.subr.mxu0 0.0
      %3242 = vmatpush2.msra.mxu0 0.0
      %3243 = vmatprep.subr.mxu0 0.0
      %3244 = vmatpush2.msra.mxu0 0.0
      %3245 = vmatprep.subr.mxu0 0.0
      %3246 = vmatpush2.msra.mxu0 0.0
      %3247 = vmatprep.subr.mxu0 0.0
      %3248 = vmatpush2.msra.mxu0 0.0
      %3249 = vmatprep.subr.mxu0 0.0
      %3250 = vmatpush2.msra.mxu0 0.0
      %3251 = vmatprep.subr.mxu0 0.0
      %3252 = vmatpush2.msra.mxu0 0.0
      %3253 = vmatprep.subr.mxu0 0.0
      %3254 = vmatpush2.msra.mxu0 0.0
      %3255 = vmatprep.subr.mxu0 0.0
      %3256 = vmatpush2.msra.mxu0 0.0
      %3257 = vmatprep.subr.mxu0 0.0
      %3258 = vmatpush2.msra.mxu0 0.0
      %3259 = vmatprep.subr.mxu0 0.0
      %3260 = vmatpush2.msra.mxu0 0.0
      %3261 = vmatprep.subr.mxu0 0.0
      %3262 = vmatpush2.msra.mxu0 0.0
      %3263 = vmatprep.subr.mxu0 0.0
      %3264 = vmatpush2.msra.mxu0 0.0
      %3265 = vmatprep.subr.mxu0 0.0
      %3266 = vmatpush2.msra.mxu0 0.0
      %3267 = vmatprep.subr.mxu0 0.0
      %3268 = vmatpush2.msra.mxu0 0.0
      %3269 = vmatprep.subr.mxu0 0.0
      %3270 = vmatpush2.msra.mxu0 0.0
      %3271 = vmatprep.mubr.f32.mxu0 0.0
      %3272 = vmatmul.mubr.f32.gmra.mxu0 %v3196
      %v3273 = vpop.f32.mrf.mxu0
      %v3274 = vadd.f32 0.0, %v3273
      %v3275 = vpop.f32.mrf.mxu0
      %3276 = vmatprep.mubr.f32.mxu0 0.0
      %3277 = vmatmul.mubr.f32.gmra.mxu0 %v3199
      %v3278 = vpop.f32.mrf.mxu0
      %v3279 = vadd.f32 0.0, %v3278
      %v3280 = vpop.f32.mrf.mxu0
      %3281 = vmatprep.mubr.f32.mxu0 0.0
      %3282 = vmatmul.mubr.f32.gmra.mxu0 %v3202
      %v3283 = vpop.f32.mrf.mxu0
      %v3284 = vadd.f32 0.0, %v3283
      %v3285 = vpop.f32.mrf.mxu0
      %3286 = vmatprep.mubr.f32.mxu0 0.0
      %3287 = vmatmul.mubr.f32.gmra.mxu0 %v3205
      %v3288 = vpop.f32.mrf.mxu0
      %v3289 = vadd.f32 0.0, %v3288
      %v3290 = vpop.f32.mrf.mxu0
      %3291 = vdwg.mxu0
      %v3292 = vadd.f32 %v3102, %v3274
      %v3293 = vadd.f32 %v3103, %v3279
      %v3294 = vadd.f32 %v3104, %v3284
      %v3295 = vadd.f32 %v3105, %v3289
      %s3296 = scalar_lea.vmem %s5, 160
      %v3297 = vld [vmem:[%s3296] sm:$0xff]
      %v3298 = vld [vmem:[%s3296 + $0x8] sm:$0xff]
      %v3299 = vld [vmem:[%s3296 + $0x10] sm:$0xff]
      %v3300 = vld [vmem:[%s3296 + $0x18] sm:$0xff]
      %s3301 = scalar_lea.vmem %s4, 320
      %v3302 = vld [vmem:[%s3301] sm:$0xff]
      %v3303 = vld [vmem:[%s3301 + $0x8] sm:$0xff]
      %v3304 = vld [vmem:[%s3301 + $0x10] sm:$0xff]
      %v3305 = vld [vmem:[%s3301 + $0x18] sm:$0xff]
      %v3306 = vld [vmem:[%s3301 + $0x20] sm:$0xff]
      %v3307 = vld [vmem:[%s3301 + $0x28] sm:$0xff]
      %v3308 = vld [vmem:[%s3301 + $0x30] sm:$0xff]
      %v3309 = vld [vmem:[%s3301 + $0x38] sm:$0xff]
      %3310 = vmatprep.subr.mxu0 0.0
      %3311 = vmatpush1.msra.mxu0 0.0
      %3312 = vmatprep.subr.mxu0 0.0
      %3313 = vmatpush1.msra.mxu0 0.0
      %3314 = vmatprep.subr.mxu0 0.0
      %3315 = vmatpush1.msra.mxu0 0.0
      %3316 = vmatprep.subr.mxu0 0.0
      %3317 = vmatpush1.msra.mxu0 0.0
      %3318 = vmatprep.subr.mxu0 0.0
      %3319 = vmatpush1.msra.mxu0 0.0
      %3320 = vmatprep.subr.mxu0 0.0
      %3321 = vmatpush1.msra.mxu0 0.0
      %3322 = vmatprep.subr.mxu0 0.0
      %3323 = vmatpush1.msra.mxu0 0.0
      %3324 = vmatprep.subr.mxu0 0.0
      %3325 = vmatpush1.msra.mxu0 0.0
      %3326 = vmatprep.subr.mxu0 0.0
      %3327 = vmatpush1.msra.mxu0 %v3309
      %3328 = vmatprep.subr.mxu0 0.0
      %3329 = vmatpush1.msra.mxu0 %v3308
      %3330 = vmatprep.subr.mxu0 0.0
      %3331 = vmatpush1.msra.mxu0 %v3307
      %3332 = vmatprep.subr.mxu0 0.0
      %3333 = vmatpush1.msra.mxu0 %v3306
      %3334 = vmatprep.subr.mxu0 0.0
      %3335 = vmatpush1.msra.mxu0 %v3305
      %3336 = vmatprep.subr.mxu0 0.0
      %3337 = vmatpush1.msra.mxu0 %v3304
      %3338 = vmatprep.subr.mxu0 0.0
      %3339 = vmatpush1.msra.mxu0 %v3303
      %3340 = vmatprep.subr.mxu0 0.0
      %3341 = vmatpush1.msra.mxu0 %v3302
      %3342 = vmatprep.subr.mxu0 0.0
      %3343 = vmatpush2.msra.mxu0 0.0
      %3344 = vmatprep.subr.mxu0 0.0
      %3345 = vmatpush2.msra.mxu0 0.0
      %3346 = vmatprep.subr.mxu0 0.0
      %3347 = vmatpush2.msra.mxu0 0.0
      %3348 = vmatprep.subr.mxu0 0.0
      %3349 = vmatpush2.msra.mxu0 0.0
      %3350 = vmatprep.subr.mxu0 0.0
      %3351 = vmatpush2.msra.mxu0 0.0
      %3352 = vmatprep.subr.mxu0 0.0
      %3353 = vmatpush2.msra.mxu0 0.0
      %3354 = vmatprep.subr.mxu0 0.0
      %3355 = vmatpush2.msra.mxu0 0.0
      %3356 = vmatprep.subr.mxu0 0.0
      %3357 = vmatpush2.msra.mxu0 0.0
      %3358 = vmatprep.subr.mxu0 0.0
      %3359 = vmatpush2.msra.mxu0 0.0
      %3360 = vmatprep.subr.mxu0 0.0
      %3361 = vmatpush2.msra.mxu0 0.0
      %3362 = vmatprep.subr.mxu0 0.0
      %3363 = vmatpush2.msra.mxu0 0.0
      %3364 = vmatprep.subr.mxu0 0.0
      %3365 = vmatpush2.msra.mxu0 0.0
      %3366 = vmatprep.subr.mxu0 0.0
      %3367 = vmatpush2.msra.mxu0 0.0
      %3368 = vmatprep.subr.mxu0 0.0
      %3369 = vmatpush2.msra.mxu0 0.0
      %3370 = vmatprep.subr.mxu0 0.0
      %3371 = vmatpush2.msra.mxu0 0.0
      %3372 = vmatprep.subr.mxu0 0.0
      %3373 = vmatpush2.msra.mxu0 0.0
      %3374 = vmatprep.mubr.f32.mxu0 0.0
      %3375 = vmatmul.mubr.f32.gmra.mxu0 %v2362
      %v3376 = vpop.f32.mrf.mxu0
      %v3377 = vadd.f32 0.0, %v3376
      %v3378 = vpop.f32.mrf.mxu0
      %3379 = vmatprep.mubr.f32.mxu0 0.0
      %3380 = vmatmul.mubr.f32.gmra.mxu0 %v2365
      %v3381 = vpop.f32.mrf.mxu0
      %v3382 = vadd.f32 0.0, %v3381
      %v3383 = vpop.f32.mrf.mxu0
      %3384 = vdwg.mxu0
      %v3386 = vsel %vm2531, %v3297, 0
      %v3389 = vsel %vm2531, %v3298, 0
      %v3392 = vsel %vm2531, %v3299, 0
      %v3395 = vsel %vm2531, %v3300, 0
      %3397 = vmatprep.subr.mxu0 0.0
      %3398 = vmatpush1.msra.mxu0 0.0
      %3399 = vmatprep.subr.mxu0 0.0
      %3400 = vmatpush1.msra.mxu0 0.0
      %3401 = vmatprep.subr.mxu0 0.0
      %3402 = vmatpush1.msra.mxu0 0.0
      %3403 = vmatprep.subr.mxu0 0.0
      %3404 = vmatpush1.msra.mxu0 0.0
      %3405 = vmatprep.subr.mxu0 0.0
      %3406 = vmatpush1.msra.mxu0 0.0
      %3407 = vmatprep.subr.mxu0 0.0
      %3408 = vmatpush1.msra.mxu0 0.0
      %3409 = vmatprep.subr.mxu0 0.0
      %3410 = vmatpush1.msra.mxu0 0.0
      %3411 = vmatprep.subr.mxu0 0.0
      %3412 = vmatpush1.msra.mxu0 0.0
      %3413 = vmatprep.subr.mxu0 0.0
      %3414 = vmatpush1.msra.mxu0 0.0
      %3415 = vmatprep.subr.mxu0 0.0
      %3416 = vmatpush1.msra.mxu0 0.0
      %3417 = vmatprep.subr.mxu0 0.0
      %3418 = vmatpush1.msra.mxu0 0.0
      %3419 = vmatprep.subr.mxu0 0.0
      %3420 = vmatpush1.msra.mxu0 0.0
      %3421 = vmatprep.subr.mxu0 0.0
      %3422 = vmatpush1.msra.mxu0 0.0
      %3423 = vmatprep.subr.mxu0 0.0
      %3424 = vmatpush1.msra.mxu0 0.0
      %3425 = vmatprep.subr.mxu0 0.0
      %3426 = vmatpush1.msra.mxu0 %v3382
      %3427 = vmatprep.subr.mxu0 0.0
      %3428 = vmatpush1.msra.mxu0 %v3377
      %3429 = vmatprep.subr.mxu0 0.0
      %3430 = vmatpush2.msra.mxu0 0.0
      %3431 = vmatprep.subr.mxu0 0.0
      %3432 = vmatpush2.msra.mxu0 0.0
      %3433 = vmatprep.subr.mxu0 0.0
      %3434 = vmatpush2.msra.mxu0 0.0
      %3435 = vmatprep.subr.mxu0 0.0
      %3436 = vmatpush2.msra.mxu0 0.0
      %3437 = vmatprep.subr.mxu0 0.0
      %3438 = vmatpush2.msra.mxu0 0.0
      %3439 = vmatprep.subr.mxu0 0.0
      %3440 = vmatpush2.msra.mxu0 0.0
      %3441 = vmatprep.subr.mxu0 0.0
      %3442 = vmatpush2.msra.mxu0 0.0
      %3443 = vmatprep.subr.mxu0 0.0
      %3444 = vmatpush2.msra.mxu0 0.0
      %3445 = vmatprep.subr.mxu0 0.0
      %3446 = vmatpush2.msra.mxu0 0.0
      %3447 = vmatprep.subr.mxu0 0.0
      %3448 = vmatpush2.msra.mxu0 0.0
      %3449 = vmatprep.subr.mxu0 0.0
      %3450 = vmatpush2.msra.mxu0 0.0
      %3451 = vmatprep.subr.mxu0 0.0
      %3452 = vmatpush2.msra.mxu0 0.0
      %3453 = vmatprep.subr.mxu0 0.0
      %3454 = vmatpush2.msra.mxu0 0.0
      %3455 = vmatprep.subr.mxu0 0.0
      %3456 = vmatpush2.msra.mxu0 0.0
      %3457 = vmatprep.subr.mxu0 0.0
      %3458 = vmatpush2.msra.mxu0 0.0
      %3459 = vmatprep.subr.mxu0 0.0
      %3460 = vmatpush2.msra.mxu0 0.0
      %3461 = vmatprep.mubr.f32.mxu0 0.0
      %3462 = vmatmul.mubr.f32.gmra.mxu0 %v3386
      %v3463 = vpop.f32.mrf.mxu0
      %v3464 = vadd.f32 0.0, %v3463
      %v3465 = vpop.f32.mrf.mxu0
      %3466 = vmatprep.mubr.f32.mxu0 0.0
      %3467 = vmatmul.mubr.f32.gmra.mxu0 %v3389
      %v3468 = vpop.f32.mrf.mxu0
      %v3469 = vadd.f32 0.0, %v3468
      %v3470 = vpop.f32.mrf.mxu0
      %3471 = vmatprep.mubr.f32.mxu0 0.0
      %3472 = vmatmul.mubr.f32.gmra.mxu0 %v3392
      %v3473 = vpop.f32.mrf.mxu0
      %v3474 = vadd.f32 0.0, %v3473
      %v3475 = vpop.f32.mrf.mxu0
      %3476 = vmatprep.mubr.f32.mxu0 0.0
      %3477 = vmatmul.mubr.f32.gmra.mxu0 %v3395
      %v3478 = vpop.f32.mrf.mxu0
      %v3479 = vadd.f32 0.0, %v3478
      %v3480 = vpop.f32.mrf.mxu0
      %3481 = vdwg.mxu0
      %v3482 = vadd.f32 %v3292, %v3464
      %v3483 = vadd.f32 %v3293, %v3469
      %v3484 = vadd.f32 %v3294, %v3474
      %v3485 = vadd.f32 %v3295, %v3479
      %s3486 = scalar_lea.vmem %s5, 192
      %v3487 = vld [vmem:[%s3486] sm:$0xff]
      %v3488 = vld [vmem:[%s3486 + $0x8] sm:$0xff]
      %v3489 = vld [vmem:[%s3486 + $0x10] sm:$0xff]
      %v3490 = vld [vmem:[%s3486 + $0x18] sm:$0xff]
      %s3491 = scalar_lea.vmem %s4, 384
      %v3492 = vld [vmem:[%s3491] sm:$0xff]
      %v3493 = vld [vmem:[%s3491 + $0x8] sm:$0xff]
      %v3494 = vld [vmem:[%s3491 + $0x10] sm:$0xff]
      %v3495 = vld [vmem:[%s3491 + $0x18] sm:$0xff]
      %v3496 = vld [vmem:[%s3491 + $0x20] sm:$0xff]
      %v3497 = vld [vmem:[%s3491 + $0x28] sm:$0xff]
      %v3498 = vld [vmem:[%s3491 + $0x30] sm:$0xff]
      %v3499 = vld [vmem:[%s3491 + $0x38] sm:$0xff]
      %3500 = vmatprep.subr.mxu0 0.0
      %3501 = vmatpush1.msra.mxu0 0.0
      %3502 = vmatprep.subr.mxu0 0.0
      %3503 = vmatpush1.msra.mxu0 0.0
      %3504 = vmatprep.subr.mxu0 0.0
      %3505 = vmatpush1.msra.mxu0 0.0
      %3506 = vmatprep.subr.mxu0 0.0
      %3507 = vmatpush1.msra.mxu0 0.0
      %3508 = vmatprep.subr.mxu0 0.0
      %3509 = vmatpush1.msra.mxu0 0.0
      %3510 = vmatprep.subr.mxu0 0.0
      %3511 = vmatpush1.msra.mxu0 0.0
      %3512 = vmatprep.subr.mxu0 0.0
      %3513 = vmatpush1.msra.mxu0 0.0
      %3514 = vmatprep.subr.mxu0 0.0
      %3515 = vmatpush1.msra.mxu0 0.0
      %3516 = vmatprep.subr.mxu0 0.0
      %3517 = vmatpush1.msra.mxu0 %v3499
      %3518 = vmatprep.subr.mxu0 0.0
      %3519 = vmatpush1.msra.mxu0 %v3498
      %3520 = vmatprep.subr.mxu0 0.0
      %3521 = vmatpush1.msra.mxu0 %v3497
      %3522 = vmatprep.subr.mxu0 0.0
      %3523 = vmatpush1.msra.mxu0 %v3496
      %3524 = vmatprep.subr.mxu0 0.0
      %3525 = vmatpush1.msra.mxu0 %v3495
      %3526 = vmatprep.subr.mxu0 0.0
      %3527 = vmatpush1.msra.mxu0 %v3494
      %3528 = vmatprep.subr.mxu0 0.0
      %3529 = vmatpush1.msra.mxu0 %v3493
      %3530 = vmatprep.subr.mxu0 0.0
      %3531 = vmatpush1.msra.mxu0 %v3492
      %3532 = vmatprep.subr.mxu0 0.0
      %3533 = vmatpush2.msra.mxu0 0.0
      %3534 = vmatprep.subr.mxu0 0.0
      %3535 = vmatpush2.msra.mxu0 0.0
      %3536 = vmatprep.subr.mxu0 0.0
      %3537 = vmatpush2.msra.mxu0 0.0
      %3538 = vmatprep.subr.mxu0 0.0
      %3539 = vmatpush2.msra.mxu0 0.0
      %3540 = vmatprep.subr.mxu0 0.0
      %3541 = vmatpush2.msra.mxu0 0.0
      %3542 = vmatprep.subr.mxu0 0.0
      %3543 = vmatpush2.msra.mxu0 0.0
      %3544 = vmatprep.subr.mxu0 0.0
      %3545 = vmatpush2.msra.mxu0 0.0
      %3546 = vmatprep.subr.mxu0 0.0
      %3547 = vmatpush2.msra.mxu0 0.0
      %3548 = vmatprep.subr.mxu0 0.0
      %3549 = vmatpush2.msra.mxu0 0.0
      %3550 = vmatprep.subr.mxu0 0.0
      %3551 = vmatpush2.msra.mxu0 0.0
      %3552 = vmatprep.subr.mxu0 0.0
      %3553 = vmatpush2.msra.mxu0 0.0
      %3554 = vmatprep.subr.mxu0 0.0
      %3555 = vmatpush2.msra.mxu0 0.0
      %3556 = vmatprep.subr.mxu0 0.0
      %3557 = vmatpush2.msra.mxu0 0.0
      %3558 = vmatprep.subr.mxu0 0.0
      %3559 = vmatpush2.msra.mxu0 0.0
      %3560 = vmatprep.subr.mxu0 0.0
      %3561 = vmatpush2.msra.mxu0 0.0
      %3562 = vmatprep.subr.mxu0 0.0
      %3563 = vmatpush2.msra.mxu0 0.0
      %3564 = vmatprep.mubr.f32.mxu0 0.0
      %3565 = vmatmul.mubr.f32.gmra.mxu0 %v2362
      %v3566 = vpop.f32.mrf.mxu0
      %v3567 = vadd.f32 0.0, %v3566
      %v3568 = vpop.f32.mrf.mxu0
      %3569 = vmatprep.mubr.f32.mxu0 0.0
      %3570 = vmatmul.mubr.f32.gmra.mxu0 %v2365
      %v3571 = vpop.f32.mrf.mxu0
      %v3572 = vadd.f32 0.0, %v3571
      %v3573 = vpop.f32.mrf.mxu0
      %3574 = vdwg.mxu0
      %v3576 = vsel %vm2531, %v3487, 0
      %v3579 = vsel %vm2531, %v3488, 0
      %v3582 = vsel %vm2531, %v3489, 0
      %v3585 = vsel %vm2531, %v3490, 0
      %3587 = vmatprep.subr.mxu0 0.0
      %3588 = vmatpush1.msra.mxu0 0.0
      %3589 = vmatprep.subr.mxu0 0.0
      %3590 = vmatpush1.msra.mxu0 0.0
      %3591 = vmatprep.subr.mxu0 0.0
      %3592 = vmatpush1.msra.mxu0 0.0
      %3593 = vmatprep.subr.mxu0 0.0
      %3594 = vmatpush1.msra.mxu0 0.0
      %3595 = vmatprep.subr.mxu0 0.0
      %3596 = vmatpush1.msra.mxu0 0.0
      %3597 = vmatprep.subr.mxu0 0.0
      %3598 = vmatpush1.msra.mxu0 0.0
      %3599 = vmatprep.subr.mxu0 0.0
      %3600 = vmatpush1.msra.mxu0 0.0
      %3601 = vmatprep.subr.mxu0 0.0
      %3602 = vmatpush1.msra.mxu0 0.0
      %3603 = vmatprep.subr.mxu0 0.0
      %3604 = vmatpush1.msra.mxu0 0.0
      %3605 = vmatprep.subr.mxu0 0.0
      %3606 = vmatpush1.msra.mxu0 0.0
      %3607 = vmatprep.subr.mxu0 0.0
      %3608 = vmatpush1.msra.mxu0 0.0
      %3609 = vmatprep.subr.mxu0 0.0
      %3610 = vmatpush1.msra.mxu0 0.0
      %3611 = vmatprep.subr.mxu0 0.0
      %3612 = vmatpush1.msra.mxu0 0.0
      %3613 = vmatprep.subr.mxu0 0.0
      %3614 = vmatpush1.msra.mxu0 0.0
      %3615 = vmatprep.subr.mxu0 0.0
      %3616 = vmatpush1.msra.mxu0 %v3572
      %3617 = vmatprep.subr.mxu0 0.0
      %3618 = vmatpush1.msra.mxu0 %v3567
      %3619 = vmatprep.subr.mxu0 0.0
      %3620 = vmatpush2.msra.mxu0 0.0
      %3621 = vmatprep.subr.mxu0 0.0
      %3622 = vmatpush2.msra.mxu0 0.0
      %3623 = vmatprep.subr.mxu0 0.0
      %3624 = vmatpush2.msra.mxu0 0.0
      %3625 = vmatprep.subr.mxu0 0.0
      %3626 = vmatpush2.msra.mxu0 0.0
      %3627 = vmatprep.subr.mxu0 0.0
      %3628 = vmatpush2.msra.mxu0 0.0
      %3629 = vmatprep.subr.mxu0 0.0
      %3630 = vmatpush2.msra.mxu0 0.0
      %3631 = vmatprep.subr.mxu0 0.0
      %3632 = vmatpush2.msra.mxu0 0.0
      %3633 = vmatprep.subr.mxu0 0.0
      %3634 = vmatpush2.msra.mxu0 0.0
      %3635 = vmatprep.subr.mxu0 0.0
      %3636 = vmatpush2.msra.mxu0 0.0
      %3637 = vmatprep.subr.mxu0 0.0
      %3638 = vmatpush2.msra.mxu0 0.0
      %3639 = vmatprep.subr.mxu0 0.0
      %3640 = vmatpush2.msra.mxu0 0.0
      %3641 = vmatprep.subr.mxu0 0.0
      %3642 = vmatpush2.msra.mxu0 0.0
      %3643 = vmatprep.subr.mxu0 0.0
      %3644 = vmatpush2.msra.mxu0 0.0
      %3645 = vmatprep.subr.mxu0 0.0
      %3646 = vmatpush2.msra.mxu0 0.0
      %3647 = vmatprep.subr.mxu0 0.0
      %3648 = vmatpush2.msra.mxu0 0.0
      %3649 = vmatprep.subr.mxu0 0.0
      %3650 = vmatpush2.msra.mxu0 0.0
      %3651 = vmatprep.mubr.f32.mxu0 0.0
      %3652 = vmatmul.mubr.f32.gmra.mxu0 %v3576
      %v3653 = vpop.f32.mrf.mxu0
      %v3654 = vadd.f32 0.0, %v3653
      %v3655 = vpop.f32.mrf.mxu0
      %3656 = vmatprep.mubr.f32.mxu0 0.0
      %3657 = vmatmul.mubr.f32.gmra.mxu0 %v3579
      %v3658 = vpop.f32.mrf.mxu0
      %v3659 = vadd.f32 0.0, %v3658
      %v3660 = vpop.f32.mrf.mxu0
      %3661 = vmatprep.mubr.f32.mxu0 0.0
      %3662 = vmatmul.mubr.f32.gmra.mxu0 %v3582
      %v3663 = vpop.f32.mrf.mxu0
      %v3664 = vadd.f32 0.0, %v3663
      %v3665 = vpop.f32.mrf.mxu0
      %3666 = vmatprep.mubr.f32.mxu0 0.0
      %3667 = vmatmul.mubr.f32.gmra.mxu0 %v3585
      %v3668 = vpop.f32.mrf.mxu0
      %v3669 = vadd.f32 0.0, %v3668
      %v3670 = vpop.f32.mrf.mxu0
      %3671 = vdwg.mxu0
      %v3672 = vadd.f32 %v3482, %v3654
      %v3673 = vadd.f32 %v3483, %v3659
      %v3674 = vadd.f32 %v3484, %v3664
      %v3675 = vadd.f32 %v3485, %v3669
      %s3676 = scalar_lea.vmem %s5, 224
      %v3677 = vld [vmem:[%s3676] sm:$0xff]
      %v3678 = vld [vmem:[%s3676 + $0x8] sm:$0xff]
      %v3679 = vld [vmem:[%s3676 + $0x10] sm:$0xff]
      %v3680 = vld [vmem:[%s3676 + $0x18] sm:$0xff]
      %s3681 = scalar_lea.vmem %s4, 448
      %v3682 = vld [vmem:[%s3681] sm:$0xff]
      %v3683 = vld [vmem:[%s3681 + $0x8] sm:$0xff]
      %v3684 = vld [vmem:[%s3681 + $0x10] sm:$0xff]
      %v3685 = vld [vmem:[%s3681 + $0x18] sm:$0xff]
      %v3686 = vld [vmem:[%s3681 + $0x20] sm:$0xff]
      %v3687 = vld [vmem:[%s3681 + $0x28] sm:$0xff]
      %v3688 = vld [vmem:[%s3681 + $0x30] sm:$0xff]
      %v3689 = vld [vmem:[%s3681 + $0x38] sm:$0xff]
      %3690 = vmatprep.subr.mxu0 0.0
      %3691 = vmatpush1.msra.mxu0 0.0
      %3692 = vmatprep.subr.mxu0 0.0
      %3693 = vmatpush1.msra.mxu0 0.0
      %3694 = vmatprep.subr.mxu0 0.0
      %3695 = vmatpush1.msra.mxu0 0.0
      %3696 = vmatprep.subr.mxu0 0.0
      %3697 = vmatpush1.msra.mxu0 0.0
      %3698 = vmatprep.subr.mxu0 0.0
      %3699 = vmatpush1.msra.mxu0 0.0
      %3700 = vmatprep.subr.mxu0 0.0
      %3701 = vmatpush1.msra.mxu0 0.0
      %3702 = vmatprep.subr.mxu0 0.0
      %3703 = vmatpush1.msra.mxu0 0.0
      %3704 = vmatprep.subr.mxu0 0.0
      %3705 = vmatpush1.msra.mxu0 0.0
      %3706 = vmatprep.subr.mxu0 0.0
      %3707 = vmatpush1.msra.mxu0 %v3689
      %3708 = vmatprep.subr.mxu0 0.0
      %3709 = vmatpush1.msra.mxu0 %v3688
      %3710 = vmatprep.subr.mxu0 0.0
      %3711 = vmatpush1.msra.mxu0 %v3687
      %3712 = vmatprep.subr.mxu0 0.0
      %3713 = vmatpush1.msra.mxu0 %v3686
      %3714 = vmatprep.subr.mxu0 0.0
      %3715 = vmatpush1.msra.mxu0 %v3685
      %3716 = vmatprep.subr.mxu0 0.0
      %3717 = vmatpush1.msra.mxu0 %v3684
      %3718 = vmatprep.subr.mxu0 0.0
      %3719 = vmatpush1.msra.mxu0 %v3683
      %3720 = vmatprep.subr.mxu0 0.0
      %3721 = vmatpush1.msra.mxu0 %v3682
      %3722 = vmatprep.subr.mxu0 0.0
      %3723 = vmatpush2.msra.mxu0 0.0
      %3724 = vmatprep.subr.mxu0 0.0
      %3725 = vmatpush2.msra.mxu0 0.0
      %3726 = vmatprep.subr.mxu0 0.0
      %3727 = vmatpush2.msra.mxu0 0.0
      %3728 = vmatprep.subr.mxu0 0.0
      %3729 = vmatpush2.msra.mxu0 0.0
      %3730 = vmatprep.subr.mxu0 0.0
      %3731 = vmatpush2.msra.mxu0 0.0
      %3732 = vmatprep.subr.mxu0 0.0
      %3733 = vmatpush2.msra.mxu0 0.0
      %3734 = vmatprep.subr.mxu0 0.0
      %3735 = vmatpush2.msra.mxu0 0.0
      %3736 = vmatprep.subr.mxu0 0.0
      %3737 = vmatpush2.msra.mxu0 0.0
      %3738 = vmatprep.subr.mxu0 0.0
      %3739 = vmatpush2.msra.mxu0 0.0
      %3740 = vmatprep.subr.mxu0 0.0
      %3741 = vmatpush2.msra.mxu0 0.0
      %3742 = vmatprep.subr.mxu0 0.0
      %3743 = vmatpush2.msra.mxu0 0.0
      %3744 = vmatprep.subr.mxu0 0.0
      %3745 = vmatpush2.msra.mxu0 0.0
      %3746 = vmatprep.subr.mxu0 0.0
      %3747 = vmatpush2.msra.mxu0 0.0
      %3748 = vmatprep.subr.mxu0 0.0
      %3749 = vmatpush2.msra.mxu0 0.0
      %3750 = vmatprep.subr.mxu0 0.0
      %3751 = vmatpush2.msra.mxu0 0.0
      %3752 = vmatprep.subr.mxu0 0.0
      %3753 = vmatpush2.msra.mxu0 0.0
      %3754 = vmatprep.mubr.f32.mxu0 0.0
      %3755 = vmatmul.mubr.f32.gmra.mxu0 %v2362
      %v3756 = vpop.f32.mrf.mxu0
      %v3757 = vadd.f32 0.0, %v3756
      %v3758 = vpop.f32.mrf.mxu0
      %3759 = vmatprep.mubr.f32.mxu0 0.0
      %3760 = vmatmul.mubr.f32.gmra.mxu0 %v2365
      %v3761 = vpop.f32.mrf.mxu0
      %v3762 = vadd.f32 0.0, %v3761
      %v3763 = vpop.f32.mrf.mxu0
      %3764 = vdwg.mxu0
      %v3766 = vsel %vm2531, %v3677, 0
      %v3769 = vsel %vm2531, %v3678, 0
      %v3772 = vsel %vm2531, %v3679, 0
      %v3775 = vsel %vm2531, %v3680, 0
      %3777 = vmatprep.subr.mxu0 0.0
      %3778 = vmatpush1.msra.mxu0 0.0
      %3779 = vmatprep.subr.mxu0 0.0
      %3780 = vmatpush1.msra.mxu0 0.0
      %3781 = vmatprep.subr.mxu0 0.0
      %3782 = vmatpush1.msra.mxu0 0.0
      %3783 = vmatprep.subr.mxu0 0.0
      %3784 = vmatpush1.msra.mxu0 0.0
      %3785 = vmatprep.subr.mxu0 0.0
      %3786 = vmatpush1.msra.mxu0 0.0
      %3787 = vmatprep.subr.mxu0 0.0
      %3788 = vmatpush1.msra.mxu0 0.0
      %3789 = vmatprep.subr.mxu0 0.0
      %3790 = vmatpush1.msra.mxu0 0.0
      %3791 = vmatprep.subr.mxu0 0.0
      %3792 = vmatpush1.msra.mxu0 0.0
      %3793 = vmatprep.subr.mxu0 0.0
      %3794 = vmatpush1.msra.mxu0 0.0
      %3795 = vmatprep.subr.mxu0 0.0
      %3796 = vmatpush1.msra.mxu0 0.0
      %3797 = vmatprep.subr.mxu0 0.0
      %3798 = vmatpush1.msra.mxu0 0.0
      %3799 = vmatprep.subr.mxu0 0.0
      %3800 = vmatpush1.msra.mxu0 0.0
      %3801 = vmatprep.subr.mxu0 0.0
      %3802 = vmatpush1.msra.mxu0 0.0
      %3803 = vmatprep.subr.mxu0 0.0
      %3804 = vmatpush1.msra.mxu0 0.0
      %3805 = vmatprep.subr.mxu0 0.0
      %3806 = vmatpush1.msra.mxu0 %v3762
      %3807 = vmatprep.subr.mxu0 0.0
      %3808 = vmatpush1.msra.mxu0 %v3757
      %3809 = vmatprep.subr.mxu0 0.0
      %3810 = vmatpush2.msra.mxu0 0.0
      %3811 = vmatprep.subr.mxu0 0.0
      %3812 = vmatpush2.msra.mxu0 0.0
      %3813 = vmatprep.subr.mxu0 0.0
      %3814 = vmatpush2.msra.mxu0 0.0
      %3815 = vmatprep.subr.mxu0 0.0
      %3816 = vmatpush2.msra.mxu0 0.0
      %3817 = vmatprep.subr.mxu0 0.0
      %3818 = vmatpush2.msra.mxu0 0.0
      %3819 = vmatprep.subr.mxu0 0.0
      %3820 = vmatpush2.msra.mxu0 0.0
      %3821 = vmatprep.subr.mxu0 0.0
      %3822 = vmatpush2.msra.mxu0 0.0
      %3823 = vmatprep.subr.mxu0 0.0
      %3824 = vmatpush2.msra.mxu0 0.0
      %3825 = vmatprep.subr.mxu0 0.0
      %3826 = vmatpush2.msra.mxu0 0.0
      %3827 = vmatprep.subr.mxu0 0.0
      %3828 = vmatpush2.msra.mxu0 0.0
      %3829 = vmatprep.subr.mxu0 0.0
      %3830 = vmatpush2.msra.mxu0 0.0
      %3831 = vmatprep.subr.mxu0 0.0
      %3832 = vmatpush2.msra.mxu0 0.0
      %3833 = vmatprep.subr.mxu0 0.0
      %3834 = vmatpush2.msra.mxu0 0.0
      %3835 = vmatprep.subr.mxu0 0.0
      %3836 = vmatpush2.msra.mxu0 0.0
      %3837 = vmatprep.subr.mxu0 0.0
      %3838 = vmatpush2.msra.mxu0 0.0
      %3839 = vmatprep.subr.mxu0 0.0
      %3840 = vmatpush2.msra.mxu0 0.0
      %3841 = vmatprep.mubr.f32.mxu0 0.0
      %3842 = vmatmul.mubr.f32.gmra.mxu0 %v3766
      %v3843 = vpop.f32.mrf.mxu0
      %v3844 = vadd.f32 0.0, %v3843
      %v3845 = vpop.f32.mrf.mxu0
      %3846 = vmatprep.mubr.f32.mxu0 0.0
      %3847 = vmatmul.mubr.f32.gmra.mxu0 %v3769
      %v3848 = vpop.f32.mrf.mxu0
      %v3849 = vadd.f32 0.0, %v3848
      %v3850 = vpop.f32.mrf.mxu0
      %3851 = vmatprep.mubr.f32.mxu0 0.0
      %3852 = vmatmul.mubr.f32.gmra.mxu0 %v3772
      %v3853 = vpop.f32.mrf.mxu0
      %v3854 = vadd.f32 0.0, %v3853
      %v3855 = vpop.f32.mrf.mxu0
      %3856 = vmatprep.mubr.f32.mxu0 0.0
      %3857 = vmatmul.mubr.f32.gmra.mxu0 %v3775
      %v3858 = vpop.f32.mrf.mxu0
      %v3859 = vadd.f32 0.0, %v3858
      %v3860 = vpop.f32.mrf.mxu0
      %3861 = vdwg.mxu0
      %v3862 = vadd.f32 %v3672, %v3844
      %v3863 = vadd.f32 %v3673, %v3849
      %v3864 = vadd.f32 %v3674, %v3854
      %v3865 = vadd.f32 %v3675, %v3859
      %s3866 = scalar_lea.vmem %s5, 256
      %v3867 = vld [vmem:[%s3866] sm:$0xff]
      %v3868 = vld [vmem:[%s3866 + $0x8] sm:$0xff]
      %v3869 = vld [vmem:[%s3866 + $0x10] sm:$0xff]
      %v3870 = vld [vmem:[%s3866 + $0x18] sm:$0xff]
      %s3871 = scalar_lea.vmem %s4, 512
      %v3872 = vld [vmem:[%s3871] sm:$0xff]
      %v3873 = vld [vmem:[%s3871 + $0x8] sm:$0xff]
      %v3874 = vld [vmem:[%s3871 + $0x10] sm:$0xff]
      %v3875 = vld [vmem:[%s3871 + $0x18] sm:$0xff]
      %v3876 = vld [vmem:[%s3871 + $0x20] sm:$0xff]
      %v3877 = vld [vmem:[%s3871 + $0x28] sm:$0xff]
      %v3878 = vld [vmem:[%s3871 + $0x30] sm:$0xff]
      %v3879 = vld [vmem:[%s3871 + $0x38] sm:$0xff]
      %3880 = vmatprep.subr.mxu0 0.0
      %3881 = vmatpush1.msra.mxu0 0.0
      %3882 = vmatprep.subr.mxu0 0.0
      %3883 = vmatpush1.msra.mxu0 0.0
      %3884 = vmatprep.subr.mxu0 0.0
      %3885 = vmatpush1.msra.mxu0 0.0
      %3886 = vmatprep.subr.mxu0 0.0
      %3887 = vmatpush1.msra.mxu0 0.0
      %3888 = vmatprep.subr.mxu0 0.0
      %3889 = vmatpush1.msra.mxu0 0.0
      %3890 = vmatprep.subr.mxu0 0.0
      %3891 = vmatpush1.msra.mxu0 0.0
      %3892 = vmatprep.subr.mxu0 0.0
      %3893 = vmatpush1.msra.mxu0 0.0
      %3894 = vmatprep.subr.mxu0 0.0
      %3895 = vmatpush1.msra.mxu0 0.0
      %3896 = vmatprep.subr.mxu0 0.0
      %3897 = vmatpush1.msra.mxu0 %v3879
      %3898 = vmatprep.subr.mxu0 0.0
      %3899 = vmatpush1.msra.mxu0 %v3878
      %3900 = vmatprep.subr.mxu0 0.0
      %3901 = vmatpush1.msra.mxu0 %v3877
      %3902 = vmatprep.subr.mxu0 0.0
      %3903 = vmatpush1.msra.mxu0 %v3876
      %3904 = vmatprep.subr.mxu0 0.0
      %3905 = vmatpush1.msra.mxu0 %v3875
      %3906 = vmatprep.subr.mxu0 0.0
      %3907 = vmatpush1.msra.mxu0 %v3874
      %3908 = vmatprep.subr.mxu0 0.0
      %3909 = vmatpush1.msra.mxu0 %v3873
      %3910 = vmatprep.subr.mxu0 0.0
      %3911 = vmatpush1.msra.mxu0 %v3872
      %3912 = vmatprep.subr.mxu0 0.0
      %3913 = vmatpush2.msra.mxu0 0.0
      %3914 = vmatprep.subr.mxu0 0.0
      %3915 = vmatpush2.msra.mxu0 0.0
      %3916 = vmatprep.subr.mxu0 0.0
      %3917 = vmatpush2.msra.mxu0 0.0
      %3918 = vmatprep.subr.mxu0 0.0
      %3919 = vmatpush2.msra.mxu0 0.0
      %3920 = vmatprep.subr.mxu0 0.0
      %3921 = vmatpush2.msra.mxu0 0.0
      %3922 = vmatprep.subr.mxu0 0.0
      %3923 = vmatpush2.msra.mxu0 0.0
      %3924 = vmatprep.subr.mxu0 0.0
      %3925 = vmatpush2.msra.mxu0 0.0
      %3926 = vmatprep.subr.mxu0 0.0
      %3927 = vmatpush2.msra.mxu0 0.0
      %3928 = vmatprep.subr.mxu0 0.0
      %3929 = vmatpush2.msra.mxu0 0.0
      %3930 = vmatprep.subr.mxu0 0.0
      %3931 = vmatpush2.msra.mxu0 0.0
      %3932 = vmatprep.subr.mxu0 0.0
      %3933 = vmatpush2.msra.mxu0 0.0
      %3934 = vmatprep.subr.mxu0 0.0
      %3935 = vmatpush2.msra.mxu0 0.0
      %3936 = vmatprep.subr.mxu0 0.0
      %3937 = vmatpush2.msra.mxu0 0.0
      %3938 = vmatprep.subr.mxu0 0.0
      %3939 = vmatpush2.msra.mxu0 0.0
      %3940 = vmatprep.subr.mxu0 0.0
      %3941 = vmatpush2.msra.mxu0 0.0
      %3942 = vmatprep.subr.mxu0 0.0
      %3943 = vmatpush2.msra.mxu0 0.0
      %3944 = vmatprep.mubr.f32.mxu0 0.0
      %3945 = vmatmul.mubr.f32.gmra.mxu0 %v2362
      %v3946 = vpop.f32.mrf.mxu0
      %v3947 = vadd.f32 0.0, %v3946
      %v3948 = vpop.f32.mrf.mxu0
      %3949 = vmatprep.mubr.f32.mxu0 0.0
      %3950 = vmatmul.mubr.f32.gmra.mxu0 %v2365
      %v3951 = vpop.f32.mrf.mxu0
      %v3952 = vadd.f32 0.0, %v3951
      %v3953 = vpop.f32.mrf.mxu0
      %3954 = vdwg.mxu0
      %v3956 = vsel %vm2531, %v3867, 0
      %v3959 = vsel %vm2531, %v3868, 0
      %v3962 = vsel %vm2531, %v3869, 0
      %v3965 = vsel %vm2531, %v3870, 0
      %3967 = vmatprep.subr.mxu0 0.0
      %3968 = vmatpush1.msra.mxu0 0.0
      %3969 = vmatprep.subr.mxu0 0.0
      %3970 = vmatpush1.msra.mxu0 0.0
      %3971 = vmatprep.subr.mxu0 0.0
      %3972 = vmatpush1.msra.mxu0 0.0
      %3973 = vmatprep.subr.mxu0 0.0
      %3974 = vmatpush1.msra.mxu0 0.0
      %3975 = vmatprep.subr.mxu0 0.0
      %3976 = vmatpush1.msra.mxu0 0.0
      %3977 = vmatprep.subr.mxu0 0.0
      %3978 = vmatpush1.msra.mxu0 0.0
      %3979 = vmatprep.subr.mxu0 0.0
      %3980 = vmatpush1.msra.mxu0 0.0
      %3981 = vmatprep.subr.mxu0 0.0
      %3982 = vmatpush1.msra.mxu0 0.0
      %3983 = vmatprep.subr.mxu0 0.0
      %3984 = vmatpush1.msra.mxu0 0.0
      %3985 = vmatprep.subr.mxu0 0.0
      %3986 = vmatpush1.msra.mxu0 0.0
      %3987 = vmatprep.subr.mxu0 0.0
      %3988 = vmatpush1.msra.mxu0 0.0
      %3989 = vmatprep.subr.mxu0 0.0
      %3990 = vmatpush1.msra.mxu0 0.0
      %3991 = vmatprep.subr.mxu0 0.0
      %3992 = vmatpush1.msra.mxu0 0.0
      %3993 = vmatprep.subr.mxu0 0.0
      %3994 = vmatpush1.msra.mxu0 0.0
      %3995 = vmatprep.subr.mxu0 0.0
      %3996 = vmatpush1.msra.mxu0 %v3952
      %3997 = vmatprep.subr.mxu0 0.0
      %3998 = vmatpush1.msra.mxu0 %v3947
      %3999 = vmatprep.subr.mxu0 0.0
      %4000 = vmatpush2.msra.mxu0 0.0
      %4001 = vmatprep.subr.mxu0 0.0
      %4002 = vmatpush2.msra.mxu0 0.0
      %4003 = vmatprep.subr.mxu0 0.0
      %4004 = vmatpush2.msra.mxu0 0.0
      %4005 = vmatprep.subr.mxu0 0.0
      %4006 = vmatpush2.msra.mxu0 0.0
      %4007 = vmatprep.subr.mxu0 0.0
      %4008 = vmatpush2.msra.mxu0 0.0
      %4009 = vmatprep.subr.mxu0 0.0
      %4010 = vmatpush2.msra.mxu0 0.0
      %4011 = vmatprep.subr.mxu0 0.0
      %4012 = vmatpush2.msra.mxu0 0.0
      %4013 = vmatprep.subr.mxu0 0.0
      %4014 = vmatpush2.msra.mxu0 0.0
      %4015 = vmatprep.subr.mxu0 0.0
      %4016 = vmatpush2.msra.mxu0 0.0
      %4017 = vmatprep.subr.mxu0 0.0
      %4018 = vmatpush2.msra.mxu0 0.0
      %4019 = vmatprep.subr.mxu0 0.0
      %4020 = vmatpush2.msra.mxu0 0.0
      %4021 = vmatprep.subr.mxu0 0.0
      %4022 = vmatpush2.msra.mxu0 0.0
      %4023 = vmatprep.subr.mxu0 0.0
      %4024 = vmatpush2.msra.mxu0 0.0
      %4025 = vmatprep.subr.mxu0 0.0
      %4026 = vmatpush2.msra.mxu0 0.0
      %4027 = vmatprep.subr.mxu0 0.0
      %4028 = vmatpush2.msra.mxu0 0.0
      %4029 = vmatprep.subr.mxu0 0.0
      %4030 = vmatpush2.msra.mxu0 0.0
      %4031 = vmatprep.mubr.f32.mxu0 0.0
      %4032 = vmatmul.mubr.f32.gmra.mxu0 %v3956
      %v4033 = vpop.f32.mrf.mxu0
      %v4034 = vadd.f32 0.0, %v4033
      %v4035 = vpop.f32.mrf.mxu0
      %4036 = vmatprep.mubr.f32.mxu0 0.0
      %4037 = vmatmul.mubr.f32.gmra.mxu0 %v3959
      %v4038 = vpop.f32.mrf.mxu0
      %v4039 = vadd.f32 0.0, %v4038
      %v4040 = vpop.f32.mrf.mxu0
      %4041 = vmatprep.mubr.f32.mxu0 0.0
      %4042 = vmatmul.mubr.f32.gmra.mxu0 %v3962
      %v4043 = vpop.f32.mrf.mxu0
      %v4044 = vadd.f32 0.0, %v4043
      %v4045 = vpop.f32.mrf.mxu0
      %4046 = vmatprep.mubr.f32.mxu0 0.0
      %4047 = vmatmul.mubr.f32.gmra.mxu0 %v3965
      %v4048 = vpop.f32.mrf.mxu0
      %v4049 = vadd.f32 0.0, %v4048
      %v4050 = vpop.f32.mrf.mxu0
      %4051 = vdwg.mxu0
      %v4052 = vadd.f32 %v3862, %v4034
      %v4053 = vadd.f32 %v3863, %v4039
      %v4054 = vadd.f32 %v3864, %v4044
      %v4055 = vadd.f32 %v3865, %v4049
      %v4056 = vld [vmem:[%s6] sm:$0xff]
      %v4057 = vld [vmem:[%s6 + $0x8] sm:$0xff]
      %v4058 = vld [vmem:[%s6 + $0x10] sm:$0xff]
      %v4059 = vld [vmem:[%s6 + $0x18] sm:$0xff]
      %4061 = vset.pattern.permute.xlu0 0
      %4062 = vperm.xlu0 %4061, %v4056
      %v4063 = vpop.permute.xlu0 %4062
      %4066 = vset.pattern.permute.xlu0 0
      %4067 = vperm.xlu0 %4066, %v4057
      %v4068 = vpop.permute.xlu0 %4067
      %4071 = vset.pattern.permute.xlu0 0
      %4072 = vperm.xlu0 %4071, %v4058
      %v4073 = vpop.permute.xlu0 %4072
      %4076 = vset.pattern.permute.xlu0 0
      %4077 = vperm.xlu0 %4076, %v4059
      %v4078 = vpop.permute.xlu0 %4077
      %v4080 = vadd.f32 %v4052, %v4063
      %v4081 = vadd.f32 %v4053, %v4068
      %v4082 = vadd.f32 %v4054, %v4073
      %v4083 = vadd.f32 %v4055, %v4078
      %vm4084 = vcmp.ge.f32.partialorder %v4080, 0.0
      %vm4085 = vcmp.ge.f32.partialorder %v4081, 0.0
      %vm4086 = vcmp.ge.f32.partialorder %v4082, 0.0
      %vm4087 = vcmp.ge.f32.partialorder %v4083, 0.0
      %v4088 = vmul.f32 %v4080, 0.01
      %v4089 = vmul.f32 %v4081, 0.01
      %v4090 = vmul.f32 %v4082, 0.01
      %v4091 = vmul.f32 %v4083, 0.01
      %v4092 = vsel %vm4084, %v4080, %v4088
      %v4093 = vsel %vm4085, %v4081, %v4089
      %v4094 = vsel %vm4086, %v4082, %v4090
      %v4095 = vsel %vm4087, %v4083, %v4091
      %v4096 = vld [vmem:[%s10] sm:$0xff]
      %v4097 = vld [vmem:[%s10 + $0x8] sm:$0xff]
      %v4098 = vld [vmem:[%s7] sm:$0xff]
      %v4099 = vld [vmem:[%s7 + $0x8] sm:$0xff]
      %v4100 = vmul.f32 %v4092, %v4098
      %v4101 = vmul.f32 %v4093, %v4099
      %v4102 = vsel %vm2531, %v4100, 0.0
      %4103 = vadd.xlane.f32.xlu0 %v4102
      %v4104 = vpop.xlane.xlu0 %4103
      %v4105 = vsel %vm2531, %v4101, 0.0
      %4106 = vadd.xlane.f32.xlu0 %v4105
      %v4107 = vpop.xlane.xlu0 %4106
      %v4108 = vadd.f32 %v4104, %v4107
      %v4109 = vrot.slane %v4108, 4
      %v4110 = vadd.f32 %v4108, %v4109
      %v4111 = vrot.slane %v4110, 2
      %v4112 = vadd.f32 %v4110, %v4111
      %v4113 = vrot.slane %v4112, 1
      %v4114 = vadd.f32 %v4112, %v4113
      %v4115 = vld [vmem:[%s8] sm:$0x1]
      %v4116 = vadd.f32 %v4114, %v4115
      %v4117 = vld [vmem:[%s9] sm:$0xff]
      %v4118 = vld [vmem:[%s9 + $0x8] sm:$0xff]
      %v4120 = vlaneseq
      %v4121 = vshrl.u32 %v4120, 7
      %v4122 = vsub.s32 0, %v4121
      %v4123 = vrot.slane %v4116, %v4122
      %4124 = vset.pattern.permute.xlu0 0
      %4125 = vperm.xlu0 %4124, %v4123
      %v4126 = vpop.permute.xlu0 %4125
      %v4128 = vmul.f32 %v4126, %v4117
      %v4129 = vmul.f32 %v4126, %v4118
      %v4130 = vadd.f32 %v4096, %v4128
      %v4131 = vadd.f32 %v4097, %v4129
      %s4132 = scalar_lea.vmem %s7, 16
      %v4133 = vld [vmem:[%s4132] sm:$0xff]
      %v4134 = vld [vmem:[%s4132 + $0x8] sm:$0xff]
      %v4135 = vmul.f32 %v4092, %v4133
      %v4136 = vmul.f32 %v4093, %v4134
      %v4137 = vsel %vm2531, %v4135, 0.0
      %4138 = vadd.xlane.f32.xlu0 %v4137
      %v4139 = vpop.xlane.xlu0 %4138
      %v4140 = vsel %vm2531, %v4136, 0.0
      %4141 = vadd.xlane.f32.xlu0 %v4140
      %v4142 = vpop.xlane.xlu0 %4141
      %v4143 = vadd.f32 %v4139, %v4142
      %v4144 = vrot.slane %v4143, 4
      %v4145 = vadd.f32 %v4143, %v4144
      %v4146 = vrot.slane %v4145, 2
      %v4147 = vadd.f32 %v4145, %v4146
      %v4148 = vrot.slane %v4147, 1
      %v4149 = vadd.f32 %v4147, %v4148
      %v4150 = vadd.f32 %v4149, %v4115
      %s4151 = scalar_lea.vmem %s9, 16
      %v4152 = vld [vmem:[%s4151] sm:$0xff]
      %v4153 = vld [vmem:[%s4151 + $0x8] sm:$0xff]
      %v4155 = vlaneseq
      %v4156 = vshrl.u32 %v4155, 7
      %v4157 = vsub.s32 0, %v4156
      %v4158 = vrot.slane %v4150, %v4157
      %4159 = vset.pattern.permute.xlu0 1
      %4160 = vperm.xlu0 %4159, %v4158
      %v4161 = vpop.permute.xlu0 %4160
      %v4163 = vmul.f32 %v4161, %v4152
      %v4164 = vmul.f32 %v4161, %v4153
      %v4165 = vadd.f32 %v4130, %v4163
      %v4166 = vadd.f32 %v4131, %v4164
      %s4167 = scalar_lea.vmem %s7, 32
      %v4168 = vld [vmem:[%s4167] sm:$0xff]
      %v4169 = vld [vmem:[%s4167 + $0x8] sm:$0xff]
      %v4170 = vmul.f32 %v4092, %v4168
      %v4171 = vmul.f32 %v4093, %v4169
      %v4172 = vsel %vm2531, %v4170, 0.0
      %4173 = vadd.xlane.f32.xlu0 %v4172
      %v4174 = vpop.xlane.xlu0 %4173
      %v4175 = vsel %vm2531, %v4171, 0.0
      %4176 = vadd.xlane.f32.xlu0 %v4175
      %v4177 = vpop.xlane.xlu0 %4176
      %v4178 = vadd.f32 %v4174, %v4177
      %v4179 = vrot.slane %v4178, 4
      %v4180 = vadd.f32 %v4178, %v4179
      %v4181 = vrot.slane %v4180, 2
      %v4182 = vadd.f32 %v4180, %v4181
      %v4183 = vrot.slane %v4182, 1
      %v4184 = vadd.f32 %v4182, %v4183
      %v4185 = vadd.f32 %v4184, %v4115
      %s4186 = scalar_lea.vmem %s9, 32
      %v4187 = vld [vmem:[%s4186] sm:$0xff]
      %v4188 = vld [vmem:[%s4186 + $0x8] sm:$0xff]
      %v4190 = vlaneseq
      %v4191 = vshrl.u32 %v4190, 7
      %v4192 = vsub.s32 0, %v4191
      %v4193 = vrot.slane %v4185, %v4192
      %4194 = vset.pattern.permute.xlu0 2
      %4195 = vperm.xlu0 %4194, %v4193
      %v4196 = vpop.permute.xlu0 %4195
      %v4198 = vmul.f32 %v4196, %v4187
      %v4199 = vmul.f32 %v4196, %v4188
      %v4200 = vadd.f32 %v4165, %v4198
      %v4201 = vadd.f32 %v4166, %v4199
      %v4202 = vmul.f32 %v4094, %v4098
      %v4203 = vmul.f32 %v4095, %v4099
      %v4204 = vsel %vm2531, %v4202, 0.0
      %4205 = vadd.xlane.f32.xlu0 %v4204
      %v4206 = vpop.xlane.xlu0 %4205
      %v4207 = vsel %vm2531, %v4203, 0.0
      %4208 = vadd.xlane.f32.xlu0 %v4207
      %v4209 = vpop.xlane.xlu0 %4208
      %v4210 = vadd.f32 %v4206, %v4209
      %v4211 = vrot.slane %v4210, 4
      %v4212 = vadd.f32 %v4210, %v4211
      %v4213 = vrot.slane %v4212, 2
      %v4214 = vadd.f32 %v4212, %v4213
      %v4215 = vrot.slane %v4214, 1
      %v4216 = vadd.f32 %v4214, %v4215
      %v4217 = vadd.f32 %v4216, %v4115
      %v4219 = vlaneseq
      %v4220 = vshrl.u32 %v4219, 7
      %v4221 = vsub.s32 0, %v4220
      %v4222 = vrot.slane %v4217, %v4221
      %4223 = vset.pattern.permute.xlu0 0
      %4224 = vperm.xlu0 %4223, %v4222
      %v4225 = vpop.permute.xlu0 %4224
      %v4227 = vmul.f32 %v4225, %v4117
      %v4228 = vmul.f32 %v4225, %v4118
      %v4229 = vadd.f32 %v4096, %v4227
      %v4230 = vadd.f32 %v4097, %v4228
      %v4231 = vmul.f32 %v4094, %v4133
      %v4232 = vmul.f32 %v4095, %v4134
      %v4233 = vsel %vm2531, %v4231, 0.0
      %4234 = vadd.xlane.f32.xlu0 %v4233
      %v4235 = vpop.xlane.xlu0 %4234
      %v4236 = vsel %vm2531, %v4232, 0.0
      %4237 = vadd.xlane.f32.xlu0 %v4236
      %v4238 = vpop.xlane.xlu0 %4237
      %v4239 = vadd.f32 %v4235, %v4238
      %v4240 = vrot.slane %v4239, 4
      %v4241 = vadd.f32 %v4239, %v4240
      %v4242 = vrot.slane %v4241, 2
      %v4243 = vadd.f32 %v4241, %v4242
      %v4244 = vrot.slane %v4243, 1
      %v4245 = vadd.f32 %v4243, %v4244
      %v4246 = vadd.f32 %v4245, %v4115
      %v4248 = vlaneseq
      %v4249 = vshrl.u32 %v4248, 7
      %v4250 = vsub.s32 0, %v4249
      %v4251 = vrot.slane %v4246, %v4250
      %4252 = vset.pattern.permute.xlu0 1
      %4253 = vperm.xlu0 %4252, %v4251
      %v4254 = vpop.permute.xlu0 %4253
      %v4256 = vmul.f32 %v4254, %v4152
      %v4257 = vmul.f32 %v4254, %v4153
      %v4258 = vadd.f32 %v4229, %v4256
      %v4259 = vadd.f32 %v4230, %v4257
      %v4260 = vmul.f32 %v4094, %v4168
      %v4261 = vmul.f32 %v4095, %v4169
      %v4262 = vsel %vm2531, %v4260, 0.0
      %4263 = vadd.xlane.f32.xlu0 %v4262
      %v4264 = vpop.xlane.xlu0 %4263
      %v4265 = vsel %vm2531, %v4261, 0.0
      %4266 = vadd.xlane.f32.xlu0 %v4265
      %v4267 = vpop.xlane.xlu0 %4266
      %v4268 = vadd.f32 %v4264, %v4267
      %v4269 = vrot.slane %v4268, 4
      %v4270 = vadd.f32 %v4268, %v4269
      %v4271 = vrot.slane %v4270, 2
      %v4272 = vadd.f32 %v4270, %v4271
      %v4273 = vrot.slane %v4272, 1
      %v4274 = vadd.f32 %v4272, %v4273
      %v4275 = vadd.f32 %v4274, %v4115
      %v4277 = vlaneseq
      %v4278 = vshrl.u32 %v4277, 7
      %v4279 = vsub.s32 0, %v4278
      %v4280 = vrot.slane %v4275, %v4279
      %4281 = vset.pattern.permute.xlu0 2
      %4282 = vperm.xlu0 %4281, %v4280
      %v4283 = vpop.permute.xlu0 %4282
      %v4285 = vmul.f32 %v4283, %v4187
      %v4286 = vmul.f32 %v4283, %v4188
      %v4287 = vadd.f32 %v4258, %v4285
      %v4288 = vadd.f32 %v4259, %v4286
      %v4289 = vld [vmem:[%s12] sm:$0xff]
      %v4290 = vld [vmem:[%s12 + $0x8] sm:$0xff]
      %v4291 = vld [vmem:[%s12 + $0x10] sm:$0xff]
      %v4292 = vld [vmem:[%s12 + $0x18] sm:$0xff]
      %vm4293 = vcmask 261120
      %v4295 = vsel %vm4293, %v4289, 0
      %v4298 = vsel %vm4293, %v4290, 0
      %v4301 = vsel %vm4293, %v4291, 0
      %v4304 = vsel %vm4293, %v4292, 0
      %4306 = vmatprep.subr.mxu0 0.0
      %4307 = vmatpush1.msra.mxu0 0.0
      %4308 = vmatprep.subr.mxu0 0.0
      %4309 = vmatpush1.msra.mxu0 0.0
      %4310 = vmatprep.subr.mxu0 0.0
      %4311 = vmatpush1.msra.mxu0 0.0
      %4312 = vmatprep.subr.mxu0 0.0
      %4313 = vmatpush1.msra.mxu0 0.0
      %4314 = vmatprep.subr.mxu0 0.0
      %4315 = vmatpush1.msra.mxu0 0.0
      %4316 = vmatprep.subr.mxu0 0.0
      %4317 = vmatpush1.msra.mxu0 0.0
      %4318 = vmatprep.subr.mxu0 0.0
      %4319 = vmatpush1.msra.mxu0 0.0
      %4320 = vmatprep.subr.mxu0 0.0
      %4321 = vmatpush1.msra.mxu0 0.0
      %4322 = vmatprep.subr.mxu0 0.0
      %4323 = vmatpush1.msra.mxu0 0.0
      %4324 = vmatprep.subr.mxu0 0.0
      %4325 = vmatpush1.msra.mxu0 0.0
      %4326 = vmatprep.subr.mxu0 0.0
      %4327 = vmatpush1.msra.mxu0 0.0
      %4328 = vmatprep.subr.mxu0 0.0
      %4329 = vmatpush1.msra.mxu0 0.0
      %4330 = vmatprep.subr.mxu0 0.0
      %4331 = vmatpush1.msra.mxu0 %v4288
      %4332 = vmatprep.subr.mxu0 0.0
      %4333 = vmatpush1.msra.mxu0 %v4287
      %4334 = vmatprep.subr.mxu0 0.0
      %4335 = vmatpush1.msra.mxu0 %v4201
      %4336 = vmatprep.subr.mxu0 0.0
      %4337 = vmatpush1.msra.mxu0 %v4200
      %4338 = vmatprep.subr.mxu0 0.0
      %4339 = vmatpush2.msra.mxu0 0.0
      %4340 = vmatprep.subr.mxu0 0.0
      %4341 = vmatpush2.msra.mxu0 0.0
      %4342 = vmatprep.subr.mxu0 0.0
      %4343 = vmatpush2.msra.mxu0 0.0
      %4344 = vmatprep.subr.mxu0 0.0
      %4345 = vmatpush2.msra.mxu0 0.0
      %4346 = vmatprep.subr.mxu0 0.0
      %4347 = vmatpush2.msra.mxu0 0.0
      %4348 = vmatprep.subr.mxu0 0.0
      %4349 = vmatpush2.msra.mxu0 0.0
      %4350 = vmatprep.subr.mxu0 0.0
      %4351 = vmatpush2.msra.mxu0 0.0
      %4352 = vmatprep.subr.mxu0 0.0
      %4353 = vmatpush2.msra.mxu0 0.0
      %4354 = vmatprep.subr.mxu0 0.0
      %4355 = vmatpush2.msra.mxu0 0.0
      %4356 = vmatprep.subr.mxu0 0.0
      %4357 = vmatpush2.msra.mxu0 0.0
      %4358 = vmatprep.subr.mxu0 0.0
      %4359 = vmatpush2.msra.mxu0 0.0
      %4360 = vmatprep.subr.mxu0 0.0
      %4361 = vmatpush2.msra.mxu0 0.0
      %4362 = vmatprep.subr.mxu0 0.0
      %4363 = vmatpush2.msra.mxu0 0.0
      %4364 = vmatprep.subr.mxu0 0.0
      %4365 = vmatpush2.msra.mxu0 0.0
      %4366 = vmatprep.subr.mxu0 0.0
      %4367 = vmatpush2.msra.mxu0 0.0
      %4368 = vmatprep.subr.mxu0 0.0
      %4369 = vmatpush2.msra.mxu0 0.0
      %4370 = vmatprep.mubr.f32.mxu0 0.0
      %4371 = vmatmul.mubr.f32.gmra.mxu0 %v4295
      %v4372 = vpop.f32.mrf.mxu0
      %v4373 = vadd.f32 0.0, %v4372
      %v4374 = vpop.f32.mrf.mxu0
      %4375 = vmatprep.mubr.f32.mxu0 0.0
      %4376 = vmatmul.mubr.f32.gmra.mxu0 %v4298
      %v4377 = vpop.f32.mrf.mxu0
      %v4378 = vadd.f32 0.0, %v4377
      %v4379 = vpop.f32.mrf.mxu0
      %4380 = vmatprep.mubr.f32.mxu0 0.0
      %4381 = vmatmul.mubr.f32.gmra.mxu0 %v4301
      %v4382 = vpop.f32.mrf.mxu0
      %v4383 = vadd.f32 0.0, %v4382
      %v4384 = vpop.f32.mrf.mxu0
      %4385 = vmatprep.mubr.f32.mxu0 0.0
      %4386 = vmatmul.mubr.f32.gmra.mxu0 %v4304
      %v4387 = vpop.f32.mrf.mxu0
      %v4388 = vadd.f32 0.0, %v4387
      %v4389 = vpop.f32.mrf.mxu0
      %4390 = vdwg.mxu0
      %v4391 = vld [vmem:[%s11] sm:$0xff]
      %v4392 = vld [vmem:[%s11 + $0x8] sm:$0xff]
      %s4393 = scalar_lea.vmem %s12, 32
      %v4394 = vld [vmem:[%s4393] sm:$0xff]
      %v4395 = vld [vmem:[%s4393 + $0x8] sm:$0xff]
      %v4396 = vld [vmem:[%s4393 + $0x10] sm:$0xff]
      %v4397 = vld [vmem:[%s4393 + $0x18] sm:$0xff]
      %v4399 = vsel %vm4293, %v4394, 0
      %v4402 = vsel %vm4293, %v4395, 0
      %v4405 = vsel %vm4293, %v4396, 0
      %v4408 = vsel %vm4293, %v4397, 0
      %4410 = vmatprep.subr.mxu0 0.0
      %4411 = vmatpush1.msra.mxu0 0.0
      %4412 = vmatprep.subr.mxu0 0.0
      %4413 = vmatpush1.msra.mxu0 0.0
      %4414 = vmatprep.subr.mxu0 0.0
      %4415 = vmatpush1.msra.mxu0 0.0
      %4416 = vmatprep.subr.mxu0 0.0
      %4417 = vmatpush1.msra.mxu0 0.0
      %4418 = vmatprep.subr.mxu0 0.0
      %4419 = vmatpush1.msra.mxu0 0.0
      %4420 = vmatprep.subr.mxu0 0.0
      %4421 = vmatpush1.msra.mxu0 0.0
      %4422 = vmatprep.subr.mxu0 0.0
      %4423 = vmatpush1.msra.mxu0 0.0
      %4424 = vmatprep.subr.mxu0 0.0
      %4425 = vmatpush1.msra.mxu0 0.0
      %4426 = vmatprep.subr.mxu0 0.0
      %4427 = vmatpush1.msra.mxu0 0.0
      %4428 = vmatprep.subr.mxu0 0.0
      %4429 = vmatpush1.msra.mxu0 0.0
      %4430 = vmatprep.subr.mxu0 0.0
      %4431 = vmatpush1.msra.mxu0 0.0
      %4432 = vmatprep.subr.mxu0 0.0
      %4433 = vmatpush1.msra.mxu0 0.0
      %4434 = vmatprep.subr.mxu0 0.0
      %4435 = vmatpush1.msra.mxu0 %v4288
      %4436 = vmatprep.subr.mxu0 0.0
      %4437 = vmatpush1.msra.mxu0 %v4287
      %4438 = vmatprep.subr.mxu0 0.0
      %4439 = vmatpush1.msra.mxu0 %v4201
      %4440 = vmatprep.subr.mxu0 0.0
      %4441 = vmatpush1.msra.mxu0 %v4200
      %4442 = vmatprep.subr.mxu0 0.0
      %4443 = vmatpush2.msra.mxu0 0.0
      %4444 = vmatprep.subr.mxu0 0.0
      %4445 = vmatpush2.msra.mxu0 0.0
      %4446 = vmatprep.subr.mxu0 0.0
      %4447 = vmatpush2.msra.mxu0 0.0
      %4448 = vmatprep.subr.mxu0 0.0
      %4449 = vmatpush2.msra.mxu0 0.0
      %4450 = vmatprep.subr.mxu0 0.0
      %4451 = vmatpush2.msra.mxu0 0.0
      %4452 = vmatprep.subr.mxu0 0.0
      %4453 = vmatpush2.msra.mxu0 0.0
      %4454 = vmatprep.subr.mxu0 0.0
      %4455 = vmatpush2.msra.mxu0 0.0
      %4456 = vmatprep.subr.mxu0 0.0
      %4457 = vmatpush2.msra.mxu0 0.0
      %4458 = vmatprep.subr.mxu0 0.0
      %4459 = vmatpush2.msra.mxu0 0.0
      %4460 = vmatprep.subr.mxu0 0.0
      %4461 = vmatpush2.msra.mxu0 0.0
      %4462 = vmatprep.subr.mxu0 0.0
      %4463 = vmatpush2.msra.mxu0 0.0
      %4464 = vmatprep.subr.mxu0 0.0
      %4465 = vmatpush2.msra.mxu0 0.0
      %4466 = vmatprep.subr.mxu0 0.0
      %4467 = vmatpush2.msra.mxu0 0.0
      %4468 = vmatprep.subr.mxu0 0.0
      %4469 = vmatpush2.msra.mxu0 0.0
      %4470 = vmatprep.subr.mxu0 0.0
      %4471 = vmatpush2.msra.mxu0 0.0
      %4472 = vmatprep.subr.mxu0 0.0
      %4473 = vmatpush2.msra.mxu0 0.0
      %4474 = vmatprep.mubr.f32.mxu0 0.0
      %4475 = vmatmul.mubr.f32.gmra.mxu0 %v4399
      %v4476 = vpop.f32.mrf.mxu0
      %v4477 = vadd.f32 0.0, %v4476
      %v4478 = vpop.f32.mrf.mxu0
      %4479 = vmatprep.mubr.f32.mxu0 0.0
      %4480 = vmatmul.mubr.f32.gmra.mxu0 %v4402
      %v4481 = vpop.f32.mrf.mxu0
      %v4482 = vadd.f32 0.0, %v4481
      %v4483 = vpop.f32.mrf.mxu0
      %4484 = vmatprep.mubr.f32.mxu0 0.0
      %4485 = vmatmul.mubr.f32.gmra.mxu0 %v4405
      %v4486 = vpop.f32.mrf.mxu0
      %v4487 = vadd.f32 0.0, %v4486
      %v4488 = vpop.f32.mrf.mxu0
      %4489 = vmatprep.mubr.f32.mxu0 0.0
      %4490 = vmatmul.mubr.f32.gmra.mxu0 %v4408
      %v4491 = vpop.f32.mrf.mxu0
      %v4492 = vadd.f32 0.0, %v4491
      %v4493 = vpop.f32.mrf.mxu0
      %4494 = vdwg.mxu0
      %s4495 = scalar_lea.vmem %s11, 16
      %v4496 = vld [vmem:[%s4495] sm:$0xff]
      %v4497 = vld [vmem:[%s4495 + $0x8] sm:$0xff]
      %v4499 = vsel %vm2531, %v4477, 0
      %v4502 = vsel %vm2531, %v4482, 0
      %v4505 = vsel %vm2531, %v4487, 0
      %v4508 = vsel %vm2531, %v4492, 0
      %4510 = vmatprep.subr.mxu0 0.0
      %4511 = vmatpush1.msra.mxu0 0.0
      %4512 = vmatprep.subr.mxu0 0.0
      %4513 = vmatpush1.msra.mxu0 0.0
      %4514 = vmatprep.subr.mxu0 0.0
      %4515 = vmatpush1.msra.mxu0 0.0
      %4516 = vmatprep.subr.mxu0 0.0
      %4517 = vmatpush1.msra.mxu0 0.0
      %4518 = vmatprep.subr.mxu0 0.0
      %4519 = vmatpush1.msra.mxu0 0.0
      %4520 = vmatprep.subr.mxu0 0.0
      %4521 = vmatpush1.msra.mxu0 0.0
      %4522 = vmatprep.subr.mxu0 0.0
      %4523 = vmatpush1.msra.mxu0 0.0
      %4524 = vmatprep.subr.mxu0 0.0
      %4525 = vmatpush1.msra.mxu0 0.0
      %4526 = vmatprep.subr.mxu0 0.0
      %4527 = vmatpush1.msra.mxu0 0.0
      %4528 = vmatprep.subr.mxu0 0.0
      %4529 = vmatpush1.msra.mxu0 0.0
      %4530 = vmatprep.subr.mxu0 0.0
      %4531 = vmatpush1.msra.mxu0 0.0
      %4532 = vmatprep.subr.mxu0 0.0
      %4533 = vmatpush1.msra.mxu0 0.0
      %4534 = vmatprep.subr.mxu0 0.0
      %4535 = vmatpush1.msra.mxu0 0.0
      %4536 = vmatprep.subr.mxu0 0.0
      %4537 = vmatpush1.msra.mxu0 0.0
      %4538 = vmatprep.subr.mxu0 0.0
      %4539 = vmatpush1.msra.mxu0 %v4497
      %4540 = vmatprep.subr.mxu0 0.0
      %4541 = vmatpush1.msra.mxu0 %v4496
      %4542 = vmatprep.subr.mxu0 0.0
      %4543 = vmatpush2.msra.mxu0 0.0
      %4544 = vmatprep.subr.mxu0 0.0
      %4545 = vmatpush2.msra.mxu0 0.0
      %4546 = vmatprep.subr.mxu0 0.0
      %4547 = vmatpush2.msra.mxu0 0.0
      %4548 = vmatprep.subr.mxu0 0.0
      %4549 = vmatpush2.msra.mxu0 0.0
      %4550 = vmatprep.subr.mxu0 0.0
      %4551 = vmatpush2.msra.mxu0 0.0
      %4552 = vmatprep.subr.mxu0 0.0
      %4553 = vmatpush2.msra.mxu0 0.0
      %4554 = vmatprep.subr.mxu0 0.0
      %4555 = vmatpush2.msra.mxu0 0.0
      %4556 = vmatprep.subr.mxu0 0.0
      %4557 = vmatpush2.msra.mxu0 0.0
      %4558 = vmatprep.subr.mxu0 0.0
      %4559 = vmatpush2.msra.mxu0 0.0
      %4560 = vmatprep.subr.mxu0 0.0
      %4561 = vmatpush2.msra.mxu0 0.0
      %4562 = vmatprep.subr.mxu0 0.0
      %4563 = vmatpush2.msra.mxu0 0.0
      %4564 = vmatprep.subr.mxu0 0.0
      %4565 = vmatpush2.msra.mxu0 0.0
      %4566 = vmatprep.subr.mxu0 0.0
      %4567 = vmatpush2.msra.mxu0 0.0
      %4568 = vmatprep.subr.mxu0 0.0
      %4569 = vmatpush2.msra.mxu0 0.0
      %4570 = vmatprep.subr.mxu0 0.0
      %4571 = vmatpush2.msra.mxu0 0.0
      %4572 = vmatprep.subr.mxu0 0.0
      %4573 = vmatpush2.msra.mxu0 0.0
      %4574 = vmatprep.mubr.f32.mxu0 0.0
      %4575 = vmatmul.mubr.f32.gmra.mxu0 %v4499
      %v4576 = vpop.f32.mrf.mxu0
      %v4577 = vadd.f32 0.0, %v4576
      %v4578 = vpop.f32.mrf.mxu0
      %4579 = vmatprep.mubr.f32.mxu0 0.0
      %4580 = vmatmul.mubr.f32.gmra.mxu0 %v4502
      %v4581 = vpop.f32.mrf.mxu0
      %v4582 = vadd.f32 0.0, %v4581
      %v4583 = vpop.f32.mrf.mxu0
      %4584 = vmatprep.mubr.f32.mxu0 0.0
      %4585 = vmatmul.mubr.f32.gmra.mxu0 %v4505
      %v4586 = vpop.f32.mrf.mxu0
      %v4587 = vadd.f32 0.0, %v4586
      %v4588 = vpop.f32.mrf.mxu0
      %4589 = vmatprep.mubr.f32.mxu0 0.0
      %4590 = vmatmul.mubr.f32.gmra.mxu0 %v4508
      %v4591 = vpop.f32.mrf.mxu0
      %v4592 = vadd.f32 0.0, %v4591
      %v4593 = vpop.f32.mrf.mxu0
      %4594 = vdwg.mxu0
      %v4596 = vsel %vm2531, %v4373, 0
      %v4599 = vsel %vm2531, %v4378, 0
      %v4602 = vsel %vm2531, %v4383, 0
      %v4605 = vsel %vm2531, %v4388, 0
      %4607 = vmatprep.subr.mxu0 0.0
      %4608 = vmatpush1.msra.mxu0 0.0
      %4609 = vmatprep.subr.mxu0 0.0
      %4610 = vmatpush1.msra.mxu0 0.0
      %4611 = vmatprep.subr.mxu0 0.0
      %4612 = vmatpush1.msra.mxu0 0.0
      %4613 = vmatprep.subr.mxu0 0.0
      %4614 = vmatpush1.msra.mxu0 0.0
      %4615 = vmatprep.subr.mxu0 0.0
      %4616 = vmatpush1.msra.mxu0 0.0
      %4617 = vmatprep.subr.mxu0 0.0
      %4618 = vmatpush1.msra.mxu0 0.0
      %4619 = vmatprep.subr.mxu0 0.0
      %4620 = vmatpush1.msra.mxu0 0.0
      %4621 = vmatprep.subr.mxu0 0.0
      %4622 = vmatpush1.msra.mxu0 0.0
      %4623 = vmatprep.subr.mxu0 0.0
      %4624 = vmatpush1.msra.mxu0 0.0
      %4625 = vmatprep.subr.mxu0 0.0
      %4626 = vmatpush1.msra.mxu0 0.0
      %4627 = vmatprep.subr.mxu0 0.0
      %4628 = vmatpush1.msra.mxu0 0.0
      %4629 = vmatprep.subr.mxu0 0.0
      %4630 = vmatpush1.msra.mxu0 0.0
      %4631 = vmatprep.subr.mxu0 0.0
      %4632 = vmatpush1.msra.mxu0 0.0
      %4633 = vmatprep.subr.mxu0 0.0
      %4634 = vmatpush1.msra.mxu0 0.0
      %4635 = vmatprep.subr.mxu0 0.0
      %4636 = vmatpush1.msra.mxu0 %v4392
      %4637 = vmatprep.subr.mxu0 0.0
      %4638 = vmatpush1.msra.mxu0 %v4391
      %4639 = vmatprep.subr.mxu0 0.0
      %4640 = vmatpush2.msra.mxu0 0.0
      %4641 = vmatprep.subr.mxu0 0.0
      %4642 = vmatpush2.msra.mxu0 0.0
      %4643 = vmatprep.subr.mxu0 0.0
      %4644 = vmatpush2.msra.mxu0 0.0
      %4645 = vmatprep.subr.mxu0 0.0
      %4646 = vmatpush2.msra.mxu0 0.0
      %4647 = vmatprep.subr.mxu0 0.0
      %4648 = vmatpush2.msra.mxu0 0.0
      %4649 = vmatprep.subr.mxu0 0.0
      %4650 = vmatpush2.msra.mxu0 0.0
      %4651 = vmatprep.subr.mxu0 0.0
      %4652 = vmatpush2.msra.mxu0 0.0
      %4653 = vmatprep.subr.mxu0 0.0
      %4654 = vmatpush2.msra.mxu0 0.0
      %4655 = vmatprep.subr.mxu0 0.0
      %4656 = vmatpush2.msra.mxu0 0.0
      %4657 = vmatprep.subr.mxu0 0.0
      %4658 = vmatpush2.msra.mxu0 0.0
      %4659 = vmatprep.subr.mxu0 0.0
      %4660 = vmatpush2.msra.mxu0 0.0
      %4661 = vmatprep.subr.mxu0 0.0
      %4662 = vmatpush2.msra.mxu0 0.0
      %4663 = vmatprep.subr.mxu0 0.0
      %4664 = vmatpush2.msra.mxu0 0.0
      %4665 = vmatprep.subr.mxu0 0.0
      %4666 = vmatpush2.msra.mxu0 0.0
      %4667 = vmatprep.subr.mxu0 0.0
      %4668 = vmatpush2.msra.mxu0 0.0
      %4669 = vmatprep.subr.mxu0 0.0
      %4670 = vmatpush2.msra.mxu0 0.0
      %4671 = vmatprep.mubr.f32.mxu0 0.0
      %4672 = vmatmul.mubr.f32.gmra.mxu0 %v4596
      %v4673 = vpop.f32.mrf.mxu0
      %v4674 = vadd.f32 %v4577, %v4673
      %v4675 = vpop.f32.mrf.mxu0
      %4676 = vmatprep.mubr.f32.mxu0 0.0
      %4677 = vmatmul.mubr.f32.gmra.mxu0 %v4599
      %v4678 = vpop.f32.mrf.mxu0
      %v4679 = vadd.f32 %v4582, %v4678
      %v4680 = vpop.f32.mrf.mxu0
      %4681 = vmatprep.mubr.f32.mxu0 0.0
      %4682 = vmatmul.mubr.f32.gmra.mxu0 %v4602
      %v4683 = vpop.f32.mrf.mxu0
      %v4684 = vadd.f32 %v4587, %v4683
      %v4685 = vpop.f32.mrf.mxu0
      %4686 = vmatprep.mubr.f32.mxu0 0.0
      %4687 = vmatmul.mubr.f32.gmra.mxu0 %v4605
      %v4688 = vpop.f32.mrf.mxu0
      %v4689 = vadd.f32 %v4592, %v4688
      %v4690 = vpop.f32.mrf.mxu0
      %4691 = vdwg.mxu0
      %s4692 = scalar_lea.vmem %s12, 64
      %v4693 = vld [vmem:[%s4692] sm:$0xff]
      %v4694 = vld [vmem:[%s4692 + $0x8] sm:$0xff]
      %v4695 = vld [vmem:[%s4692 + $0x10] sm:$0xff]
      %v4696 = vld [vmem:[%s4692 + $0x18] sm:$0xff]
      %v4698 = vsel %vm4293, %v4693, 0
      %v4701 = vsel %vm4293, %v4694, 0
      %v4704 = vsel %vm4293, %v4695, 0
      %v4707 = vsel %vm4293, %v4696, 0
      %4709 = vmatprep.subr.mxu0 0.0
      %4710 = vmatpush1.msra.mxu0 0.0
      %4711 = vmatprep.subr.mxu0 0.0
      %4712 = vmatpush1.msra.mxu0 0.0
      %4713 = vmatprep.subr.mxu0 0.0
      %4714 = vmatpush1.msra.mxu0 0.0
      %4715 = vmatprep.subr.mxu0 0.0
      %4716 = vmatpush1.msra.mxu0 0.0
      %4717 = vmatprep.subr.mxu0 0.0
      %4718 = vmatpush1.msra.mxu0 0.0
      %4719 = vmatprep.subr.mxu0 0.0
      %4720 = vmatpush1.msra.mxu0 0.0
      %4721 = vmatprep.subr.mxu0 0.0
      %4722 = vmatpush1.msra.mxu0 0.0
      %4723 = vmatprep.subr.mxu0 0.0
      %4724 = vmatpush1.msra.mxu0 0.0
      %4725 = vmatprep.subr.mxu0 0.0
      %4726 = vmatpush1.msra.mxu0 0.0
      %4727 = vmatprep.subr.mxu0 0.0
      %4728 = vmatpush1.msra.mxu0 0.0
      %4729 = vmatprep.subr.mxu0 0.0
      %4730 = vmatpush1.msra.mxu0 0.0
      %4731 = vmatprep.subr.mxu0 0.0
      %4732 = vmatpush1.msra.mxu0 0.0
      %4733 = vmatprep.subr.mxu0 0.0
      %4734 = vmatpush1.msra.mxu0 %v4288
      %4735 = vmatprep.subr.mxu0 0.0
      %4736 = vmatpush1.msra.mxu0 %v4287
      %4737 = vmatprep.subr.mxu0 0.0
      %4738 = vmatpush1.msra.mxu0 %v4201
      %4739 = vmatprep.subr.mxu0 0.0
      %4740 = vmatpush1.msra.mxu0 %v4200
      %4741 = vmatprep.subr.mxu0 0.0
      %4742 = vmatpush2.msra.mxu0 0.0
      %4743 = vmatprep.subr.mxu0 0.0
      %4744 = vmatpush2.msra.mxu0 0.0
      %4745 = vmatprep.subr.mxu0 0.0
      %4746 = vmatpush2.msra.mxu0 0.0
      %4747 = vmatprep.subr.mxu0 0.0
      %4748 = vmatpush2.msra.mxu0 0.0
      %4749 = vmatprep.subr.mxu0 0.0
      %4750 = vmatpush2.msra.mxu0 0.0
      %4751 = vmatprep.subr.mxu0 0.0
      %4752 = vmatpush2.msra.mxu0 0.0
      %4753 = vmatprep.subr.mxu0 0.0
      %4754 = vmatpush2.msra.mxu0 0.0
      %4755 = vmatprep.subr.mxu0 0.0
      %4756 = vmatpush2.msra.mxu0 0.0
      %4757 = vmatprep.subr.mxu0 0.0
      %4758 = vmatpush2.msra.mxu0 0.0
      %4759 = vmatprep.subr.mxu0 0.0
      %4760 = vmatpush2.msra.mxu0 0.0
      %4761 = vmatprep.subr.mxu0 0.0
      %4762 = vmatpush2.msra.mxu0 0.0
      %4763 = vmatprep.subr.mxu0 0.0
      %4764 = vmatpush2.msra.mxu0 0.0
      %4765 = vmatprep.subr.mxu0 0.0
      %4766 = vmatpush2.msra.mxu0 0.0
      %4767 = vmatprep.subr.mxu0 0.0
      %4768 = vmatpush2.msra.mxu0 0.0
      %4769 = vmatprep.subr.mxu0 0.0
      %4770 = vmatpush2.msra.mxu0 0.0
      %4771 = vmatprep.subr.mxu0 0.0
      %4772 = vmatpush2.msra.mxu0 0.0
      %4773 = vmatprep.mubr.f32.mxu0 0.0
      %4774 = vmatmul.mubr.f32.gmra.mxu0 %v4698
      %v4775 = vpop.f32.mrf.mxu0
      %v4776 = vadd.f32 0.0, %v4775
      %v4777 = vpop.f32.mrf.mxu0
      %4778 = vmatprep.mubr.f32.mxu0 0.0
      %4779 = vmatmul.mubr.f32.gmra.mxu0 %v4701
      %v4780 = vpop.f32.mrf.mxu0
      %v4781 = vadd.f32 0.0, %v4780
      %v4782 = vpop.f32.mrf.mxu0
      %4783 = vmatprep.mubr.f32.mxu0 0.0
      %4784 = vmatmul.mubr.f32.gmra.mxu0 %v4704
      %v4785 = vpop.f32.mrf.mxu0
      %v4786 = vadd.f32 0.0, %v4785
      %v4787 = vpop.f32.mrf.mxu0
      %4788 = vmatprep.mubr.f32.mxu0 0.0
      %4789 = vmatmul.mubr.f32.gmra.mxu0 %v4707
      %v4790 = vpop.f32.mrf.mxu0
      %v4791 = vadd.f32 0.0, %v4790
      %v4792 = vpop.f32.mrf.mxu0
      %4793 = vdwg.mxu0
      %s4794 = scalar_lea.vmem %s11, 32
      %v4795 = vld [vmem:[%s4794] sm:$0xff]
      %v4796 = vld [vmem:[%s4794 + $0x8] sm:$0xff]
      %v4798 = vsel %vm2531, %v4776, 0
      %v4801 = vsel %vm2531, %v4781, 0
      %v4804 = vsel %vm2531, %v4786, 0
      %v4807 = vsel %vm2531, %v4791, 0
      %4809 = vmatprep.subr.mxu0 0.0
      %4810 = vmatpush1.msra.mxu0 0.0
      %4811 = vmatprep.subr.mxu0 0.0
      %4812 = vmatpush1.msra.mxu0 0.0
      %4813 = vmatprep.subr.mxu0 0.0
      %4814 = vmatpush1.msra.mxu0 0.0
      %4815 = vmatprep.subr.mxu0 0.0
      %4816 = vmatpush1.msra.mxu0 0.0
      %4817 = vmatprep.subr.mxu0 0.0
      %4818 = vmatpush1.msra.mxu0 0.0
      %4819 = vmatprep.subr.mxu0 0.0
      %4820 = vmatpush1.msra.mxu0 0.0
      %4821 = vmatprep.subr.mxu0 0.0
      %4822 = vmatpush1.msra.mxu0 0.0
      %4823 = vmatprep.subr.mxu0 0.0
      %4824 = vmatpush1.msra.mxu0 0.0
      %4825 = vmatprep.subr.mxu0 0.0
      %4826 = vmatpush1.msra.mxu0 0.0
      %4827 = vmatprep.subr.mxu0 0.0
      %4828 = vmatpush1.msra.mxu0 0.0
      %4829 = vmatprep.subr.mxu0 0.0
      %4830 = vmatpush1.msra.mxu0 0.0
      %4831 = vmatprep.subr.mxu0 0.0
      %4832 = vmatpush1.msra.mxu0 0.0
      %4833 = vmatprep.subr.mxu0 0.0
      %4834 = vmatpush1.msra.mxu0 0.0
      %4835 = vmatprep.subr.mxu0 0.0
      %4836 = vmatpush1.msra.mxu0 0.0
      %4837 = vmatprep.subr.mxu0 0.0
      %4838 = vmatpush1.msra.mxu0 %v4796
      %4839 = vmatprep.subr.mxu0 0.0
      %4840 = vmatpush1.msra.mxu0 %v4795
      %4841 = vmatprep.subr.mxu0 0.0
      %4842 = vmatpush2.msra.mxu0 0.0
      %4843 = vmatprep.subr.mxu0 0.0
      %4844 = vmatpush2.msra.mxu0 0.0
      %4845 = vmatprep.subr.mxu0 0.0
      %4846 = vmatpush2.msra.mxu0 0.0
      %4847 = vmatprep.subr.mxu0 0.0
      %4848 = vmatpush2.msra.mxu0 0.0
      %4849 = vmatprep.subr.mxu0 0.0
      %4850 = vmatpush2.msra.mxu0 0.0
      %4851 = vmatprep.subr.mxu0 0.0
      %4852 = vmatpush2.msra.mxu0 0.0
      %4853 = vmatprep.subr.mxu0 0.0
      %4854 = vmatpush2.msra.mxu0 0.0
      %4855 = vmatprep.subr.mxu0 0.0
      %4856 = vmatpush2.msra.mxu0 0.0
      %4857 = vmatprep.subr.mxu0 0.0
      %4858 = vmatpush2.msra.mxu0 0.0
      %4859 = vmatprep.subr.mxu0 0.0
      %4860 = vmatpush2.msra.mxu0 0.0
      %4861 = vmatprep.subr.mxu0 0.0
      %4862 = vmatpush2.msra.mxu0 0.0
      %4863 = vmatprep.subr.mxu0 0.0
      %4864 = vmatpush2.msra.mxu0 0.0
      %4865 = vmatprep.subr.mxu0 0.0
      %4866 = vmatpush2.msra.mxu0 0.0
      %4867 = vmatprep.subr.mxu0 0.0
      %4868 = vmatpush2.msra.mxu0 0.0
      %4869 = vmatprep.subr.mxu0 0.0
      %4870 = vmatpush2.msra.mxu0 0.0
      %4871 = vmatprep.subr.mxu0 0.0
      %4872 = vmatpush2.msra.mxu0 0.0
      %4873 = vmatprep.mubr.f32.mxu0 0.0
      %4874 = vmatmul.mubr.f32.gmra.mxu0 %v4798
      %v4875 = vpop.f32.mrf.mxu0
      %v4876 = vadd.f32 0.0, %v4875
      %v4877 = vpop.f32.mrf.mxu0
      %4878 = vmatprep.mubr.f32.mxu0 0.0
      %4879 = vmatmul.mubr.f32.gmra.mxu0 %v4801
      %v4880 = vpop.f32.mrf.mxu0
      %v4881 = vadd.f32 0.0, %v4880
      %v4882 = vpop.f32.mrf.mxu0
      %4883 = vmatprep.mubr.f32.mxu0 0.0
      %4884 = vmatmul.mubr.f32.gmra.mxu0 %v4804
      %v4885 = vpop.f32.mrf.mxu0
      %v4886 = vadd.f32 0.0, %v4885
      %v4887 = vpop.f32.mrf.mxu0
      %4888 = vmatprep.mubr.f32.mxu0 0.0
      %4889 = vmatmul.mubr.f32.gmra.mxu0 %v4807
      %v4890 = vpop.f32.mrf.mxu0
      %v4891 = vadd.f32 0.0, %v4890
      %v4892 = vpop.f32.mrf.mxu0
      %4893 = vdwg.mxu0
      %v4894 = vadd.f32 %v4674, %v4876
      %v4895 = vadd.f32 %v4679, %v4881
      %v4896 = vadd.f32 %v4684, %v4886
      %v4897 = vadd.f32 %v4689, %v4891
      %s4898 = scalar_lea.vmem %s12, 96
      %v4899 = vld [vmem:[%s4898] sm:$0xff]
      %v4900 = vld [vmem:[%s4898 + $0x8] sm:$0xff]
      %v4901 = vld [vmem:[%s4898 + $0x10] sm:$0xff]
      %v4902 = vld [vmem:[%s4898 + $0x18] sm:$0xff]
      %v4904 = vsel %vm4293, %v4899, 0
      %v4907 = vsel %vm4293, %v4900, 0
      %v4910 = vsel %vm4293, %v4901, 0
      %v4913 = vsel %vm4293, %v4902, 0
      %4915 = vmatprep.subr.mxu0 0.0
      %4916 = vmatpush1.msra.mxu0 0.0
      %4917 = vmatprep.subr.mxu0 0.0
      %4918 = vmatpush1.msra.mxu0 0.0
      %4919 = vmatprep.subr.mxu0 0.0
      %4920 = vmatpush1.msra.mxu0 0.0
      %4921 = vmatprep.subr.mxu0 0.0
      %4922 = vmatpush1.msra.mxu0 0.0
      %4923 = vmatprep.subr.mxu0 0.0
      %4924 = vmatpush1.msra.mxu0 0.0
      %4925 = vmatprep.subr.mxu0 0.0
      %4926 = vmatpush1.msra.mxu0 0.0
      %4927 = vmatprep.subr.mxu0 0.0
      %4928 = vmatpush1.msra.mxu0 0.0
      %4929 = vmatprep.subr.mxu0 0.0
      %4930 = vmatpush1.msra.mxu0 0.0
      %4931 = vmatprep.subr.mxu0 0.0
      %4932 = vmatpush1.msra.mxu0 0.0
      %4933 = vmatprep.subr.mxu0 0.0
      %4934 = vmatpush1.msra.mxu0 0.0
      %4935 = vmatprep.subr.mxu0 0.0
      %4936 = vmatpush1.msra.mxu0 0.0
      %4937 = vmatprep.subr.mxu0 0.0
      %4938 = vmatpush1.msra.mxu0 0.0
      %4939 = vmatprep.subr.mxu0 0.0
      %4940 = vmatpush1.msra.mxu0 %v4288
      %4941 = vmatprep.subr.mxu0 0.0
      %4942 = vmatpush1.msra.mxu0 %v4287
      %4943 = vmatprep.subr.mxu0 0.0
      %4944 = vmatpush1.msra.mxu0 %v4201
      %4945 = vmatprep.subr.mxu0 0.0
      %4946 = vmatpush1.msra.mxu0 %v4200
      %4947 = vmatprep.subr.mxu0 0.0
      %4948 = vmatpush2.msra.mxu0 0.0
      %4949 = vmatprep.subr.mxu0 0.0
      %4950 = vmatpush2.msra.mxu0 0.0
      %4951 = vmatprep.subr.mxu0 0.0
      %4952 = vmatpush2.msra.mxu0 0.0
      %4953 = vmatprep.subr.mxu0 0.0
      %4954 = vmatpush2.msra.mxu0 0.0
      %4955 = vmatprep.subr.mxu0 0.0
      %4956 = vmatpush2.msra.mxu0 0.0
      %4957 = vmatprep.subr.mxu0 0.0
      %4958 = vmatpush2.msra.mxu0 0.0
      %4959 = vmatprep.subr.mxu0 0.0
      %4960 = vmatpush2.msra.mxu0 0.0
      %4961 = vmatprep.subr.mxu0 0.0
      %4962 = vmatpush2.msra.mxu0 0.0
      %4963 = vmatprep.subr.mxu0 0.0
      %4964 = vmatpush2.msra.mxu0 0.0
      %4965 = vmatprep.subr.mxu0 0.0
      %4966 = vmatpush2.msra.mxu0 0.0
      %4967 = vmatprep.subr.mxu0 0.0
      %4968 = vmatpush2.msra.mxu0 0.0
      %4969 = vmatprep.subr.mxu0 0.0
      %4970 = vmatpush2.msra.mxu0 0.0
      %4971 = vmatprep.subr.mxu0 0.0
      %4972 = vmatpush2.msra.mxu0 0.0
      %4973 = vmatprep.subr.mxu0 0.0
      %4974 = vmatpush2.msra.mxu0 0.0
      %4975 = vmatprep.subr.mxu0 0.0
      %4976 = vmatpush2.msra.mxu0 0.0
      %4977 = vmatprep.subr.mxu0 0.0
      %4978 = vmatpush2.msra.mxu0 0.0
      %4979 = vmatprep.mubr.f32.mxu0 0.0
      %4980 = vmatmul.mubr.f32.gmra.mxu0 %v4904
      %v4981 = vpop.f32.mrf.mxu0
      %v4982 = vadd.f32 0.0, %v4981
      %v4983 = vpop.f32.mrf.mxu0
      %4984 = vmatprep.mubr.f32.mxu0 0.0
      %4985 = vmatmul.mubr.f32.gmra.mxu0 %v4907
      %v4986 = vpop.f32.mrf.mxu0
      %v4987 = vadd.f32 0.0, %v4986
      %v4988 = vpop.f32.mrf.mxu0
      %4989 = vmatprep.mubr.f32.mxu0 0.0
      %4990 = vmatmul.mubr.f32.gmra.mxu0 %v4910
      %v4991 = vpop.f32.mrf.mxu0
      %v4992 = vadd.f32 0.0, %v4991
      %v4993 = vpop.f32.mrf.mxu0
      %4994 = vmatprep.mubr.f32.mxu0 0.0
      %4995 = vmatmul.mubr.f32.gmra.mxu0 %v4913
      %v4996 = vpop.f32.mrf.mxu0
      %v4997 = vadd.f32 0.0, %v4996
      %v4998 = vpop.f32.mrf.mxu0
      %4999 = vdwg.mxu0
      %s5000 = scalar_lea.vmem %s11, 48
      %v5001 = vld [vmem:[%s5000] sm:$0xff]
      %v5002 = vld [vmem:[%s5000 + $0x8] sm:$0xff]
      %v5004 = vsel %vm2531, %v4982, 0
      %v5007 = vsel %vm2531, %v4987, 0
      %v5010 = vsel %vm2531, %v4992, 0
      %v5013 = vsel %vm2531, %v4997, 0
      %5015 = vmatprep.subr.mxu0 0.0
      %5016 = vmatpush1.msra.mxu0 0.0
      %5017 = vmatprep.subr.mxu0 0.0
      %5018 = vmatpush1.msra.mxu0 0.0
      %5019 = vmatprep.subr.mxu0 0.0
      %5020 = vmatpush1.msra.mxu0 0.0
      %5021 = vmatprep.subr.mxu0 0.0
      %5022 = vmatpush1.msra.mxu0 0.0
      %5023 = vmatprep.subr.mxu0 0.0
      %5024 = vmatpush1.msra.mxu0 0.0
      %5025 = vmatprep.subr.mxu0 0.0
      %5026 = vmatpush1.msra.mxu0 0.0
      %5027 = vmatprep.subr.mxu0 0.0
      %5028 = vmatpush1.msra.mxu0 0.0
      %5029 = vmatprep.subr.mxu0 0.0
      %5030 = vmatpush1.msra.mxu0 0.0
      %5031 = vmatprep.subr.mxu0 0.0
      %5032 = vmatpush1.msra.mxu0 0.0
      %5033 = vmatprep.subr.mxu0 0.0
      %5034 = vmatpush1.msra.mxu0 0.0
      %5035 = vmatprep.subr.mxu0 0.0
      %5036 = vmatpush1.msra.mxu0 0.0
      %5037 = vmatprep.subr.mxu0 0.0
      %5038 = vmatpush1.msra.mxu0 0.0
      %5039 = vmatprep.subr.mxu0 0.0
      %5040 = vmatpush1.msra.mxu0 0.0
      %5041 = vmatprep.subr.mxu0 0.0
      %5042 = vmatpush1.msra.mxu0 0.0
      %5043 = vmatprep.subr.mxu0 0.0
      %5044 = vmatpush1.msra.mxu0 %v5002
      %5045 = vmatprep.subr.mxu0 0.0
      %5046 = vmatpush1.msra.mxu0 %v5001
      %5047 = vmatprep.subr.mxu0 0.0
      %5048 = vmatpush2.msra.mxu0 0.0
      %5049 = vmatprep.subr.mxu0 0.0
      %5050 = vmatpush2.msra.mxu0 0.0
      %5051 = vmatprep.subr.mxu0 0.0
      %5052 = vmatpush2.msra.mxu0 0.0
      %5053 = vmatprep.subr.mxu0 0.0
      %5054 = vmatpush2.msra.mxu0 0.0
      %5055 = vmatprep.subr.mxu0 0.0
      %5056 = vmatpush2.msra.mxu0 0.0
      %5057 = vmatprep.subr.mxu0 0.0
      %5058 = vmatpush2.msra.mxu0 0.0
      %5059 = vmatprep.subr.mxu0 0.0
      %5060 = vmatpush2.msra.mxu0 0.0
      %5061 = vmatprep.subr.mxu0 0.0
      %5062 = vmatpush2.msra.mxu0 0.0
      %5063 = vmatprep.subr.mxu0 0.0
      %5064 = vmatpush2.msra.mxu0 0.0
      %5065 = vmatprep.subr.mxu0 0.0
      %5066 = vmatpush2.msra.mxu0 0.0
      %5067 = vmatprep.subr.mxu0 0.0
      %5068 = vmatpush2.msra.mxu0 0.0
      %5069 = vmatprep.subr.mxu0 0.0
      %5070 = vmatpush2.msra.mxu0 0.0
      %5071 = vmatprep.subr.mxu0 0.0
      %5072 = vmatpush2.msra.mxu0 0.0
      %5073 = vmatprep.subr.mxu0 0.0
      %5074 = vmatpush2.msra.mxu0 0.0
      %5075 = vmatprep.subr.mxu0 0.0
      %5076 = vmatpush2.msra.mxu0 0.0
      %5077 = vmatprep.subr.mxu0 0.0
      %5078 = vmatpush2.msra.mxu0 0.0
      %5079 = vmatprep.mubr.f32.mxu0 0.0
      %5080 = vmatmul.mubr.f32.gmra.mxu0 %v5004
      %v5081 = vpop.f32.mrf.mxu0
      %v5082 = vadd.f32 0.0, %v5081
      %v5083 = vpop.f32.mrf.mxu0
      %5084 = vmatprep.mubr.f32.mxu0 0.0
      %5085 = vmatmul.mubr.f32.gmra.mxu0 %v5007
      %v5086 = vpop.f32.mrf.mxu0
      %v5087 = vadd.f32 0.0, %v5086
      %v5088 = vpop.f32.mrf.mxu0
      %5089 = vmatprep.mubr.f32.mxu0 0.0
      %5090 = vmatmul.mubr.f32.gmra.mxu0 %v5010
      %v5091 = vpop.f32.mrf.mxu0
      %v5092 = vadd.f32 0.0, %v5091
      %v5093 = vpop.f32.mrf.mxu0
      %5094 = vmatprep.mubr.f32.mxu0 0.0
      %5095 = vmatmul.mubr.f32.gmra.mxu0 %v5013
      %v5096 = vpop.f32.mrf.mxu0
      %v5097 = vadd.f32 0.0, %v5096
      %v5098 = vpop.f32.mrf.mxu0
      %5099 = vdwg.mxu0
      %v5100 = vadd.f32 %v4894, %v5082
      %v5101 = vadd.f32 %v4895, %v5087
      %v5102 = vadd.f32 %v4896, %v5092
      %v5103 = vadd.f32 %v4897, %v5097
      %s5104 = scalar_lea.vmem %s12, 128
      %v5105 = vld [vmem:[%s5104] sm:$0xff]
      %v5106 = vld [vmem:[%s5104 + $0x8] sm:$0xff]
      %v5107 = vld [vmem:[%s5104 + $0x10] sm:$0xff]
      %v5108 = vld [vmem:[%s5104 + $0x18] sm:$0xff]
      %v5110 = vsel %vm4293, %v5105, 0
      %v5113 = vsel %vm4293, %v5106, 0
      %v5116 = vsel %vm4293, %v5107, 0
      %v5119 = vsel %vm4293, %v5108, 0
      %5121 = vmatprep.subr.mxu0 0.0
      %5122 = vmatpush1.msra.mxu0 0.0
      %5123 = vmatprep.subr.mxu0 0.0
      %5124 = vmatpush1.msra.mxu0 0.0
      %5125 = vmatprep.subr.mxu0 0.0
      %5126 = vmatpush1.msra.mxu0 0.0
      %5127 = vmatprep.subr.mxu0 0.0
      %5128 = vmatpush1.msra.mxu0 0.0
      %5129 = vmatprep.subr.mxu0 0.0
      %5130 = vmatpush1.msra.mxu0 0.0
      %5131 = vmatprep.subr.mxu0 0.0
      %5132 = vmatpush1.msra.mxu0 0.0
      %5133 = vmatprep.subr.mxu0 0.0
      %5134 = vmatpush1.msra.mxu0 0.0
      %5135 = vmatprep.subr.mxu0 0.0
      %5136 = vmatpush1.msra.mxu0 0.0
      %5137 = vmatprep.subr.mxu0 0.0
      %5138 = vmatpush1.msra.mxu0 0.0
      %5139 = vmatprep.subr.mxu0 0.0
      %5140 = vmatpush1.msra.mxu0 0.0
      %5141 = vmatprep.subr.mxu0 0.0
      %5142 = vmatpush1.msra.mxu0 0.0
      %5143 = vmatprep.subr.mxu0 0.0
      %5144 = vmatpush1.msra.mxu0 0.0
      %5145 = vmatprep.subr.mxu0 0.0
      %5146 = vmatpush1.msra.mxu0 %v4288
      %5147 = vmatprep.subr.mxu0 0.0
      %5148 = vmatpush1.msra.mxu0 %v4287
      %5149 = vmatprep.subr.mxu0 0.0
      %5150 = vmatpush1.msra.mxu0 %v4201
      %5151 = vmatprep.subr.mxu0 0.0
      %5152 = vmatpush1.msra.mxu0 %v4200
      %5153 = vmatprep.subr.mxu0 0.0
      %5154 = vmatpush2.msra.mxu0 0.0
      %5155 = vmatprep.subr.mxu0 0.0
      %5156 = vmatpush2.msra.mxu0 0.0
      %5157 = vmatprep.subr.mxu0 0.0
      %5158 = vmatpush2.msra.mxu0 0.0
      %5159 = vmatprep.subr.mxu0 0.0
      %5160 = vmatpush2.msra.mxu0 0.0
      %5161 = vmatprep.subr.mxu0 0.0
      %5162 = vmatpush2.msra.mxu0 0.0
      %5163 = vmatprep.subr.mxu0 0.0
      %5164 = vmatpush2.msra.mxu0 0.0
      %5165 = vmatprep.subr.mxu0 0.0
      %5166 = vmatpush2.msra.mxu0 0.0
      %5167 = vmatprep.subr.mxu0 0.0
      %5168 = vmatpush2.msra.mxu0 0.0
      %5169 = vmatprep.subr.mxu0 0.0
      %5170 = vmatpush2.msra.mxu0 0.0
      %5171 = vmatprep.subr.mxu0 0.0
      %5172 = vmatpush2.msra.mxu0 0.0
      %5173 = vmatprep.subr.mxu0 0.0
      %5174 = vmatpush2.msra.mxu0 0.0
      %5175 = vmatprep.subr.mxu0 0.0
      %5176 = vmatpush2.msra.mxu0 0.0
      %5177 = vmatprep.subr.mxu0 0.0
      %5178 = vmatpush2.msra.mxu0 0.0
      %5179 = vmatprep.subr.mxu0 0.0
      %5180 = vmatpush2.msra.mxu0 0.0
      %5181 = vmatprep.subr.mxu0 0.0
      %5182 = vmatpush2.msra.mxu0 0.0
      %5183 = vmatprep.subr.mxu0 0.0
      %5184 = vmatpush2.msra.mxu0 0.0
      %5185 = vmatprep.mubr.f32.mxu0 0.0
      %5186 = vmatmul.mubr.f32.gmra.mxu0 %v5110
      %v5187 = vpop.f32.mrf.mxu0
      %v5188 = vadd.f32 0.0, %v5187
      %v5189 = vpop.f32.mrf.mxu0
      %5190 = vmatprep.mubr.f32.mxu0 0.0
      %5191 = vmatmul.mubr.f32.gmra.mxu0 %v5113
      %v5192 = vpop.f32.mrf.mxu0
      %v5193 = vadd.f32 0.0, %v5192
      %v5194 = vpop.f32.mrf.mxu0
      %5195 = vmatprep.mubr.f32.mxu0 0.0
      %5196 = vmatmul.mubr.f32.gmra.mxu0 %v5116
      %v5197 = vpop.f32.mrf.mxu0
      %v5198 = vadd.f32 0.0, %v5197
      %v5199 = vpop.f32.mrf.mxu0
      %5200 = vmatprep.mubr.f32.mxu0 0.0
      %5201 = vmatmul.mubr.f32.gmra.mxu0 %v5119
      %v5202 = vpop.f32.mrf.mxu0
      %v5203 = vadd.f32 0.0, %v5202
      %v5204 = vpop.f32.mrf.mxu0
      %5205 = vdwg.mxu0
      %s5206 = scalar_lea.vmem %s11, 64
      %v5207 = vld [vmem:[%s5206] sm:$0xff]
      %v5208 = vld [vmem:[%s5206 + $0x8] sm:$0xff]
      %v5210 = vsel %vm2531, %v5188, 0
      %v5213 = vsel %vm2531, %v5193, 0
      %v5216 = vsel %vm2531, %v5198, 0
      %v5219 = vsel %vm2531, %v5203, 0
      %5221 = vmatprep.subr.mxu0 0.0
      %5222 = vmatpush1.msra.mxu0 0.0
      %5223 = vmatprep.subr.mxu0 0.0
      %5224 = vmatpush1.msra.mxu0 0.0
      %5225 = vmatprep.subr.mxu0 0.0
      %5226 = vmatpush1.msra.mxu0 0.0
      %5227 = vmatprep.subr.mxu0 0.0
      %5228 = vmatpush1.msra.mxu0 0.0
      %5229 = vmatprep.subr.mxu0 0.0
      %5230 = vmatpush1.msra.mxu0 0.0
      %5231 = vmatprep.subr.mxu0 0.0
      %5232 = vmatpush1.msra.mxu0 0.0
      %5233 = vmatprep.subr.mxu0 0.0
      %5234 = vmatpush1.msra.mxu0 0.0
      %5235 = vmatprep.subr.mxu0 0.0
      %5236 = vmatpush1.msra.mxu0 0.0
      %5237 = vmatprep.subr.mxu0 0.0
      %5238 = vmatpush1.msra.mxu0 0.0
      %5239 = vmatprep.subr.mxu0 0.0
      %5240 = vmatpush1.msra.mxu0 0.0
      %5241 = vmatprep.subr.mxu0 0.0
      %5242 = vmatpush1.msra.mxu0 0.0
      %5243 = vmatprep.subr.mxu0 0.0
      %5244 = vmatpush1.msra.mxu0 0.0
      %5245 = vmatprep.subr.mxu0 0.0
      %5246 = vmatpush1.msra.mxu0 0.0
      %5247 = vmatprep.subr.mxu0 0.0
      %5248 = vmatpush1.msra.mxu0 0.0
      %5249 = vmatprep.subr.mxu0 0.0
      %5250 = vmatpush1.msra.mxu0 %v5208
      %5251 = vmatprep.subr.mxu0 0.0
      %5252 = vmatpush1.msra.mxu0 %v5207
      %5253 = vmatprep.subr.mxu0 0.0
      %5254 = vmatpush2.msra.mxu0 0.0
      %5255 = vmatprep.subr.mxu0 0.0
      %5256 = vmatpush2.msra.mxu0 0.0
      %5257 = vmatprep.subr.mxu0 0.0
      %5258 = vmatpush2.msra.mxu0 0.0
      %5259 = vmatprep.subr.mxu0 0.0
      %5260 = vmatpush2.msra.mxu0 0.0
      %5261 = vmatprep.subr.mxu0 0.0
      %5262 = vmatpush2.msra.mxu0 0.0
      %5263 = vmatprep.subr.mxu0 0.0
      %5264 = vmatpush2.msra.mxu0 0.0
      %5265 = vmatprep.subr.mxu0 0.0
      %5266 = vmatpush2.msra.mxu0 0.0
      %5267 = vmatprep.subr.mxu0 0.0
      %5268 = vmatpush2.msra.mxu0 0.0
      %5269 = vmatprep.subr.mxu0 0.0
      %5270 = vmatpush2.msra.mxu0 0.0
      %5271 = vmatprep.subr.mxu0 0.0
      %5272 = vmatpush2.msra.mxu0 0.0
      %5273 = vmatprep.subr.mxu0 0.0
      %5274 = vmatpush2.msra.mxu0 0.0
      %5275 = vmatprep.subr.mxu0 0.0
      %5276 = vmatpush2.msra.mxu0 0.0
      %5277 = vmatprep.subr.mxu0 0.0
      %5278 = vmatpush2.msra.mxu0 0.0
      %5279 = vmatprep.subr.mxu0 0.0
      %5280 = vmatpush2.msra.mxu0 0.0
      %5281 = vmatprep.subr.mxu0 0.0
      %5282 = vmatpush2.msra.mxu0 0.0
      %5283 = vmatprep.subr.mxu0 0.0
      %5284 = vmatpush2.msra.mxu0 0.0
      %5285 = vmatprep.mubr.f32.mxu0 0.0
      %5286 = vmatmul.mubr.f32.gmra.mxu0 %v5210
      %v5287 = vpop.f32.mrf.mxu0
      %v5288 = vadd.f32 0.0, %v5287
      %v5289 = vpop.f32.mrf.mxu0
      %5290 = vmatprep.mubr.f32.mxu0 0.0
      %5291 = vmatmul.mubr.f32.gmra.mxu0 %v5213
      %v5292 = vpop.f32.mrf.mxu0
      %v5293 = vadd.f32 0.0, %v5292
      %v5294 = vpop.f32.mrf.mxu0
      %5295 = vmatprep.mubr.f32.mxu0 0.0
      %5296 = vmatmul.mubr.f32.gmra.mxu0 %v5216
      %v5297 = vpop.f32.mrf.mxu0
      %v5298 = vadd.f32 0.0, %v5297
      %v5299 = vpop.f32.mrf.mxu0
      %5300 = vmatprep.mubr.f32.mxu0 0.0
      %5301 = vmatmul.mubr.f32.gmra.mxu0 %v5219
      %v5302 = vpop.f32.mrf.mxu0
      %v5303 = vadd.f32 0.0, %v5302
      %v5304 = vpop.f32.mrf.mxu0
      %5305 = vdwg.mxu0
      %v5306 = vadd.f32 %v5100, %v5288
      %v5307 = vadd.f32 %v5101, %v5293
      %v5308 = vadd.f32 %v5102, %v5298
      %v5309 = vadd.f32 %v5103, %v5303
      %s5310 = scalar_lea.vmem %s12, 160
      %v5311 = vld [vmem:[%s5310] sm:$0xff]
      %v5312 = vld [vmem:[%s5310 + $0x8] sm:$0xff]
      %v5313 = vld [vmem:[%s5310 + $0x10] sm:$0xff]
      %v5314 = vld [vmem:[%s5310 + $0x18] sm:$0xff]
      %v5316 = vsel %vm4293, %v5311, 0
      %v5319 = vsel %vm4293, %v5312, 0
      %v5322 = vsel %vm4293, %v5313, 0
      %v5325 = vsel %vm4293, %v5314, 0
      %5327 = vmatprep.subr.mxu0 0.0
      %5328 = vmatpush1.msra.mxu0 0.0
      %5329 = vmatprep.subr.mxu0 0.0
      %5330 = vmatpush1.msra.mxu0 0.0
      %5331 = vmatprep.subr.mxu0 0.0
      %5332 = vmatpush1.msra.mxu0 0.0
      %5333 = vmatprep.subr.mxu0 0.0
      %5334 = vmatpush1.msra.mxu0 0.0
      %5335 = vmatprep.subr.mxu0 0.0
      %5336 = vmatpush1.msra.mxu0 0.0
      %5337 = vmatprep.subr.mxu0 0.0
      %5338 = vmatpush1.msra.mxu0 0.0
      %5339 = vmatprep.subr.mxu0 0.0
      %5340 = vmatpush1.msra.mxu0 0.0
      %5341 = vmatprep.subr.mxu0 0.0
      %5342 = vmatpush1.msra.mxu0 0.0
      %5343 = vmatprep.subr.mxu0 0.0
      %5344 = vmatpush1.msra.mxu0 0.0
      %5345 = vmatprep.subr.mxu0 0.0
      %5346 = vmatpush1.msra.mxu0 0.0
      %5347 = vmatprep.subr.mxu0 0.0
      %5348 = vmatpush1.msra.mxu0 0.0
      %5349 = vmatprep.subr.mxu0 0.0
      %5350 = vmatpush1.msra.mxu0 0.0
      %5351 = vmatprep.subr.mxu0 0.0
      %5352 = vmatpush1.msra.mxu0 %v4288
      %5353 = vmatprep.subr.mxu0 0.0
      %5354 = vmatpush1.msra.mxu0 %v4287
      %5355 = vmatprep.subr.mxu0 0.0
      %5356 = vmatpush1.msra.mxu0 %v4201
      %5357 = vmatprep.subr.mxu0 0.0
      %5358 = vmatpush1.msra.mxu0 %v4200
      %5359 = vmatprep.subr.mxu0 0.0
      %5360 = vmatpush2.msra.mxu0 0.0
      %5361 = vmatprep.subr.mxu0 0.0
      %5362 = vmatpush2.msra.mxu0 0.0
      %5363 = vmatprep.subr.mxu0 0.0
      %5364 = vmatpush2.msra.mxu0 0.0
      %5365 = vmatprep.subr.mxu0 0.0
      %5366 = vmatpush2.msra.mxu0 0.0
      %5367 = vmatprep.subr.mxu0 0.0
      %5368 = vmatpush2.msra.mxu0 0.0
      %5369 = vmatprep.subr.mxu0 0.0
      %5370 = vmatpush2.msra.mxu0 0.0
      %5371 = vmatprep.subr.mxu0 0.0
      %5372 = vmatpush2.msra.mxu0 0.0
      %5373 = vmatprep.subr.mxu0 0.0
      %5374 = vmatpush2.msra.mxu0 0.0
      %5375 = vmatprep.subr.mxu0 0.0
      %5376 = vmatpush2.msra.mxu0 0.0
      %5377 = vmatprep.subr.mxu0 0.0
      %5378 = vmatpush2.msra.mxu0 0.0
      %5379 = vmatprep.subr.mxu0 0.0
      %5380 = vmatpush2.msra.mxu0 0.0
      %5381 = vmatprep.subr.mxu0 0.0
      %5382 = vmatpush2.msra.mxu0 0.0
      %5383 = vmatprep.subr.mxu0 0.0
      %5384 = vmatpush2.msra.mxu0 0.0
      %5385 = vmatprep.subr.mxu0 0.0
      %5386 = vmatpush2.msra.mxu0 0.0
      %5387 = vmatprep.subr.mxu0 0.0
      %5388 = vmatpush2.msra.mxu0 0.0
      %5389 = vmatprep.subr.mxu0 0.0
      %5390 = vmatpush2.msra.mxu0 0.0
      %5391 = vmatprep.mubr.f32.mxu0 0.0
      %5392 = vmatmul.mubr.f32.gmra.mxu0 %v5316
      %v5393 = vpop.f32.mrf.mxu0
      %v5394 = vadd.f32 0.0, %v5393
      %v5395 = vpop.f32.mrf.mxu0
      %5396 = vmatprep.mubr.f32.mxu0 0.0
      %5397 = vmatmul.mubr.f32.gmra.mxu0 %v5319
      %v5398 = vpop.f32.mrf.mxu0
      %v5399 = vadd.f32 0.0, %v5398
      %v5400 = vpop.f32.mrf.mxu0
      %5401 = vmatprep.mubr.f32.mxu0 0.0
      %5402 = vmatmul.mubr.f32.gmra.mxu0 %v5322
      %v5403 = vpop.f32.mrf.mxu0
      %v5404 = vadd.f32 0.0, %v5403
      %v5405 = vpop.f32.mrf.mxu0
      %5406 = vmatprep.mubr.f32.mxu0 0.0
      %5407 = vmatmul.mubr.f32.gmra.mxu0 %v5325
      %v5408 = vpop.f32.mrf.mxu0
      %v5409 = vadd.f32 0.0, %v5408
      %v5410 = vpop.f32.mrf.mxu0
      %5411 = vdwg.mxu0
      %s5412 = scalar_lea.vmem %s11, 80
      %v5413 = vld [vmem:[%s5412] sm:$0xff]
      %v5414 = vld [vmem:[%s5412 + $0x8] sm:$0xff]
      %v5416 = vsel %vm2531, %v5394, 0
      %v5419 = vsel %vm2531, %v5399, 0
      %v5422 = vsel %vm2531, %v5404, 0
      %v5425 = vsel %vm2531, %v5409, 0
      %5427 = vmatprep.subr.mxu0 0.0
      %5428 = vmatpush1.msra.mxu0 0.0
      %5429 = vmatprep.subr.mxu0 0.0
      %5430 = vmatpush1.msra.mxu0 0.0
      %5431 = vmatprep.subr.mxu0 0.0
      %5432 = vmatpush1.msra.mxu0 0.0
      %5433 = vmatprep.subr.mxu0 0.0
      %5434 = vmatpush1.msra.mxu0 0.0
      %5435 = vmatprep.subr.mxu0 0.0
      %5436 = vmatpush1.msra.mxu0 0.0
      %5437 = vmatprep.subr.mxu0 0.0
      %5438 = vmatpush1.msra.mxu0 0.0
      %5439 = vmatprep.subr.mxu0 0.0
      %5440 = vmatpush1.msra.mxu0 0.0
      %5441 = vmatprep.subr.mxu0 0.0
      %5442 = vmatpush1.msra.mxu0 0.0
      %5443 = vmatprep.subr.mxu0 0.0
      %5444 = vmatpush1.msra.mxu0 0.0
      %5445 = vmatprep.subr.mxu0 0.0
      %5446 = vmatpush1.msra.mxu0 0.0
      %5447 = vmatprep.subr.mxu0 0.0
      %5448 = vmatpush1.msra.mxu0 0.0
      %5449 = vmatprep.subr.mxu0 0.0
      %5450 = vmatpush1.msra.mxu0 0.0
      %5451 = vmatprep.subr.mxu0 0.0
      %5452 = vmatpush1.msra.mxu0 0.0
      %5453 = vmatprep.subr.mxu0 0.0
      %5454 = vmatpush1.msra.mxu0 0.0
      %5455 = vmatprep.subr.mxu0 0.0
      %5456 = vmatpush1.msra.mxu0 %v5414
      %5457 = vmatprep.subr.mxu0 0.0
      %5458 = vmatpush1.msra.mxu0 %v5413
      %5459 = vmatprep.subr.mxu0 0.0
      %5460 = vmatpush2.msra.mxu0 0.0
      %5461 = vmatprep.subr.mxu0 0.0
      %5462 = vmatpush2.msra.mxu0 0.0
      %5463 = vmatprep.subr.mxu0 0.0
      %5464 = vmatpush2.msra.mxu0 0.0
      %5465 = vmatprep.subr.mxu0 0.0
      %5466 = vmatpush2.msra.mxu0 0.0
      %5467 = vmatprep.subr.mxu0 0.0
      %5468 = vmatpush2.msra.mxu0 0.0
      %5469 = vmatprep.subr.mxu0 0.0
      %5470 = vmatpush2.msra.mxu0 0.0
      %5471 = vmatprep.subr.mxu0 0.0
      %5472 = vmatpush2.msra.mxu0 0.0
      %5473 = vmatprep.subr.mxu0 0.0
      %5474 = vmatpush2.msra.mxu0 0.0
      %5475 = vmatprep.subr.mxu0 0.0
      %5476 = vmatpush2.msra.mxu0 0.0
      %5477 = vmatprep.subr.mxu0 0.0
      %5478 = vmatpush2.msra.mxu0 0.0
      %5479 = vmatprep.subr.mxu0 0.0
      %5480 = vmatpush2.msra.mxu0 0.0
      %5481 = vmatprep.subr.mxu0 0.0
      %5482 = vmatpush2.msra.mxu0 0.0
      %5483 = vmatprep.subr.mxu0 0.0
      %5484 = vmatpush2.msra.mxu0 0.0
      %5485 = vmatprep.subr.mxu0 0.0
      %5486 = vmatpush2.msra.mxu0 0.0
      %5487 = vmatprep.subr.mxu0 0.0
      %5488 = vmatpush2.msra.mxu0 0.0
      %5489 = vmatprep.subr.mxu0 0.0
      %5490 = vmatpush2.msra.mxu0 0.0
      %5491 = vmatprep.mubr.f32.mxu0 0.0
      %5492 = vmatmul.mubr.f32.gmra.mxu0 %v5416
      %v5493 = vpop.f32.mrf.mxu0
      %v5494 = vadd.f32 0.0, %v5493
      %v5495 = vpop.f32.mrf.mxu0
      %5496 = vmatprep.mubr.f32.mxu0 0.0
      %5497 = vmatmul.mubr.f32.gmra.mxu0 %v5419
      %v5498 = vpop.f32.mrf.mxu0
      %v5499 = vadd.f32 0.0, %v5498
      %v5500 = vpop.f32.mrf.mxu0
      %5501 = vmatprep.mubr.f32.mxu0 0.0
      %5502 = vmatmul.mubr.f32.gmra.mxu0 %v5422
      %v5503 = vpop.f32.mrf.mxu0
      %v5504 = vadd.f32 0.0, %v5503
      %v5505 = vpop.f32.mrf.mxu0
      %5506 = vmatprep.mubr.f32.mxu0 0.0
      %5507 = vmatmul.mubr.f32.gmra.mxu0 %v5425
      %v5508 = vpop.f32.mrf.mxu0
      %v5509 = vadd.f32 0.0, %v5508
      %v5510 = vpop.f32.mrf.mxu0
      %5511 = vdwg.mxu0
      %v5512 = vadd.f32 %v5306, %v5494
      %v5513 = vadd.f32 %v5307, %v5499
      %v5514 = vadd.f32 %v5308, %v5504
      %v5515 = vadd.f32 %v5309, %v5509
      %s5516 = scalar_lea.vmem %s12, 192
      %v5517 = vld [vmem:[%s5516] sm:$0xff]
      %v5518 = vld [vmem:[%s5516 + $0x8] sm:$0xff]
      %v5519 = vld [vmem:[%s5516 + $0x10] sm:$0xff]
      %v5520 = vld [vmem:[%s5516 + $0x18] sm:$0xff]
      %v5522 = vsel %vm4293, %v5517, 0
      %v5525 = vsel %vm4293, %v5518, 0
      %v5528 = vsel %vm4293, %v5519, 0
      %v5531 = vsel %vm4293, %v5520, 0
      %5533 = vmatprep.subr.mxu0 0.0
      %5534 = vmatpush1.msra.mxu0 0.0
      %5535 = vmatprep.subr.mxu0 0.0
      %5536 = vmatpush1.msra.mxu0 0.0
      %5537 = vmatprep.subr.mxu0 0.0
      %5538 = vmatpush1.msra.mxu0 0.0
      %5539 = vmatprep.subr.mxu0 0.0
      %5540 = vmatpush1.msra.mxu0 0.0
      %5541 = vmatprep.subr.mxu0 0.0
      %5542 = vmatpush1.msra.mxu0 0.0
      %5543 = vmatprep.subr.mxu0 0.0
      %5544 = vmatpush1.msra.mxu0 0.0
      %5545 = vmatprep.subr.mxu0 0.0
      %5546 = vmatpush1.msra.mxu0 0.0
      %5547 = vmatprep.subr.mxu0 0.0
      %5548 = vmatpush1.msra.mxu0 0.0
      %5549 = vmatprep.subr.mxu0 0.0
      %5550 = vmatpush1.msra.mxu0 0.0
      %5551 = vmatprep.subr.mxu0 0.0
      %5552 = vmatpush1.msra.mxu0 0.0
      %5553 = vmatprep.subr.mxu0 0.0
      %5554 = vmatpush1.msra.mxu0 0.0
      %5555 = vmatprep.subr.mxu0 0.0
      %5556 = vmatpush1.msra.mxu0 0.0
      %5557 = vmatprep.subr.mxu0 0.0
      %5558 = vmatpush1.msra.mxu0 %v4288
      %5559 = vmatprep.subr.mxu0 0.0
      %5560 = vmatpush1.msra.mxu0 %v4287
      %5561 = vmatprep.subr.mxu0 0.0
      %5562 = vmatpush1.msra.mxu0 %v4201
      %5563 = vmatprep.subr.mxu0 0.0
      %5564 = vmatpush1.msra.mxu0 %v4200
      %5565 = vmatprep.subr.mxu0 0.0
      %5566 = vmatpush2.msra.mxu0 0.0
      %5567 = vmatprep.subr.mxu0 0.0
      %5568 = vmatpush2.msra.mxu0 0.0
      %5569 = vmatprep.subr.mxu0 0.0
      %5570 = vmatpush2.msra.mxu0 0.0
      %5571 = vmatprep.subr.mxu0 0.0
      %5572 = vmatpush2.msra.mxu0 0.0
      %5573 = vmatprep.subr.mxu0 0.0
      %5574 = vmatpush2.msra.mxu0 0.0
      %5575 = vmatprep.subr.mxu0 0.0
      %5576 = vmatpush2.msra.mxu0 0.0
      %5577 = vmatprep.subr.mxu0 0.0
      %5578 = vmatpush2.msra.mxu0 0.0
      %5579 = vmatprep.subr.mxu0 0.0
      %5580 = vmatpush2.msra.mxu0 0.0
      %5581 = vmatprep.subr.mxu0 0.0
      %5582 = vmatpush2.msra.mxu0 0.0
      %5583 = vmatprep.subr.mxu0 0.0
      %5584 = vmatpush2.msra.mxu0 0.0
      %5585 = vmatprep.subr.mxu0 0.0
      %5586 = vmatpush2.msra.mxu0 0.0
      %5587 = vmatprep.subr.mxu0 0.0
      %5588 = vmatpush2.msra.mxu0 0.0
      %5589 = vmatprep.subr.mxu0 0.0
      %5590 = vmatpush2.msra.mxu0 0.0
      %5591 = vmatprep.subr.mxu0 0.0
      %5592 = vmatpush2.msra.mxu0 0.0
      %5593 = vmatprep.subr.mxu0 0.0
      %5594 = vmatpush2.msra.mxu0 0.0
      %5595 = vmatprep.subr.mxu0 0.0
      %5596 = vmatpush2.msra.mxu0 0.0
      %5597 = vmatprep.mubr.f32.mxu0 0.0
      %5598 = vmatmul.mubr.f32.gmra.mxu0 %v5522
      %v5599 = vpop.f32.mrf.mxu0
      %v5600 = vadd.f32 0.0, %v5599
      %v5601 = vpop.f32.mrf.mxu0
      %5602 = vmatprep.mubr.f32.mxu0 0.0
      %5603 = vmatmul.mubr.f32.gmra.mxu0 %v5525
      %v5604 = vpop.f32.mrf.mxu0
      %v5605 = vadd.f32 0.0, %v5604
      %v5606 = vpop.f32.mrf.mxu0
      %5607 = vmatprep.mubr.f32.mxu0 0.0
      %5608 = vmatmul.mubr.f32.gmra.mxu0 %v5528
      %v5609 = vpop.f32.mrf.mxu0
      %v5610 = vadd.f32 0.0, %v5609
      %v5611 = vpop.f32.mrf.mxu0
      %5612 = vmatprep.mubr.f32.mxu0 0.0
      %5613 = vmatmul.mubr.f32.gmra.mxu0 %v5531
      %v5614 = vpop.f32.mrf.mxu0
      %v5615 = vadd.f32 0.0, %v5614
      %v5616 = vpop.f32.mrf.mxu0
      %5617 = vdwg.mxu0
      %s5618 = scalar_lea.vmem %s11, 96
      %v5619 = vld [vmem:[%s5618] sm:$0xff]
      %v5620 = vld [vmem:[%s5618 + $0x8] sm:$0xff]
      %v5622 = vsel %vm2531, %v5600, 0
      %v5625 = vsel %vm2531, %v5605, 0
      %v5628 = vsel %vm2531, %v5610, 0
      %v5631 = vsel %vm2531, %v5615, 0
      %5633 = vmatprep.subr.mxu0 0.0
      %5634 = vmatpush1.msra.mxu0 0.0
      %5635 = vmatprep.subr.mxu0 0.0
      %5636 = vmatpush1.msra.mxu0 0.0
      %5637 = vmatprep.subr.mxu0 0.0
      %5638 = vmatpush1.msra.mxu0 0.0
      %5639 = vmatprep.subr.mxu0 0.0
      %5640 = vmatpush1.msra.mxu0 0.0
      %5641 = vmatprep.subr.mxu0 0.0
      %5642 = vmatpush1.msra.mxu0 0.0
      %5643 = vmatprep.subr.mxu0 0.0
      %5644 = vmatpush1.msra.mxu0 0.0
      %5645 = vmatprep.subr.mxu0 0.0
      %5646 = vmatpush1.msra.mxu0 0.0
      %5647 = vmatprep.subr.mxu0 0.0
      %5648 = vmatpush1.msra.mxu0 0.0
      %5649 = vmatprep.subr.mxu0 0.0
      %5650 = vmatpush1.msra.mxu0 0.0
      %5651 = vmatprep.subr.mxu0 0.0
      %5652 = vmatpush1.msra.mxu0 0.0
      %5653 = vmatprep.subr.mxu0 0.0
      %5654 = vmatpush1.msra.mxu0 0.0
      %5655 = vmatprep.subr.mxu0 0.0
      %5656 = vmatpush1.msra.mxu0 0.0
      %5657 = vmatprep.subr.mxu0 0.0
      %5658 = vmatpush1.msra.mxu0 0.0
      %5659 = vmatprep.subr.mxu0 0.0
      %5660 = vmatpush1.msra.mxu0 0.0
      %5661 = vmatprep.subr.mxu0 0.0
      %5662 = vmatpush1.msra.mxu0 %v5620
      %5663 = vmatprep.subr.mxu0 0.0
      %5664 = vmatpush1.msra.mxu0 %v5619
      %5665 = vmatprep.subr.mxu0 0.0
      %5666 = vmatpush2.msra.mxu0 0.0
      %5667 = vmatprep.subr.mxu0 0.0
      %5668 = vmatpush2.msra.mxu0 0.0
      %5669 = vmatprep.subr.mxu0 0.0
      %5670 = vmatpush2.msra.mxu0 0.0
      %5671 = vmatprep.subr.mxu0 0.0
      %5672 = vmatpush2.msra.mxu0 0.0
      %5673 = vmatprep.subr.mxu0 0.0
      %5674 = vmatpush2.msra.mxu0 0.0
      %5675 = vmatprep.subr.mxu0 0.0
      %5676 = vmatpush2.msra.mxu0 0.0
      %5677 = vmatprep.subr.mxu0 0.0
      %5678 = vmatpush2.msra.mxu0 0.0
      %5679 = vmatprep.subr.mxu0 0.0
      %5680 = vmatpush2.msra.mxu0 0.0
      %5681 = vmatprep.subr.mxu0 0.0
      %5682 = vmatpush2.msra.mxu0 0.0
      %5683 = vmatprep.subr.mxu0 0.0
      %5684 = vmatpush2.msra.mxu0 0.0
      %5685 = vmatprep.subr.mxu0 0.0
      %5686 = vmatpush2.msra.mxu0 0.0
      %5687 = vmatprep.subr.mxu0 0.0
      %5688 = vmatpush2.msra.mxu0 0.0
      %5689 = vmatprep.subr.mxu0 0.0
      %5690 = vmatpush2.msra.mxu0 0.0
      %5691 = vmatprep.subr.mxu0 0.0
      %5692 = vmatpush2.msra.mxu0 0.0
      %5693 = vmatprep.subr.mxu0 0.0
      %5694 = vmatpush2.msra.mxu0 0.0
      %5695 = vmatprep.subr.mxu0 0.0
      %5696 = vmatpush2.msra.mxu0 0.0
      %5697 = vmatprep.mubr.f32.mxu0 0.0
      %5698 = vmatmul.mubr.f32.gmra.mxu0 %v5622
      %v5699 = vpop.f32.mrf.mxu0
      %v5700 = vadd.f32 0.0, %v5699
      %v5701 = vpop.f32.mrf.mxu0
      %5702 = vmatprep.mubr.f32.mxu0 0.0
      %5703 = vmatmul.mubr.f32.gmra.mxu0 %v5625
      %v5704 = vpop.f32.mrf.mxu0
      %v5705 = vadd.f32 0.0, %v5704
      %v5706 = vpop.f32.mrf.mxu0
      %5707 = vmatprep.mubr.f32.mxu0 0.0
      %5708 = vmatmul.mubr.f32.gmra.mxu0 %v5628
      %v5709 = vpop.f32.mrf.mxu0
      %v5710 = vadd.f32 0.0, %v5709
      %v5711 = vpop.f32.mrf.mxu0
      %5712 = vmatprep.mubr.f32.mxu0 0.0
      %5713 = vmatmul.mubr.f32.gmra.mxu0 %v5631
      %v5714 = vpop.f32.mrf.mxu0
      %v5715 = vadd.f32 0.0, %v5714
      %v5716 = vpop.f32.mrf.mxu0
      %5717 = vdwg.mxu0
      %v5718 = vadd.f32 %v5512, %v5700
      %v5719 = vadd.f32 %v5513, %v5705
      %v5720 = vadd.f32 %v5514, %v5710
      %v5721 = vadd.f32 %v5515, %v5715
      %s5722 = scalar_lea.vmem %s12, 224
      %v5723 = vld [vmem:[%s5722] sm:$0xff]
      %v5724 = vld [vmem:[%s5722 + $0x8] sm:$0xff]
      %v5725 = vld [vmem:[%s5722 + $0x10] sm:$0xff]
      %v5726 = vld [vmem:[%s5722 + $0x18] sm:$0xff]
      %v5728 = vsel %vm4293, %v5723, 0
      %v5731 = vsel %vm4293, %v5724, 0
      %v5734 = vsel %vm4293, %v5725, 0
      %v5737 = vsel %vm4293, %v5726, 0
      %5739 = vmatprep.subr.mxu0 0.0
      %5740 = vmatpush1.msra.mxu0 0.0
      %5741 = vmatprep.subr.mxu0 0.0
      %5742 = vmatpush1.msra.mxu0 0.0
      %5743 = vmatprep.subr.mxu0 0.0
      %5744 = vmatpush1.msra.mxu0 0.0
      %5745 = vmatprep.subr.mxu0 0.0
      %5746 = vmatpush1.msra.mxu0 0.0
      %5747 = vmatprep.subr.mxu0 0.0
      %5748 = vmatpush1.msra.mxu0 0.0
      %5749 = vmatprep.subr.mxu0 0.0
      %5750 = vmatpush1.msra.mxu0 0.0
      %5751 = vmatprep.subr.mxu0 0.0
      %5752 = vmatpush1.msra.mxu0 0.0
      %5753 = vmatprep.subr.mxu0 0.0
      %5754 = vmatpush1.msra.mxu0 0.0
      %5755 = vmatprep.subr.mxu0 0.0
      %5756 = vmatpush1.msra.mxu0 0.0
      %5757 = vmatprep.subr.mxu0 0.0
      %5758 = vmatpush1.msra.mxu0 0.0
      %5759 = vmatprep.subr.mxu0 0.0
      %5760 = vmatpush1.msra.mxu0 0.0
      %5761 = vmatprep.subr.mxu0 0.0
      %5762 = vmatpush1.msra.mxu0 0.0
      %5763 = vmatprep.subr.mxu0 0.0
      %5764 = vmatpush1.msra.mxu0 %v4288
      %5765 = vmatprep.subr.mxu0 0.0
      %5766 = vmatpush1.msra.mxu0 %v4287
      %5767 = vmatprep.subr.mxu0 0.0
      %5768 = vmatpush1.msra.mxu0 %v4201
      %5769 = vmatprep.subr.mxu0 0.0
      %5770 = vmatpush1.msra.mxu0 %v4200
      %5771 = vmatprep.subr.mxu0 0.0
      %5772 = vmatpush2.msra.mxu0 0.0
      %5773 = vmatprep.subr.mxu0 0.0
      %5774 = vmatpush2.msra.mxu0 0.0
      %5775 = vmatprep.subr.mxu0 0.0
      %5776 = vmatpush2.msra.mxu0 0.0
      %5777 = vmatprep.subr.mxu0 0.0
      %5778 = vmatpush2.msra.mxu0 0.0
      %5779 = vmatprep.subr.mxu0 0.0
      %5780 = vmatpush2.msra.mxu0 0.0
      %5781 = vmatprep.subr.mxu0 0.0
      %5782 = vmatpush2.msra.mxu0 0.0
      %5783 = vmatprep.subr.mxu0 0.0
      %5784 = vmatpush2.msra.mxu0 0.0
      %5785 = vmatprep.subr.mxu0 0.0
      %5786 = vmatpush2.msra.mxu0 0.0
      %5787 = vmatprep.subr.mxu0 0.0
      %5788 = vmatpush2.msra.mxu0 0.0
      %5789 = vmatprep.subr.mxu0 0.0
      %5790 = vmatpush2.msra.mxu0 0.0
      %5791 = vmatprep.subr.mxu0 0.0
      %5792 = vmatpush2.msra.mxu0 0.0
      %5793 = vmatprep.subr.mxu0 0.0
      %5794 = vmatpush2.msra.mxu0 0.0
      %5795 = vmatprep.subr.mxu0 0.0
      %5796 = vmatpush2.msra.mxu0 0.0
      %5797 = vmatprep.subr.mxu0 0.0
      %5798 = vmatpush2.msra.mxu0 0.0
      %5799 = vmatprep.subr.mxu0 0.0
      %5800 = vmatpush2.msra.mxu0 0.0
      %5801 = vmatprep.subr.mxu0 0.0
      %5802 = vmatpush2.msra.mxu0 0.0
      %5803 = vmatprep.mubr.f32.mxu0 0.0
      %5804 = vmatmul.mubr.f32.gmra.mxu0 %v5728
      %v5805 = vpop.f32.mrf.mxu0
      %v5806 = vadd.f32 0.0, %v5805
      %v5807 = vpop.f32.mrf.mxu0
      %5808 = vmatprep.mubr.f32.mxu0 0.0
      %5809 = vmatmul.mubr.f32.gmra.mxu0 %v5731
      %v5810 = vpop.f32.mrf.mxu0
      %v5811 = vadd.f32 0.0, %v5810
      %v5812 = vpop.f32.mrf.mxu0
      %5813 = vmatprep.mubr.f32.mxu0 0.0
      %5814 = vmatmul.mubr.f32.gmra.mxu0 %v5734
      %v5815 = vpop.f32.mrf.mxu0
      %v5816 = vadd.f32 0.0, %v5815
      %v5817 = vpop.f32.mrf.mxu0
      %5818 = vmatprep.mubr.f32.mxu0 0.0
      %5819 = vmatmul.mubr.f32.gmra.mxu0 %v5737
      %v5820 = vpop.f32.mrf.mxu0
      %v5821 = vadd.f32 0.0, %v5820
      %v5822 = vpop.f32.mrf.mxu0
      %5823 = vdwg.mxu0
      %s5824 = scalar_lea.vmem %s11, 112
      %v5825 = vld [vmem:[%s5824] sm:$0xff]
      %v5826 = vld [vmem:[%s5824 + $0x8] sm:$0xff]
      %v5828 = vsel %vm2531, %v5806, 0
      %v5831 = vsel %vm2531, %v5811, 0
      %v5834 = vsel %vm2531, %v5816, 0
      %v5837 = vsel %vm2531, %v5821, 0
      %5839 = vmatprep.subr.mxu0 0.0
      %5840 = vmatpush1.msra.mxu0 0.0
      %5841 = vmatprep.subr.mxu0 0.0
      %5842 = vmatpush1.msra.mxu0 0.0
      %5843 = vmatprep.subr.mxu0 0.0
      %5844 = vmatpush1.msra.mxu0 0.0
      %5845 = vmatprep.subr.mxu0 0.0
      %5846 = vmatpush1.msra.mxu0 0.0
      %5847 = vmatprep.subr.mxu0 0.0
      %5848 = vmatpush1.msra.mxu0 0.0
      %5849 = vmatprep.subr.mxu0 0.0
      %5850 = vmatpush1.msra.mxu0 0.0
      %5851 = vmatprep.subr.mxu0 0.0
      %5852 = vmatpush1.msra.mxu0 0.0
      %5853 = vmatprep.subr.mxu0 0.0
      %5854 = vmatpush1.msra.mxu0 0.0
      %5855 = vmatprep.subr.mxu0 0.0
      %5856 = vmatpush1.msra.mxu0 0.0
      %5857 = vmatprep.subr.mxu0 0.0
      %5858 = vmatpush1.msra.mxu0 0.0
      %5859 = vmatprep.subr.mxu0 0.0
      %5860 = vmatpush1.msra.mxu0 0.0
      %5861 = vmatprep.subr.mxu0 0.0
      %5862 = vmatpush1.msra.mxu0 0.0
      %5863 = vmatprep.subr.mxu0 0.0
      %5864 = vmatpush1.msra.mxu0 0.0
      %5865 = vmatprep.subr.mxu0 0.0
      %5866 = vmatpush1.msra.mxu0 0.0
      %5867 = vmatprep.subr.mxu0 0.0
      %5868 = vmatpush1.msra.mxu0 %v5826
      %5869 = vmatprep.subr.mxu0 0.0
      %5870 = vmatpush1.msra.mxu0 %v5825
      %5871 = vmatprep.subr.mxu0 0.0
      %5872 = vmatpush2.msra.mxu0 0.0
      %5873 = vmatprep.subr.mxu0 0.0
      %5874 = vmatpush2.msra.mxu0 0.0
      %5875 = vmatprep.subr.mxu0 0.0
      %5876 = vmatpush2.msra.mxu0 0.0
      %5877 = vmatprep.subr.mxu0 0.0
      %5878 = vmatpush2.msra.mxu0 0.0
      %5879 = vmatprep.subr.mxu0 0.0
      %5880 = vmatpush2.msra.mxu0 0.0
      %5881 = vmatprep.subr.mxu0 0.0
      %5882 = vmatpush2.msra.mxu0 0.0
      %5883 = vmatprep.subr.mxu0 0.0
      %5884 = vmatpush2.msra.mxu0 0.0
      %5885 = vmatprep.subr.mxu0 0.0
      %5886 = vmatpush2.msra.mxu0 0.0
      %5887 = vmatprep.subr.mxu0 0.0
      %5888 = vmatpush2.msra.mxu0 0.0
      %5889 = vmatprep.subr.mxu0 0.0
      %5890 = vmatpush2.msra.mxu0 0.0
      %5891 = vmatprep.subr.mxu0 0.0
      %5892 = vmatpush2.msra.mxu0 0.0
      %5893 = vmatprep.subr.mxu0 0.0
      %5894 = vmatpush2.msra.mxu0 0.0
      %5895 = vmatprep.subr.mxu0 0.0
      %5896 = vmatpush2.msra.mxu0 0.0
      %5897 = vmatprep.subr.mxu0 0.0
      %5898 = vmatpush2.msra.mxu0 0.0
      %5899 = vmatprep.subr.mxu0 0.0
      %5900 = vmatpush2.msra.mxu0 0.0
      %5901 = vmatprep.subr.mxu0 0.0
      %5902 = vmatpush2.msra.mxu0 0.0
      %5903 = vmatprep.mubr.f32.mxu0 0.0
      %5904 = vmatmul.mubr.f32.gmra.mxu0 %v5828
      %v5905 = vpop.f32.mrf.mxu0
      %v5906 = vadd.f32 0.0, %v5905
      %v5907 = vpop.f32.mrf.mxu0
      %5908 = vmatprep.mubr.f32.mxu0 0.0
      %5909 = vmatmul.mubr.f32.gmra.mxu0 %v5831
      %v5910 = vpop.f32.mrf.mxu0
      %v5911 = vadd.f32 0.0, %v5910
      %v5912 = vpop.f32.mrf.mxu0
      %5913 = vmatprep.mubr.f32.mxu0 0.0
      %5914 = vmatmul.mubr.f32.gmra.mxu0 %v5834
      %v5915 = vpop.f32.mrf.mxu0
      %v5916 = vadd.f32 0.0, %v5915
      %v5917 = vpop.f32.mrf.mxu0
      %5918 = vmatprep.mubr.f32.mxu0 0.0
      %5919 = vmatmul.mubr.f32.gmra.mxu0 %v5837
      %v5920 = vpop.f32.mrf.mxu0
      %v5921 = vadd.f32 0.0, %v5920
      %v5922 = vpop.f32.mrf.mxu0
      %5923 = vdwg.mxu0
      %v5924 = vadd.f32 %v5718, %v5906
      %v5925 = vadd.f32 %v5719, %v5911
      %v5926 = vadd.f32 %v5720, %v5916
      %v5927 = vadd.f32 %v5721, %v5921
      %s5928 = scalar_lea.vmem %s12, 256
      %v5929 = vld [vmem:[%s5928] sm:$0xff]
      %v5930 = vld [vmem:[%s5928 + $0x8] sm:$0xff]
      %v5931 = vld [vmem:[%s5928 + $0x10] sm:$0xff]
      %v5932 = vld [vmem:[%s5928 + $0x18] sm:$0xff]
      %v5934 = vsel %vm4293, %v5929, 0
      %v5937 = vsel %vm4293, %v5930, 0
      %v5940 = vsel %vm4293, %v5931, 0
      %v5943 = vsel %vm4293, %v5932, 0
      %5945 = vmatprep.subr.mxu0 0.0
      %5946 = vmatpush1.msra.mxu0 0.0
      %5947 = vmatprep.subr.mxu0 0.0
      %5948 = vmatpush1.msra.mxu0 0.0
      %5949 = vmatprep.subr.mxu0 0.0
      %5950 = vmatpush1.msra.mxu0 0.0
      %5951 = vmatprep.subr.mxu0 0.0
      %5952 = vmatpush1.msra.mxu0 0.0
      %5953 = vmatprep.subr.mxu0 0.0
      %5954 = vmatpush1.msra.mxu0 0.0
      %5955 = vmatprep.subr.mxu0 0.0
      %5956 = vmatpush1.msra.mxu0 0.0
      %5957 = vmatprep.subr.mxu0 0.0
      %5958 = vmatpush1.msra.mxu0 0.0
      %5959 = vmatprep.subr.mxu0 0.0
      %5960 = vmatpush1.msra.mxu0 0.0
      %5961 = vmatprep.subr.mxu0 0.0
      %5962 = vmatpush1.msra.mxu0 0.0
      %5963 = vmatprep.subr.mxu0 0.0
      %5964 = vmatpush1.msra.mxu0 0.0
      %5965 = vmatprep.subr.mxu0 0.0
      %5966 = vmatpush1.msra.mxu0 0.0
      %5967 = vmatprep.subr.mxu0 0.0
      %5968 = vmatpush1.msra.mxu0 0.0
      %5969 = vmatprep.subr.mxu0 0.0
      %5970 = vmatpush1.msra.mxu0 %v4288
      %5971 = vmatprep.subr.mxu0 0.0
      %5972 = vmatpush1.msra.mxu0 %v4287
      %5973 = vmatprep.subr.mxu0 0.0
      %5974 = vmatpush1.msra.mxu0 %v4201
      %5975 = vmatprep.subr.mxu0 0.0
      %5976 = vmatpush1.msra.mxu0 %v4200
      %5977 = vmatprep.subr.mxu0 0.0
      %5978 = vmatpush2.msra.mxu0 0.0
      %5979 = vmatprep.subr.mxu0 0.0
      %5980 = vmatpush2.msra.mxu0 0.0
      %5981 = vmatprep.subr.mxu0 0.0
      %5982 = vmatpush2.msra.mxu0 0.0
      %5983 = vmatprep.subr.mxu0 0.0
      %5984 = vmatpush2.msra.mxu0 0.0
      %5985 = vmatprep.subr.mxu0 0.0
      %5986 = vmatpush2.msra.mxu0 0.0
      %5987 = vmatprep.subr.mxu0 0.0
      %5988 = vmatpush2.msra.mxu0 0.0
      %5989 = vmatprep.subr.mxu0 0.0
      %5990 = vmatpush2.msra.mxu0 0.0
      %5991 = vmatprep.subr.mxu0 0.0
      %5992 = vmatpush2.msra.mxu0 0.0
      %5993 = vmatprep.subr.mxu0 0.0
      %5994 = vmatpush2.msra.mxu0 0.0
      %5995 = vmatprep.subr.mxu0 0.0
      %5996 = vmatpush2.msra.mxu0 0.0
      %5997 = vmatprep.subr.mxu0 0.0
      %5998 = vmatpush2.msra.mxu0 0.0
      %5999 = vmatprep.subr.mxu0 0.0
      %6000 = vmatpush2.msra.mxu0 0.0
      %6001 = vmatprep.subr.mxu0 0.0
      %6002 = vmatpush2.msra.mxu0 0.0
      %6003 = vmatprep.subr.mxu0 0.0
      %6004 = vmatpush2.msra.mxu0 0.0
      %6005 = vmatprep.subr.mxu0 0.0
      %6006 = vmatpush2.msra.mxu0 0.0
      %6007 = vmatprep.subr.mxu0 0.0
      %6008 = vmatpush2.msra.mxu0 0.0
      %6009 = vmatprep.mubr.f32.mxu0 0.0
      %6010 = vmatmul.mubr.f32.gmra.mxu0 %v5934
      %v6011 = vpop.f32.mrf.mxu0
      %v6012 = vadd.f32 0.0, %v6011
      %v6013 = vpop.f32.mrf.mxu0
      %6014 = vmatprep.mubr.f32.mxu0 0.0
      %6015 = vmatmul.mubr.f32.gmra.mxu0 %v5937
      %v6016 = vpop.f32.mrf.mxu0
      %v6017 = vadd.f32 0.0, %v6016
      %v6018 = vpop.f32.mrf.mxu0
      %6019 = vmatprep.mubr.f32.mxu0 0.0
      %6020 = vmatmul.mubr.f32.gmra.mxu0 %v5940
      %v6021 = vpop.f32.mrf.mxu0
      %v6022 = vadd.f32 0.0, %v6021
      %v6023 = vpop.f32.mrf.mxu0
      %6024 = vmatprep.mubr.f32.mxu0 0.0
      %6025 = vmatmul.mubr.f32.gmra.mxu0 %v5943
      %v6026 = vpop.f32.mrf.mxu0
      %v6027 = vadd.f32 0.0, %v6026
      %v6028 = vpop.f32.mrf.mxu0
      %6029 = vdwg.mxu0
      %s6030 = scalar_lea.vmem %s11, 128
      %v6031 = vld [vmem:[%s6030] sm:$0xff]
      %v6032 = vld [vmem:[%s6030 + $0x8] sm:$0xff]
      %v6034 = vsel %vm2531, %v6012, 0
      %v6037 = vsel %vm2531, %v6017, 0
      %v6040 = vsel %vm2531, %v6022, 0
      %v6043 = vsel %vm2531, %v6027, 0
      %6045 = vmatprep.subr.mxu0 0.0
      %6046 = vmatpush1.msra.mxu0 0.0
      %6047 = vmatprep.subr.mxu0 0.0
      %6048 = vmatpush1.msra.mxu0 0.0
      %6049 = vmatprep.subr.mxu0 0.0
      %6050 = vmatpush1.msra.mxu0 0.0
      %6051 = vmatprep.subr.mxu0 0.0
      %6052 = vmatpush1.msra.mxu0 0.0
      %6053 = vmatprep.subr.mxu0 0.0
      %6054 = vmatpush1.msra.mxu0 0.0
      %6055 = vmatprep.subr.mxu0 0.0
      %6056 = vmatpush1.msra.mxu0 0.0
      %6057 = vmatprep.subr.mxu0 0.0
      %6058 = vmatpush1.msra.mxu0 0.0
      %6059 = vmatprep.subr.mxu0 0.0
      %6060 = vmatpush1.msra.mxu0 0.0
      %6061 = vmatprep.subr.mxu0 0.0
      %6062 = vmatpush1.msra.mxu0 0.0
      %6063 = vmatprep.subr.mxu0 0.0
      %6064 = vmatpush1.msra.mxu0 0.0
      %6065 = vmatprep.subr.mxu0 0.0
      %6066 = vmatpush1.msra.mxu0 0.0
      %6067 = vmatprep.subr.mxu0 0.0
      %6068 = vmatpush1.msra.mxu0 0.0
      %6069 = vmatprep.subr.mxu0 0.0
      %6070 = vmatpush1.msra.mxu0 0.0
      %6071 = vmatprep.subr.mxu0 0.0
      %6072 = vmatpush1.msra.mxu0 0.0
      %6073 = vmatprep.subr.mxu0 0.0
      %6074 = vmatpush1.msra.mxu0 %v6032
      %6075 = vmatprep.subr.mxu0 0.0
      %6076 = vmatpush1.msra.mxu0 %v6031
      %6077 = vmatprep.subr.mxu0 0.0
      %6078 = vmatpush2.msra.mxu0 0.0
      %6079 = vmatprep.subr.mxu0 0.0
      %6080 = vmatpush2.msra.mxu0 0.0
      %6081 = vmatprep.subr.mxu0 0.0
      %6082 = vmatpush2.msra.mxu0 0.0
      %6083 = vmatprep.subr.mxu0 0.0
      %6084 = vmatpush2.msra.mxu0 0.0
      %6085 = vmatprep.subr.mxu0 0.0
      %6086 = vmatpush2.msra.mxu0 0.0
      %6087 = vmatprep.subr.mxu0 0.0
      %6088 = vmatpush2.msra.mxu0 0.0
      %6089 = vmatprep.subr.mxu0 0.0
      %6090 = vmatpush2.msra.mxu0 0.0
      %6091 = vmatprep.subr.mxu0 0.0
      %6092 = vmatpush2.msra.mxu0 0.0
      %6093 = vmatprep.subr.mxu0 0.0
      %6094 = vmatpush2.msra.mxu0 0.0
      %6095 = vmatprep.subr.mxu0 0.0
      %6096 = vmatpush2.msra.mxu0 0.0
      %6097 = vmatprep.subr.mxu0 0.0
      %6098 = vmatpush2.msra.mxu0 0.0
      %6099 = vmatprep.subr.mxu0 0.0
      %6100 = vmatpush2.msra.mxu0 0.0
      %6101 = vmatprep.subr.mxu0 0.0
      %6102 = vmatpush2.msra.mxu0 0.0
      %6103 = vmatprep.subr.mxu0 0.0
      %6104 = vmatpush2.msra.mxu0 0.0
      %6105 = vmatprep.subr.mxu0 0.0
      %6106 = vmatpush2.msra.mxu0 0.0
      %6107 = vmatprep.subr.mxu0 0.0
      %6108 = vmatpush2.msra.mxu0 0.0
      %6109 = vmatprep.mubr.f32.mxu0 0.0
      %6110 = vmatmul.mubr.f32.gmra.mxu0 %v6034
      %v6111 = vpop.f32.mrf.mxu0
      %v6112 = vadd.f32 0.0, %v6111
      %v6113 = vpop.f32.mrf.mxu0
      %6114 = vmatprep.mubr.f32.mxu0 0.0
      %6115 = vmatmul.mubr.f32.gmra.mxu0 %v6037
      %v6116 = vpop.f32.mrf.mxu0
      %v6117 = vadd.f32 0.0, %v6116
      %v6118 = vpop.f32.mrf.mxu0
      %6119 = vmatprep.mubr.f32.mxu0 0.0
      %6120 = vmatmul.mubr.f32.gmra.mxu0 %v6040
      %v6121 = vpop.f32.mrf.mxu0
      %v6122 = vadd.f32 0.0, %v6121
      %v6123 = vpop.f32.mrf.mxu0
      %6124 = vmatprep.mubr.f32.mxu0 0.0
      %6125 = vmatmul.mubr.f32.gmra.mxu0 %v6043
      %v6126 = vpop.f32.mrf.mxu0
      %v6127 = vadd.f32 0.0, %v6126
      %v6128 = vpop.f32.mrf.mxu0
      %6129 = vdwg.mxu0
      %v6130 = vadd.f32 %v5924, %v6112
      %v6131 = vadd.f32 %v5925, %v6117
      %v6132 = vadd.f32 %v5926, %v6122
      %v6133 = vadd.f32 %v5927, %v6127
      %v6134 = vld [vmem:[%s13] sm:$0xff]
      %v6135 = vld [vmem:[%s13 + $0x8] sm:$0xff]
      %v6136 = vld [vmem:[%s13 + $0x10] sm:$0xff]
      %v6137 = vld [vmem:[%s13 + $0x18] sm:$0xff]
      %6139 = vset.pattern.permute.xlu0 0
      %6140 = vperm.xlu0 %6139, %v6134
      %v6141 = vpop.permute.xlu0 %6140
      %6144 = vset.pattern.permute.xlu0 0
      %6145 = vperm.xlu0 %6144, %v6135
      %v6146 = vpop.permute.xlu0 %6145
      %6149 = vset.pattern.permute.xlu0 0
      %6150 = vperm.xlu0 %6149, %v6136
      %v6151 = vpop.permute.xlu0 %6150
      %6154 = vset.pattern.permute.xlu0 0
      %6155 = vperm.xlu0 %6154, %v6137
      %v6156 = vpop.permute.xlu0 %6155
      %v6158 = vadd.f32 %v6130, %v6141
      %v6159 = vadd.f32 %v6131, %v6146
      %v6160 = vadd.f32 %v6132, %v6151
      %v6161 = vadd.f32 %v6133, %v6156
      %vm6162 = vcmp.ge.f32.partialorder %v6158, 0.0
      %vm6163 = vcmp.ge.f32.partialorder %v6159, 0.0
      %vm6164 = vcmp.ge.f32.partialorder %v6160, 0.0
      %vm6165 = vcmp.ge.f32.partialorder %v6161, 0.0
      %v6166 = vmul.f32 %v6158, 0.01
      %v6167 = vmul.f32 %v6159, 0.01
      %v6168 = vmul.f32 %v6160, 0.01
      %v6169 = vmul.f32 %v6161, 0.01
      %v6170 = vsel %vm6162, %v6158, %v6166
      %v6171 = vsel %vm6163, %v6159, %v6167
      %v6172 = vsel %vm6164, %v6160, %v6168
      %v6173 = vsel %vm6165, %v6161, %v6169
      %v6174 = vld [vmem:[%s15] sm:$0xff]
      %v6175 = vld [vmem:[%s15 + $0x8] sm:$0xff]
      %v6177 = vsel %vm4293, %v6174, 0
      %v6180 = vsel %vm4293, %v6175, 0
      %6182 = vmatprep.subr.mxu0 0.0
      %6183 = vmatpush1.msra.mxu0 0.0
      %6184 = vmatprep.subr.mxu0 0.0
      %6185 = vmatpush1.msra.mxu0 0.0
      %6186 = vmatprep.subr.mxu0 0.0
      %6187 = vmatpush1.msra.mxu0 0.0
      %6188 = vmatprep.subr.mxu0 0.0
      %6189 = vmatpush1.msra.mxu0 0.0
      %6190 = vmatprep.subr.mxu0 0.0
      %6191 = vmatpush1.msra.mxu0 0.0
      %6192 = vmatprep.subr.mxu0 0.0
      %6193 = vmatpush1.msra.mxu0 0.0
      %6194 = vmatprep.subr.mxu0 0.0
      %6195 = vmatpush1.msra.mxu0 0.0
      %6196 = vmatprep.subr.mxu0 0.0
      %6197 = vmatpush1.msra.mxu0 0.0
      %6198 = vmatprep.subr.mxu0 0.0
      %6199 = vmatpush1.msra.mxu0 0.0
      %6200 = vmatprep.subr.mxu0 0.0
      %6201 = vmatpush1.msra.mxu0 0.0
      %6202 = vmatprep.subr.mxu0 0.0
      %6203 = vmatpush1.msra.mxu0 0.0
      %6204 = vmatprep.subr.mxu0 0.0
      %6205 = vmatpush1.msra.mxu0 0.0
      %6206 = vmatprep.subr.mxu0 0.0
      %6207 = vmatpush1.msra.mxu0 %v6173
      %6208 = vmatprep.subr.mxu0 0.0
      %6209 = vmatpush1.msra.mxu0 %v6172
      %6210 = vmatprep.subr.mxu0 0.0
      %6211 = vmatpush1.msra.mxu0 %v6171
      %6212 = vmatprep.subr.mxu0 0.0
      %6213 = vmatpush1.msra.mxu0 %v6170
      %6214 = vmatprep.subr.mxu0 0.0
      %6215 = vmatpush2.msra.mxu0 0.0
      %6216 = vmatprep.subr.mxu0 0.0
      %6217 = vmatpush2.msra.mxu0 0.0
      %6218 = vmatprep.subr.mxu0 0.0
      %6219 = vmatpush2.msra.mxu0 0.0
      %6220 = vmatprep.subr.mxu0 0.0
      %6221 = vmatpush2.msra.mxu0 0.0
      %6222 = vmatprep.subr.mxu0 0.0
      %6223 = vmatpush2.msra.mxu0 0.0
      %6224 = vmatprep.subr.mxu0 0.0
      %6225 = vmatpush2.msra.mxu0 0.0
      %6226 = vmatprep.subr.mxu0 0.0
      %6227 = vmatpush2.msra.mxu0 0.0
      %6228 = vmatprep.subr.mxu0 0.0
      %6229 = vmatpush2.msra.mxu0 0.0
      %6230 = vmatprep.subr.mxu0 0.0
      %6231 = vmatpush2.msra.mxu0 0.0
      %6232 = vmatprep.subr.mxu0 0.0
      %6233 = vmatpush2.msra.mxu0 0.0
      %6234 = vmatprep.subr.mxu0 0.0
      %6235 = vmatpush2.msra.mxu0 0.0
      %6236 = vmatprep.subr.mxu0 0.0
      %6237 = vmatpush2.msra.mxu0 0.0
      %6238 = vmatprep.subr.mxu0 0.0
      %6239 = vmatpush2.msra.mxu0 0.0
      %6240 = vmatprep.subr.mxu0 0.0
      %6241 = vmatpush2.msra.mxu0 0.0
      %6242 = vmatprep.subr.mxu0 0.0
      %6243 = vmatpush2.msra.mxu0 0.0
      %6244 = vmatprep.subr.mxu0 0.0
      %6245 = vmatpush2.msra.mxu0 0.0
      %6246 = vmatprep.mubr.f32.mxu0 0.0
      %6247 = vmatmul.mubr.f32.gmra.mxu0 %v6177
      %v6248 = vpop.f32.mrf.mxu0
      %v6249 = vadd.f32 0.0, %v6248
      %v6250 = vpop.f32.mrf.mxu0
      %6251 = vmatprep.mubr.f32.mxu0 0.0
      %6252 = vmatmul.mubr.f32.gmra.mxu0 %v6180
      %v6253 = vpop.f32.mrf.mxu0
      %v6254 = vadd.f32 0.0, %v6253
      %v6255 = vpop.f32.mrf.mxu0
      %6256 = vdwg.mxu0
      %v6257 = vld [vmem:[%s14] sm:$0xff]
      %v6258 = vld [vmem:[%s14 + $0x8] sm:$0xff]
      %v6259 = vld [vmem:[%s14 + $0x10] sm:$0xff]
      %v6260 = vld [vmem:[%s14 + $0x18] sm:$0xff]
      %v6261 = vld [vmem:[%s14 + $0x20] sm:$0xff]
      %v6262 = vld [vmem:[%s14 + $0x28] sm:$0xff]
      %v6263 = vld [vmem:[%s14 + $0x30] sm:$0xff]
      %v6264 = vld [vmem:[%s14 + $0x38] sm:$0xff]
      %v6265 = vld [vmem:[%s14 + $0x40] sm:$0xff]
      %v6266 = vld [vmem:[%s14 + $0x48] sm:$0xff]
      %v6267 = vld [vmem:[%s14 + $0x50] sm:$0xff]
      %v6268 = vld [vmem:[%s14 + $0x58] sm:$0xff]
      %v6269 = vld [vmem:[%s14 + $0x60] sm:$0xff]
      %v6270 = vld [vmem:[%s14 + $0x68] sm:$0xff]
      %v6271 = vld [vmem:[%s14 + $0x70] sm:$0xff]
      %v6272 = vld [vmem:[%s14 + $0x78] sm:$0xff]
      %s6273 = scalar_lea.vmem %s15, 16
      %v6274 = vld [vmem:[%s6273] sm:$0xff]
      %v6275 = vld [vmem:[%s6273 + $0x8] sm:$0xff]
      %v6277 = vsel %vm4293, %v6274, 0
      %v6280 = vsel %vm4293, %v6275, 0
      %6282 = vmatprep.subr.mxu0 0.0
      %6283 = vmatpush1.msra.mxu0 0.0
      %6284 = vmatprep.subr.mxu0 0.0
      %6285 = vmatpush1.msra.mxu0 0.0
      %6286 = vmatprep.subr.mxu0 0.0
      %6287 = vmatpush1.msra.mxu0 0.0
      %6288 = vmatprep.subr.mxu0 0.0
      %6289 = vmatpush1.msra.mxu0 0.0
      %6290 = vmatprep.subr.mxu0 0.0
      %6291 = vmatpush1.msra.mxu0 0.0
      %6292 = vmatprep.subr.mxu0 0.0
      %6293 = vmatpush1.msra.mxu0 0.0
      %6294 = vmatprep.subr.mxu0 0.0
      %6295 = vmatpush1.msra.mxu0 0.0
      %6296 = vmatprep.subr.mxu0 0.0
      %6297 = vmatpush1.msra.mxu0 0.0
      %6298 = vmatprep.subr.mxu0 0.0
      %6299 = vmatpush1.msra.mxu0 0.0
      %6300 = vmatprep.subr.mxu0 0.0
      %6301 = vmatpush1.msra.mxu0 0.0
      %6302 = vmatprep.subr.mxu0 0.0
      %6303 = vmatpush1.msra.mxu0 0.0
      %6304 = vmatprep.subr.mxu0 0.0
      %6305 = vmatpush1.msra.mxu0 0.0
      %6306 = vmatprep.subr.mxu0 0.0
      %6307 = vmatpush1.msra.mxu0 %v6173
      %6308 = vmatprep.subr.mxu0 0.0
      %6309 = vmatpush1.msra.mxu0 %v6172
      %6310 = vmatprep.subr.mxu0 0.0
      %6311 = vmatpush1.msra.mxu0 %v6171
      %6312 = vmatprep.subr.mxu0 0.0
      %6313 = vmatpush1.msra.mxu0 %v6170
      %6314 = vmatprep.subr.mxu0 0.0
      %6315 = vmatpush2.msra.mxu0 0.0
      %6316 = vmatprep.subr.mxu0 0.0
      %6317 = vmatpush2.msra.mxu0 0.0
      %6318 = vmatprep.subr.mxu0 0.0
      %6319 = vmatpush2.msra.mxu0 0.0
      %6320 = vmatprep.subr.mxu0 0.0
      %6321 = vmatpush2.msra.mxu0 0.0
      %6322 = vmatprep.subr.mxu0 0.0
      %6323 = vmatpush2.msra.mxu0 0.0
      %6324 = vmatprep.subr.mxu0 0.0
      %6325 = vmatpush2.msra.mxu0 0.0
      %6326 = vmatprep.subr.mxu0 0.0
      %6327 = vmatpush2.msra.mxu0 0.0
      %6328 = vmatprep.subr.mxu0 0.0
      %6329 = vmatpush2.msra.mxu0 0.0
      %6330 = vmatprep.subr.mxu0 0.0
      %6331 = vmatpush2.msra.mxu0 0.0
      %6332 = vmatprep.subr.mxu0 0.0
      %6333 = vmatpush2.msra.mxu0 0.0
      %6334 = vmatprep.subr.mxu0 0.0
      %6335 = vmatpush2.msra.mxu0 0.0
      %6336 = vmatprep.subr.mxu0 0.0
      %6337 = vmatpush2.msra.mxu0 0.0
      %6338 = vmatprep.subr.mxu0 0.0
      %6339 = vmatpush2.msra.mxu0 0.0
      %6340 = vmatprep.subr.mxu0 0.0
      %6341 = vmatpush2.msra.mxu0 0.0
      %6342 = vmatprep.subr.mxu0 0.0
      %6343 = vmatpush2.msra.mxu0 0.0
      %6344 = vmatprep.subr.mxu0 0.0
      %6345 = vmatpush2.msra.mxu0 0.0
      %6346 = vmatprep.mubr.f32.mxu0 0.0
      %6347 = vmatmul.mubr.f32.gmra.mxu0 %v6277
      %v6348 = vpop.f32.mrf.mxu0
      %v6349 = vadd.f32 0.0, %v6348
      %v6350 = vpop.f32.mrf.mxu0
      %6351 = vmatprep.mubr.f32.mxu0 0.0
      %6352 = vmatmul.mubr.f32.gmra.mxu0 %v6280
      %v6353 = vpop.f32.mrf.mxu0
      %v6354 = vadd.f32 0.0, %v6353
      %v6355 = vpop.f32.mrf.mxu0
      %6356 = vdwg.mxu0
      %s6357 = scalar_lea.vmem %s14, 128
      %v6358 = vld [vmem:[%s6357] sm:$0xff]
      %v6359 = vld [vmem:[%s6357 + $0x8] sm:$0xff]
      %v6360 = vld [vmem:[%s6357 + $0x10] sm:$0xff]
      %v6361 = vld [vmem:[%s6357 + $0x18] sm:$0xff]
      %v6362 = vld [vmem:[%s6357 + $0x20] sm:$0xff]
      %v6363 = vld [vmem:[%s6357 + $0x28] sm:$0xff]
      %v6364 = vld [vmem:[%s6357 + $0x30] sm:$0xff]
      %v6365 = vld [vmem:[%s6357 + $0x38] sm:$0xff]
      %v6366 = vld [vmem:[%s6357 + $0x40] sm:$0xff]
      %v6367 = vld [vmem:[%s6357 + $0x48] sm:$0xff]
      %v6368 = vld [vmem:[%s6357 + $0x50] sm:$0xff]
      %v6369 = vld [vmem:[%s6357 + $0x58] sm:$0xff]
      %v6370 = vld [vmem:[%s6357 + $0x60] sm:$0xff]
      %v6371 = vld [vmem:[%s6357 + $0x68] sm:$0xff]
      %v6372 = vld [vmem:[%s6357 + $0x70] sm:$0xff]
      %v6373 = vld [vmem:[%s6357 + $0x78] sm:$0xff]
      %v6375 = vsel %vm2360, %v6349, 0
      %v6378 = vsel %vm2360, %v6354, 0
      %6380 = vmatprep.subr.mxu0 0.0
      %6381 = vmatpush1.msra.mxu0 0.0
      %6382 = vmatprep.subr.mxu0 0.0
      %6383 = vmatpush1.msra.mxu0 0.0
      %6384 = vmatprep.subr.mxu0 0.0
      %6385 = vmatpush1.msra.mxu0 0.0
      %6386 = vmatprep.subr.mxu0 0.0
      %6387 = vmatpush1.msra.mxu0 0.0
      %6388 = vmatprep.subr.mxu0 0.0
      %6389 = vmatpush1.msra.mxu0 0.0
      %6390 = vmatprep.subr.mxu0 0.0
      %6391 = vmatpush1.msra.mxu0 0.0
      %6392 = vmatprep.subr.mxu0 0.0
      %6393 = vmatpush1.msra.mxu0 0.0
      %6394 = vmatprep.subr.mxu0 0.0
      %6395 = vmatpush1.msra.mxu0 0.0
      %6396 = vmatprep.subr.mxu0 %v6373
      %6397 = vmatpush1.msra.mxu0 %v6372
      %6398 = vmatprep.subr.mxu0 %v6371
      %6399 = vmatpush1.msra.mxu0 %v6370
      %6400 = vmatprep.subr.mxu0 %v6369
      %6401 = vmatpush1.msra.mxu0 %v6368
      %6402 = vmatprep.subr.mxu0 %v6367
      %6403 = vmatpush1.msra.mxu0 %v6366
      %6404 = vmatprep.subr.mxu0 %v6365
      %6405 = vmatpush1.msra.mxu0 %v6364
      %6406 = vmatprep.subr.mxu0 %v6363
      %6407 = vmatpush1.msra.mxu0 %v6362
      %6408 = vmatprep.subr.mxu0 %v6361
      %6409 = vmatpush1.msra.mxu0 %v6360
      %6410 = vmatprep.subr.mxu0 %v6359
      %6411 = vmatpush1.msra.mxu0 %v6358
      %6412 = vmatprep.subr.mxu0 0.0
      %6413 = vmatpush2.msra.mxu0 0.0
      %6414 = vmatprep.subr.mxu0 0.0
      %6415 = vmatpush2.msra.mxu0 0.0
      %6416 = vmatprep.subr.mxu0 0.0
      %6417 = vmatpush2.msra.mxu0 0.0
      %6418 = vmatprep.subr.mxu0 0.0
      %6419 = vmatpush2.msra.mxu0 0.0
      %6420 = vmatprep.subr.mxu0 0.0
      %6421 = vmatpush2.msra.mxu0 0.0
      %6422 = vmatprep.subr.mxu0 0.0
      %6423 = vmatpush2.msra.mxu0 0.0
      %6424 = vmatprep.subr.mxu0 0.0
      %6425 = vmatpush2.msra.mxu0 0.0
      %6426 = vmatprep.subr.mxu0 0.0
      %6427 = vmatpush2.msra.mxu0 0.0
      %6428 = vmatprep.subr.mxu0 0.0
      %6429 = vmatpush2.msra.mxu0 0.0
      %6430 = vmatprep.subr.mxu0 0.0
      %6431 = vmatpush2.msra.mxu0 0.0
      %6432 = vmatprep.subr.mxu0 0.0
      %6433 = vmatpush2.msra.mxu0 0.0
      %6434 = vmatprep.subr.mxu0 0.0
      %6435 = vmatpush2.msra.mxu0 0.0
      %6436 = vmatprep.subr.mxu0 0.0
      %6437 = vmatpush2.msra.mxu0 0.0
      %6438 = vmatprep.subr.mxu0 0.0
      %6439 = vmatpush2.msra.mxu0 0.0
      %6440 = vmatprep.subr.mxu0 0.0
      %6441 = vmatpush2.msra.mxu0 0.0
      %6442 = vmatprep.subr.mxu0 0.0
      %6443 = vmatpush2.msra.mxu0 0.0
      %6444 = vmatprep.mubr.f32.mxu0 0.0
      %6445 = vmatmul.mubr.f32.gmra.mxu0 %v6375
      %v6446 = vpop.f32.mrf.mxu0
      %v6447 = vadd.f32 0.0, %v6446
      %v6448 = vpop.f32.mrf.mxu0
      %v6449 = vadd.f32 0.0, %v6448
      %6450 = vmatprep.mubr.f32.mxu0 0.0
      %6451 = vmatmul.mubr.f32.gmra.mxu0 %v6378
      %v6452 = vpop.f32.mrf.mxu0
      %v6453 = vadd.f32 0.0, %v6452
      %v6454 = vpop.f32.mrf.mxu0
      %v6455 = vadd.f32 0.0, %v6454
      %6456 = vdwg.mxu0
      %v6458 = vsel %vm2360, %v6249, 0
      %v6461 = vsel %vm2360, %v6254, 0
      %6463 = vmatprep.subr.mxu0 0.0
      %6464 = vmatpush1.msra.mxu0 0.0
      %6465 = vmatprep.subr.mxu0 0.0
      %6466 = vmatpush1.msra.mxu0 0.0
      %6467 = vmatprep.subr.mxu0 0.0
      %6468 = vmatpush1.msra.mxu0 0.0
      %6469 = vmatprep.subr.mxu0 0.0
      %6470 = vmatpush1.msra.mxu0 0.0
      %6471 = vmatprep.subr.mxu0 0.0
      %6472 = vmatpush1.msra.mxu0 0.0
      %6473 = vmatprep.subr.mxu0 0.0
      %6474 = vmatpush1.msra.mxu0 0.0
      %6475 = vmatprep.subr.mxu0 0.0
      %6476 = vmatpush1.msra.mxu0 0.0
      %6477 = vmatprep.subr.mxu0 0.0
      %6478 = vmatpush1.msra.mxu0 0.0
      %6479 = vmatprep.subr.mxu0 %v6272
      %6480 = vmatpush1.msra.mxu0 %v6271
      %6481 = vmatprep.subr.mxu0 %v6270
      %6482 = vmatpush1.msra.mxu0 %v6269
      %6483 = vmatprep.subr.mxu0 %v6268
      %6484 = vmatpush1.msra.mxu0 %v6267
      %6485 = vmatprep.subr.mxu0 %v6266
      %6486 = vmatpush1.msra.mxu0 %v6265
      %6487 = vmatprep.subr.mxu0 %v6264
      %6488 = vmatpush1.msra.mxu0 %v6263
      %6489 = vmatprep.subr.mxu0 %v6262
      %6490 = vmatpush1.msra.mxu0 %v6261
      %6491 = vmatprep.subr.mxu0 %v6260
      %6492 = vmatpush1.msra.mxu0 %v6259
      %6493 = vmatprep.subr.mxu0 %v6258
      %6494 = vmatpush1.msra.mxu0 %v6257
      %6495 = vmatprep.subr.mxu0 0.0
      %6496 = vmatpush2.msra.mxu0 0.0
      %6497 = vmatprep.subr.mxu0 0.0
      %6498 = vmatpush2.msra.mxu0 0.0
      %6499 = vmatprep.subr.mxu0 0.0
      %6500 = vmatpush2.msra.mxu0 0.0
      %6501 = vmatprep.subr.mxu0 0.0
      %6502 = vmatpush2.msra.mxu0 0.0
      %6503 = vmatprep.subr.mxu0 0.0
      %6504 = vmatpush2.msra.mxu0 0.0
      %6505 = vmatprep.subr.mxu0 0.0
      %6506 = vmatpush2.msra.mxu0 0.0
      %6507 = vmatprep.subr.mxu0 0.0
      %6508 = vmatpush2.msra.mxu0 0.0
      %6509 = vmatprep.subr.mxu0 0.0
      %6510 = vmatpush2.msra.mxu0 0.0
      %6511 = vmatprep.subr.mxu0 0.0
      %6512 = vmatpush2.msra.mxu0 0.0
      %6513 = vmatprep.subr.mxu0 0.0
      %6514 = vmatpush2.msra.mxu0 0.0
      %6515 = vmatprep.subr.mxu0 0.0
      %6516 = vmatpush2.msra.mxu0 0.0
      %6517 = vmatprep.subr.mxu0 0.0
      %6518 = vmatpush2.msra.mxu0 0.0
      %6519 = vmatprep.subr.mxu0 0.0
      %6520 = vmatpush2.msra.mxu0 0.0
      %6521 = vmatprep.subr.mxu0 0.0
      %6522 = vmatpush2.msra.mxu0 0.0
      %6523 = vmatprep.subr.mxu0 0.0
      %6524 = vmatpush2.msra.mxu0 0.0
      %6525 = vmatprep.subr.mxu0 0.0
      %6526 = vmatpush2.msra.mxu0 0.0
      %6527 = vmatprep.mubr.f32.mxu0 0.0
      %6528 = vmatmul.mubr.f32.gmra.mxu0 %v6458
      %v6529 = vpop.f32.mrf.mxu0
      %v6530 = vadd.f32 %v6447, %v6529
      %v6531 = vpop.f32.mrf.mxu0
      %v6532 = vadd.f32 %v6449, %v6531
      %6533 = vmatprep.mubr.f32.mxu0 0.0
      %6534 = vmatmul.mubr.f32.gmra.mxu0 %v6461
      %v6535 = vpop.f32.mrf.mxu0
      %v6536 = vadd.f32 %v6453, %v6535
      %v6537 = vpop.f32.mrf.mxu0
      %v6538 = vadd.f32 %v6455, %v6537
      %6539 = vdwg.mxu0
      %s6540 = scalar_lea.vmem %s15, 32
      %v6541 = vld [vmem:[%s6540] sm:$0xff]
      %v6542 = vld [vmem:[%s6540 + $0x8] sm:$0xff]
      %v6544 = vsel %vm4293, %v6541, 0
      %v6547 = vsel %vm4293, %v6542, 0
      %6549 = vmatprep.subr.mxu0 0.0
      %6550 = vmatpush1.msra.mxu0 0.0
      %6551 = vmatprep.subr.mxu0 0.0
      %6552 = vmatpush1.msra.mxu0 0.0
      %6553 = vmatprep.subr.mxu0 0.0
      %6554 = vmatpush1.msra.mxu0 0.0
      %6555 = vmatprep.subr.mxu0 0.0
      %6556 = vmatpush1.msra.mxu0 0.0
      %6557 = vmatprep.subr.mxu0 0.0
      %6558 = vmatpush1.msra.mxu0 0.0
      %6559 = vmatprep.subr.mxu0 0.0
      %6560 = vmatpush1.msra.mxu0 0.0
      %6561 = vmatprep.subr.mxu0 0.0
      %6562 = vmatpush1.msra.mxu0 0.0
      %6563 = vmatprep.subr.mxu0 0.0
      %6564 = vmatpush1.msra.mxu0 0.0
      %6565 = vmatprep.subr.mxu0 0.0
      %6566 = vmatpush1.msra.mxu0 0.0
      %6567 = vmatprep.subr.mxu0 0.0
      %6568 = vmatpush1.msra.mxu0 0.0
      %6569 = vmatprep.subr.mxu0 0.0
      %6570 = vmatpush1.msra.mxu0 0.0
      %6571 = vmatprep.subr.mxu0 0.0
      %6572 = vmatpush1.msra.mxu0 0.0
      %6573 = vmatprep.subr.mxu0 0.0
      %6574 = vmatpush1.msra.mxu0 %v6173
      %6575 = vmatprep.subr.mxu0 0.0
      %6576 = vmatpush1.msra.mxu0 %v6172
      %6577 = vmatprep.subr.mxu0 0.0
      %6578 = vmatpush1.msra.mxu0 %v6171
      %6579 = vmatprep.subr.mxu0 0.0
      %6580 = vmatpush1.msra.mxu0 %v6170
      %6581 = vmatprep.subr.mxu0 0.0
      %6582 = vmatpush2.msra.mxu0 0.0
      %6583 = vmatprep.subr.mxu0 0.0
      %6584 = vmatpush2.msra.mxu0 0.0
      %6585 = vmatprep.subr.mxu0 0.0
      %6586 = vmatpush2.msra.mxu0 0.0
      %6587 = vmatprep.subr.mxu0 0.0
      %6588 = vmatpush2.msra.mxu0 0.0
      %6589 = vmatprep.subr.mxu0 0.0
      %6590 = vmatpush2.msra.mxu0 0.0
      %6591 = vmatprep.subr.mxu0 0.0
      %6592 = vmatpush2.msra.mxu0 0.0
      %6593 = vmatprep.subr.mxu0 0.0
      %6594 = vmatpush2.msra.mxu0 0.0
      %6595 = vmatprep.subr.mxu0 0.0
      %6596 = vmatpush2.msra.mxu0 0.0
      %6597 = vmatprep.subr.mxu0 0.0
      %6598 = vmatpush2.msra.mxu0 0.0
      %6599 = vmatprep.subr.mxu0 0.0
      %6600 = vmatpush2.msra.mxu0 0.0
      %6601 = vmatprep.subr.mxu0 0.0
      %6602 = vmatpush2.msra.mxu0 0.0
      %6603 = vmatprep.subr.mxu0 0.0
      %6604 = vmatpush2.msra.mxu0 0.0
      %6605 = vmatprep.subr.mxu0 0.0
      %6606 = vmatpush2.msra.mxu0 0.0
      %6607 = vmatprep.subr.mxu0 0.0
      %6608 = vmatpush2.msra.mxu0 0.0
      %6609 = vmatprep.subr.mxu0 0.0
      %6610 = vmatpush2.msra.mxu0 0.0
      %6611 = vmatprep.subr.mxu0 0.0
      %6612 = vmatpush2.msra.mxu0 0.0
      %6613 = vmatprep.mubr.f32.mxu0 0.0
      %6614 = vmatmul.mubr.f32.gmra.mxu0 %v6544
      %v6615 = vpop.f32.mrf.mxu0
      %v6616 = vadd.f32 0.0, %v6615
      %v6617 = vpop.f32.mrf.mxu0
      %6618 = vmatprep.mubr.f32.mxu0 0.0
      %6619 = vmatmul.mubr.f32.gmra.mxu0 %v6547
      %v6620 = vpop.f32.mrf.mxu0
      %v6621 = vadd.f32 0.0, %v6620
      %v6622 = vpop.f32.mrf.mxu0
      %6623 = vdwg.mxu0
      %s6624 = scalar_lea.vmem %s14, 256
      %v6625 = vld [vmem:[%s6624] sm:$0xff]
      %v6626 = vld [vmem:[%s6624 + $0x8] sm:$0xff]
      %v6627 = vld [vmem:[%s6624 + $0x10] sm:$0xff]
      %v6628 = vld [vmem:[%s6624 + $0x18] sm:$0xff]
      %v6629 = vld [vmem:[%s6624 + $0x20] sm:$0xff]
      %v6630 = vld [vmem:[%s6624 + $0x28] sm:$0xff]
      %v6631 = vld [vmem:[%s6624 + $0x30] sm:$0xff]
      %v6632 = vld [vmem:[%s6624 + $0x38] sm:$0xff]
      %v6633 = vld [vmem:[%s6624 + $0x40] sm:$0xff]
      %v6634 = vld [vmem:[%s6624 + $0x48] sm:$0xff]
      %v6635 = vld [vmem:[%s6624 + $0x50] sm:$0xff]
      %v6636 = vld [vmem:[%s6624 + $0x58] sm:$0xff]
      %v6637 = vld [vmem:[%s6624 + $0x60] sm:$0xff]
      %v6638 = vld [vmem:[%s6624 + $0x68] sm:$0xff]
      %v6639 = vld [vmem:[%s6624 + $0x70] sm:$0xff]
      %v6640 = vld [vmem:[%s6624 + $0x78] sm:$0xff]
      %v6642 = vsel %vm2360, %v6616, 0
      %v6645 = vsel %vm2360, %v6621, 0
      %6647 = vmatprep.subr.mxu0 0.0
      %6648 = vmatpush1.msra.mxu0 0.0
      %6649 = vmatprep.subr.mxu0 0.0
      %6650 = vmatpush1.msra.mxu0 0.0
      %6651 = vmatprep.subr.mxu0 0.0
      %6652 = vmatpush1.msra.mxu0 0.0
      %6653 = vmatprep.subr.mxu0 0.0
      %6654 = vmatpush1.msra.mxu0 0.0
      %6655 = vmatprep.subr.mxu0 0.0
      %6656 = vmatpush1.msra.mxu0 0.0
      %6657 = vmatprep.subr.mxu0 0.0
      %6658 = vmatpush1.msra.mxu0 0.0
      %6659 = vmatprep.subr.mxu0 0.0
      %6660 = vmatpush1.msra.mxu0 0.0
      %6661 = vmatprep.subr.mxu0 0.0
      %6662 = vmatpush1.msra.mxu0 0.0
      %6663 = vmatprep.subr.mxu0 %v6640
      %6664 = vmatpush1.msra.mxu0 %v6639
      %6665 = vmatprep.subr.mxu0 %v6638
      %6666 = vmatpush1.msra.mxu0 %v6637
      %6667 = vmatprep.subr.mxu0 %v6636
      %6668 = vmatpush1.msra.mxu0 %v6635
      %6669 = vmatprep.subr.mxu0 %v6634
      %6670 = vmatpush1.msra.mxu0 %v6633
      %6671 = vmatprep.subr.mxu0 %v6632
      %6672 = vmatpush1.msra.mxu0 %v6631
      %6673 = vmatprep.subr.mxu0 %v6630
      %6674 = vmatpush1.msra.mxu0 %v6629
      %6675 = vmatprep.subr.mxu0 %v6628
      %6676 = vmatpush1.msra.mxu0 %v6627
      %6677 = vmatprep.subr.mxu0 %v6626
      %6678 = vmatpush1.msra.mxu0 %v6625
      %6679 = vmatprep.subr.mxu0 0.0
      %6680 = vmatpush2.msra.mxu0 0.0
      %6681 = vmatprep.subr.mxu0 0.0
      %6682 = vmatpush2.msra.mxu0 0.0
      %6683 = vmatprep.subr.mxu0 0.0
      %6684 = vmatpush2.msra.mxu0 0.0
      %6685 = vmatprep.subr.mxu0 0.0
      %6686 = vmatpush2.msra.mxu0 0.0
      %6687 = vmatprep.subr.mxu0 0.0
      %6688 = vmatpush2.msra.mxu0 0.0
      %6689 = vmatprep.subr.mxu0 0.0
      %6690 = vmatpush2.msra.mxu0 0.0
      %6691 = vmatprep.subr.mxu0 0.0
      %6692 = vmatpush2.msra.mxu0 0.0
      %6693 = vmatprep.subr.mxu0 0.0
      %6694 = vmatpush2.msra.mxu0 0.0
      %6695 = vmatprep.subr.mxu0 0.0
      %6696 = vmatpush2.msra.mxu0 0.0
      %6697 = vmatprep.subr.mxu0 0.0
      %6698 = vmatpush2.msra.mxu0 0.0
      %6699 = vmatprep.subr.mxu0 0.0
      %6700 = vmatpush2.msra.mxu0 0.0
      %6701 = vmatprep.subr.mxu0 0.0
      %6702 = vmatpush2.msra.mxu0 0.0
      %6703 = vmatprep.subr.mxu0 0.0
      %6704 = vmatpush2.msra.mxu0 0.0
      %6705 = vmatprep.subr.mxu0 0.0
      %6706 = vmatpush2.msra.mxu0 0.0
      %6707 = vmatprep.subr.mxu0 0.0
      %6708 = vmatpush2.msra.mxu0 0.0
      %6709 = vmatprep.subr.mxu0 0.0
      %6710 = vmatpush2.msra.mxu0 0.0
      %6711 = vmatprep.mubr.f32.mxu0 0.0
      %6712 = vmatmul.mubr.f32.gmra.mxu0 %v6642
      %v6713 = vpop.f32.mrf.mxu0
      %v6714 = vadd.f32 0.0, %v6713
      %v6715 = vpop.f32.mrf.mxu0
      %v6716 = vadd.f32 0.0, %v6715
      %6717 = vmatprep.mubr.f32.mxu0 0.0
      %6718 = vmatmul.mubr.f32.gmra.mxu0 %v6645
      %v6719 = vpop.f32.mrf.mxu0
      %v6720 = vadd.f32 0.0, %v6719
      %v6721 = vpop.f32.mrf.mxu0
      %v6722 = vadd.f32 0.0, %v6721
      %6723 = vdwg.mxu0
      %v6724 = vadd.f32 %v6530, %v6714
      %v6725 = vadd.f32 %v6532, %v6716
      %v6726 = vadd.f32 %v6536, %v6720
      %v6727 = vadd.f32 %v6538, %v6722
      %s6728 = scalar_lea.vmem %s15, 48
      %v6729 = vld [vmem:[%s6728] sm:$0xff]
      %v6730 = vld [vmem:[%s6728 + $0x8] sm:$0xff]
      %v6732 = vsel %vm4293, %v6729, 0
      %v6735 = vsel %vm4293, %v6730, 0
      %6737 = vmatprep.subr.mxu0 0.0
      %6738 = vmatpush1.msra.mxu0 0.0
      %6739 = vmatprep.subr.mxu0 0.0
      %6740 = vmatpush1.msra.mxu0 0.0
      %6741 = vmatprep.subr.mxu0 0.0
      %6742 = vmatpush1.msra.mxu0 0.0
      %6743 = vmatprep.subr.mxu0 0.0
      %6744 = vmatpush1.msra.mxu0 0.0
      %6745 = vmatprep.subr.mxu0 0.0
      %6746 = vmatpush1.msra.mxu0 0.0
      %6747 = vmatprep.subr.mxu0 0.0
      %6748 = vmatpush1.msra.mxu0 0.0
      %6749 = vmatprep.subr.mxu0 0.0
      %6750 = vmatpush1.msra.mxu0 0.0
      %6751 = vmatprep.subr.mxu0 0.0
      %6752 = vmatpush1.msra.mxu0 0.0
      %6753 = vmatprep.subr.mxu0 0.0
      %6754 = vmatpush1.msra.mxu0 0.0
      %6755 = vmatprep.subr.mxu0 0.0
      %6756 = vmatpush1.msra.mxu0 0.0
      %6757 = vmatprep.subr.mxu0 0.0
      %6758 = vmatpush1.msra.mxu0 0.0
      %6759 = vmatprep.subr.mxu0 0.0
      %6760 = vmatpush1.msra.mxu0 0.0
      %6761 = vmatprep.subr.mxu0 0.0
      %6762 = vmatpush1.msra.mxu0 %v6173
      %6763 = vmatprep.subr.mxu0 0.0
      %6764 = vmatpush1.msra.mxu0 %v6172
      %6765 = vmatprep.subr.mxu0 0.0
      %6766 = vmatpush1.msra.mxu0 %v6171
      %6767 = vmatprep.subr.mxu0 0.0
      %6768 = vmatpush1.msra.mxu0 %v6170
      %6769 = vmatprep.subr.mxu0 0.0
      %6770 = vmatpush2.msra.mxu0 0.0
      %6771 = vmatprep.subr.mxu0 0.0
      %6772 = vmatpush2.msra.mxu0 0.0
      %6773 = vmatprep.subr.mxu0 0.0
      %6774 = vmatpush2.msra.mxu0 0.0
      %6775 = vmatprep.subr.mxu0 0.0
      %6776 = vmatpush2.msra.mxu0 0.0
      %6777 = vmatprep.subr.mxu0 0.0
      %6778 = vmatpush2.msra.mxu0 0.0
      %6779 = vmatprep.subr.mxu0 0.0
      %6780 = vmatpush2.msra.mxu0 0.0
      %6781 = vmatprep.subr.mxu0 0.0
      %6782 = vmatpush2.msra.mxu0 0.0
      %6783 = vmatprep.subr.mxu0 0.0
      %6784 = vmatpush2.msra.mxu0 0.0
      %6785 = vmatprep.subr.mxu0 0.0
      %6786 = vmatpush2.msra.mxu0 0.0
      %6787 = vmatprep.subr.mxu0 0.0
      %6788 = vmatpush2.msra.mxu0 0.0
      %6789 = vmatprep.subr.mxu0 0.0
      %6790 = vmatpush2.msra.mxu0 0.0
      %6791 = vmatprep.subr.mxu0 0.0
      %6792 = vmatpush2.msra.mxu0 0.0
      %6793 = vmatprep.subr.mxu0 0.0
      %6794 = vmatpush2.msra.mxu0 0.0
      %6795 = vmatprep.subr.mxu0 0.0
      %6796 = vmatpush2.msra.mxu0 0.0
      %6797 = vmatprep.subr.mxu0 0.0
      %6798 = vmatpush2.msra.mxu0 0.0
      %6799 = vmatprep.subr.mxu0 0.0
      %6800 = vmatpush2.msra.mxu0 0.0
      %6801 = vmatprep.mubr.f32.mxu0 0.0
      %6802 = vmatmul.mubr.f32.gmra.mxu0 %v6732
      %v6803 = vpop.f32.mrf.mxu0
      %v6804 = vadd.f32 0.0, %v6803
      %v6805 = vpop.f32.mrf.mxu0
      %6806 = vmatprep.mubr.f32.mxu0 0.0
      %6807 = vmatmul.mubr.f32.gmra.mxu0 %v6735
      %v6808 = vpop.f32.mrf.mxu0
      %v6809 = vadd.f32 0.0, %v6808
      %v6810 = vpop.f32.mrf.mxu0
      %6811 = vdwg.mxu0
      %s6812 = scalar_lea.vmem %s14, 384
      %v6813 = vld [vmem:[%s6812] sm:$0xff]
      %v6814 = vld [vmem:[%s6812 + $0x8] sm:$0xff]
      %v6815 = vld [vmem:[%s6812 + $0x10] sm:$0xff]
      %v6816 = vld [vmem:[%s6812 + $0x18] sm:$0xff]
      %v6817 = vld [vmem:[%s6812 + $0x20] sm:$0xff]
      %v6818 = vld [vmem:[%s6812 + $0x28] sm:$0xff]
      %v6819 = vld [vmem:[%s6812 + $0x30] sm:$0xff]
      %v6820 = vld [vmem:[%s6812 + $0x38] sm:$0xff]
      %v6821 = vld [vmem:[%s6812 + $0x40] sm:$0xff]
      %v6822 = vld [vmem:[%s6812 + $0x48] sm:$0xff]
      %v6823 = vld [vmem:[%s6812 + $0x50] sm:$0xff]
      %v6824 = vld [vmem:[%s6812 + $0x58] sm:$0xff]
      %v6825 = vld [vmem:[%s6812 + $0x60] sm:$0xff]
      %v6826 = vld [vmem:[%s6812 + $0x68] sm:$0xff]
      %v6827 = vld [vmem:[%s6812 + $0x70] sm:$0xff]
      %v6828 = vld [vmem:[%s6812 + $0x78] sm:$0xff]
      %v6830 = vsel %vm2360, %v6804, 0
      %v6833 = vsel %vm2360, %v6809, 0
      %6835 = vmatprep.subr.mxu0 0.0
      %6836 = vmatpush1.msra.mxu0 0.0
      %6837 = vmatprep.subr.mxu0 0.0
      %6838 = vmatpush1.msra.mxu0 0.0
      %6839 = vmatprep.subr.mxu0 0.0
      %6840 = vmatpush1.msra.mxu0 0.0
      %6841 = vmatprep.subr.mxu0 0.0
      %6842 = vmatpush1.msra.mxu0 0.0
      %6843 = vmatprep.subr.mxu0 0.0
      %6844 = vmatpush1.msra.mxu0 0.0
      %6845 = vmatprep.subr.mxu0 0.0
      %6846 = vmatpush1.msra.mxu0 0.0
      %6847 = vmatprep.subr.mxu0 0.0
      %6848 = vmatpush1.msra.mxu0 0.0
      %6849 = vmatprep.subr.mxu0 0.0
      %6850 = vmatpush1.msra.mxu0 0.0
      %6851 = vmatprep.subr.mxu0 %v6828
      %6852 = vmatpush1.msra.mxu0 %v6827
      %6853 = vmatprep.subr.mxu0 %v6826
      %6854 = vmatpush1.msra.mxu0 %v6825
      %6855 = vmatprep.subr.mxu0 %v6824
      %6856 = vmatpush1.msra.mxu0 %v6823
      %6857 = vmatprep.subr.mxu0 %v6822
      %6858 = vmatpush1.msra.mxu0 %v6821
      %6859 = vmatprep.subr.mxu0 %v6820
      %6860 = vmatpush1.msra.mxu0 %v6819
      %6861 = vmatprep.subr.mxu0 %v6818
      %6862 = vmatpush1.msra.mxu0 %v6817
      %6863 = vmatprep.subr.mxu0 %v6816
      %6864 = vmatpush1.msra.mxu0 %v6815
      %6865 = vmatprep.subr.mxu0 %v6814
      %6866 = vmatpush1.msra.mxu0 %v6813
      %6867 = vmatprep.subr.mxu0 0.0
      %6868 = vmatpush2.msra.mxu0 0.0
      %6869 = vmatprep.subr.mxu0 0.0
      %6870 = vmatpush2.msra.mxu0 0.0
      %6871 = vmatprep.subr.mxu0 0.0
      %6872 = vmatpush2.msra.mxu0 0.0
      %6873 = vmatprep.subr.mxu0 0.0
      %6874 = vmatpush2.msra.mxu0 0.0
      %6875 = vmatprep.subr.mxu0 0.0
      %6876 = vmatpush2.msra.mxu0 0.0
      %6877 = vmatprep.subr.mxu0 0.0
      %6878 = vmatpush2.msra.mxu0 0.0
      %6879 = vmatprep.subr.mxu0 0.0
      %6880 = vmatpush2.msra.mxu0 0.0
      %6881 = vmatprep.subr.mxu0 0.0
      %6882 = vmatpush2.msra.mxu0 0.0
      %6883 = vmatprep.subr.mxu0 0.0
      %6884 = vmatpush2.msra.mxu0 0.0
      %6885 = vmatprep.subr.mxu0 0.0
      %6886 = vmatpush2.msra.mxu0 0.0
      %6887 = vmatprep.subr.mxu0 0.0
      %6888 = vmatpush2.msra.mxu0 0.0
      %6889 = vmatprep.subr.mxu0 0.0
      %6890 = vmatpush2.msra.mxu0 0.0
      %6891 = vmatprep.subr.mxu0 0.0
      %6892 = vmatpush2.msra.mxu0 0.0
      %6893 = vmatprep.subr.mxu0 0.0
      %6894 = vmatpush2.msra.mxu0 0.0
      %6895 = vmatprep.subr.mxu0 0.0
      %6896 = vmatpush2.msra.mxu0 0.0
      %6897 = vmatprep.subr.mxu0 0.0
      %6898 = vmatpush2.msra.mxu0 0.0
      %6899 = vmatprep.mubr.f32.mxu0 0.0
      %6900 = vmatmul.mubr.f32.gmra.mxu0 %v6830
      %v6901 = vpop.f32.mrf.mxu0
      %v6902 = vadd.f32 0.0, %v6901
      %v6903 = vpop.f32.mrf.mxu0
      %v6904 = vadd.f32 0.0, %v6903
      %6905 = vmatprep.mubr.f32.mxu0 0.0
      %6906 = vmatmul.mubr.f32.gmra.mxu0 %v6833
      %v6907 = vpop.f32.mrf.mxu0
      %v6908 = vadd.f32 0.0, %v6907
      %v6909 = vpop.f32.mrf.mxu0
      %v6910 = vadd.f32 0.0, %v6909
      %6911 = vdwg.mxu0
      %v6912 = vadd.f32 %v6724, %v6902
      %v6913 = vadd.f32 %v6725, %v6904
      %v6914 = vadd.f32 %v6726, %v6908
      %v6915 = vadd.f32 %v6727, %v6910
      %s6916 = scalar_lea.vmem %s15, 64
      %v6917 = vld [vmem:[%s6916] sm:$0xff]
      %v6918 = vld [vmem:[%s6916 + $0x8] sm:$0xff]
      %v6920 = vsel %vm4293, %v6917, 0
      %v6923 = vsel %vm4293, %v6918, 0
      %6925 = vmatprep.subr.mxu0 0.0
      %6926 = vmatpush1.msra.mxu0 0.0
      %6927 = vmatprep.subr.mxu0 0.0
      %6928 = vmatpush1.msra.mxu0 0.0
      %6929 = vmatprep.subr.mxu0 0.0
      %6930 = vmatpush1.msra.mxu0 0.0
      %6931 = vmatprep.subr.mxu0 0.0
      %6932 = vmatpush1.msra.mxu0 0.0
      %6933 = vmatprep.subr.mxu0 0.0
      %6934 = vmatpush1.msra.mxu0 0.0
      %6935 = vmatprep.subr.mxu0 0.0
      %6936 = vmatpush1.msra.mxu0 0.0
      %6937 = vmatprep.subr.mxu0 0.0
      %6938 = vmatpush1.msra.mxu0 0.0
      %6939 = vmatprep.subr.mxu0 0.0
      %6940 = vmatpush1.msra.mxu0 0.0
      %6941 = vmatprep.subr.mxu0 0.0
      %6942 = vmatpush1.msra.mxu0 0.0
      %6943 = vmatprep.subr.mxu0 0.0
      %6944 = vmatpush1.msra.mxu0 0.0
      %6945 = vmatprep.subr.mxu0 0.0
      %6946 = vmatpush1.msra.mxu0 0.0
      %6947 = vmatprep.subr.mxu0 0.0
      %6948 = vmatpush1.msra.mxu0 0.0
      %6949 = vmatprep.subr.mxu0 0.0
      %6950 = vmatpush1.msra.mxu0 %v6173
      %6951 = vmatprep.subr.mxu0 0.0
      %6952 = vmatpush1.msra.mxu0 %v6172
      %6953 = vmatprep.subr.mxu0 0.0
      %6954 = vmatpush1.msra.mxu0 %v6171
      %6955 = vmatprep.subr.mxu0 0.0
      %6956 = vmatpush1.msra.mxu0 %v6170
      %6957 = vmatprep.subr.mxu0 0.0
      %6958 = vmatpush2.msra.mxu0 0.0
      %6959 = vmatprep.subr.mxu0 0.0
      %6960 = vmatpush2.msra.mxu0 0.0
      %6961 = vmatprep.subr.mxu0 0.0
      %6962 = vmatpush2.msra.mxu0 0.0
      %6963 = vmatprep.subr.mxu0 0.0
      %6964 = vmatpush2.msra.mxu0 0.0
      %6965 = vmatprep.subr.mxu0 0.0
      %6966 = vmatpush2.msra.mxu0 0.0
      %6967 = vmatprep.subr.mxu0 0.0
      %6968 = vmatpush2.msra.mxu0 0.0
      %6969 = vmatprep.subr.mxu0 0.0
      %6970 = vmatpush2.msra.mxu0 0.0
      %6971 = vmatprep.subr.mxu0 0.0
      %6972 = vmatpush2.msra.mxu0 0.0
      %6973 = vmatprep.subr.mxu0 0.0
      %6974 = vmatpush2.msra.mxu0 0.0
      %6975 = vmatprep.subr.mxu0 0.0
      %6976 = vmatpush2.msra.mxu0 0.0
      %6977 = vmatprep.subr.mxu0 0.0
      %6978 = vmatpush2.msra.mxu0 0.0
      %6979 = vmatprep.subr.mxu0 0.0
      %6980 = vmatpush2.msra.mxu0 0.0
      %6981 = vmatprep.subr.mxu0 0.0
      %6982 = vmatpush2.msra.mxu0 0.0
      %6983 = vmatprep.subr.mxu0 0.0
      %6984 = vmatpush2.msra.mxu0 0.0
      %6985 = vmatprep.subr.mxu0 0.0
      %6986 = vmatpush2.msra.mxu0 0.0
      %6987 = vmatprep.subr.mxu0 0.0
      %6988 = vmatpush2.msra.mxu0 0.0
      %6989 = vmatprep.mubr.f32.mxu0 0.0
      %6990 = vmatmul.mubr.f32.gmra.mxu0 %v6920
      %v6991 = vpop.f32.mrf.mxu0
      %v6992 = vadd.f32 0.0, %v6991
      %v6993 = vpop.f32.mrf.mxu0
      %6994 = vmatprep.mubr.f32.mxu0 0.0
      %6995 = vmatmul.mubr.f32.gmra.mxu0 %v6923
      %v6996 = vpop.f32.mrf.mxu0
      %v6997 = vadd.f32 0.0, %v6996
      %v6998 = vpop.f32.mrf.mxu0
      %6999 = vdwg.mxu0
      %s7000 = scalar_lea.vmem %s14, 512
      %v7001 = vld [vmem:[%s7000] sm:$0xff]
      %v7002 = vld [vmem:[%s7000 + $0x8] sm:$0xff]
      %v7003 = vld [vmem:[%s7000 + $0x10] sm:$0xff]
      %v7004 = vld [vmem:[%s7000 + $0x18] sm:$0xff]
      %v7005 = vld [vmem:[%s7000 + $0x20] sm:$0xff]
      %v7006 = vld [vmem:[%s7000 + $0x28] sm:$0xff]
      %v7007 = vld [vmem:[%s7000 + $0x30] sm:$0xff]
      %v7008 = vld [vmem:[%s7000 + $0x38] sm:$0xff]
      %v7009 = vld [vmem:[%s7000 + $0x40] sm:$0xff]
      %v7010 = vld [vmem:[%s7000 + $0x48] sm:$0xff]
      %v7011 = vld [vmem:[%s7000 + $0x50] sm:$0xff]
      %v7012 = vld [vmem:[%s7000 + $0x58] sm:$0xff]
      %v7013 = vld [vmem:[%s7000 + $0x60] sm:$0xff]
      %v7014 = vld [vmem:[%s7000 + $0x68] sm:$0xff]
      %v7015 = vld [vmem:[%s7000 + $0x70] sm:$0xff]
      %v7016 = vld [vmem:[%s7000 + $0x78] sm:$0xff]
      %v7018 = vsel %vm2360, %v6992, 0
      %v7021 = vsel %vm2360, %v6997, 0
      %7023 = vmatprep.subr.mxu0 0.0
      %7024 = vmatpush1.msra.mxu0 0.0
      %7025 = vmatprep.subr.mxu0 0.0
      %7026 = vmatpush1.msra.mxu0 0.0
      %7027 = vmatprep.subr.mxu0 0.0
      %7028 = vmatpush1.msra.mxu0 0.0
      %7029 = vmatprep.subr.mxu0 0.0
      %7030 = vmatpush1.msra.mxu0 0.0
      %7031 = vmatprep.subr.mxu0 0.0
      %7032 = vmatpush1.msra.mxu0 0.0
      %7033 = vmatprep.subr.mxu0 0.0
      %7034 = vmatpush1.msra.mxu0 0.0
      %7035 = vmatprep.subr.mxu0 0.0
      %7036 = vmatpush1.msra.mxu0 0.0
      %7037 = vmatprep.subr.mxu0 0.0
      %7038 = vmatpush1.msra.mxu0 0.0
      %7039 = vmatprep.subr.mxu0 %v7016
      %7040 = vmatpush1.msra.mxu0 %v7015
      %7041 = vmatprep.subr.mxu0 %v7014
      %7042 = vmatpush1.msra.mxu0 %v7013
      %7043 = vmatprep.subr.mxu0 %v7012
      %7044 = vmatpush1.msra.mxu0 %v7011
      %7045 = vmatprep.subr.mxu0 %v7010
      %7046 = vmatpush1.msra.mxu0 %v7009
      %7047 = vmatprep.subr.mxu0 %v7008
      %7048 = vmatpush1.msra.mxu0 %v7007
      %7049 = vmatprep.subr.mxu0 %v7006
      %7050 = vmatpush1.msra.mxu0 %v7005
      %7051 = vmatprep.subr.mxu0 %v7004
      %7052 = vmatpush1.msra.mxu0 %v7003
      %7053 = vmatprep.subr.mxu0 %v7002
      %7054 = vmatpush1.msra.mxu0 %v7001
      %7055 = vmatprep.subr.mxu0 0.0
      %7056 = vmatpush2.msra.mxu0 0.0
      %7057 = vmatprep.subr.mxu0 0.0
      %7058 = vmatpush2.msra.mxu0 0.0
      %7059 = vmatprep.subr.mxu0 0.0
      %7060 = vmatpush2.msra.mxu0 0.0
      %7061 = vmatprep.subr.mxu0 0.0
      %7062 = vmatpush2.msra.mxu0 0.0
      %7063 = vmatprep.subr.mxu0 0.0
      %7064 = vmatpush2.msra.mxu0 0.0
      %7065 = vmatprep.subr.mxu0 0.0
      %7066 = vmatpush2.msra.mxu0 0.0
      %7067 = vmatprep.subr.mxu0 0.0
      %7068 = vmatpush2.msra.mxu0 0.0
      %7069 = vmatprep.subr.mxu0 0.0
      %7070 = vmatpush2.msra.mxu0 0.0
      %7071 = vmatprep.subr.mxu0 0.0
      %7072 = vmatpush2.msra.mxu0 0.0
      %7073 = vmatprep.subr.mxu0 0.0
      %7074 = vmatpush2.msra.mxu0 0.0
      %7075 = vmatprep.subr.mxu0 0.0
      %7076 = vmatpush2.msra.mxu0 0.0
      %7077 = vmatprep.subr.mxu0 0.0
      %7078 = vmatpush2.msra.mxu0 0.0
      %7079 = vmatprep.subr.mxu0 0.0
      %7080 = vmatpush2.msra.mxu0 0.0
      %7081 = vmatprep.subr.mxu0 0.0
      %7082 = vmatpush2.msra.mxu0 0.0
      %7083 = vmatprep.subr.mxu0 0.0
      %7084 = vmatpush2.msra.mxu0 0.0
      %7085 = vmatprep.subr.mxu0 0.0
      %7086 = vmatpush2.msra.mxu0 0.0
      %7087 = vmatprep.mubr.f32.mxu0 0.0
      %7088 = vmatmul.mubr.f32.gmra.mxu0 %v7018
      %v7089 = vpop.f32.mrf.mxu0
      %v7090 = vadd.f32 0.0, %v7089
      %v7091 = vpop.f32.mrf.mxu0
      %v7092 = vadd.f32 0.0, %v7091
      %7093 = vmatprep.mubr.f32.mxu0 0.0
      %7094 = vmatmul.mubr.f32.gmra.mxu0 %v7021
      %v7095 = vpop.f32.mrf.mxu0
      %v7096 = vadd.f32 0.0, %v7095
      %v7097 = vpop.f32.mrf.mxu0
      %v7098 = vadd.f32 0.0, %v7097
      %7099 = vdwg.mxu0
      %v7100 = vadd.f32 %v6912, %v7090
      %v7101 = vadd.f32 %v6913, %v7092
      %v7102 = vadd.f32 %v6914, %v7096
      %v7103 = vadd.f32 %v6915, %v7098
      %s7104 = scalar_lea.vmem %s15, 80
      %v7105 = vld [vmem:[%s7104] sm:$0xff]
      %v7106 = vld [vmem:[%s7104 + $0x8] sm:$0xff]
      %v7108 = vsel %vm4293, %v7105, 0
      %v7111 = vsel %vm4293, %v7106, 0
      %7113 = vmatprep.subr.mxu0 0.0
      %7114 = vmatpush1.msra.mxu0 0.0
      %7115 = vmatprep.subr.mxu0 0.0
      %7116 = vmatpush1.msra.mxu0 0.0
      %7117 = vmatprep.subr.mxu0 0.0
      %7118 = vmatpush1.msra.mxu0 0.0
      %7119 = vmatprep.subr.mxu0 0.0
      %7120 = vmatpush1.msra.mxu0 0.0
      %7121 = vmatprep.subr.mxu0 0.0
      %7122 = vmatpush1.msra.mxu0 0.0
      %7123 = vmatprep.subr.mxu0 0.0
      %7124 = vmatpush1.msra.mxu0 0.0
      %7125 = vmatprep.subr.mxu0 0.0
      %7126 = vmatpush1.msra.mxu0 0.0
      %7127 = vmatprep.subr.mxu0 0.0
      %7128 = vmatpush1.msra.mxu0 0.0
      %7129 = vmatprep.subr.mxu0 0.0
      %7130 = vmatpush1.msra.mxu0 0.0
      %7131 = vmatprep.subr.mxu0 0.0
      %7132 = vmatpush1.msra.mxu0 0.0
      %7133 = vmatprep.subr.mxu0 0.0
      %7134 = vmatpush1.msra.mxu0 0.0
      %7135 = vmatprep.subr.mxu0 0.0
      %7136 = vmatpush1.msra.mxu0 0.0
      %7137 = vmatprep.subr.mxu0 0.0
      %7138 = vmatpush1.msra.mxu0 %v6173
      %7139 = vmatprep.subr.mxu0 0.0
      %7140 = vmatpush1.msra.mxu0 %v6172
      %7141 = vmatprep.subr.mxu0 0.0
      %7142 = vmatpush1.msra.mxu0 %v6171
      %7143 = vmatprep.subr.mxu0 0.0
      %7144 = vmatpush1.msra.mxu0 %v6170
      %7145 = vmatprep.subr.mxu0 0.0
      %7146 = vmatpush2.msra.mxu0 0.0
      %7147 = vmatprep.subr.mxu0 0.0
      %7148 = vmatpush2.msra.mxu0 0.0
      %7149 = vmatprep.subr.mxu0 0.0
      %7150 = vmatpush2.msra.mxu0 0.0
      %7151 = vmatprep.subr.mxu0 0.0
      %7152 = vmatpush2.msra.mxu0 0.0
      %7153 = vmatprep.subr.mxu0 0.0
      %7154 = vmatpush2.msra.mxu0 0.0
      %7155 = vmatprep.subr.mxu0 0.0
      %7156 = vmatpush2.msra.mxu0 0.0
      %7157 = vmatprep.subr.mxu0 0.0
      %7158 = vmatpush2.msra.mxu0 0.0
      %7159 = vmatprep.subr.mxu0 0.0
      %7160 = vmatpush2.msra.mxu0 0.0
      %7161 = vmatprep.subr.mxu0 0.0
      %7162 = vmatpush2.msra.mxu0 0.0
      %7163 = vmatprep.subr.mxu0 0.0
      %7164 = vmatpush2.msra.mxu0 0.0
      %7165 = vmatprep.subr.mxu0 0.0
      %7166 = vmatpush2.msra.mxu0 0.0
      %7167 = vmatprep.subr.mxu0 0.0
      %7168 = vmatpush2.msra.mxu0 0.0
      %7169 = vmatprep.subr.mxu0 0.0
      %7170 = vmatpush2.msra.mxu0 0.0
      %7171 = vmatprep.subr.mxu0 0.0
      %7172 = vmatpush2.msra.mxu0 0.0
      %7173 = vmatprep.subr.mxu0 0.0
      %7174 = vmatpush2.msra.mxu0 0.0
      %7175 = vmatprep.subr.mxu0 0.0
      %7176 = vmatpush2.msra.mxu0 0.0
      %7177 = vmatprep.mubr.f32.mxu0 0.0
      %7178 = vmatmul.mubr.f32.gmra.mxu0 %v7108
      %v7179 = vpop.f32.mrf.mxu0
      %v7180 = vadd.f32 0.0, %v7179
      %v7181 = vpop.f32.mrf.mxu0
      %7182 = vmatprep.mubr.f32.mxu0 0.0
      %7183 = vmatmul.mubr.f32.gmra.mxu0 %v7111
      %v7184 = vpop.f32.mrf.mxu0
      %v7185 = vadd.f32 0.0, %v7184
      %v7186 = vpop.f32.mrf.mxu0
      %7187 = vdwg.mxu0
      %s7188 = scalar_lea.vmem %s14, 640
      %v7189 = vld [vmem:[%s7188] sm:$0xff]
      %v7190 = vld [vmem:[%s7188 + $0x8] sm:$0xff]
      %v7191 = vld [vmem:[%s7188 + $0x10] sm:$0xff]
      %v7192 = vld [vmem:[%s7188 + $0x18] sm:$0xff]
      %v7193 = vld [vmem:[%s7188 + $0x20] sm:$0xff]
      %v7194 = vld [vmem:[%s7188 + $0x28] sm:$0xff]
      %v7195 = vld [vmem:[%s7188 + $0x30] sm:$0xff]
      %v7196 = vld [vmem:[%s7188 + $0x38] sm:$0xff]
      %v7197 = vld [vmem:[%s7188 + $0x40] sm:$0xff]
      %v7198 = vld [vmem:[%s7188 + $0x48] sm:$0xff]
      %v7199 = vld [vmem:[%s7188 + $0x50] sm:$0xff]
      %v7200 = vld [vmem:[%s7188 + $0x58] sm:$0xff]
      %v7201 = vld [vmem:[%s7188 + $0x60] sm:$0xff]
      %v7202 = vld [vmem:[%s7188 + $0x68] sm:$0xff]
      %v7203 = vld [vmem:[%s7188 + $0x70] sm:$0xff]
      %v7204 = vld [vmem:[%s7188 + $0x78] sm:$0xff]
      %v7206 = vsel %vm2360, %v7180, 0
      %v7209 = vsel %vm2360, %v7185, 0
      %7211 = vmatprep.subr.mxu0 0.0
      %7212 = vmatpush1.msra.mxu0 0.0
      %7213 = vmatprep.subr.mxu0 0.0
      %7214 = vmatpush1.msra.mxu0 0.0
      %7215 = vmatprep.subr.mxu0 0.0
      %7216 = vmatpush1.msra.mxu0 0.0
      %7217 = vmatprep.subr.mxu0 0.0
      %7218 = vmatpush1.msra.mxu0 0.0
      %7219 = vmatprep.subr.mxu0 0.0
      %7220 = vmatpush1.msra.mxu0 0.0
      %7221 = vmatprep.subr.mxu0 0.0
      %7222 = vmatpush1.msra.mxu0 0.0
      %7223 = vmatprep.subr.mxu0 0.0
      %7224 = vmatpush1.msra.mxu0 0.0
      %7225 = vmatprep.subr.mxu0 0.0
      %7226 = vmatpush1.msra.mxu0 0.0
      %7227 = vmatprep.subr.mxu0 %v7204
      %7228 = vmatpush1.msra.mxu0 %v7203
      %7229 = vmatprep.subr.mxu0 %v7202
      %7230 = vmatpush1.msra.mxu0 %v7201
      %7231 = vmatprep.subr.mxu0 %v7200
      %7232 = vmatpush1.msra.mxu0 %v7199
      %7233 = vmatprep.subr.mxu0 %v7198
      %7234 = vmatpush1.msra.mxu0 %v7197
      %7235 = vmatprep.subr.mxu0 %v7196
      %7236 = vmatpush1.msra.mxu0 %v7195
      %7237 = vmatprep.subr.mxu0 %v7194
      %7238 = vmatpush1.msra.mxu0 %v7193
      %7239 = vmatprep.subr.mxu0 %v7192
      %7240 = vmatpush1.msra.mxu0 %v7191
      %7241 = vmatprep.subr.mxu0 %v7190
      %7242 = vmatpush1.msra.mxu0 %v7189
      %7243 = vmatprep.subr.mxu0 0.0
      %7244 = vmatpush2.msra.mxu0 0.0
      %7245 = vmatprep.subr.mxu0 0.0
      %7246 = vmatpush2.msra.mxu0 0.0
      %7247 = vmatprep.subr.mxu0 0.0
      %7248 = vmatpush2.msra.mxu0 0.0
      %7249 = vmatprep.subr.mxu0 0.0
      %7250 = vmatpush2.msra.mxu0 0.0
      %7251 = vmatprep.subr.mxu0 0.0
      %7252 = vmatpush2.msra.mxu0 0.0
      %7253 = vmatprep.subr.mxu0 0.0
      %7254 = vmatpush2.msra.mxu0 0.0
      %7255 = vmatprep.subr.mxu0 0.0
      %7256 = vmatpush2.msra.mxu0 0.0
      %7257 = vmatprep.subr.mxu0 0.0
      %7258 = vmatpush2.msra.mxu0 0.0
      %7259 = vmatprep.subr.mxu0 0.0
      %7260 = vmatpush2.msra.mxu0 0.0
      %7261 = vmatprep.subr.mxu0 0.0
      %7262 = vmatpush2.msra.mxu0 0.0
      %7263 = vmatprep.subr.mxu0 0.0
      %7264 = vmatpush2.msra.mxu0 0.0
      %7265 = vmatprep.subr.mxu0 0.0
      %7266 = vmatpush2.msra.mxu0 0.0
      %7267 = vmatprep.subr.mxu0 0.0
      %7268 = vmatpush2.msra.mxu0 0.0
      %7269 = vmatprep.subr.mxu0 0.0
      %7270 = vmatpush2.msra.mxu0 0.0
      %7271 = vmatprep.subr.mxu0 0.0
      %7272 = vmatpush2.msra.mxu0 0.0
      %7273 = vmatprep.subr.mxu0 0.0
      %7274 = vmatpush2.msra.mxu0 0.0
      %7275 = vmatprep.mubr.f32.mxu0 0.0
      %7276 = vmatmul.mubr.f32.gmra.mxu0 %v7206
      %v7277 = vpop.f32.mrf.mxu0
      %v7278 = vadd.f32 0.0, %v7277
      %v7279 = vpop.f32.mrf.mxu0
      %v7280 = vadd.f32 0.0, %v7279
      %7281 = vmatprep.mubr.f32.mxu0 0.0
      %7282 = vmatmul.mubr.f32.gmra.mxu0 %v7209
      %v7283 = vpop.f32.mrf.mxu0
      %v7284 = vadd.f32 0.0, %v7283
      %v7285 = vpop.f32.mrf.mxu0
      %v7286 = vadd.f32 0.0, %v7285
      %7287 = vdwg.mxu0
      %v7288 = vadd.f32 %v7100, %v7278
      %v7289 = vadd.f32 %v7101, %v7280
      %v7290 = vadd.f32 %v7102, %v7284
      %v7291 = vadd.f32 %v7103, %v7286
      %s7292 = scalar_lea.vmem %s15, 96
      %v7293 = vld [vmem:[%s7292] sm:$0xff]
      %v7294 = vld [vmem:[%s7292 + $0x8] sm:$0xff]
      %v7296 = vsel %vm4293, %v7293, 0
      %v7299 = vsel %vm4293, %v7294, 0
      %7301 = vmatprep.subr.mxu0 0.0
      %7302 = vmatpush1.msra.mxu0 0.0
      %7303 = vmatprep.subr.mxu0 0.0
      %7304 = vmatpush1.msra.mxu0 0.0
      %7305 = vmatprep.subr.mxu0 0.0
      %7306 = vmatpush1.msra.mxu0 0.0
      %7307 = vmatprep.subr.mxu0 0.0
      %7308 = vmatpush1.msra.mxu0 0.0
      %7309 = vmatprep.subr.mxu0 0.0
      %7310 = vmatpush1.msra.mxu0 0.0
      %7311 = vmatprep.subr.mxu0 0.0
      %7312 = vmatpush1.msra.mxu0 0.0
      %7313 = vmatprep.subr.mxu0 0.0
      %7314 = vmatpush1.msra.mxu0 0.0
      %7315 = vmatprep.subr.mxu0 0.0
      %7316 = vmatpush1.msra.mxu0 0.0
      %7317 = vmatprep.subr.mxu0 0.0
      %7318 = vmatpush1.msra.mxu0 0.0
      %7319 = vmatprep.subr.mxu0 0.0
      %7320 = vmatpush1.msra.mxu0 0.0
      %7321 = vmatprep.subr.mxu0 0.0
      %7322 = vmatpush1.msra.mxu0 0.0
      %7323 = vmatprep.subr.mxu0 0.0
      %7324 = vmatpush1.msra.mxu0 0.0
      %7325 = vmatprep.subr.mxu0 0.0
      %7326 = vmatpush1.msra.mxu0 %v6173
      %7327 = vmatprep.subr.mxu0 0.0
      %7328 = vmatpush1.msra.mxu0 %v6172
      %7329 = vmatprep.subr.mxu0 0.0
      %7330 = vmatpush1.msra.mxu0 %v6171
      %7331 = vmatprep.subr.mxu0 0.0
      %7332 = vmatpush1.msra.mxu0 %v6170
      %7333 = vmatprep.subr.mxu0 0.0
      %7334 = vmatpush2.msra.mxu0 0.0
      %7335 = vmatprep.subr.mxu0 0.0
      %7336 = vmatpush2.msra.mxu0 0.0
      %7337 = vmatprep.subr.mxu0 0.0
      %7338 = vmatpush2.msra.mxu0 0.0
      %7339 = vmatprep.subr.mxu0 0.0
      %7340 = vmatpush2.msra.mxu0 0.0
      %7341 = vmatprep.subr.mxu0 0.0
      %7342 = vmatpush2.msra.mxu0 0.0
      %7343 = vmatprep.subr.mxu0 0.0
      %7344 = vmatpush2.msra.mxu0 0.0
      %7345 = vmatprep.subr.mxu0 0.0
      %7346 = vmatpush2.msra.mxu0 0.0
      %7347 = vmatprep.subr.mxu0 0.0
      %7348 = vmatpush2.msra.mxu0 0.0
      %7349 = vmatprep.subr.mxu0 0.0
      %7350 = vmatpush2.msra.mxu0 0.0
      %7351 = vmatprep.subr.mxu0 0.0
      %7352 = vmatpush2.msra.mxu0 0.0
      %7353 = vmatprep.subr.mxu0 0.0
      %7354 = vmatpush2.msra.mxu0 0.0
      %7355 = vmatprep.subr.mxu0 0.0
      %7356 = vmatpush2.msra.mxu0 0.0
      %7357 = vmatprep.subr.mxu0 0.0
      %7358 = vmatpush2.msra.mxu0 0.0
      %7359 = vmatprep.subr.mxu0 0.0
      %7360 = vmatpush2.msra.mxu0 0.0
      %7361 = vmatprep.subr.mxu0 0.0
      %7362 = vmatpush2.msra.mxu0 0.0
      %7363 = vmatprep.subr.mxu0 0.0
      %7364 = vmatpush2.msra.mxu0 0.0
      %7365 = vmatprep.mubr.f32.mxu0 0.0
      %7366 = vmatmul.mubr.f32.gmra.mxu0 %v7296
      %v7367 = vpop.f32.mrf.mxu0
      %v7368 = vadd.f32 0.0, %v7367
      %v7369 = vpop.f32.mrf.mxu0
      %7370 = vmatprep.mubr.f32.mxu0 0.0
      %7371 = vmatmul.mubr.f32.gmra.mxu0 %v7299
      %v7372 = vpop.f32.mrf.mxu0
      %v7373 = vadd.f32 0.0, %v7372
      %v7374 = vpop.f32.mrf.mxu0
      %7375 = vdwg.mxu0
      %s7376 = scalar_lea.vmem %s14, 768
      %v7377 = vld [vmem:[%s7376] sm:$0xff]
      %v7378 = vld [vmem:[%s7376 + $0x8] sm:$0xff]
      %v7379 = vld [vmem:[%s7376 + $0x10] sm:$0xff]
      %v7380 = vld [vmem:[%s7376 + $0x18] sm:$0xff]
      %v7381 = vld [vmem:[%s7376 + $0x20] sm:$0xff]
      %v7382 = vld [vmem:[%s7376 + $0x28] sm:$0xff]
      %v7383 = vld [vmem:[%s7376 + $0x30] sm:$0xff]
      %v7384 = vld [vmem:[%s7376 + $0x38] sm:$0xff]
      %v7385 = vld [vmem:[%s7376 + $0x40] sm:$0xff]
      %v7386 = vld [vmem:[%s7376 + $0x48] sm:$0xff]
      %v7387 = vld [vmem:[%s7376 + $0x50] sm:$0xff]
      %v7388 = vld [vmem:[%s7376 + $0x58] sm:$0xff]
      %v7389 = vld [vmem:[%s7376 + $0x60] sm:$0xff]
      %v7390 = vld [vmem:[%s7376 + $0x68] sm:$0xff]
      %v7391 = vld [vmem:[%s7376 + $0x70] sm:$0xff]
      %v7392 = vld [vmem:[%s7376 + $0x78] sm:$0xff]
      %v7394 = vsel %vm2360, %v7368, 0
      %v7397 = vsel %vm2360, %v7373, 0
      %7399 = vmatprep.subr.mxu0 0.0
      %7400 = vmatpush1.msra.mxu0 0.0
      %7401 = vmatprep.subr.mxu0 0.0
      %7402 = vmatpush1.msra.mxu0 0.0
      %7403 = vmatprep.subr.mxu0 0.0
      %7404 = vmatpush1.msra.mxu0 0.0
      %7405 = vmatprep.subr.mxu0 0.0
      %7406 = vmatpush1.msra.mxu0 0.0
      %7407 = vmatprep.subr.mxu0 0.0
      %7408 = vmatpush1.msra.mxu0 0.0
      %7409 = vmatprep.subr.mxu0 0.0
      %7410 = vmatpush1.msra.mxu0 0.0
      %7411 = vmatprep.subr.mxu0 0.0
      %7412 = vmatpush1.msra.mxu0 0.0
      %7413 = vmatprep.subr.mxu0 0.0
      %7414 = vmatpush1.msra.mxu0 0.0
      %7415 = vmatprep.subr.mxu0 %v7392
      %7416 = vmatpush1.msra.mxu0 %v7391
      %7417 = vmatprep.subr.mxu0 %v7390
      %7418 = vmatpush1.msra.mxu0 %v7389
      %7419 = vmatprep.subr.mxu0 %v7388
      %7420 = vmatpush1.msra.mxu0 %v7387
      %7421 = vmatprep.subr.mxu0 %v7386
      %7422 = vmatpush1.msra.mxu0 %v7385
      %7423 = vmatprep.subr.mxu0 %v7384
      %7424 = vmatpush1.msra.mxu0 %v7383
      %7425 = vmatprep.subr.mxu0 %v7382
      %7426 = vmatpush1.msra.mxu0 %v7381
      %7427 = vmatprep.subr.mxu0 %v7380
      %7428 = vmatpush1.msra.mxu0 %v7379
      %7429 = vmatprep.subr.mxu0 %v7378
      %7430 = vmatpush1.msra.mxu0 %v7377
      %7431 = vmatprep.subr.mxu0 0.0
      %7432 = vmatpush2.msra.mxu0 0.0
      %7433 = vmatprep.subr.mxu0 0.0
      %7434 = vmatpush2.msra.mxu0 0.0
      %7435 = vmatprep.subr.mxu0 0.0
      %7436 = vmatpush2.msra.mxu0 0.0
      %7437 = vmatprep.subr.mxu0 0.0
      %7438 = vmatpush2.msra.mxu0 0.0
      %7439 = vmatprep.subr.mxu0 0.0
      %7440 = vmatpush2.msra.mxu0 0.0
      %7441 = vmatprep.subr.mxu0 0.0
      %7442 = vmatpush2.msra.mxu0 0.0
      %7443 = vmatprep.subr.mxu0 0.0
      %7444 = vmatpush2.msra.mxu0 0.0
      %7445 = vmatprep.subr.mxu0 0.0
      %7446 = vmatpush2.msra.mxu0 0.0
      %7447 = vmatprep.subr.mxu0 0.0
      %7448 = vmatpush2.msra.mxu0 0.0
      %7449 = vmatprep.subr.mxu0 0.0
      %7450 = vmatpush2.msra.mxu0 0.0
      %7451 = vmatprep.subr.mxu0 0.0
      %7452 = vmatpush2.msra.mxu0 0.0
      %7453 = vmatprep.subr.mxu0 0.0
      %7454 = vmatpush2.msra.mxu0 0.0
      %7455 = vmatprep.subr.mxu0 0.0
      %7456 = vmatpush2.msra.mxu0 0.0
      %7457 = vmatprep.subr.mxu0 0.0
      %7458 = vmatpush2.msra.mxu0 0.0
      %7459 = vmatprep.subr.mxu0 0.0
      %7460 = vmatpush2.msra.mxu0 0.0
      %7461 = vmatprep.subr.mxu0 0.0
      %7462 = vmatpush2.msra.mxu0 0.0
      %7463 = vmatprep.mubr.f32.mxu0 0.0
      %7464 = vmatmul.mubr.f32.gmra.mxu0 %v7394
      %v7465 = vpop.f32.mrf.mxu0
      %v7466 = vadd.f32 0.0, %v7465
      %v7467 = vpop.f32.mrf.mxu0
      %v7468 = vadd.f32 0.0, %v7467
      %7469 = vmatprep.mubr.f32.mxu0 0.0
      %7470 = vmatmul.mubr.f32.gmra.mxu0 %v7397
      %v7471 = vpop.f32.mrf.mxu0
      %v7472 = vadd.f32 0.0, %v7471
      %v7473 = vpop.f32.mrf.mxu0
      %v7474 = vadd.f32 0.0, %v7473
      %7475 = vdwg.mxu0
      %v7476 = vadd.f32 %v7288, %v7466
      %v7477 = vadd.f32 %v7289, %v7468
      %v7478 = vadd.f32 %v7290, %v7472
      %v7479 = vadd.f32 %v7291, %v7474
      %s7480 = scalar_lea.vmem %s15, 112
      %v7481 = vld [vmem:[%s7480] sm:$0xff]
      %v7482 = vld [vmem:[%s7480 + $0x8] sm:$0xff]
      %v7484 = vsel %vm4293, %v7481, 0
      %v7487 = vsel %vm4293, %v7482, 0
      %7489 = vmatprep.subr.mxu0 0.0
      %7490 = vmatpush1.msra.mxu0 0.0
      %7491 = vmatprep.subr.mxu0 0.0
      %7492 = vmatpush1.msra.mxu0 0.0
      %7493 = vmatprep.subr.mxu0 0.0
      %7494 = vmatpush1.msra.mxu0 0.0
      %7495 = vmatprep.subr.mxu0 0.0
      %7496 = vmatpush1.msra.mxu0 0.0
      %7497 = vmatprep.subr.mxu0 0.0
      %7498 = vmatpush1.msra.mxu0 0.0
      %7499 = vmatprep.subr.mxu0 0.0
      %7500 = vmatpush1.msra.mxu0 0.0
      %7501 = vmatprep.subr.mxu0 0.0
      %7502 = vmatpush1.msra.mxu0 0.0
      %7503 = vmatprep.subr.mxu0 0.0
      %7504 = vmatpush1.msra.mxu0 0.0
      %7505 = vmatprep.subr.mxu0 0.0
      %7506 = vmatpush1.msra.mxu0 0.0
      %7507 = vmatprep.subr.mxu0 0.0
      %7508 = vmatpush1.msra.mxu0 0.0
      %7509 = vmatprep.subr.mxu0 0.0
      %7510 = vmatpush1.msra.mxu0 0.0
      %7511 = vmatprep.subr.mxu0 0.0
      %7512 = vmatpush1.msra.mxu0 0.0
      %7513 = vmatprep.subr.mxu0 0.0
      %7514 = vmatpush1.msra.mxu0 %v6173
      %7515 = vmatprep.subr.mxu0 0.0
      %7516 = vmatpush1.msra.mxu0 %v6172
      %7517 = vmatprep.subr.mxu0 0.0
      %7518 = vmatpush1.msra.mxu0 %v6171
      %7519 = vmatprep.subr.mxu0 0.0
      %7520 = vmatpush1.msra.mxu0 %v6170
      %7521 = vmatprep.subr.mxu0 0.0
      %7522 = vmatpush2.msra.mxu0 0.0
      %7523 = vmatprep.subr.mxu0 0.0
      %7524 = vmatpush2.msra.mxu0 0.0
      %7525 = vmatprep.subr.mxu0 0.0
      %7526 = vmatpush2.msra.mxu0 0.0
      %7527 = vmatprep.subr.mxu0 0.0
      %7528 = vmatpush2.msra.mxu0 0.0
      %7529 = vmatprep.subr.mxu0 0.0
      %7530 = vmatpush2.msra.mxu0 0.0
      %7531 = vmatprep.subr.mxu0 0.0
      %7532 = vmatpush2.msra.mxu0 0.0
      %7533 = vmatprep.subr.mxu0 0.0
      %7534 = vmatpush2.msra.mxu0 0.0
      %7535 = vmatprep.subr.mxu0 0.0
      %7536 = vmatpush2.msra.mxu0 0.0
      %7537 = vmatprep.subr.mxu0 0.0
      %7538 = vmatpush2.msra.mxu0 0.0
      %7539 = vmatprep.subr.mxu0 0.0
      %7540 = vmatpush2.msra.mxu0 0.0
      %7541 = vmatprep.subr.mxu0 0.0
      %7542 = vmatpush2.msra.mxu0 0.0
      %7543 = vmatprep.subr.mxu0 0.0
      %7544 = vmatpush2.msra.mxu0 0.0
      %7545 = vmatprep.subr.mxu0 0.0
      %7546 = vmatpush2.msra.mxu0 0.0
      %7547 = vmatprep.subr.mxu0 0.0
      %7548 = vmatpush2.msra.mxu0 0.0
      %7549 = vmatprep.subr.mxu0 0.0
      %7550 = vmatpush2.msra.mxu0 0.0
      %7551 = vmatprep.subr.mxu0 0.0
      %7552 = vmatpush2.msra.mxu0 0.0
      %7553 = vmatprep.mubr.f32.mxu0 0.0
      %7554 = vmatmul.mubr.f32.gmra.mxu0 %v7484
      %v7555 = vpop.f32.mrf.mxu0
      %v7556 = vadd.f32 0.0, %v7555
      %v7557 = vpop.f32.mrf.mxu0
      %7558 = vmatprep.mubr.f32.mxu0 0.0
      %7559 = vmatmul.mubr.f32.gmra.mxu0 %v7487
      %v7560 = vpop.f32.mrf.mxu0
      %v7561 = vadd.f32 0.0, %v7560
      %v7562 = vpop.f32.mrf.mxu0
      %7563 = vdwg.mxu0
      %s7564 = scalar_lea.vmem %s14, 896
      %v7565 = vld [vmem:[%s7564] sm:$0xff]
      %v7566 = vld [vmem:[%s7564 + $0x8] sm:$0xff]
      %v7567 = vld [vmem:[%s7564 + $0x10] sm:$0xff]
      %v7568 = vld [vmem:[%s7564 + $0x18] sm:$0xff]
      %v7569 = vld [vmem:[%s7564 + $0x20] sm:$0xff]
      %v7570 = vld [vmem:[%s7564 + $0x28] sm:$0xff]
      %v7571 = vld [vmem:[%s7564 + $0x30] sm:$0xff]
      %v7572 = vld [vmem:[%s7564 + $0x38] sm:$0xff]
      %v7573 = vld [vmem:[%s7564 + $0x40] sm:$0xff]
      %v7574 = vld [vmem:[%s7564 + $0x48] sm:$0xff]
      %v7575 = vld [vmem:[%s7564 + $0x50] sm:$0xff]
      %v7576 = vld [vmem:[%s7564 + $0x58] sm:$0xff]
      %v7577 = vld [vmem:[%s7564 + $0x60] sm:$0xff]
      %v7578 = vld [vmem:[%s7564 + $0x68] sm:$0xff]
      %v7579 = vld [vmem:[%s7564 + $0x70] sm:$0xff]
      %v7580 = vld [vmem:[%s7564 + $0x78] sm:$0xff]
      %v7582 = vsel %vm2360, %v7556, 0
      %v7585 = vsel %vm2360, %v7561, 0
      %7587 = vmatprep.subr.mxu0 0.0
      %7588 = vmatpush1.msra.mxu0 0.0
      %7589 = vmatprep.subr.mxu0 0.0
      %7590 = vmatpush1.msra.mxu0 0.0
      %7591 = vmatprep.subr.mxu0 0.0
      %7592 = vmatpush1.msra.mxu0 0.0
      %7593 = vmatprep.subr.mxu0 0.0
      %7594 = vmatpush1.msra.mxu0 0.0
      %7595 = vmatprep.subr.mxu0 0.0
      %7596 = vmatpush1.msra.mxu0 0.0
      %7597 = vmatprep.subr.mxu0 0.0
      %7598 = vmatpush1.msra.mxu0 0.0
      %7599 = vmatprep.subr.mxu0 0.0
      %7600 = vmatpush1.msra.mxu0 0.0
      %7601 = vmatprep.subr.mxu0 0.0
      %7602 = vmatpush1.msra.mxu0 0.0
      %7603 = vmatprep.subr.mxu0 %v7580
      %7604 = vmatpush1.msra.mxu0 %v7579
      %7605 = vmatprep.subr.mxu0 %v7578
      %7606 = vmatpush1.msra.mxu0 %v7577
      %7607 = vmatprep.subr.mxu0 %v7576
      %7608 = vmatpush1.msra.mxu0 %v7575
      %7609 = vmatprep.subr.mxu0 %v7574
      %7610 = vmatpush1.msra.mxu0 %v7573
      %7611 = vmatprep.subr.mxu0 %v7572
      %7612 = vmatpush1.msra.mxu0 %v7571
      %7613 = vmatprep.subr.mxu0 %v7570
      %7614 = vmatpush1.msra.mxu0 %v7569
      %7615 = vmatprep.subr.mxu0 %v7568
      %7616 = vmatpush1.msra.mxu0 %v7567
      %7617 = vmatprep.subr.mxu0 %v7566
      %7618 = vmatpush1.msra.mxu0 %v7565
      %7619 = vmatprep.subr.mxu0 0.0
      %7620 = vmatpush2.msra.mxu0 0.0
      %7621 = vmatprep.subr.mxu0 0.0
      %7622 = vmatpush2.msra.mxu0 0.0
      %7623 = vmatprep.subr.mxu0 0.0
      %7624 = vmatpush2.msra.mxu0 0.0
      %7625 = vmatprep.subr.mxu0 0.0
      %7626 = vmatpush2.msra.mxu0 0.0
      %7627 = vmatprep.subr.mxu0 0.0
      %7628 = vmatpush2.msra.mxu0 0.0
      %7629 = vmatprep.subr.mxu0 0.0
      %7630 = vmatpush2.msra.mxu0 0.0
      %7631 = vmatprep.subr.mxu0 0.0
      %7632 = vmatpush2.msra.mxu0 0.0
      %7633 = vmatprep.subr.mxu0 0.0
      %7634 = vmatpush2.msra.mxu0 0.0
      %7635 = vmatprep.subr.mxu0 0.0
      %7636 = vmatpush2.msra.mxu0 0.0
      %7637 = vmatprep.subr.mxu0 0.0
      %7638 = vmatpush2.msra.mxu0 0.0
      %7639 = vmatprep.subr.mxu0 0.0
      %7640 = vmatpush2.msra.mxu0 0.0
      %7641 = vmatprep.subr.mxu0 0.0
      %7642 = vmatpush2.msra.mxu0 0.0
      %7643 = vmatprep.subr.mxu0 0.0
      %7644 = vmatpush2.msra.mxu0 0.0
      %7645 = vmatprep.subr.mxu0 0.0
      %7646 = vmatpush2.msra.mxu0 0.0
      %7647 = vmatprep.subr.mxu0 0.0
      %7648 = vmatpush2.msra.mxu0 0.0
      %7649 = vmatprep.subr.mxu0 0.0
      %7650 = vmatpush2.msra.mxu0 0.0
      %7651 = vmatprep.mubr.f32.mxu0 0.0
      %7652 = vmatmul.mubr.f32.gmra.mxu0 %v7582
      %v7653 = vpop.f32.mrf.mxu0
      %v7654 = vadd.f32 0.0, %v7653
      %v7655 = vpop.f32.mrf.mxu0
      %v7656 = vadd.f32 0.0, %v7655
      %7657 = vmatprep.mubr.f32.mxu0 0.0
      %7658 = vmatmul.mubr.f32.gmra.mxu0 %v7585
      %v7659 = vpop.f32.mrf.mxu0
      %v7660 = vadd.f32 0.0, %v7659
      %v7661 = vpop.f32.mrf.mxu0
      %v7662 = vadd.f32 0.0, %v7661
      %7663 = vdwg.mxu0
      %v7664 = vadd.f32 %v7476, %v7654
      %v7665 = vadd.f32 %v7477, %v7656
      %v7666 = vadd.f32 %v7478, %v7660
      %v7667 = vadd.f32 %v7479, %v7662
      %s7668 = scalar_lea.vmem %s15, 128
      %v7669 = vld [vmem:[%s7668] sm:$0xff]
      %v7670 = vld [vmem:[%s7668 + $0x8] sm:$0xff]
      %v7672 = vsel %vm4293, %v7669, 0
      %v7675 = vsel %vm4293, %v7670, 0
      %7677 = vmatprep.subr.mxu0 0.0
      %7678 = vmatpush1.msra.mxu0 0.0
      %7679 = vmatprep.subr.mxu0 0.0
      %7680 = vmatpush1.msra.mxu0 0.0
      %7681 = vmatprep.subr.mxu0 0.0
      %7682 = vmatpush1.msra.mxu0 0.0
      %7683 = vmatprep.subr.mxu0 0.0
      %7684 = vmatpush1.msra.mxu0 0.0
      %7685 = vmatprep.subr.mxu0 0.0
      %7686 = vmatpush1.msra.mxu0 0.0
      %7687 = vmatprep.subr.mxu0 0.0
      %7688 = vmatpush1.msra.mxu0 0.0
      %7689 = vmatprep.subr.mxu0 0.0
      %7690 = vmatpush1.msra.mxu0 0.0
      %7691 = vmatprep.subr.mxu0 0.0
      %7692 = vmatpush1.msra.mxu0 0.0
      %7693 = vmatprep.subr.mxu0 0.0
      %7694 = vmatpush1.msra.mxu0 0.0
      %7695 = vmatprep.subr.mxu0 0.0
      %7696 = vmatpush1.msra.mxu0 0.0
      %7697 = vmatprep.subr.mxu0 0.0
      %7698 = vmatpush1.msra.mxu0 0.0
      %7699 = vmatprep.subr.mxu0 0.0
      %7700 = vmatpush1.msra.mxu0 0.0
      %7701 = vmatprep.subr.mxu0 0.0
      %7702 = vmatpush1.msra.mxu0 %v6173
      %7703 = vmatprep.subr.mxu0 0.0
      %7704 = vmatpush1.msra.mxu0 %v6172
      %7705 = vmatprep.subr.mxu0 0.0
      %7706 = vmatpush1.msra.mxu0 %v6171
      %7707 = vmatprep.subr.mxu0 0.0
      %7708 = vmatpush1.msra.mxu0 %v6170
      %7709 = vmatprep.subr.mxu0 0.0
      %7710 = vmatpush2.msra.mxu0 0.0
      %7711 = vmatprep.subr.mxu0 0.0
      %7712 = vmatpush2.msra.mxu0 0.0
      %7713 = vmatprep.subr.mxu0 0.0
      %7714 = vmatpush2.msra.mxu0 0.0
      %7715 = vmatprep.subr.mxu0 0.0
      %7716 = vmatpush2.msra.mxu0 0.0
      %7717 = vmatprep.subr.mxu0 0.0
      %7718 = vmatpush2.msra.mxu0 0.0
      %7719 = vmatprep.subr.mxu0 0.0
      %7720 = vmatpush2.msra.mxu0 0.0
      %7721 = vmatprep.subr.mxu0 0.0
      %7722 = vmatpush2.msra.mxu0 0.0
      %7723 = vmatprep.subr.mxu0 0.0
      %7724 = vmatpush2.msra.mxu0 0.0
      %7725 = vmatprep.subr.mxu0 0.0
      %7726 = vmatpush2.msra.mxu0 0.0
      %7727 = vmatprep.subr.mxu0 0.0
      %7728 = vmatpush2.msra.mxu0 0.0
      %7729 = vmatprep.subr.mxu0 0.0
      %7730 = vmatpush2.msra.mxu0 0.0
      %7731 = vmatprep.subr.mxu0 0.0
      %7732 = vmatpush2.msra.mxu0 0.0
      %7733 = vmatprep.subr.mxu0 0.0
      %7734 = vmatpush2.msra.mxu0 0.0
      %7735 = vmatprep.subr.mxu0 0.0
      %7736 = vmatpush2.msra.mxu0 0.0
      %7737 = vmatprep.subr.mxu0 0.0
      %7738 = vmatpush2.msra.mxu0 0.0
      %7739 = vmatprep.subr.mxu0 0.0
      %7740 = vmatpush2.msra.mxu0 0.0
      %7741 = vmatprep.mubr.f32.mxu0 0.0
      %7742 = vmatmul.mubr.f32.gmra.mxu0 %v7672
      %v7743 = vpop.f32.mrf.mxu0
      %v7744 = vadd.f32 0.0, %v7743
      %v7745 = vpop.f32.mrf.mxu0
      %7746 = vmatprep.mubr.f32.mxu0 0.0
      %7747 = vmatmul.mubr.f32.gmra.mxu0 %v7675
      %v7748 = vpop.f32.mrf.mxu0
      %v7749 = vadd.f32 0.0, %v7748
      %v7750 = vpop.f32.mrf.mxu0
      %7751 = vdwg.mxu0
      %s7752 = scalar_lea.vmem %s14, 1024
      %v7753 = vld [vmem:[%s7752] sm:$0xff]
      %v7754 = vld [vmem:[%s7752 + $0x8] sm:$0xff]
      %v7755 = vld [vmem:[%s7752 + $0x10] sm:$0xff]
      %v7756 = vld [vmem:[%s7752 + $0x18] sm:$0xff]
      %v7757 = vld [vmem:[%s7752 + $0x20] sm:$0xff]
      %v7758 = vld [vmem:[%s7752 + $0x28] sm:$0xff]
      %v7759 = vld [vmem:[%s7752 + $0x30] sm:$0xff]
      %v7760 = vld [vmem:[%s7752 + $0x38] sm:$0xff]
      %v7761 = vld [vmem:[%s7752 + $0x40] sm:$0xff]
      %v7762 = vld [vmem:[%s7752 + $0x48] sm:$0xff]
      %v7763 = vld [vmem:[%s7752 + $0x50] sm:$0xff]
      %v7764 = vld [vmem:[%s7752 + $0x58] sm:$0xff]
      %v7765 = vld [vmem:[%s7752 + $0x60] sm:$0xff]
      %v7766 = vld [vmem:[%s7752 + $0x68] sm:$0xff]
      %v7767 = vld [vmem:[%s7752 + $0x70] sm:$0xff]
      %v7768 = vld [vmem:[%s7752 + $0x78] sm:$0xff]
      %v7770 = vsel %vm2360, %v7744, 0
      %v7773 = vsel %vm2360, %v7749, 0
      %7775 = vmatprep.subr.mxu0 0.0
      %7776 = vmatpush1.msra.mxu0 0.0
      %7777 = vmatprep.subr.mxu0 0.0
      %7778 = vmatpush1.msra.mxu0 0.0
      %7779 = vmatprep.subr.mxu0 0.0
      %7780 = vmatpush1.msra.mxu0 0.0
      %7781 = vmatprep.subr.mxu0 0.0
      %7782 = vmatpush1.msra.mxu0 0.0
      %7783 = vmatprep.subr.mxu0 0.0
      %7784 = vmatpush1.msra.mxu0 0.0
      %7785 = vmatprep.subr.mxu0 0.0
      %7786 = vmatpush1.msra.mxu0 0.0
      %7787 = vmatprep.subr.mxu0 0.0
      %7788 = vmatpush1.msra.mxu0 0.0
      %7789 = vmatprep.subr.mxu0 0.0
      %7790 = vmatpush1.msra.mxu0 0.0
      %7791 = vmatprep.subr.mxu0 %v7768
      %7792 = vmatpush1.msra.mxu0 %v7767
      %7793 = vmatprep.subr.mxu0 %v7766
      %7794 = vmatpush1.msra.mxu0 %v7765
      %7795 = vmatprep.subr.mxu0 %v7764
      %7796 = vmatpush1.msra.mxu0 %v7763
      %7797 = vmatprep.subr.mxu0 %v7762
      %7798 = vmatpush1.msra.mxu0 %v7761
      %7799 = vmatprep.subr.mxu0 %v7760
      %7800 = vmatpush1.msra.mxu0 %v7759
      %7801 = vmatprep.subr.mxu0 %v7758
      %7802 = vmatpush1.msra.mxu0 %v7757
      %7803 = vmatprep.subr.mxu0 %v7756
      %7804 = vmatpush1.msra.mxu0 %v7755
      %7805 = vmatprep.subr.mxu0 %v7754
      %7806 = vmatpush1.msra.mxu0 %v7753
      %7807 = vmatprep.subr.mxu0 0.0
      %7808 = vmatpush2.msra.mxu0 0.0
      %7809 = vmatprep.subr.mxu0 0.0
      %7810 = vmatpush2.msra.mxu0 0.0
      %7811 = vmatprep.subr.mxu0 0.0
      %7812 = vmatpush2.msra.mxu0 0.0
      %7813 = vmatprep.subr.mxu0 0.0
      %7814 = vmatpush2.msra.mxu0 0.0
      %7815 = vmatprep.subr.mxu0 0.0
      %7816 = vmatpush2.msra.mxu0 0.0
      %7817 = vmatprep.subr.mxu0 0.0
      %7818 = vmatpush2.msra.mxu0 0.0
      %7819 = vmatprep.subr.mxu0 0.0
      %7820 = vmatpush2.msra.mxu0 0.0
      %7821 = vmatprep.subr.mxu0 0.0
      %7822 = vmatpush2.msra.mxu0 0.0
      %7823 = vmatprep.subr.mxu0 0.0
      %7824 = vmatpush2.msra.mxu0 0.0
      %7825 = vmatprep.subr.mxu0 0.0
      %7826 = vmatpush2.msra.mxu0 0.0
      %7827 = vmatprep.subr.mxu0 0.0
      %7828 = vmatpush2.msra.mxu0 0.0
      %7829 = vmatprep.subr.mxu0 0.0
      %7830 = vmatpush2.msra.mxu0 0.0
      %7831 = vmatprep.subr.mxu0 0.0
      %7832 = vmatpush2.msra.mxu0 0.0
      %7833 = vmatprep.subr.mxu0 0.0
      %7834 = vmatpush2.msra.mxu0 0.0
      %7835 = vmatprep.subr.mxu0 0.0
      %7836 = vmatpush2.msra.mxu0 0.0
      %7837 = vmatprep.subr.mxu0 0.0
      %7838 = vmatpush2.msra.mxu0 0.0
      %7839 = vmatprep.mubr.f32.mxu0 0.0
      %7840 = vmatmul.mubr.f32.gmra.mxu0 %v7770
      %v7841 = vpop.f32.mrf.mxu0
      %v7842 = vadd.f32 0.0, %v7841
      %v7843 = vpop.f32.mrf.mxu0
      %v7844 = vadd.f32 0.0, %v7843
      %7845 = vmatprep.mubr.f32.mxu0 0.0
      %7846 = vmatmul.mubr.f32.gmra.mxu0 %v7773
      %v7847 = vpop.f32.mrf.mxu0
      %v7848 = vadd.f32 0.0, %v7847
      %v7849 = vpop.f32.mrf.mxu0
      %v7850 = vadd.f32 0.0, %v7849
      %7851 = vdwg.mxu0
      %v7852 = vadd.f32 %v7664, %v7842
      %v7853 = vadd.f32 %v7665, %v7844
      %v7854 = vadd.f32 %v7666, %v7848
      %v7855 = vadd.f32 %v7667, %v7850
      %v7856 = vld [vmem:[%s16] sm:$0xff]
      %v7857 = vld [vmem:[%s16 + $0x8] sm:$0xff]
      %7859 = vset.pattern.permute.xlu0 0
      %7860 = vperm.xlu0 %7859, %v7856
      %v7861 = vpop.permute.xlu0 %7860
      %7864 = vset.pattern.permute.xlu0 0
      %7865 = vperm.xlu0 %7864, %v7857
      %v7866 = vpop.permute.xlu0 %7865
      %v7868 = vadd.f32 %v7852, %v7861
      %v7869 = vadd.f32 %v7853, %v7861
      %v7870 = vadd.f32 %v7854, %v7866
      %v7871 = vadd.f32 %v7855, %v7866
      %vm7872 = vcmp.ge.f32.partialorder %v7868, 0.0
      %vm7873 = vcmp.ge.f32.partialorder %v7869, 0.0
      %vm7874 = vcmp.ge.f32.partialorder %v7870, 0.0
      %vm7875 = vcmp.ge.f32.partialorder %v7871, 0.0
      %v7876 = vmul.f32 %v7868, 0.01
      %v7877 = vmul.f32 %v7869, 0.01
      %v7878 = vmul.f32 %v7870, 0.01
      %v7879 = vmul.f32 %v7871, 0.01
      %v7880 = vsel %vm7872, %v7868, %v7876
      %v7881 = vsel %vm7873, %v7869, %v7877
      %v7882 = vsel %vm7874, %v7870, %v7878
      %v7883 = vsel %vm7875, %v7871, %v7879
      %v7884 = vld [vmem:[%s18] sm:$0xff]
      %v7886 = vsel %vm2531, %v7884, 0
      %7888 = vmatprep.subr.mxu0 0.0
      %7889 = vmatpush1.msra.mxu0 0.0
      %7890 = vmatprep.subr.mxu0 0.0
      %7891 = vmatpush1.msra.mxu0 0.0
      %7892 = vmatprep.subr.mxu0 0.0
      %7893 = vmatpush1.msra.mxu0 0.0
      %7894 = vmatprep.subr.mxu0 0.0
      %7895 = vmatpush1.msra.mxu0 0.0
      %7896 = vmatprep.subr.mxu0 0.0
      %7897 = vmatpush1.msra.mxu0 0.0
      %7898 = vmatprep.subr.mxu0 0.0
      %7899 = vmatpush1.msra.mxu0 0.0
      %7900 = vmatprep.subr.mxu0 0.0
      %7901 = vmatpush1.msra.mxu0 0.0
      %7902 = vmatprep.subr.mxu0 0.0
      %7903 = vmatpush1.msra.mxu0 0.0
      %7904 = vmatprep.subr.mxu0 0.0
      %7905 = vmatpush1.msra.mxu0 0.0
      %7906 = vmatprep.subr.mxu0 0.0
      %7907 = vmatpush1.msra.mxu0 0.0
      %7908 = vmatprep.subr.mxu0 0.0
      %7909 = vmatpush1.msra.mxu0 0.0
      %7910 = vmatprep.subr.mxu0 0.0
      %7911 = vmatpush1.msra.mxu0 0.0
      %7912 = vmatprep.subr.mxu0 0.0
      %7913 = vmatpush1.msra.mxu0 0.0
      %7914 = vmatprep.subr.mxu0 0.0
      %7915 = vmatpush1.msra.mxu0 0.0
      %7916 = vmatprep.subr.mxu0 %v7883
      %7917 = vmatpush1.msra.mxu0 %v7882
      %7918 = vmatprep.subr.mxu0 %v7881
      %7919 = vmatpush1.msra.mxu0 %v7880
      %7920 = vmatprep.subr.mxu0 0.0
      %7921 = vmatpush2.msra.mxu0 0.0
      %7922 = vmatprep.subr.mxu0 0.0
      %7923 = vmatpush2.msra.mxu0 0.0
      %7924 = vmatprep.subr.mxu0 0.0
      %7925 = vmatpush2.msra.mxu0 0.0
      %7926 = vmatprep.subr.mxu0 0.0
      %7927 = vmatpush2.msra.mxu0 0.0
      %7928 = vmatprep.subr.mxu0 0.0
      %7929 = vmatpush2.msra.mxu0 0.0
      %7930 = vmatprep.subr.mxu0 0.0
      %7931 = vmatpush2.msra.mxu0 0.0
      %7932 = vmatprep.subr.mxu0 0.0
      %7933 = vmatpush2.msra.mxu0 0.0
      %7934 = vmatprep.subr.mxu0 0.0
      %7935 = vmatpush2.msra.mxu0 0.0
      %7936 = vmatprep.subr.mxu0 0.0
      %7937 = vmatpush2.msra.mxu0 0.0
      %7938 = vmatprep.subr.mxu0 0.0
      %7939 = vmatpush2.msra.mxu0 0.0
      %7940 = vmatprep.subr.mxu0 0.0
      %7941 = vmatpush2.msra.mxu0 0.0
      %7942 = vmatprep.subr.mxu0 0.0
      %7943 = vmatpush2.msra.mxu0 0.0
      %7944 = vmatprep.subr.mxu0 0.0
      %7945 = vmatpush2.msra.mxu0 0.0
      %7946 = vmatprep.subr.mxu0 0.0
      %7947 = vmatpush2.msra.mxu0 0.0
      %7948 = vmatprep.subr.mxu0 0.0
      %7949 = vmatpush2.msra.mxu0 0.0
      %7950 = vmatprep.subr.mxu0 0.0
      %7951 = vmatpush2.msra.mxu0 0.0
      %7952 = vmatprep.mubr.f32.mxu0 0.0
      %7953 = vmatmul.mubr.f32.gmra.mxu0 %v7886
      %v7954 = vpop.f32.mrf.mxu0
      %v7955 = vadd.f32 0.0, %v7954
      %v7956 = vpop.f32.mrf.mxu0
      %v7957 = vadd.f32 0.0, %v7956
      %7958 = vdwg.mxu0
      %7959 = vrot.lane.b32.xlu0 %v7955, 17
      %v7960 = vpop.permute.xlu0 %7959
      %7961 = vrot.lane.b32.xlu0 %v7957, 17
      %v7962 = vpop.permute.xlu0 %7961
      %v7963 = vlaneseq
      %v7964 = vand.u32 %v7963, 127
      %vm7965 = vcmp.lt.s32.totalorder %v7964, 17
      %v7966 = vsel %vm7965, %v7960, %v7962
      %v7967 = vsel %vm7965, %v7962, %v7960
      %v7968 = vld [vmem:[%s17] sm:$0x3]
      %v7970 = vlaneseq
      %v7971 = vshrl.u32 %v7970, 7
      %v7972 = vsub.s32 0, %v7971
      %v7973 = vrot.slane %v7968, %v7972
      %v7974 = vlaneseq
      %v7975 = vshrl.u32 %v7974, 7
      %v7976 = vsub.s32 1, %v7975
      %v7977 = vrot.slane %v7968, %v7976
      %v7980 = vmul.f32 %v7967, %v7973
      %v7981 = vmul.f32 %v7966, %v7977
      %s7982 = scalar_lea.vmem %s18, 8
      %v7983 = vld [vmem:[%s7982] sm:$0xff]
      %v7985 = vsel %vm2531, %v7983, 0
      %7987 = vmatprep.subr.mxu0 0.0
      %7988 = vmatpush1.msra.mxu0 0.0
      %7989 = vmatprep.subr.mxu0 0.0
      %7990 = vmatpush1.msra.mxu0 0.0
      %7991 = vmatprep.subr.mxu0 0.0
      %7992 = vmatpush1.msra.mxu0 0.0
      %7993 = vmatprep.subr.mxu0 0.0
      %7994 = vmatpush1.msra.mxu0 0.0
      %7995 = vmatprep.subr.mxu0 0.0
      %7996 = vmatpush1.msra.mxu0 0.0
      %7997 = vmatprep.subr.mxu0 0.0
      %7998 = vmatpush1.msra.mxu0 0.0
      %7999 = vmatprep.subr.mxu0 0.0
      %8000 = vmatpush1.msra.mxu0 0.0
      %8001 = vmatprep.subr.mxu0 0.0
      %8002 = vmatpush1.msra.mxu0 0.0
      %8003 = vmatprep.subr.mxu0 0.0
      %8004 = vmatpush1.msra.mxu0 0.0
      %8005 = vmatprep.subr.mxu0 0.0
      %8006 = vmatpush1.msra.mxu0 0.0
      %8007 = vmatprep.subr.mxu0 0.0
      %8008 = vmatpush1.msra.mxu0 0.0
      %8009 = vmatprep.subr.mxu0 0.0
      %8010 = vmatpush1.msra.mxu0 0.0
      %8011 = vmatprep.subr.mxu0 0.0
      %8012 = vmatpush1.msra.mxu0 0.0
      %8013 = vmatprep.subr.mxu0 0.0
      %8014 = vmatpush1.msra.mxu0 0.0
      %8015 = vmatprep.subr.mxu0 %v7883
      %8016 = vmatpush1.msra.mxu0 %v7882
      %8017 = vmatprep.subr.mxu0 %v7881
      %8018 = vmatpush1.msra.mxu0 %v7880
      %8019 = vmatprep.subr.mxu0 0.0
      %8020 = vmatpush2.msra.mxu0 0.0
      %8021 = vmatprep.subr.mxu0 0.0
      %8022 = vmatpush2.msra.mxu0 0.0
      %8023 = vmatprep.subr.mxu0 0.0
      %8024 = vmatpush2.msra.mxu0 0.0
      %8025 = vmatprep.subr.mxu0 0.0
      %8026 = vmatpush2.msra.mxu0 0.0
      %8027 = vmatprep.subr.mxu0 0.0
      %8028 = vmatpush2.msra.mxu0 0.0
      %8029 = vmatprep.subr.mxu0 0.0
      %8030 = vmatpush2.msra.mxu0 0.0
      %8031 = vmatprep.subr.mxu0 0.0
      %8032 = vmatpush2.msra.mxu0 0.0
      %8033 = vmatprep.subr.mxu0 0.0
      %8034 = vmatpush2.msra.mxu0 0.0
      %8035 = vmatprep.subr.mxu0 0.0
      %8036 = vmatpush2.msra.mxu0 0.0
      %8037 = vmatprep.subr.mxu0 0.0
      %8038 = vmatpush2.msra.mxu0 0.0
      %8039 = vmatprep.subr.mxu0 0.0
      %8040 = vmatpush2.msra.mxu0 0.0
      %8041 = vmatprep.subr.mxu0 0.0
      %8042 = vmatpush2.msra.mxu0 0.0
      %8043 = vmatprep.subr.mxu0 0.0
      %8044 = vmatpush2.msra.mxu0 0.0
      %8045 = vmatprep.subr.mxu0 0.0
      %8046 = vmatpush2.msra.mxu0 0.0
      %8047 = vmatprep.subr.mxu0 0.0
      %8048 = vmatpush2.msra.mxu0 0.0
      %8049 = vmatprep.subr.mxu0 0.0
      %8050 = vmatpush2.msra.mxu0 0.0
      %8051 = vmatprep.mubr.f32.mxu0 0.0
      %8052 = vmatmul.mubr.f32.gmra.mxu0 %v7985
      %v8053 = vpop.f32.mrf.mxu0
      %v8054 = vadd.f32 0.0, %v8053
      %v8055 = vpop.f32.mrf.mxu0
      %v8056 = vadd.f32 0.0, %v8055
      %8057 = vdwg.mxu0
      %8058 = vrot.lane.b32.xlu0 %v8054, 16
      %v8059 = vpop.permute.xlu0 %8058
      %8060 = vrot.lane.b32.xlu0 %v8056, 16
      %v8061 = vpop.permute.xlu0 %8060
      %vm8062 = vcmp.lt.s32.totalorder %v7964, 16
      %v8063 = vsel %vm8062, %v8059, %v8061
      %v8064 = vsel %vm8062, %v8061, %v8059
      %s8065 = scalar_lea.vmem %s17, 2
      %v8066 = vld [vmem:[%s8065] sm:$0x3]
      %v8068 = vlaneseq
      %v8069 = vshrl.u32 %v8068, 7
      %v8070 = vsub.s32 0, %v8069
      %v8071 = vrot.slane %v8066, %v8070
      %v8072 = vlaneseq
      %v8073 = vshrl.u32 %v8072, 7
      %v8074 = vsub.s32 1, %v8073
      %v8075 = vrot.slane %v8066, %v8074
      %v8078 = vmul.f32 %v8064, %v8071
      %v8079 = vmul.f32 %v8063, %v8075
      %v8080 = vadd.f32 %v7980, %v8078
      %v8081 = vadd.f32 %v7981, %v8079
      %s8082 = scalar_lea.vmem %s18, 16
      %v8083 = vld [vmem:[%s8082] sm:$0xff]
      %v8085 = vsel %vm2531, %v8083, 0
      %8087 = vmatprep.subr.mxu0 0.0
      %8088 = vmatpush1.msra.mxu0 0.0
      %8089 = vmatprep.subr.mxu0 0.0
      %8090 = vmatpush1.msra.mxu0 0.0
      %8091 = vmatprep.subr.mxu0 0.0
      %8092 = vmatpush1.msra.mxu0 0.0
      %8093 = vmatprep.subr.mxu0 0.0
      %8094 = vmatpush1.msra.mxu0 0.0
      %8095 = vmatprep.subr.mxu0 0.0
      %8096 = vmatpush1.msra.mxu0 0.0
      %8097 = vmatprep.subr.mxu0 0.0
      %8098 = vmatpush1.msra.mxu0 0.0
      %8099 = vmatprep.subr.mxu0 0.0
      %8100 = vmatpush1.msra.mxu0 0.0
      %8101 = vmatprep.subr.mxu0 0.0
      %8102 = vmatpush1.msra.mxu0 0.0
      %8103 = vmatprep.subr.mxu0 0.0
      %8104 = vmatpush1.msra.mxu0 0.0
      %8105 = vmatprep.subr.mxu0 0.0
      %8106 = vmatpush1.msra.mxu0 0.0
      %8107 = vmatprep.subr.mxu0 0.0
      %8108 = vmatpush1.msra.mxu0 0.0
      %8109 = vmatprep.subr.mxu0 0.0
      %8110 = vmatpush1.msra.mxu0 0.0
      %8111 = vmatprep.subr.mxu0 0.0
      %8112 = vmatpush1.msra.mxu0 0.0
      %8113 = vmatprep.subr.mxu0 0.0
      %8114 = vmatpush1.msra.mxu0 0.0
      %8115 = vmatprep.subr.mxu0 %v7883
      %8116 = vmatpush1.msra.mxu0 %v7882
      %8117 = vmatprep.subr.mxu0 %v7881
      %8118 = vmatpush1.msra.mxu0 %v7880
      %8119 = vmatprep.subr.mxu0 0.0
      %8120 = vmatpush2.msra.mxu0 0.0
      %8121 = vmatprep.subr.mxu0 0.0
      %8122 = vmatpush2.msra.mxu0 0.0
      %8123 = vmatprep.subr.mxu0 0.0
      %8124 = vmatpush2.msra.mxu0 0.0
      %8125 = vmatprep.subr.mxu0 0.0
      %8126 = vmatpush2.msra.mxu0 0.0
      %8127 = vmatprep.subr.mxu0 0.0
      %8128 = vmatpush2.msra.mxu0 0.0
      %8129 = vmatprep.subr.mxu0 0.0
      %8130 = vmatpush2.msra.mxu0 0.0
      %8131 = vmatprep.subr.mxu0 0.0
      %8132 = vmatpush2.msra.mxu0 0.0
      %8133 = vmatprep.subr.mxu0 0.0
      %8134 = vmatpush2.msra.mxu0 0.0
      %8135 = vmatprep.subr.mxu0 0.0
      %8136 = vmatpush2.msra.mxu0 0.0
      %8137 = vmatprep.subr.mxu0 0.0
      %8138 = vmatpush2.msra.mxu0 0.0
      %8139 = vmatprep.subr.mxu0 0.0
      %8140 = vmatpush2.msra.mxu0 0.0
      %8141 = vmatprep.subr.mxu0 0.0
      %8142 = vmatpush2.msra.mxu0 0.0
      %8143 = vmatprep.subr.mxu0 0.0
      %8144 = vmatpush2.msra.mxu0 0.0
      %8145 = vmatprep.subr.mxu0 0.0
      %8146 = vmatpush2.msra.mxu0 0.0
      %8147 = vmatprep.subr.mxu0 0.0
      %8148 = vmatpush2.msra.mxu0 0.0
      %8149 = vmatprep.subr.mxu0 0.0
      %8150 = vmatpush2.msra.mxu0 0.0
      %8151 = vmatprep.mubr.f32.mxu0 0.0
      %8152 = vmatmul.mubr.f32.gmra.mxu0 %v8085
      %v8153 = vpop.f32.mrf.mxu0
      %v8154 = vadd.f32 0.0, %v8153
      %v8155 = vpop.f32.mrf.mxu0
      %v8156 = vadd.f32 0.0, %v8155
      %8157 = vdwg.mxu0
      %8158 = vrot.lane.b32.xlu0 %v8154, 15
      %v8159 = vpop.permute.xlu0 %8158
      %8160 = vrot.lane.b32.xlu0 %v8156, 15
      %v8161 = vpop.permute.xlu0 %8160
      %vm8162 = vcmp.lt.s32.totalorder %v7964, 15
      %v8163 = vsel %vm8162, %v8159, %v8161
      %v8164 = vsel %vm8162, %v8161, %v8159
      %s8165 = scalar_lea.vmem %s17, 4
      %v8166 = vld [vmem:[%s8165] sm:$0x3]
      %v8168 = vlaneseq
      %v8169 = vshrl.u32 %v8168, 7
      %v8170 = vsub.s32 0, %v8169
      %v8171 = vrot.slane %v8166, %v8170
      %v8172 = vlaneseq
      %v8173 = vshrl.u32 %v8172, 7
      %v8174 = vsub.s32 1, %v8173
      %v8175 = vrot.slane %v8166, %v8174
      %v8178 = vmul.f32 %v8164, %v8171
      %v8179 = vmul.f32 %v8163, %v8175
      %v8180 = vadd.f32 %v8080, %v8178
      %v8181 = vadd.f32 %v8081, %v8179
      %s8182 = scalar_lea.vmem %s18, 24
      %v8183 = vld [vmem:[%s8182] sm:$0xff]
      %v8185 = vsel %vm2531, %v8183, 0
      %8187 = vmatprep.subr.mxu0 0.0
      %8188 = vmatpush1.msra.mxu0 0.0
      %8189 = vmatprep.subr.mxu0 0.0
      %8190 = vmatpush1.msra.mxu0 0.0
      %8191 = vmatprep.subr.mxu0 0.0
      %8192 = vmatpush1.msra.mxu0 0.0
      %8193 = vmatprep.subr.mxu0 0.0
      %8194 = vmatpush1.msra.mxu0 0.0
      %8195 = vmatprep.subr.mxu0 0.0
      %8196 = vmatpush1.msra.mxu0 0.0
      %8197 = vmatprep.subr.mxu0 0.0
      %8198 = vmatpush1.msra.mxu0 0.0
      %8199 = vmatprep.subr.mxu0 0.0
      %8200 = vmatpush1.msra.mxu0 0.0
      %8201 = vmatprep.subr.mxu0 0.0
      %8202 = vmatpush1.msra.mxu0 0.0
      %8203 = vmatprep.subr.mxu0 0.0
      %8204 = vmatpush1.msra.mxu0 0.0
      %8205 = vmatprep.subr.mxu0 0.0
      %8206 = vmatpush1.msra.mxu0 0.0
      %8207 = vmatprep.subr.mxu0 0.0
      %8208 = vmatpush1.msra.mxu0 0.0
      %8209 = vmatprep.subr.mxu0 0.0
      %8210 = vmatpush1.msra.mxu0 0.0
      %8211 = vmatprep.subr.mxu0 0.0
      %8212 = vmatpush1.msra.mxu0 0.0
      %8213 = vmatprep.subr.mxu0 0.0
      %8214 = vmatpush1.msra.mxu0 0.0
      %8215 = vmatprep.subr.mxu0 %v7883
      %8216 = vmatpush1.msra.mxu0 %v7882
      %8217 = vmatprep.subr.mxu0 %v7881
      %8218 = vmatpush1.msra.mxu0 %v7880
      %8219 = vmatprep.subr.mxu0 0.0
      %8220 = vmatpush2.msra.mxu0 0.0
      %8221 = vmatprep.subr.mxu0 0.0
      %8222 = vmatpush2.msra.mxu0 0.0
      %8223 = vmatprep.subr.mxu0 0.0
      %8224 = vmatpush2.msra.mxu0 0.0
      %8225 = vmatprep.subr.mxu0 0.0
      %8226 = vmatpush2.msra.mxu0 0.0
      %8227 = vmatprep.subr.mxu0 0.0
      %8228 = vmatpush2.msra.mxu0 0.0
      %8229 = vmatprep.subr.mxu0 0.0
      %8230 = vmatpush2.msra.mxu0 0.0
      %8231 = vmatprep.subr.mxu0 0.0
      %8232 = vmatpush2.msra.mxu0 0.0
      %8233 = vmatprep.subr.mxu0 0.0
      %8234 = vmatpush2.msra.mxu0 0.0
      %8235 = vmatprep.subr.mxu0 0.0
      %8236 = vmatpush2.msra.mxu0 0.0
      %8237 = vmatprep.subr.mxu0 0.0
      %8238 = vmatpush2.msra.mxu0 0.0
      %8239 = vmatprep.subr.mxu0 0.0
      %8240 = vmatpush2.msra.mxu0 0.0
      %8241 = vmatprep.subr.mxu0 0.0
      %8242 = vmatpush2.msra.mxu0 0.0
      %8243 = vmatprep.subr.mxu0 0.0
      %8244 = vmatpush2.msra.mxu0 0.0
      %8245 = vmatprep.subr.mxu0 0.0
      %8246 = vmatpush2.msra.mxu0 0.0
      %8247 = vmatprep.subr.mxu0 0.0
      %8248 = vmatpush2.msra.mxu0 0.0
      %8249 = vmatprep.subr.mxu0 0.0
      %8250 = vmatpush2.msra.mxu0 0.0
      %8251 = vmatprep.mubr.f32.mxu0 0.0
      %8252 = vmatmul.mubr.f32.gmra.mxu0 %v8185
      %v8253 = vpop.f32.mrf.mxu0
      %v8254 = vadd.f32 0.0, %v8253
      %v8255 = vpop.f32.mrf.mxu0
      %v8256 = vadd.f32 0.0, %v8255
      %8257 = vdwg.mxu0
      %8258 = vrot.lane.b32.xlu0 %v8254, 1
      %v8259 = vpop.permute.xlu0 %8258
      %8260 = vrot.lane.b32.xlu0 %v8256, 1
      %v8261 = vpop.permute.xlu0 %8260
      %vm8262 = vcmp.lt.s32.totalorder %v7964, 1
      %v8263 = vsel %vm8262, %v8259, %v8261
      %v8264 = vsel %vm8262, %v8261, %v8259
      %s8265 = scalar_lea.vmem %s17, 6
      %v8266 = vld [vmem:[%s8265] sm:$0x3]
      %v8268 = vlaneseq
      %v8269 = vshrl.u32 %v8268, 7
      %v8270 = vsub.s32 0, %v8269
      %v8271 = vrot.slane %v8266, %v8270
      %v8272 = vlaneseq
      %v8273 = vshrl.u32 %v8272, 7
      %v8274 = vsub.s32 1, %v8273
      %v8275 = vrot.slane %v8266, %v8274
      %v8278 = vmul.f32 %v8264, %v8271
      %v8279 = vmul.f32 %v8263, %v8275
      %v8280 = vadd.f32 %v8180, %v8278
      %v8281 = vadd.f32 %v8181, %v8279
      %s8282 = scalar_lea.vmem %s18, 32
      %v8283 = vld [vmem:[%s8282] sm:$0xff]
      %v8285 = vsel %vm2531, %v8283, 0
      %8287 = vmatprep.subr.mxu0 0.0
      %8288 = vmatpush1.msra.mxu0 0.0
      %8289 = vmatprep.subr.mxu0 0.0
      %8290 = vmatpush1.msra.mxu0 0.0
      %8291 = vmatprep.subr.mxu0 0.0
      %8292 = vmatpush1.msra.mxu0 0.0
      %8293 = vmatprep.subr.mxu0 0.0
      %8294 = vmatpush1.msra.mxu0 0.0
      %8295 = vmatprep.subr.mxu0 0.0
      %8296 = vmatpush1.msra.mxu0 0.0
      %8297 = vmatprep.subr.mxu0 0.0
      %8298 = vmatpush1.msra.mxu0 0.0
      %8299 = vmatprep.subr.mxu0 0.0
      %8300 = vmatpush1.msra.mxu0 0.0
      %8301 = vmatprep.subr.mxu0 0.0
      %8302 = vmatpush1.msra.mxu0 0.0
      %8303 = vmatprep.subr.mxu0 0.0
      %8304 = vmatpush1.msra.mxu0 0.0
      %8305 = vmatprep.subr.mxu0 0.0
      %8306 = vmatpush1.msra.mxu0 0.0
      %8307 = vmatprep.subr.mxu0 0.0
      %8308 = vmatpush1.msra.mxu0 0.0
      %8309 = vmatprep.subr.mxu0 0.0
      %8310 = vmatpush1.msra.mxu0 0.0
      %8311 = vmatprep.subr.mxu0 0.0
      %8312 = vmatpush1.msra.mxu0 0.0
      %8313 = vmatprep.subr.mxu0 0.0
      %8314 = vmatpush1.msra.mxu0 0.0
      %8315 = vmatprep.subr.mxu0 %v7883
      %8316 = vmatpush1.msra.mxu0 %v7882
      %8317 = vmatprep.subr.mxu0 %v7881
      %8318 = vmatpush1.msra.mxu0 %v7880
      %8319 = vmatprep.subr.mxu0 0.0
      %8320 = vmatpush2.msra.mxu0 0.0
      %8321 = vmatprep.subr.mxu0 0.0
      %8322 = vmatpush2.msra.mxu0 0.0
      %8323 = vmatprep.subr.mxu0 0.0
      %8324 = vmatpush2.msra.mxu0 0.0
      %8325 = vmatprep.subr.mxu0 0.0
      %8326 = vmatpush2.msra.mxu0 0.0
      %8327 = vmatprep.subr.mxu0 0.0
      %8328 = vmatpush2.msra.mxu0 0.0
      %8329 = vmatprep.subr.mxu0 0.0
      %8330 = vmatpush2.msra.mxu0 0.0
      %8331 = vmatprep.subr.mxu0 0.0
      %8332 = vmatpush2.msra.mxu0 0.0
      %8333 = vmatprep.subr.mxu0 0.0
      %8334 = vmatpush2.msra.mxu0 0.0
      %8335 = vmatprep.subr.mxu0 0.0
      %8336 = vmatpush2.msra.mxu0 0.0
      %8337 = vmatprep.subr.mxu0 0.0
      %8338 = vmatpush2.msra.mxu0 0.0
      %8339 = vmatprep.subr.mxu0 0.0
      %8340 = vmatpush2.msra.mxu0 0.0
      %8341 = vmatprep.subr.mxu0 0.0
      %8342 = vmatpush2.msra.mxu0 0.0
      %8343 = vmatprep.subr.mxu0 0.0
      %8344 = vmatpush2.msra.mxu0 0.0
      %8345 = vmatprep.subr.mxu0 0.0
      %8346 = vmatpush2.msra.mxu0 0.0
      %8347 = vmatprep.subr.mxu0 0.0
      %8348 = vmatpush2.msra.mxu0 0.0
      %8349 = vmatprep.subr.mxu0 0.0
      %8350 = vmatpush2.msra.mxu0 0.0
      %8351 = vmatprep.mubr.f32.mxu0 0.0
      %8352 = vmatmul.mubr.f32.gmra.mxu0 %v8285
      %v8353 = vpop.f32.mrf.mxu0
      %v8354 = vadd.f32 0.0, %v8353
      %v8355 = vpop.f32.mrf.mxu0
      %v8356 = vadd.f32 0.0, %v8355
      %8357 = vdwg.mxu0
      %v8358 = vadd.f32 %v8280, %v8354
      %v8359 = vadd.f32 %v8281, %v8356
      %s8360 = scalar_lea.vmem %s18, 40
      %v8361 = vld [vmem:[%s8360] sm:$0xff]
      %v8363 = vsel %vm2531, %v8361, 0
      %8365 = vmatprep.subr.mxu0 0.0
      %8366 = vmatpush1.msra.mxu0 0.0
      %8367 = vmatprep.subr.mxu0 0.0
      %8368 = vmatpush1.msra.mxu0 0.0
      %8369 = vmatprep.subr.mxu0 0.0
      %8370 = vmatpush1.msra.mxu0 0.0
      %8371 = vmatprep.subr.mxu0 0.0
      %8372 = vmatpush1.msra.mxu0 0.0
      %8373 = vmatprep.subr.mxu0 0.0
      %8374 = vmatpush1.msra.mxu0 0.0
      %8375 = vmatprep.subr.mxu0 0.0
      %8376 = vmatpush1.msra.mxu0 0.0
      %8377 = vmatprep.subr.mxu0 0.0
      %8378 = vmatpush1.msra.mxu0 0.0
      %8379 = vmatprep.subr.mxu0 0.0
      %8380 = vmatpush1.msra.mxu0 0.0
      %8381 = vmatprep.subr.mxu0 0.0
      %8382 = vmatpush1.msra.mxu0 0.0
      %8383 = vmatprep.subr.mxu0 0.0
      %8384 = vmatpush1.msra.mxu0 0.0
      %8385 = vmatprep.subr.mxu0 0.0
      %8386 = vmatpush1.msra.mxu0 0.0
      %8387 = vmatprep.subr.mxu0 0.0
      %8388 = vmatpush1.msra.mxu0 0.0
      %8389 = vmatprep.subr.mxu0 0.0
      %8390 = vmatpush1.msra.mxu0 0.0
      %8391 = vmatprep.subr.mxu0 0.0
      %8392 = vmatpush1.msra.mxu0 0.0
      %8393 = vmatprep.subr.mxu0 %v7883
      %8394 = vmatpush1.msra.mxu0 %v7882
      %8395 = vmatprep.subr.mxu0 %v7881
      %8396 = vmatpush1.msra.mxu0 %v7880
      %8397 = vmatprep.subr.mxu0 0.0
      %8398 = vmatpush2.msra.mxu0 0.0
      %8399 = vmatprep.subr.mxu0 0.0
      %8400 = vmatpush2.msra.mxu0 0.0
      %8401 = vmatprep.subr.mxu0 0.0
      %8402 = vmatpush2.msra.mxu0 0.0
      %8403 = vmatprep.subr.mxu0 0.0
      %8404 = vmatpush2.msra.mxu0 0.0
      %8405 = vmatprep.subr.mxu0 0.0
      %8406 = vmatpush2.msra.mxu0 0.0
      %8407 = vmatprep.subr.mxu0 0.0
      %8408 = vmatpush2.msra.mxu0 0.0
      %8409 = vmatprep.subr.mxu0 0.0
      %8410 = vmatpush2.msra.mxu0 0.0
      %8411 = vmatprep.subr.mxu0 0.0
      %8412 = vmatpush2.msra.mxu0 0.0
      %8413 = vmatprep.subr.mxu0 0.0
      %8414 = vmatpush2.msra.mxu0 0.0
      %8415 = vmatprep.subr.mxu0 0.0
      %8416 = vmatpush2.msra.mxu0 0.0
      %8417 = vmatprep.subr.mxu0 0.0
      %8418 = vmatpush2.msra.mxu0 0.0
      %8419 = vmatprep.subr.mxu0 0.0
      %8420 = vmatpush2.msra.mxu0 0.0
      %8421 = vmatprep.subr.mxu0 0.0
      %8422 = vmatpush2.msra.mxu0 0.0
      %8423 = vmatprep.subr.mxu0 0.0
      %8424 = vmatpush2.msra.mxu0 0.0
      %8425 = vmatprep.subr.mxu0 0.0
      %8426 = vmatpush2.msra.mxu0 0.0
      %8427 = vmatprep.subr.mxu0 0.0
      %8428 = vmatpush2.msra.mxu0 0.0
      %8429 = vmatprep.mubr.f32.mxu0 0.0
      %8430 = vmatmul.mubr.f32.gmra.mxu0 %v8363
      %v8431 = vpop.f32.mrf.mxu0
      %v8432 = vadd.f32 0.0, %v8431
      %v8433 = vpop.f32.mrf.mxu0
      %v8434 = vadd.f32 0.0, %v8433
      %8435 = vdwg.mxu0
      %8436 = vrot.lane.b32.xlu0 %v8432, 127
      %v8437 = vpop.permute.xlu0 %8436
      %8438 = vrot.lane.b32.xlu0 %v8434, 127
      %v8439 = vpop.permute.xlu0 %8438
      %vm8440 = vcmp.lt.s32.totalorder %v7964, 127
      %v8441 = vsel %vm8440, %v8437, %v8439
      %v8442 = vsel %vm8440, %v8439, %v8437
      %s8443 = scalar_lea.vmem %s17, 10
      %v8444 = vld [vmem:[%s8443] sm:$0x3]
      %v8446 = vlaneseq
      %v8447 = vshrl.u32 %v8446, 7
      %v8448 = vsub.s32 0, %v8447
      %v8449 = vrot.slane %v8444, %v8448
      %v8450 = vlaneseq
      %v8451 = vshrl.u32 %v8450, 7
      %v8452 = vsub.s32 1, %v8451
      %v8453 = vrot.slane %v8444, %v8452
      %v8456 = vmul.f32 %v8441, %v8449
      %v8457 = vmul.f32 %v8442, %v8453
      %v8458 = vadd.f32 %v8358, %v8456
      %v8459 = vadd.f32 %v8359, %v8457
      %s8460 = scalar_lea.vmem %s18, 48
      %v8461 = vld [vmem:[%s8460] sm:$0xff]
      %v8463 = vsel %vm2531, %v8461, 0
      %8465 = vmatprep.subr.mxu0 0.0
      %8466 = vmatpush1.msra.mxu0 0.0
      %8467 = vmatprep.subr.mxu0 0.0
      %8468 = vmatpush1.msra.mxu0 0.0
      %8469 = vmatprep.subr.mxu0 0.0
      %8470 = vmatpush1.msra.mxu0 0.0
      %8471 = vmatprep.subr.mxu0 0.0
      %8472 = vmatpush1.msra.mxu0 0.0
      %8473 = vmatprep.subr.mxu0 0.0
      %8474 = vmatpush1.msra.mxu0 0.0
      %8475 = vmatprep.subr.mxu0 0.0
      %8476 = vmatpush1.msra.mxu0 0.0
      %8477 = vmatprep.subr.mxu0 0.0
      %8478 = vmatpush1.msra.mxu0 0.0
      %8479 = vmatprep.subr.mxu0 0.0
      %8480 = vmatpush1.msra.mxu0 0.0
      %8481 = vmatprep.subr.mxu0 0.0
      %8482 = vmatpush1.msra.mxu0 0.0
      %8483 = vmatprep.subr.mxu0 0.0
      %8484 = vmatpush1.msra.mxu0 0.0
      %8485 = vmatprep.subr.mxu0 0.0
      %8486 = vmatpush1.msra.mxu0 0.0
      %8487 = vmatprep.subr.mxu0 0.0
      %8488 = vmatpush1.msra.mxu0 0.0
      %8489 = vmatprep.subr.mxu0 0.0
      %8490 = vmatpush1.msra.mxu0 0.0
      %8491 = vmatprep.subr.mxu0 0.0
      %8492 = vmatpush1.msra.mxu0 0.0
      %8493 = vmatprep.subr.mxu0 %v7883
      %8494 = vmatpush1.msra.mxu0 %v7882
      %8495 = vmatprep.subr.mxu0 %v7881
      %8496 = vmatpush1.msra.mxu0 %v7880
      %8497 = vmatprep.subr.mxu0 0.0
      %8498 = vmatpush2.msra.mxu0 0.0
      %8499 = vmatprep.subr.mxu0 0.0
      %8500 = vmatpush2.msra.mxu0 0.0
      %8501 = vmatprep.subr.mxu0 0.0
      %8502 = vmatpush2.msra.mxu0 0.0
      %8503 = vmatprep.subr.mxu0 0.0
      %8504 = vmatpush2.msra.mxu0 0.0
      %8505 = vmatprep.subr.mxu0 0.0
      %8506 = vmatpush2.msra.mxu0 0.0
      %8507 = vmatprep.subr.mxu0 0.0
      %8508 = vmatpush2.msra.mxu0 0.0
      %8509 = vmatprep.subr.mxu0 0.0
      %8510 = vmatpush2.msra.mxu0 0.0
      %8511 = vmatprep.subr.mxu0 0.0
      %8512 = vmatpush2.msra.mxu0 0.0
      %8513 = vmatprep.subr.mxu0 0.0
      %8514 = vmatpush2.msra.mxu0 0.0
      %8515 = vmatprep.subr.mxu0 0.0
      %8516 = vmatpush2.msra.mxu0 0.0
      %8517 = vmatprep.subr.mxu0 0.0
      %8518 = vmatpush2.msra.mxu0 0.0
      %8519 = vmatprep.subr.mxu0 0.0
      %8520 = vmatpush2.msra.mxu0 0.0
      %8521 = vmatprep.subr.mxu0 0.0
      %8522 = vmatpush2.msra.mxu0 0.0
      %8523 = vmatprep.subr.mxu0 0.0
      %8524 = vmatpush2.msra.mxu0 0.0
      %8525 = vmatprep.subr.mxu0 0.0
      %8526 = vmatpush2.msra.mxu0 0.0
      %8527 = vmatprep.subr.mxu0 0.0
      %8528 = vmatpush2.msra.mxu0 0.0
      %8529 = vmatprep.mubr.f32.mxu0 0.0
      %8530 = vmatmul.mubr.f32.gmra.mxu0 %v8463
      %v8531 = vpop.f32.mrf.mxu0
      %v8532 = vadd.f32 0.0, %v8531
      %v8533 = vpop.f32.mrf.mxu0
      %v8534 = vadd.f32 0.0, %v8533
      %8535 = vdwg.mxu0
      %8536 = vrot.lane.b32.xlu0 %v8532, 113
      %v8537 = vpop.permute.xlu0 %8536
      %8538 = vrot.lane.b32.xlu0 %v8534, 113
      %v8539 = vpop.permute.xlu0 %8538
      %vm8540 = vcmp.lt.s32.totalorder %v7964, 113
      %v8541 = vsel %vm8540, %v8537, %v8539
      %v8542 = vsel %vm8540, %v8539, %v8537
      %s8543 = scalar_lea.vmem %s17, 12
      %v8544 = vld [vmem:[%s8543] sm:$0x3]
      %v8546 = vlaneseq
      %v8547 = vshrl.u32 %v8546, 7
      %v8548 = vsub.s32 0, %v8547
      %v8549 = vrot.slane %v8544, %v8548
      %v8550 = vlaneseq
      %v8551 = vshrl.u32 %v8550, 7
      %v8552 = vsub.s32 1, %v8551
      %v8553 = vrot.slane %v8544, %v8552
      %v8556 = vmul.f32 %v8541, %v8549
      %v8557 = vmul.f32 %v8542, %v8553
      %v8558 = vadd.f32 %v8458, %v8556
      %v8559 = vadd.f32 %v8459, %v8557
      %s8560 = scalar_lea.vmem %s18, 56
      %v8561 = vld [vmem:[%s8560] sm:$0xff]
      %v8563 = vsel %vm2531, %v8561, 0
      %8565 = vmatprep.subr.mxu0 0.0
      %8566 = vmatpush1.msra.mxu0 0.0
      %8567 = vmatprep.subr.mxu0 0.0
      %8568 = vmatpush1.msra.mxu0 0.0
      %8569 = vmatprep.subr.mxu0 0.0
      %8570 = vmatpush1.msra.mxu0 0.0
      %8571 = vmatprep.subr.mxu0 0.0
      %8572 = vmatpush1.msra.mxu0 0.0
      %8573 = vmatprep.subr.mxu0 0.0
      %8574 = vmatpush1.msra.mxu0 0.0
      %8575 = vmatprep.subr.mxu0 0.0
      %8576 = vmatpush1.msra.mxu0 0.0
      %8577 = vmatprep.subr.mxu0 0.0
      %8578 = vmatpush1.msra.mxu0 0.0
      %8579 = vmatprep.subr.mxu0 0.0
      %8580 = vmatpush1.msra.mxu0 0.0
      %8581 = vmatprep.subr.mxu0 0.0
      %8582 = vmatpush1.msra.mxu0 0.0
      %8583 = vmatprep.subr.mxu0 0.0
      %8584 = vmatpush1.msra.mxu0 0.0
      %8585 = vmatprep.subr.mxu0 0.0
      %8586 = vmatpush1.msra.mxu0 0.0
      %8587 = vmatprep.subr.mxu0 0.0
      %8588 = vmatpush1.msra.mxu0 0.0
      %8589 = vmatprep.subr.mxu0 0.0
      %8590 = vmatpush1.msra.mxu0 0.0
      %8591 = vmatprep.subr.mxu0 0.0
      %8592 = vmatpush1.msra.mxu0 0.0
      %8593 = vmatprep.subr.mxu0 %v7883
      %8594 = vmatpush1.msra.mxu0 %v7882
      %8595 = vmatprep.subr.mxu0 %v7881
      %8596 = vmatpush1.msra.mxu0 %v7880
      %8597 = vmatprep.subr.mxu0 0.0
      %8598 = vmatpush2.msra.mxu0 0.0
      %8599 = vmatprep.subr.mxu0 0.0
      %8600 = vmatpush2.msra.mxu0 0.0
      %8601 = vmatprep.subr.mxu0 0.0
      %8602 = vmatpush2.msra.mxu0 0.0
      %8603 = vmatprep.subr.mxu0 0.0
      %8604 = vmatpush2.msra.mxu0 0.0
      %8605 = vmatprep.subr.mxu0 0.0
      %8606 = vmatpush2.msra.mxu0 0.0
      %8607 = vmatprep.subr.mxu0 0.0
      %8608 = vmatpush2.msra.mxu0 0.0
      %8609 = vmatprep.subr.mxu0 0.0
      %8610 = vmatpush2.msra.mxu0 0.0
      %8611 = vmatprep.subr.mxu0 0.0
      %8612 = vmatpush2.msra.mxu0 0.0
      %8613 = vmatprep.subr.mxu0 0.0
      %8614 = vmatpush2.msra.mxu0 0.0
      %8615 = vmatprep.subr.mxu0 0.0
      %8616 = vmatpush2.msra.mxu0 0.0
      %8617 = vmatprep.subr.mxu0 0.0
      %8618 = vmatpush2.msra.mxu0 0.0
      %8619 = vmatprep.subr.mxu0 0.0
      %8620 = vmatpush2.msra.mxu0 0.0
      %8621 = vmatprep.subr.mxu0 0.0
      %8622 = vmatpush2.msra.mxu0 0.0
      %8623 = vmatprep.subr.mxu0 0.0
      %8624 = vmatpush2.msra.mxu0 0.0
      %8625 = vmatprep.subr.mxu0 0.0
      %8626 = vmatpush2.msra.mxu0 0.0
      %8627 = vmatprep.subr.mxu0 0.0
      %8628 = vmatpush2.msra.mxu0 0.0
      %8629 = vmatprep.mubr.f32.mxu0 0.0
      %8630 = vmatmul.mubr.f32.gmra.mxu0 %v8563
      %v8631 = vpop.f32.mrf.mxu0
      %v8632 = vadd.f32 0.0, %v8631
      %v8633 = vpop.f32.mrf.mxu0
      %v8634 = vadd.f32 0.0, %v8633
      %8635 = vdwg.mxu0
      %8636 = vrot.lane.b32.xlu0 %v8632, 112
      %v8637 = vpop.permute.xlu0 %8636
      %8638 = vrot.lane.b32.xlu0 %v8634, 112
      %v8639 = vpop.permute.xlu0 %8638
      %vm8640 = vcmp.lt.s32.totalorder %v7964, 112
      %v8641 = vsel %vm8640, %v8637, %v8639
      %v8642 = vsel %vm8640, %v8639, %v8637
      %s8643 = scalar_lea.vmem %s17, 14
      %v8644 = vld [vmem:[%s8643] sm:$0x3]
      %v8646 = vlaneseq
      %v8647 = vshrl.u32 %v8646, 7
      %v8648 = vsub.s32 0, %v8647
      %v8649 = vrot.slane %v8644, %v8648
      %v8650 = vlaneseq
      %v8651 = vshrl.u32 %v8650, 7
      %v8652 = vsub.s32 1, %v8651
      %v8653 = vrot.slane %v8644, %v8652
      %v8656 = vmul.f32 %v8641, %v8649
      %v8657 = vmul.f32 %v8642, %v8653
      %v8658 = vadd.f32 %v8558, %v8656
      %v8659 = vadd.f32 %v8559, %v8657
      %s8660 = scalar_lea.vmem %s18, 64
      %v8661 = vld [vmem:[%s8660] sm:$0xff]
      %v8663 = vsel %vm2531, %v8661, 0
      %8665 = vmatprep.subr.mxu0 0.0
      %8666 = vmatpush1.msra.mxu0 0.0
      %8667 = vmatprep.subr.mxu0 0.0
      %8668 = vmatpush1.msra.mxu0 0.0
      %8669 = vmatprep.subr.mxu0 0.0
      %8670 = vmatpush1.msra.mxu0 0.0
      %8671 = vmatprep.subr.mxu0 0.0
      %8672 = vmatpush1.msra.mxu0 0.0
      %8673 = vmatprep.subr.mxu0 0.0
      %8674 = vmatpush1.msra.mxu0 0.0
      %8675 = vmatprep.subr.mxu0 0.0
      %8676 = vmatpush1.msra.mxu0 0.0
      %8677 = vmatprep.subr.mxu0 0.0
      %8678 = vmatpush1.msra.mxu0 0.0
      %8679 = vmatprep.subr.mxu0 0.0
      %8680 = vmatpush1.msra.mxu0 0.0
      %8681 = vmatprep.subr.mxu0 0.0
      %8682 = vmatpush1.msra.mxu0 0.0
      %8683 = vmatprep.subr.mxu0 0.0
      %8684 = vmatpush1.msra.mxu0 0.0
      %8685 = vmatprep.subr.mxu0 0.0
      %8686 = vmatpush1.msra.mxu0 0.0
      %8687 = vmatprep.subr.mxu0 0.0
      %8688 = vmatpush1.msra.mxu0 0.0
      %8689 = vmatprep.subr.mxu0 0.0
      %8690 = vmatpush1.msra.mxu0 0.0
      %8691 = vmatprep.subr.mxu0 0.0
      %8692 = vmatpush1.msra.mxu0 0.0
      %8693 = vmatprep.subr.mxu0 %v7883
      %8694 = vmatpush1.msra.mxu0 %v7882
      %8695 = vmatprep.subr.mxu0 %v7881
      %8696 = vmatpush1.msra.mxu0 %v7880
      %8697 = vmatprep.subr.mxu0 0.0
      %8698 = vmatpush2.msra.mxu0 0.0
      %8699 = vmatprep.subr.mxu0 0.0
      %8700 = vmatpush2.msra.mxu0 0.0
      %8701 = vmatprep.subr.mxu0 0.0
      %8702 = vmatpush2.msra.mxu0 0.0
      %8703 = vmatprep.subr.mxu0 0.0
      %8704 = vmatpush2.msra.mxu0 0.0
      %8705 = vmatprep.subr.mxu0 0.0
      %8706 = vmatpush2.msra.mxu0 0.0
      %8707 = vmatprep.subr.mxu0 0.0
      %8708 = vmatpush2.msra.mxu0 0.0
      %8709 = vmatprep.subr.mxu0 0.0
      %8710 = vmatpush2.msra.mxu0 0.0
      %8711 = vmatprep.subr.mxu0 0.0
      %8712 = vmatpush2.msra.mxu0 0.0
      %8713 = vmatprep.subr.mxu0 0.0
      %8714 = vmatpush2.msra.mxu0 0.0
      %8715 = vmatprep.subr.mxu0 0.0
      %8716 = vmatpush2.msra.mxu0 0.0
      %8717 = vmatprep.subr.mxu0 0.0
      %8718 = vmatpush2.msra.mxu0 0.0
      %8719 = vmatprep.subr.mxu0 0.0
      %8720 = vmatpush2.msra.mxu0 0.0
      %8721 = vmatprep.subr.mxu0 0.0
      %8722 = vmatpush2.msra.mxu0 0.0
      %8723 = vmatprep.subr.mxu0 0.0
      %8724 = vmatpush2.msra.mxu0 0.0
      %8725 = vmatprep.subr.mxu0 0.0
      %8726 = vmatpush2.msra.mxu0 0.0
      %8727 = vmatprep.subr.mxu0 0.0
      %8728 = vmatpush2.msra.mxu0 0.0
      %8729 = vmatprep.mubr.f32.mxu0 0.0
      %8730 = vmatmul.mubr.f32.gmra.mxu0 %v8663
      %v8731 = vpop.f32.mrf.mxu0
      %v8732 = vadd.f32 0.0, %v8731
      %v8733 = vpop.f32.mrf.mxu0
      %v8734 = vadd.f32 0.0, %v8733
      %8735 = vdwg.mxu0
      %8736 = vrot.lane.b32.xlu0 %v8732, 111
      %v8737 = vpop.permute.xlu0 %8736
      %8738 = vrot.lane.b32.xlu0 %v8734, 111
      %v8739 = vpop.permute.xlu0 %8738
      %vm8740 = vcmp.lt.s32.totalorder %v7964, 111
      %v8741 = vsel %vm8740, %v8737, %v8739
      %v8742 = vsel %vm8740, %v8739, %v8737
      %s8743 = scalar_lea.vmem %s17, 16
      %v8744 = vld [vmem:[%s8743] sm:$0x3]
      %v8746 = vlaneseq
      %v8747 = vshrl.u32 %v8746, 7
      %v8748 = vsub.s32 0, %v8747
      %v8749 = vrot.slane %v8744, %v8748
      %v8750 = vlaneseq
      %v8751 = vshrl.u32 %v8750, 7
      %v8752 = vsub.s32 1, %v8751
      %v8753 = vrot.slane %v8744, %v8752
      %v8756 = vmul.f32 %v8741, %v8749
      %v8757 = vmul.f32 %v8742, %v8753
      %v8758 = vadd.f32 %v8658, %v8756
      %v8759 = vadd.f32 %v8659, %v8757
      %v8760 = vld [vmem:[%s19] sm:$0xff]
      %8762 = vset.pattern.permute.xlu0 0
      %8763 = vperm.xlu0 %8762, %v8760
      %v8764 = vpop.permute.xlu0 %8763
      %v8766 = vadd.f32 %v8758, %v8764
      %v8767 = vadd.f32 %v8759, %v8764
      %v8768 = vxor.u32 %v8766, 2147483648
      %v8769 = vxor.u32 %v8767, 2147483648
      %v8770 = vmul.f32 %v8768, 1.442695
      %v8771 = vpow.pop %v8770
      %v8772 = vmul.f32 %v8769, 1.442695
      %v8773 = vpow.pop %v8772
      %v8774 = vadd.f32 %v8771, 1.0
      %v8775 = vadd.f32 %v8773, 1.0
      %v8776 = vrcp.pop %v8774
      %v8777 = vmul.f32 1.0, %v8776
      %v8778 = vrcp.pop %v8775
      %v8779 = vmul.f32 1.0, %v8778
      %8780 = vst [vmem:[%s629] sm:$0xff] %v8777
      %8781 = vst [vmem:[%s629 + $0x8] sm:$0xff] %v8779
      %p8782 = scmp.lt.s32.totalorder %s31, 1
      %s8783 = scalar_select %p8782, %s31, 1
      %s8784 = smul.addr %s8783, 2
      %s8785 = smul.addr %s8784, 8
      %s8786 = scalar_lea.vmem %s20, %s8785
      // Predicated region
      $region101: #{autoencoder_forward.1} parent=99 // pred_check
        %p8787 = pneg %p474
      $region102: #{autoencoder_forward.1} parent=99 // pred_check_branch
        %8789 = sbr.rel (%p8787) target = $region104
      $region103: #{autoencoder_forward.1} parent=99 // pred_region
        _
      $region104: #{autoencoder_forward.1} parent=99 // pred_fallthru
        _
    $region100: #{autoencoder_forward.1} parent=5 // pred_fallthru
      _
    %p8790 = scmp.le.s32.totalorder 2, %s26
    // Predicated region
    $region105: #{autoencoder_forward.1} parent=5 // pred_check
      %p8791 = pneg %p8790
    $region106: #{autoencoder_forward.1} parent=5 // pred_check_branch
      %8793 = sbr.rel (%p8791) target = $region108
    $region107: #{autoencoder_forward.1} parent=5 // pred_region
      %s8794 = ssub.s32 %s26, 2
      // Predicated region
      $region109: #{autoencoder_forward.1} parent=107 // pred_check
        %p8795 = pneg %p480
      $region110: #{autoencoder_forward.1} parent=107 // pred_check_branch
        %8797 = sbr.rel (%p8795) target = $region112
      $region111: #{autoencoder_forward.1} parent=107 // pred_region
        %p8798 = scmp.lt.s32.totalorder %s32, 1
        %s8799 = scalar_select %p8798, %s32, 1
        %s8800 = smul.addr %s8799, 2
        %s8801 = smul.addr %s8800, 8
        %s8802 = scalar_lea.vmem %s20, %s8801
      $region112: #{autoencoder_forward.1} parent=107 // pred_fallthru
        _
    $region108: #{autoencoder_forward.1} parent=5 // pred_fallthru
      _
  $region6: #{autoencoder_forward.1} parent=0 // loop_footer
    %s30 = sadd.s32 1, %s26
  $region7: #{autoencoder_forward.1} parent=0 // loop_footer_branch
    %25 = sbr.rel target = $region3
  $region8: #{autoencoder_forward.1} parent=0 // loop_exit
    _

</llo_original>
